<compile_context>
chip_gen: v7x
topology: tpu7x:2x2x1
jax: 0.10.0
libtpu: 0.0.40
codegen_flags: <defaults>
</compile_context>

<pallas_src>
import functools
import math

import numpy as np

import jax
import jax.numpy as jnp
from jax import lax
from jax.experimental import pallas as pl
from jax.experimental.pallas import tpu as pltpu

_LANES = 128


# ----------------------------- small helpers --------------------------------

def _round_up(x, m):
    return (x + m - 1) // m * m


def _vmem_budget():
    """Generation-specific VMEM budget (~75% of physical, capped)."""
    try:
        cap = int(pltpu.get_tpu_info().vmem_capacity_bytes)
    except Exception:
        cap = 64 * 1024 * 1024
    return min(cap * 3 // 4, 112 * 1024 * 1024)


def _pick_tile_h(h, w, ci, co, budget):
    """Largest even row tile that divides H, fits the VMEM budget, and gives a
    matmul M dim up to ~2048 rows."""
    best = 2
    for th in range(2, h + 1, 2):
        if h % th:
            continue
        io = 2 * ((th + 2) * w * ci * 2 + th * w * co * 2)          # dbl-buffered blocks
        consts = 2 * (9 * ci * co * 2 + 16 * co * 4 + 16 * ci * 4)  # weights / vectors
        reg = th * w * (9 * ci * 2 * 2 + co * 4 * 2) + (th + 2) * (w + 2) * ci * 4
        if io + consts + reg > budget:
            continue
        best = th
        if th * w >= 2048:
            break
    return best


def _erf(x):
    # Abramowitz & Stegun 7.1.26 (|err| ~ 1.5e-7), exact divide.
    a1, a2, a3 = 0.254829592, -0.284496736, 1.421413741
    a4, a5, p = -1.453152027, 1.061405429, 0.3275911
    ax = jnp.abs(x)
    t = 1.0 / (1.0 + p * ax)
    poly = ((((a5 * t + a4) * t + a3) * t + a2) * t + a1) * t
    y = 1.0 - poly * jnp.exp(-ax * ax)
    return jnp.where(x >= 0, y, -y)


def _gelu(x):
    # torch.nn.GELU() default (approximate='none'): 0.5*x*(1+erf(x/sqrt(2)))
    return 0.5 * x * (1.0 + _erf(x * 0.7071067811865476))


def _pool_selectors(th, w):
    """0/1 selection matrices for the W-direction of the 2x2 max-pool, built
    once in the wrapper (hoisted out of the kernel body)."""
    m = (th // 2) * w
    k = m // 2
    r = np.arange(k)
    se = np.zeros((k, m), np.float32)
    so = np.zeros((k, m), np.float32)
    se[r, 2 * r] = 1.0
    so[r, 2 * r + 1] = 1.0
    return jnp.asarray(se), jnp.asarray(so)


# ------------------------------- kernels ------------------------------------

def _conv_stats_kernel(*refs, th, w, prologue):
    """(optional BN+GELU prologue) -> 3x3 conv (stride 1, pad 1) + bias.

    Writes the pre-BN conv output (bf16) and accumulates per-batch per-channel
    sum / sum-of-squares for the following BatchNorm.
    Refs (in order): top, mid, bot, weight(9*ci,co), bias(1,co),
                     [pscale(1,ci), pshift(1,ci)], z_out, stats_out.
    """
    if prologue:
        (top_ref, mid_ref, bot_ref, w_ref, b_ref,
         ps_ref, pb_ref, z_ref, stats_ref) = refs
    else:
        (top_ref, mid_ref, bot_ref, w_ref, b_ref, z_ref, stats_ref) = refs
        ps_ref = pb_ref = None

    hh = pl.program_id(1)
    nh = pl.num_programs(1)
    ci = mid_ref.shape[-1]
    co = w_ref.shape[-1]

    def prep(ref):
        v = ref[0].astype(jnp.float32)
        if prologue:
            # BN-apply + exact GELU of the *previous* layer, fused into this
            # conv's input read (so y1 never round-trips HBM).
            v = _gelu(v * ps_ref[...] + pb_ref[...])
        return v

    # Boundary rows of the 3x3 halo are gated to zero (PyTorch zero padding
    # applies to the post-GELU activation, so gate AFTER the prologue).
    mid = prep(mid_ref).astype(jnp.bfloat16)                       # (th, w, ci)
    top = (prep(top_ref) * (hh > 0).astype(jnp.float32)).astype(jnp.bfloat16)
    bot = (prep(bot_ref) * (hh + 1 < nh).astype(jnp.float32)).astype(jnp.bfloat16)

    rows = jnp.concatenate([top, mid, bot], axis=0)                # (th+2, w, ci)
    zcol = jnp.zeros((th + 2, 1, ci), rows.dtype)
    xw = jnp.concatenate([zcol, rows, zcol], axis=1)               # (th+2, w+2, ci)

    # In-register im2col: one wide-K matmul (K = 9*ci) instead of 9 K=ci ones.
    taps = [xw[kh:kh + th, kw:kw + w, :]
            for kh in range(3) for kw in range(3)]                 # 9 x (th, w, ci)
    patches = jnp.concatenate(taps, axis=-1).reshape(th * w, 9 * ci)
    acc = jnp.dot(patches, w_ref[...],
                  preferred_element_type=jnp.float32) + b_ref[...]  # (th*w, co)

    zb = acc.astype(jnp.bfloat16)
    z_ref[0] = zb.reshape(th, w, co)

    # BN statistics from the exact values pass 2 will read back (bf16-rounded).
    zf = zb.astype(jnp.float32)
    s = jnp.sum(zf, axis=0, keepdims=True)                          # (1, co)
    ss = jnp.sum(zf * zf, axis=0, keepdims=True)                    # (1, co)
    part = jnp.concatenate([s, ss], axis=0)[None]                   # (1, 2, co)

    @pl.when(hh == 0)
    def _init():
        stats_ref[...] = jnp.zeros_like(stats_ref)

    stats_ref[...] += part


def _bn_gelu_pool_kernel(z_ref, sc_ref, sh_ref, se_ref, so_ref, o_ref, *, th, w):
    """BN-apply + exact GELU + fused 2x2 max-pool."""
    co = z_ref.shape[-1]
    y = _gelu(z_ref[0].astype(jnp.float32) * sc_ref[...] + sh_ref[...])  # (th, w, co)

    # H direction: row pairs via a leading-dim split (layout-trivial) + VPU max.
    y = y.reshape(th // 2, 2, w, co)
    yh = jnp.maximum(y[:, 0], y[:, 1])                              # (th//2, w, co)

    # W direction: even/odd column gather via hoisted 0/1 selection matmuls on
    # the (otherwise idle) MXU; avoids sublane-strided slicing.
    m = (th // 2) * w
    yh2 = yh.reshape(m, co)
    pooled = jnp.maximum(
        jnp.dot(se_ref[...], yh2, preferred_element_type=jnp.float32),
        jnp.dot(so_ref[...], yh2, preferred_element_type=jnp.float32))
    o_ref[0] = pooled.reshape(th // 2, w // 2, co).astype(o_ref.dtype)


# --------------------------- pallas_call wrappers ----------------------------

def _conv_stats_pass(x, wflat, bias, pscale=None, pshift=None, *, th, prologue,
                     vmem_limit):
    """conv (+ optional fused BN/GELU prologue) over a (batch, row-tile) grid."""
    n, h, w, ci = x.shape
    co = wflat.shape[-1]

    top = pl.BlockSpec((1, 1, w, ci),
                       lambda nn, hh: (nn, jnp.maximum(hh * th - 1, 0), 0, 0))
    mid = pl.BlockSpec((1, th, w, ci), lambda nn, hh: (nn, hh, 0, 0))
    bot = pl.BlockSpec((1, 1, w, ci),
                       lambda nn, hh: (nn, jnp.minimum((hh + 1) * th, h - 1), 0, 0))
    wsp = pl.BlockSpec((9 * ci, co), lambda nn, hh: (0, 0))
    vco = pl.BlockSpec((1, co), lambda nn, hh: (0, 0))
    vci = pl.BlockSpec((1, ci), lambda nn, hh: (0, 0))

    in_specs = [top, mid, bot, wsp, vco]
    args = [x, x, x, wflat, bias]
    if prologue:
        in_specs += [vci, vci]
        args += [pscale, pshift]

    kernel = functools.partial(_conv_stats_kernel, th=th, w=w, prologue=prologue)
    cost = pl.CostEstimate(
        flops=2 * n * h * w * 9 * ci * co,
        transcendentals=(n * h * w * ci) if prologue else 0,
        bytes_accessed=n * h * w * (ci + co) * 2 + 9 * ci * co * 2 + n * 2 * co * 4)

    return pl.pallas_call(
        kernel,
        out_shape=(jax.ShapeDtypeStruct((n, h, w, co), jnp.bfloat16),
                   jax.ShapeDtypeStruct((n, 2, co), jnp.float32)),
        grid=(n, h // th),
        in_specs=in_specs,
        out_specs=(pl.BlockSpec((1, th, w, co), lambda nn, hh: (nn, hh, 0, 0)),
                   pl.BlockSpec((1, 2, co), lambda nn, hh: (nn, 0, 0))),
        compiler_params=pltpu.CompilerParams(
            dimension_semantics=("parallel", "arbitrary"),
            vmem_limit_bytes=vmem_limit),
        cost_estimate=cost,
    )(*args)


def _bn_gelu_pool_pass(z, scale, shift, sel_e, sel_o, *, th, vmem_limit):
    n, h, w, co = z.shape
    m = (th // 2) * w
    k = m // 2
    kernel = functools.partial(_bn_gelu_pool_kernel, th=th, w=w)
    cost = pl.CostEstimate(
        flops=6 * n * h * w * co,
        transcendentals=n * h * w * co,
        bytes_accessed=n * h * w * co * 2 + n * (h // 2) * (w // 2) * co * 4)
    return pl.pallas_call(
        kernel,
        out_shape=jax.ShapeDtypeStruct((n, h // 2, w // 2, co), jnp.float32),
        grid=(n, h // th),
        in_specs=[pl.BlockSpec((1, th, w, co), lambda nn, hh: (nn, hh, 0, 0)),
                  pl.BlockSpec((1, co), lambda nn, hh: (0, 0)),
                  pl.BlockSpec((1, co), lambda nn, hh: (0, 0)),
                  pl.BlockSpec((k, m), lambda nn, hh: (0, 0)),
                  pl.BlockSpec((k, m), lambda nn, hh: (0, 0))],
        out_specs=pl.BlockSpec((1, th // 2, w // 2, co),
                               lambda nn, hh: (nn, hh, 0, 0)),
        compiler_params=pltpu.CompilerParams(
            dimension_semantics=("parallel", "parallel"),
            vmem_limit_bytes=vmem_limit),
        cost_estimate=cost,
    )(z, scale, shift, sel_e, sel_o)


# ------------------------------- JAX glue ------------------------------------

def _prep_weight(w_oihw, ci_pad, co_pad):
    co, ci = w_oihw.shape[0], w_oihw.shape[1]
    w = jnp.transpose(w_oihw, (2, 3, 1, 0))                        # (3,3,Cin,Cout)
    w = jnp.pad(w, ((0, 0), (0, 0), (0, ci_pad - ci), (0, co_pad - co)))
    # Row order (kh, kw, ci) matches the in-kernel tap concatenation order.
    return w.reshape(9 * ci_pad, co_pad).astype(jnp.bfloat16)


def _pad_vec(v, n_pad):
    return jnp.pad(v, (0, n_pad - v.shape[0])).astype(jnp.float32)


def _bn_affine(stats, gamma_p, beta_p, count, eps=1e-5):
    # Training-mode BatchNorm2d: biased variance over N*H*W, eps=1e-5.
    mean = stats[0] / count
    var = jnp.maximum(stats[1] / count - mean * mean, 0.0)
    scale = gamma_p * lax.rsqrt(var + eps)
    shift = beta_p - mean * scale
    return scale[None, :].astype(jnp.float32), shift[None, :].astype(jnp.float32)


def init_params(key, in_channels, out_channels):
    k1, k2, k3, k4 = jax.random.split(key, 4)
    fan1 = in_channels * 9
    fan2 = out_channels * 9
    return {
        "conv1_w": jax.random.normal(k1, (out_channels, in_channels, 3, 3),
                                     jnp.float32) * (1.0 / math.sqrt(fan1)),
        "conv1_b": jax.random.normal(k2, (out_channels,), jnp.float32) * 0.1,
        "bn1_g": jnp.ones((out_channels,), jnp.float32),
        "bn1_b": jnp.zeros((out_channels,), jnp.float32),
        "conv2_w": jax.random.normal(k3, (out_channels, out_channels, 3, 3),
                                     jnp.float32) * (1.0 / math.sqrt(fan2)),
        "conv2_b": jax.random.normal(k4, (out_channels,), jnp.float32) * 0.1,
        "bn2_g": jnp.ones((out_channels,), jnp.float32),
        "bn2_b": jnp.zeros((out_channels,), jnp.float32),
    }


def unet_down(x_nchw, params):
    """UnetDown.forward: ResidualConvBlock(is_res=False) then MaxPool2d(2)."""
    n, cin, h, w = x_nchw.shape
    cout = params["conv1_w"].shape[0]
    assert h % 2 == 0 and w % 16 == 0, "kernel assumes H even and W % 16 == 0"

    ci = _round_up(cin, _LANES)
    co = _round_up(cout, _LANES)
    budget = _vmem_budget()
    th1 = _pick_tile_h(h, w, ci, co, budget)
    th2 = _pick_tile_h(h, w, co, co, budget)

    # NCHW -> NHWC (channels on the lane axis), pad channels to a lane-dense
    # multiple of 128, cast the matmul operand to bf16 (f32 accumulation
    # in-kernel).  Spatial conv padding is handled inside the kernels.
    x = jnp.transpose(x_nchw, (0, 2, 3, 1))
    xp = jnp.pad(x, ((0, 0), (0, 0), (0, 0), (0, ci - cin))).astype(jnp.bfloat16)

    # conv1 + bias -> z1 (pre-BN, bf16) + per-batch BN1 statistics.
    w1 = _prep_weight(params["conv1_w"], ci, co)
    b1 = _pad_vec(params["conv1_b"], co)[None, :]
    z1, st1 = _conv_stats_pass(xp, w1, b1, th=th1, prologue=False,
                               vmem_limit=budget)
    scale1, shift1 = _bn_affine(jnp.sum(st1, axis=0),
                                _pad_vec(params["bn1_g"], co),
                                _pad_vec(params["bn1_b"], co), n * h * w)

    # Fused BN1-apply + GELU prologue + conv2 + bias -> z2 + BN2 statistics
    # (y1 never round-trips HBM, and no wrapper-side spatial pad).
    w2 = _prep_weight(params["conv2_w"], co, co)
    b2 = _pad_vec(params["conv2_b"], co)[None, :]
    z2, st2 = _conv_stats_pass(z1, w2, b2, scale1, shift1, th=th2,
                               prologue=True, vmem_limit=budget)
    scale2, shift2 = _bn_affine(jnp.sum(st2, axis=0),
                                _pad_vec(params["bn2_g"], co),
                                _pad_vec(params["bn2_b"], co), n * h * w)

    # BN2-apply + GELU + fused MaxPool2d(2).
    sel_e, sel_o = _pool_selectors(th2, w)
    pooled = _bn_gelu_pool_pass(z2, scale2, shift2, sel_e, sel_o, th=th2,
                                vmem_limit=budget)                  # (n,h/2,w/2,co)

    out = pooled[..., :cout]                                        # drop lane pad
    return jnp.transpose(out, (0, 3, 1, 2)).astype(jnp.float32)     # -> NCHW f32


# ---------------------------------- main --------------------------------------

if __name__ == "__main__":
    key = jax.random.PRNGKey(0)
    kx, kp = jax.random.split(key)

    N, Cin, H, W = 2, 4, 16, 16
    Cout = 8
    x = jax.random.normal(kx, (N, Cin, H, W), jnp.float32)
    params = init_params(kp, Cin, Cout)

    out = jax.jit(unet_down)(x, params)
    out = jax.block_until_ready(out)

    assert out.shape == (N, Cout, H // 2, W // 2), out.shape
    assert out.dtype == jnp.float32
    assert bool(jnp.all(jnp.isfinite(out)))
    print("KERNEL_OK")
</pallas_src>

<mosaic_0001>
module attributes {stable_mosaic.version = 11 : i64} {
  func.func @_conv_stats_kernel(%arg0: i32, %arg1: i32, %arg2: memref<1x1x16x128xbf16, #tpu.memory_space<vmem>>, %arg3: memref<1x16x16x128xbf16, #tpu.memory_space<vmem>>, %arg4: memref<1x1x16x128xbf16, #tpu.memory_space<vmem>>, %arg5: memref<1152x128xbf16, #tpu.memory_space<vmem>>, %arg6: memref<1x128xf32, #tpu.memory_space<vmem>>, %arg7: memref<1x16x16x128xbf16, #tpu.memory_space<vmem>>, %arg8: memref<1x2x128xf32, #tpu.memory_space<vmem>>) attributes {dimension_semantics = [#tpu.dimension_semantics<parallel>, #tpu.dimension_semantics<arbitrary>], iteration_bounds = array<i64: 2, 1>, scalar_prefetch = 0 : i64, scratch_operands = 0 : i64, tpu.core_type = #tpu.core_type<tc>, window_params = [{transform_indices = @transform_0, window_bounds = array<i64: 1, 1, 16, 128>}, {transform_indices = @transform_1, window_bounds = array<i64: 1, 16, 16, 128>}, {transform_indices = @transform_2, window_bounds = array<i64: 1, 1, 16, 128>}, {pipeline_mode = #tpu.pipeline_mode<synchronous>, transform_indices = @transform_3, window_bounds = array<i64: 1152, 128>}, {pipeline_mode = #tpu.pipeline_mode<synchronous>, transform_indices = @transform_4, window_bounds = array<i64: 1, 128>}, {transform_indices = @transform_5, window_bounds = array<i64: 1, 16, 16, 128>}, {transform_indices = @transform_6, window_bounds = array<i64: 1, 2, 128>}]} {
    %c0 = arith.constant 0 : index
    %c0_0 = arith.constant 0 : index
    %c0_1 = arith.constant 0 : index
    %c0_2 = arith.constant 0 : index
    %0 = vector.load %arg3[%c0, %c0_0, %c0_1, %c0_2] : memref<1x16x16x128xbf16, #tpu.memory_space<vmem>>, vector<1x16x16x128xbf16>
    %1 = vector.shape_cast %0 : vector<1x16x16x128xbf16> to vector<16x16x128xbf16>
    %2 = arith.extf %1 : vector<16x16x128xbf16> to vector<16x16x128xf32>
    %3 = arith.truncf %2 : vector<16x16x128xf32> to vector<16x16x128xbf16>
    %c0_3 = arith.constant 0 : index
    %c0_4 = arith.constant 0 : index
    %c0_5 = arith.constant 0 : index
    %c0_6 = arith.constant 0 : index
    %4 = vector.load %arg2[%c0_3, %c0_4, %c0_5, %c0_6] : memref<1x1x16x128xbf16, #tpu.memory_space<vmem>>, vector<1x1x16x128xbf16>
    %5 = vector.shape_cast %4 : vector<1x1x16x128xbf16> to vector<1x16x128xbf16>
    %6 = arith.extf %5 : vector<1x16x128xbf16> to vector<1x16x128xf32>
    %c0_i32 = arith.constant 0 : i32
    %7 = arith.cmpi sgt, %arg1, %c0_i32 : i32
    %8 = arith.extui %7 : i1 to i32
    %9 = arith.sitofp %8 : i32 to f32
    %10 = vector.broadcast %9 : f32 to vector<1x16x128xf32>
    %11 = arith.mulf %6, %10 : vector<1x16x128xf32>
    %12 = arith.truncf %11 : vector<1x16x128xf32> to vector<1x16x128xbf16>
    %c0_7 = arith.constant 0 : index
    %c0_8 = arith.constant 0 : index
    %c0_9 = arith.constant 0 : index
    %c0_10 = arith.constant 0 : index
    %13 = vector.load %arg4[%c0_7, %c0_8, %c0_9, %c0_10] : memref<1x1x16x128xbf16, #tpu.memory_space<vmem>>, vector<1x1x16x128xbf16>
    %14 = vector.shape_cast %13 : vector<1x1x16x128xbf16> to vector<1x16x128xbf16>
    %15 = arith.extf %14 : vector<1x16x128xbf16> to vector<1x16x128xf32>
    %c1_i32 = arith.constant 1 : i32
    %16 = arith.addi %arg1, %c1_i32 : i32
    %c1_i32_11 = arith.constant 1 : i32
    %17 = arith.cmpi slt, %16, %c1_i32_11 : i32
    %18 = arith.extui %17 : i1 to i32
    %19 = arith.sitofp %18 : i32 to f32
    %20 = vector.broadcast %19 : f32 to vector<1x16x128xf32>
    %21 = arith.mulf %15, %20 : vector<1x16x128xf32>
    %22 = arith.truncf %21 : vector<1x16x128xf32> to vector<1x16x128xbf16>
    %23 = tpu.concatenate %12, %3, %22 in 0 : vector<1x16x128xbf16>, vector<16x16x128xbf16>, vector<1x16x128xbf16> -> vector<18x16x128xbf16>
    %cst = arith.constant 0.000000e+00 : bf16
    %24 = vector.broadcast %cst : bf16 to vector<18x1x128xbf16>
    %25 = tpu.concatenate %24, %23, %24 in 1 : vector<18x1x128xbf16>, vector<18x16x128xbf16>, vector<18x1x128xbf16> -> vector<18x18x128xbf16>
    %26 = vector.extract_strided_slice %25 {offsets = [0, 0, 0], sizes = [16, 16, 128], strides = [1, 1, 1]} : vector<18x18x128xbf16> to vector<16x16x128xbf16>
    %27 = vector.extract_strided_slice %25 {offsets = [0, 1, 0], sizes = [16, 16, 128], strides = [1, 1, 1]} : vector<18x18x128xbf16> to vector<16x16x128xbf16>
    %28 = vector.extract_strided_slice %25 {offsets = [0, 2, 0], sizes = [16, 16, 128], strides = [1, 1, 1]} : vector<18x18x128xbf16> to vector<16x16x128xbf16>
    %29 = vector.extract_strided_slice %25 {offsets = [1, 0, 0], sizes = [16, 16, 128], strides = [1, 1, 1]} : vector<18x18x128xbf16> to vector<16x16x128xbf16>
    %30 = vector.extract_strided_slice %25 {offsets = [1, 1, 0], sizes = [16, 16, 128], strides = [1, 1, 1]} : vector<18x18x128xbf16> to vector<16x16x128xbf16>
    %31 = vector.extract_strided_slice %25 {offsets = [1, 2, 0], sizes = [16, 16, 128], strides = [1, 1, 1]} : vector<18x18x128xbf16> to vector<16x16x128xbf16>
    %32 = vector.extract_strided_slice %25 {offsets = [2, 0, 0], sizes = [16, 16, 128], strides = [1, 1, 1]} : vector<18x18x128xbf16> to vector<16x16x128xbf16>
    %33 = vector.extract_strided_slice %25 {offsets = [2, 1, 0], sizes = [16, 16, 128], strides = [1, 1, 1]} : vector<18x18x128xbf16> to vector<16x16x128xbf16>
    %34 = vector.extract_strided_slice %25 {offsets = [2, 2, 0], sizes = [16, 16, 128], strides = [1, 1, 1]} : vector<18x18x128xbf16> to vector<16x16x128xbf16>
    %35 = tpu.concatenate %26, %27, %28, %29, %30, %31, %32, %33, %34 in 2 : vector<16x16x128xbf16>, vector<16x16x128xbf16>, vector<16x16x128xbf16>, vector<16x16x128xbf16>, vector<16x16x128xbf16>, vector<16x16x128xbf16>, vector<16x16x128xbf16>, vector<16x16x128xbf16>, vector<16x16x128xbf16> -> vector<16x16x1152xbf16>
    %36 = vector.shape_cast %35 : vector<16x16x1152xbf16> to vector<256x1152xbf16>
    %c0_12 = arith.constant 0 : index
    %c0_13 = arith.constant 0 : index
    %37 = vector.load %arg5[%c0_12, %c0_13] : memref<1152x128xbf16, #tpu.memory_space<vmem>>, vector<1152x128xbf16>
    %cst_14 = arith.constant dense<0.000000e+00> : vector<256x128xf32>
    %38 = tpu.matmul %36, %37, %cst_14 {dimension_numbers = #tpu.dot_dimension_numbers<[1], [0], [0], [1], [0, 0, 1, 1], [], []>} : vector<256x1152xbf16>, vector<1152x128xbf16>, vector<256x128xf32> -> vector<256x128xf32>
    %c0_15 = arith.constant 0 : index
    %c0_16 = arith.constant 0 : index
    %39 = vector.load %arg6[%c0_15, %c0_16] : memref<1x128xf32, #tpu.memory_space<vmem>>, vector<1x128xf32>
    %40 = vector.broadcast %39 : vector<1x128xf32> to vector<256x128xf32>
    %41 = arith.addf %38, %40 : vector<256x128xf32>
    %42 = arith.truncf %41 : vector<256x128xf32> to vector<256x128xbf16>
    %43 = vector.shape_cast %42 : vector<256x128xbf16> to vector<16x16x128xbf16>
    %c0_17 = arith.constant 0 : index
    %c0_18 = arith.constant 0 : index
    %c0_19 = arith.constant 0 : index
    %c0_20 = arith.constant 0 : index
    %44 = vector.load %arg7[%c0_17, %c0_18, %c0_19, %c0_20] : memref<1x16x16x128xbf16, #tpu.memory_space<vmem>>, vector<1x16x16x128xbf16>
    %45 = vector.shape_cast %44 : vector<1x16x16x128xbf16> to vector<16x16x128xbf16>
    %46 = vector.shape_cast %43 : vector<16x16x128xbf16> to vector<1x16x16x128xbf16>
    tpu.vector_store %arg7[%c0_17, %c0_18, %c0_19, %c0_20], %46 {strides = array<i32>} : memref<1x16x16x128xbf16, #tpu.memory_space<vmem>>, vector<1x16x16x128xbf16>,
    %47 = arith.extf %42 : vector<256x128xbf16> to vector<256x128xf32>
    %cst_21 = arith.constant dense<0.000000e+00> : vector<128xf32>
    %48 = vector.multi_reduction <add>, %47, %cst_21 [0] : vector<256x128xf32> to vector<128xf32>
    %49 = vector.shape_cast %48 : vector<128xf32> to vector<1x128xf32>
    %50 = arith.mulf %47, %47 : vector<256x128xf32>
    %cst_22 = arith.constant dense<0.000000e+00> : vector<128xf32>
    %51 = vector.multi_reduction <add>, %50, %cst_22 [0] : vector<256x128xf32> to vector<128xf32>
    %52 = vector.shape_cast %51 : vector<128xf32> to vector<1x128xf32>
    %53 = tpu.concatenate %49, %52 in 0 : vector<1x128xf32>, vector<1x128xf32> -> vector<2x128xf32>
    %54 = vector.shape_cast %53 : vector<2x128xf32> to vector<1x2x128xf32>
    %c0_i32_23 = arith.constant 0 : i32
    %55 = arith.cmpi eq, %arg1, %c0_i32_23 : i32
    %56 = arith.extui %55 : i1 to i32
    %c0_i32_24 = arith.constant 0 : i32
    %57 = arith.cmpi ne, %56, %c0_i32_24 : i32
    scf.if %57 {
      %cst_31 = arith.constant 0.000000e+00 : f32
      %61 = vector.broadcast %cst_31 : f32 to vector<1x2x128xf32>
      %c0_32 = arith.constant 0 : index
      %c0_33 = arith.constant 0 : index
      %c0_34 = arith.constant 0 : index
      %62 = vector.load %arg8[%c0_32, %c0_33, %c0_34] : memref<1x2x128xf32, #tpu.memory_space<vmem>>, vector<1x2x128xf32>
      tpu.vector_store %arg8[%c0_32, %c0_33, %c0_34], %61 {strides = array<i32>} : memref<1x2x128xf32, #tpu.memory_space<vmem>>, vector<1x2x128xf32>,
    } else {
    }
    %c0_25 = arith.constant 0 : index
    %c0_26 = arith.constant 0 : index
    %c0_27 = arith.constant 0 : index
    %58 = vector.load %arg8[%c0_25, %c0_26, %c0_27] : memref<1x2x128xf32, #tpu.memory_space<vmem>>, vector<1x2x128xf32>
    %59 = arith.addf %58, %54 : vector<1x2x128xf32>
    %c0_28 = arith.constant 0 : index
    %c0_29 = arith.constant 0 : index
    %c0_30 = arith.constant 0 : index
    %60 = vector.load %arg8[%c0_28, %c0_29, %c0_30] : memref<1x2x128xf32, #tpu.memory_space<vmem>>, vector<1x2x128xf32>
    tpu.vector_store %arg8[%c0_28, %c0_29, %c0_30], %59 {strides = array<i32>} : memref<1x2x128xf32, #tpu.memory_space<vmem>>, vector<1x2x128xf32>,
    return
  }
  func.func @transform_0(%arg0: i32, %arg1: i32) -> (i32, i32, i32, i32) {
    %c16_i32 = arith.constant 16 : i32
    %0 = arith.muli %arg1, %c16_i32 : i32
    %c1_i32 = arith.constant 1 : i32
    %1 = arith.subi %0, %c1_i32 : i32
    %c0_i32 = arith.constant 0 : i32
    %2 = arith.maxsi %1, %c0_i32 : i32
    %c0_i32_0 = arith.constant 0 : i32
    %c0_i32_1 = arith.constant 0 : i32
    %c0_i32_2 = arith.constant 0 : i32
    return %arg0, %2, %c0_i32_0, %c0_i32_1 : i32, i32, i32, i32
  }
  func.func @transform_1(%arg0: i32, %arg1: i32) -> (i32, i32, i32, i32) {
    %c0_i32 = arith.constant 0 : i32
    %c0_i32_0 = arith.constant 0 : i32
    %c0_i32_1 = arith.constant 0 : i32
    return %arg0, %arg1, %c0_i32, %c0_i32_0 : i32, i32, i32, i32
  }
  func.func @transform_2(%arg0: i32, %arg1: i32) -> (i32, i32, i32, i32) {
    %c1_i32 = arith.constant 1 : i32
    %0 = arith.addi %arg1, %c1_i32 : i32
    %c16_i32 = arith.constant 16 : i32
    %1 = arith.muli %0, %c16_i32 : i32
    %c15_i32 = arith.constant 15 : i32
    %2 = arith.minsi %1, %c15_i32 : i32
    %c0_i32 = arith.constant 0 : i32
    %c0_i32_0 = arith.constant 0 : i32
    %c0_i32_1 = arith.constant 0 : i32
    return %arg0, %2, %c0_i32, %c0_i32_0 : i32, i32, i32, i32
  }
  func.func @transform_3(%arg0: i32, %arg1: i32) -> (i32, i32) {
    %c0_i32 = arith.constant 0 : i32
    %c0_i32_0 = arith.constant 0 : i32
    %c0_i32_1 = arith.constant 0 : i32
    return %c0_i32, %c0_i32_0 : i32, i32
  }
  func.func @transform_4(%arg0: i32, %arg1: i32) -> (i32, i32) {
    %c0_i32 = arith.constant 0 : i32
    %c0_i32_0 = arith.constant 0 : i32
    %c0_i32_1 = arith.constant 0 : i32
    return %c0_i32, %c0_i32_0 : i32, i32
  }
  func.func @transform_5(%arg0: i32, %arg1: i32) -> (i32, i32, i32, i32) {
    %c0_i32 = arith.constant 0 : i32
    %c0_i32_0 = arith.constant 0 : i32
    %c0_i32_1 = arith.constant 0 : i32
    return %arg0, %arg1, %c0_i32, %c0_i32_0 : i32, i32, i32, i32
  }
  func.func @transform_6(%arg0: i32, %arg1: i32) -> (i32, i32, i32) {
    %c0_i32 = arith.constant 0 : i32
    %c0_i32_0 = arith.constant 0 : i32
    %c0_i32_1 = arith.constant 0 : i32
    return %arg0, %c0_i32, %c0_i32_0 : i32, i32, i32
  }
}

module attributes {stable_mosaic.version = 11 : i64} {
  func.func @_conv_stats_kernel(%arg0: i32, %arg1: i32, %arg2: memref<1x1x16x128xbf16, #tpu.memory_space<vmem>>, %arg3: memref<1x16x16x128xbf16, #tpu.memory_space<vmem>>, %arg4: memref<1x1x16x128xbf16, #tpu.memory_space<vmem>>, %arg5: memref<1152x128xbf16, #tpu.memory_space<vmem>>, %arg6: memref<1x128xf32, #tpu.memory_space<vmem>>, %arg7: memref<1x128xf32, #tpu.memory_space<vmem>>, %arg8: memref<1x128xf32, #tpu.memory_space<vmem>>, %arg9: memref<1x16x16x128xbf16, #tpu.memory_space<vmem>>, %arg10: memref<1x2x128xf32, #tpu.memory_space<vmem>>) attributes {dimension_semantics = [#tpu.dimension_semantics<parallel>, #tpu.dimension_semantics<arbitrary>], iteration_bounds = array<i64: 2, 1>, scalar_prefetch = 0 : i64, scratch_operands = 0 : i64, tpu.core_type = #tpu.core_type<tc>, window_params = [{transform_indices = @transform_0, window_bounds = array<i64: 1, 1, 16, 128>}, {transform_indices = @transform_1, window_bounds = array<i64: 1, 16, 16, 128>}, {transform_indices = @transform_2, window_bounds = array<i64: 1, 1, 16, 128>}, {pipeline_mode = #tpu.pipeline_mode<synchronous>, transform_indices = @transform_3, window_bounds = array<i64: 1152, 128>}, {pipeline_mode = #tpu.pipeline_mode<synchronous>, transform_indices = @transform_4, window_bounds = array<i64: 1, 128>}, {pipeline_mode = #tpu.pipeline_mode<synchronous>, transform_indices = @transform_5, window_bounds = array<i64: 1, 128>}, {pipeline_mode = #tpu.pipeline_mode<synchronous>, transform_indices = @transform_6, window_bounds = array<i64: 1, 128>}, {transform_indices = @transform_7, window_bounds = array<i64: 1, 16, 16, 128>}, {transform_indices = @transform_8, window_bounds = array<i64: 1, 2, 128>}]} {
    %c0 = arith.constant 0 : index
    %c0_0 = arith.constant 0 : index
    %c0_1 = arith.constant 0 : index
    %c0_2 = arith.constant 0 : index
    %0 = vector.load %arg3[%c0, %c0_0, %c0_1, %c0_2] : memref<1x16x16x128xbf16, #tpu.memory_space<vmem>>, vector<1x16x16x128xbf16>
    %1 = vector.shape_cast %0 : vector<1x16x16x128xbf16> to vector<16x16x128xbf16>
    %2 = arith.extf %1 : vector<16x16x128xbf16> to vector<16x16x128xf32>
    %c0_3 = arith.constant 0 : index
    %c0_4 = arith.constant 0 : index
    %3 = vector.load %arg7[%c0_3, %c0_4] : memref<1x128xf32, #tpu.memory_space<vmem>>, vector<1x128xf32>
    %4 = vector.shape_cast %3 : vector<1x128xf32> to vector<1x1x128xf32>
    %5 = vector.broadcast %4 : vector<1x1x128xf32> to vector<16x16x128xf32>
    %6 = arith.mulf %2, %5 : vector<16x16x128xf32>
    %c0_5 = arith.constant 0 : index
    %c0_6 = arith.constant 0 : index
    %7 = vector.load %arg8[%c0_5, %c0_6] : memref<1x128xf32, #tpu.memory_space<vmem>>, vector<1x128xf32>
    %8 = vector.shape_cast %7 : vector<1x128xf32> to vector<1x1x128xf32>
    %9 = vector.broadcast %8 : vector<1x1x128xf32> to vector<16x16x128xf32>
    %10 = arith.addf %6, %9 : vector<16x16x128xf32>
    %cst = arith.constant 5.000000e-01 : f32
    %11 = vector.broadcast %cst : f32 to vector<16x16x128xf32>
    %12 = arith.mulf %11, %10 : vector<16x16x128xf32>
    %cst_7 = arith.constant 0.707106769 : f32
    %13 = vector.broadcast %cst_7 : f32 to vector<16x16x128xf32>
    %14 = arith.mulf %10, %13 : vector<16x16x128xf32>
    %15 = math.absf %14 : vector<16x16x128xf32>
    %cst_8 = arith.constant 0.327591091 : f32
    %16 = vector.broadcast %cst_8 : f32 to vector<16x16x128xf32>
    %17 = arith.mulf %16, %15 : vector<16x16x128xf32>
    %cst_9 = arith.constant 1.000000e+00 : f32
    %18 = vector.broadcast %cst_9 : f32 to vector<16x16x128xf32>
    %19 = arith.addf %18, %17 : vector<16x16x128xf32>
    %cst_10 = arith.constant 1.000000e+00 : f32
    %20 = vector.broadcast %cst_10 : f32 to vector<16x16x128xf32>
    %21 = arith.divf %20, %19 : vector<16x16x128xf32>
    %cst_11 = arith.constant 1.06140542 : f32
    %22 = vector.broadcast %cst_11 : f32 to vector<16x16x128xf32>
    %23 = arith.mulf %22, %21 : vector<16x16x128xf32>
    %cst_12 = arith.constant -1.45315206 : f32
    %24 = vector.broadcast %cst_12 : f32 to vector<16x16x128xf32>
    %25 = arith.addf %23, %24 : vector<16x16x128xf32>
    %26 = arith.mulf %25, %21 : vector<16x16x128xf32>
    %cst_13 = arith.constant 1.42141378 : f32
    %27 = vector.broadcast %cst_13 : f32 to vector<16x16x128xf32>
    %28 = arith.addf %26, %27 : vector<16x16x128xf32>
    %29 = arith.mulf %28, %21 : vector<16x16x128xf32>
    %cst_14 = arith.constant -0.284496725 : f32
    %30 = vector.broadcast %cst_14 : f32 to vector<16x16x128xf32>
    %31 = arith.addf %29, %30 : vector<16x16x128xf32>
    %32 = arith.mulf %31, %21 : vector<16x16x128xf32>
    %cst_15 = arith.constant 0.254829586 : f32
    %33 = vector.broadcast %cst_15 : f32 to vector<16x16x128xf32>
    %34 = arith.addf %32, %33 : vector<16x16x128xf32>
    %35 = arith.mulf %34, %21 : vector<16x16x128xf32>
    %cst_16 = arith.constant 0.000000e+00 : f32
    %36 = vector.broadcast %cst_16 : f32 to vector<16x16x128xf32>
    %37 = arith.subf %36, %15 : vector<16x16x128xf32>
    %38 = arith.mulf %37, %15 : vector<16x16x128xf32>
    %39 = math.exp %38 : vector<16x16x128xf32>
    %40 = arith.mulf %35, %39 : vector<16x16x128xf32>
    %cst_17 = arith.constant 1.000000e+00 : f32
    %41 = vector.broadcast %cst_17 : f32 to vector<16x16x128xf32>
    %42 = arith.subf %41, %40 : vector<16x16x128xf32>
    %cst_18 = arith.constant 0.000000e+00 : f32
    %43 = vector.broadcast %cst_18 : f32 to vector<16x16x128xf32>
    %44 = arith.cmpf oge, %14, %43 : vector<16x16x128xf32>
    %cst_19 = arith.constant 0.000000e+00 : f32
    %45 = vector.broadcast %cst_19 : f32 to vector<16x16x128xf32>
    %46 = arith.subf %45, %42 : vector<16x16x128xf32>
    %47 = arith.select %44, %42, %46 : vector<16x16x128xi1>, vector<16x16x128xf32>
    %cst_20 = arith.constant 1.000000e+00 : f32
    %48 = vector.broadcast %cst_20 : f32 to vector<16x16x128xf32>
    %49 = arith.addf %48, %47 : vector<16x16x128xf32>
    %50 = arith.mulf %12, %49 : vector<16x16x128xf32>
    %51 = arith.truncf %50 : vector<16x16x128xf32> to vector<16x16x128xbf16>
    %c0_21 = arith.constant 0 : index
    %c0_22 = arith.constant 0 : index
    %c0_23 = arith.constant 0 : index
    %c0_24 = arith.constant 0 : index
    %52 = vector.load %arg2[%c0_21, %c0_22, %c0_23, %c0_24] : memref<1x1x16x128xbf16, #tpu.memory_space<vmem>>, vector<1x1x16x128xbf16>
    %53 = vector.shape_cast %52 : vector<1x1x16x128xbf16> to vector<1x16x128xbf16>
    %54 = arith.extf %53 : vector<1x16x128xbf16> to vector<1x16x128xf32>
    %c0_25 = arith.constant 0 : index
    %c0_26 = arith.constant 0 : index
    %55 = vector.load %arg7[%c0_25, %c0_26] : memref<1x128xf32, #tpu.memory_space<vmem>>, vector<1x128xf32>
    %56 = vector.shape_cast %55 : vector<1x128xf32> to vector<1x1x128xf32>
    %57 = vector.broadcast %56 : vector<1x1x128xf32> to vector<1x16x128xf32>
    %58 = arith.mulf %54, %57 : vector<1x16x128xf32>
    %c0_27 = arith.constant 0 : index
    %c0_28 = arith.constant 0 : index
    %59 = vector.load %arg8[%c0_27, %c0_28] : memref<1x128xf32, #tpu.memory_space<vmem>>, vector<1x128xf32>
    %60 = vector.shape_cast %59 : vector<1x128xf32> to vector<1x1x128xf32>
    %61 = vector.broadcast %60 : vector<1x1x128xf32> to vector<1x16x128xf32>
    %62 = arith.addf %58, %61 : vector<1x16x128xf32>
    %cst_29 = arith.constant 5.000000e-01 : f32
    %63 = vector.broadcast %cst_29 : f32 to vector<1x16x128xf32>
    %64 = arith.mulf %63, %62 : vector<1x16x128xf32>
    %cst_30 = arith.constant 0.707106769 : f32
    %65 = vector.broadcast %cst_30 : f32 to vector<1x16x128xf32>
    %66 = arith.mulf %62, %65 : vector<1x16x128xf32>
    %67 = math.absf %66 : vector<1x16x128xf32>
    %cst_31 = arith.constant 0.327591091 : f32
    %68 = vector.broadcast %cst_31 : f32 to vector<1x16x128xf32>
    %69 = arith.mulf %68, %67 : vector<1x16x128xf32>
    %cst_32 = arith.constant 1.000000e+00 : f32
    %70 = vector.broadcast %cst_32 : f32 to vector<1x16x128xf32>
    %71 = arith.addf %70, %69 : vector<1x16x128xf32>
    %cst_33 = arith.constant 1.000000e+00 : f32
    %72 = vector.broadcast %cst_33 : f32 to vector<1x16x128xf32>
    %73 = arith.divf %72, %71 : vector<1x16x128xf32>
    %cst_34 = arith.constant 1.06140542 : f32
    %74 = vector.broadcast %cst_34 : f32 to vector<1x16x128xf32>
    %75 = arith.mulf %74, %73 : vector<1x16x128xf32>
    %cst_35 = arith.constant -1.45315206 : f32
    %76 = vector.broadcast %cst_35 : f32 to vector<1x16x128xf32>
    %77 = arith.addf %75, %76 : vector<1x16x128xf32>
    %78 = arith.mulf %77, %73 : vector<1x16x128xf32>
    %cst_36 = arith.constant 1.42141378 : f32
    %79 = vector.broadcast %cst_36 : f32 to vector<1x16x128xf32>
    %80 = arith.addf %78, %79 : vector<1x16x128xf32>
    %81 = arith.mulf %80, %73 : vector<1x16x128xf32>
    %cst_37 = arith.constant -0.284496725 : f32
    %82 = vector.broadcast %cst_37 : f32 to vector<1x16x128xf32>
    %83 = arith.addf %81, %82 : vector<1x16x128xf32>
    %84 = arith.mulf %83, %73 : vector<1x16x128xf32>
    %cst_38 = arith.constant 0.254829586 : f32
    %85 = vector.broadcast %cst_38 : f32 to vector<1x16x128xf32>
    %86 = arith.addf %84, %85 : vector<1x16x128xf32>
    %87 = arith.mulf %86, %73 : vector<1x16x128xf32>
    %cst_39 = arith.constant 0.000000e+00 : f32
    %88 = vector.broadcast %cst_39 : f32 to vector<1x16x128xf32>
    %89 = arith.subf %88, %67 : vector<1x16x128xf32>
    %90 = arith.mulf %89, %67 : vector<1x16x128xf32>
    %91 = math.exp %90 : vector<1x16x128xf32>
    %92 = arith.mulf %87, %91 : vector<1x16x128xf32>
    %cst_40 = arith.constant 1.000000e+00 : f32
    %93 = vector.broadcast %cst_40 : f32 to vector<1x16x128xf32>
    %94 = arith.subf %93, %92 : vector<1x16x128xf32>
    %cst_41 = arith.constant 0.000000e+00 : f32
    %95 = vector.broadcast %cst_41 : f32 to vector<1x16x128xf32>
    %96 = arith.cmpf oge, %66, %95 : vector<1x16x128xf32>
    %cst_42 = arith.constant 0.000000e+00 : f32
    %97 = vector.broadcast %cst_42 : f32 to vector<1x16x128xf32>
    %98 = arith.subf %97, %94 : vector<1x16x128xf32>
    %99 = arith.select %96, %94, %98 : vector<1x16x128xi1>, vector<1x16x128xf32>
    %cst_43 = arith.constant 1.000000e+00 : f32
    %100 = vector.broadcast %cst_43 : f32 to vector<1x16x128xf32>
    %101 = arith.addf %100, %99 : vector<1x16x128xf32>
    %102 = arith.mulf %64, %101 : vector<1x16x128xf32>
    %c0_i32 = arith.constant 0 : i32
    %103 = arith.cmpi sgt, %arg1, %c0_i32 : i32
    %104 = arith.extui %103 : i1 to i32
    %105 = arith.sitofp %104 : i32 to f32
    %106 = vector.broadcast %105 : f32 to vector<1x16x128xf32>
    %107 = arith.mulf %102, %106 : vector<1x16x128xf32>
    %108 = arith.truncf %107 : vector<1x16x128xf32> to vector<1x16x128xbf16>
    %c0_44 = arith.constant 0 : index
    %c0_45 = arith.constant 0 : index
    %c0_46 = arith.constant 0 : index
    %c0_47 = arith.constant 0 : index
    %109 = vector.load %arg4[%c0_44, %c0_45, %c0_46, %c0_47] : memref<1x1x16x128xbf16, #tpu.memory_space<vmem>>, vector<1x1x16x128xbf16>
    %110 = vector.shape_cast %109 : vector<1x1x16x128xbf16> to vector<1x16x128xbf16>
    %111 = arith.extf %110 : vector<1x16x128xbf16> to vector<1x16x128xf32>
    %c0_48 = arith.constant 0 : index
    %c0_49 = arith.constant 0 : index
    %112 = vector.load %arg7[%c0_48, %c0_49] : memref<1x128xf32, #tpu.memory_space<vmem>>, vector<1x128xf32>
    %113 = vector.shape_cast %112 : vector<1x128xf32> to vector<1x1x128xf32>
    %114 = vector.broadcast %113 : vector<1x1x128xf32> to vector<1x16x128xf32>
    %115 = arith.mulf %111, %114 : vector<1x16x128xf32>
    %c0_50 = arith.constant 0 : index
    %c0_51 = arith.constant 0 : index
    %116 = vector.load %arg8[%c0_50, %c0_51] : memref<1x128xf32, #tpu.memory_space<vmem>>, vector<1x128xf32>
    %117 = vector.shape_cast %116 : vector<1x128xf32> to vector<1x1x128xf32>
    %118 = vector.broadcast %117 : vector<1x1x128xf32> to vector<1x16x128xf32>
    %119 = arith.addf %115, %118 : vector<1x16x128xf32>
    %cst_52 = arith.constant 5.000000e-01 : f32
    %120 = vector.broadcast %cst_52 : f32 to vector<1x16x128xf32>
    %121 = arith.mulf %120, %119 : vector<1x16x128xf32>
    %cst_53 = arith.constant 0.707106769 : f32
    %122 = vector.broadcast %cst_53 : f32 to vector<1x16x128xf32>
    %123 = arith.mulf %119, %122 : vector<1x16x128xf32>
    %124 = math.absf %123 : vector<1x16x128xf32>
    %cst_54 = arith.constant 0.327591091 : f32
    %125 = vector.broadcast %cst_54 : f32 to vector<1x16x128xf32>
    %126 = arith.mulf %125, %124 : vector<1x16x128xf32>
    %cst_55 = arith.constant 1.000000e+00 : f32
    %127 = vector.broadcast %cst_55 : f32 to vector<1x16x128xf32>
    %128 = arith.addf %127, %126 : vector<1x16x128xf32>
    %cst_56 = arith.constant 1.000000e+00 : f32
    %129 = vector.broadcast %cst_56 : f32 to vector<1x16x128xf32>
    %130 = arith.divf %129, %128 : vector<1x16x128xf32>
    %cst_57 = arith.constant 1.06140542 : f32
    %131 = vector.broadcast %cst_57 : f32 to vector<1x16x128xf32>
    %132 = arith.mulf %131, %130 : vector<1x16x128xf32>
    %cst_58 = arith.constant -1.45315206 : f32
    %133 = vector.broadcast %cst_58 : f32 to vector<1x16x128xf32>
    %134 = arith.addf %132, %133 : vector<1x16x128xf32>
    %135 = arith.mulf %134, %130 : vector<1x16x128xf32>
    %cst_59 = arith.constant 1.42141378 : f32
    %136 = vector.broadcast %cst_59 : f32 to vector<1x16x128xf32>
    %137 = arith.addf %135, %136 : vector<1x16x128xf32>
    %138 = arith.mulf %137, %130 : vector<1x16x128xf32>
    %cst_60 = arith.constant -0.284496725 : f32
    %139 = vector.broadcast %cst_60 : f32 to vector<1x16x128xf32>
    %140 = arith.addf %138, %139 : vector<1x16x128xf32>
    %141 = arith.mulf %140, %130 : vector<1x16x128xf32>
    %cst_61 = arith.constant 0.254829586 : f32
    %142 = vector.broadcast %cst_61 : f32 to vector<1x16x128xf32>
    %143 = arith.addf %141, %142 : vector<1x16x128xf32>
    %144 = arith.mulf %143, %130 : vector<1x16x128xf32>
    %cst_62 = arith.constant 0.000000e+00 : f32
    %145 = vector.broadcast %cst_62 : f32 to vector<1x16x128xf32>
    %146 = arith.subf %145, %124 : vector<1x16x128xf32>
    %147 = arith.mulf %146, %124 : vector<1x16x128xf32>
    %148 = math.exp %147 : vector<1x16x128xf32>
    %149 = arith.mulf %144, %148 : vector<1x16x128xf32>
    %cst_63 = arith.constant 1.000000e+00 : f32
    %150 = vector.broadcast %cst_63 : f32 to vector<1x16x128xf32>
    %151 = arith.subf %150, %149 : vector<1x16x128xf32>
    %cst_64 = arith.constant 0.000000e+00 : f32
    %152 = vector.broadcast %cst_64 : f32 to vector<1x16x128xf32>
    %153 = arith.cmpf oge, %123, %152 : vector<1x16x128xf32>
    %cst_65 = arith.constant 0.000000e+00 : f32
    %154 = vector.broadcast %cst_65 : f32 to vector<1x16x128xf32>
    %155 = arith.subf %154, %151 : vector<1x16x128xf32>
    %156 = arith.select %153, %151, %155 : vector<1x16x128xi1>, vector<1x16x128xf32>
    %cst_66 = arith.constant 1.000000e+00 : f32
    %157 = vector.broadcast %cst_66 : f32 to vector<1x16x128xf32>
    %158 = arith.addf %157, %156 : vector<1x16x128xf32>
    %159 = arith.mulf %121, %158 : vector<1x16x128xf32>
    %c1_i32 = arith.constant 1 : i32
    %160 = arith.addi %arg1, %c1_i32 : i32
    %c1_i32_67 = arith.constant 1 : i32
    %161 = arith.cmpi slt, %160, %c1_i32_67 : i32
    %162 = arith.extui %161 : i1 to i32
    %163 = arith.sitofp %162 : i32 to f32
    %164 = vector.broadcast %163 : f32 to vector<1x16x128xf32>
    %165 = arith.mulf %159, %164 : vector<1x16x128xf32>
    %166 = arith.truncf %165 : vector<1x16x128xf32> to vector<1x16x128xbf16>
    %167 = tpu.concatenate %108, %51, %166 in 0 : vector<1x16x128xbf16>, vector<16x16x128xbf16>, vector<1x16x128xbf16> -> vector<18x16x128xbf16>
    %cst_68 = arith.constant 0.000000e+00 : bf16
    %168 = vector.broadcast %cst_68 : bf16 to vector<18x1x128xbf16>
    %169 = tpu.concatenate %168, %167, %168 in 1 : vector<18x1x128xbf16>, vector<18x16x128xbf16>, vector<18x1x128xbf16> -> vector<18x18x128xbf16>
    %170 = vector.extract_strided_slice %169 {offsets = [0, 0, 0], sizes = [16, 16, 128], strides = [1, 1, 1]} : vector<18x18x128xbf16> to vector<16x16x128xbf16>
    %171 = vector.extract_strided_slice %169 {offsets = [0, 1, 0], sizes = [16, 16, 128], strides = [1, 1, 1]} : vector<18x18x128xbf16> to vector<16x16x128xbf16>
    %172 = vector.extract_strided_slice %169 {offsets = [0, 2, 0], sizes = [16, 16, 128], strides = [1, 1, 1]} : vector<18x18x128xbf16> to vector<16x16x128xbf16>
    %173 = vector.extract_strided_slice %169 {offsets = [1, 0, 0], sizes = [16, 16, 128], strides = [1, 1, 1]} : vector<18x18x128xbf16> to vector<16x16x128xbf16>
    %174 = vector.extract_strided_slice %169 {offsets = [1, 1, 0], sizes = [16, 16, 128], strides = [1, 1, 1]} : vector<18x18x128xbf16> to vector<16x16x128xbf16>
    %175 = vector.extract_strided_slice %169 {offsets = [1, 2, 0], sizes = [16, 16, 128], strides = [1, 1, 1]} : vector<18x18x128xbf16> to vector<16x16x128xbf16>
    %176 = vector.extract_strided_slice %169 {offsets = [2, 0, 0], sizes = [16, 16, 128], strides = [1, 1, 1]} : vector<18x18x128xbf16> to vector<16x16x128xbf16>
    %177 = vector.extract_strided_slice %169 {offsets = [2, 1, 0], sizes = [16, 16, 128], strides = [1, 1, 1]} : vector<18x18x128xbf16> to vector<16x16x128xbf16>
    %178 = vector.extract_strided_slice %169 {offsets = [2, 2, 0], sizes = [16, 16, 128], strides = [1, 1, 1]} : vector<18x18x128xbf16> to vector<16x16x128xbf16>
    %179 = tpu.concatenate %170, %171, %172, %173, %174, %175, %176, %177, %178 in 2 : vector<16x16x128xbf16>, vector<16x16x128xbf16>, vector<16x16x128xbf16>, vector<16x16x128xbf16>, vector<16x16x128xbf16>, vector<16x16x128xbf16>, vector<16x16x128xbf16>, vector<16x16x128xbf16>, vector<16x16x128xbf16> -> vector<16x16x1152xbf16>
    %180 = vector.shape_cast %179 : vector<16x16x1152xbf16> to vector<256x1152xbf16>
    %c0_69 = arith.constant 0 : index
    %c0_70 = arith.constant 0 : index
    %181 = vector.load %arg5[%c0_69, %c0_70] : memref<1152x128xbf16, #tpu.memory_space<vmem>>, vector<1152x128xbf16>
    %cst_71 = arith.constant dense<0.000000e+00> : vector<256x128xf32>
    %182 = tpu.matmul %180, %181, %cst_71 {dimension_numbers = #tpu.dot_dimension_numbers<[1], [0], [0], [1], [0, 0, 1, 1], [], []>} : vector<256x1152xbf16>, vector<1152x128xbf16>, vector<256x128xf32> -> vector<256x128xf32>
    %c0_72 = arith.constant 0 : index
    %c0_73 = arith.constant 0 : index
    %183 = vector.load %arg6[%c0_72, %c0_73] : memref<1x128xf32, #tpu.memory_space<vmem>>, vector<1x128xf32>
    %184 = vector.broadcast %183 : vector<1x128xf32> to vector<256x128xf32>
    %185 = arith.addf %182, %184 : vector<256x128xf32>
    %186 = arith.truncf %185 : vector<256x128xf32> to vector<256x128xbf16>
    %187 = vector.shape_cast %186 : vector<256x128xbf16> to vector<16x16x128xbf16>
    %c0_74 = arith.constant 0 : index
    %c0_75 = arith.constant 0 : index
    %c0_76 = arith.constant 0 : index
    %c0_77 = arith.constant 0 : index
    %188 = vector.load %arg9[%c0_74, %c0_75, %c0_76, %c0_77] : memref<1x16x16x128xbf16, #tpu.memory_space<vmem>>, vector<1x16x16x128xbf16>
    %189 = vector.shape_cast %188 : vector<1x16x16x128xbf16> to vector<16x16x128xbf16>
    %190 = vector.shape_cast %187 : vector<16x16x128xbf16> to vector<1x16x16x128xbf16>
    tpu.vector_store %arg9[%c0_74, %c0_75, %c0_76, %c0_77], %190 {strides = array<i32>} : memref<1x16x16x128xbf16, #tpu.memory_space<vmem>>, vector<1x16x16x128xbf16>,
    %191 = arith.extf %186 : vector<256x128xbf16> to vector<256x128xf32>
    %cst_78 = arith.constant dense<0.000000e+00> : vector<128xf32>
    %192 = vector.multi_reduction <add>, %191, %cst_78 [0] : vector<256x128xf32> to vector<128xf32>
    %193 = vector.shape_cast %192 : vector<128xf32> to vector<1x128xf32>
    %194 = arith.mulf %191, %191 : vector<256x128xf32>
    %cst_79 = arith.constant dense<0.000000e+00> : vector<128xf32>
    %195 = vector.multi_reduction <add>, %194, %cst_79 [0] : vector<256x128xf32> to vector<128xf32>
    %196 = vector.shape_cast %195 : vector<128xf32> to vector<1x128xf32>
    %197 = tpu.concatenate %193, %196 in 0 : vector<1x128xf32>, vector<1x128xf32> -> vector<2x128xf32>
    %198 = vector.shape_cast %197 : vector<2x128xf32> to vector<1x2x128xf32>
    %c0_i32_80 = arith.constant 0 : i32
    %199 = arith.cmpi eq, %arg1, %c0_i32_80 : i32
    %200 = arith.extui %199 : i1 to i32
    %c0_i32_81 = arith.constant 0 : i32
    %201 = arith.cmpi ne, %200, %c0_i32_81 : i32
    scf.if %201 {
      %cst_88 = arith.constant 0.000000e+00 : f32
      %205 = vector.broadcast %cst_88 : f32 to vector<1x2x128xf32>
      %c0_89 = arith.constant 0 : index
      %c0_90 = arith.constant 0 : index
      %c0_91 = arith.constant 0 : index
      %206 = vector.load %arg10[%c0_89, %c0_90, %c0_91] : memref<1x2x128xf32, #tpu.memory_space<vmem>>, vector<1x2x128xf32>
      tpu.vector_store %arg10[%c0_89, %c0_90, %c0_91], %205 {strides = array<i32>} : memref<1x2x128xf32, #tpu.memory_space<vmem>>, vector<1x2x128xf32>,
    } else {
    }
    %c0_82 = arith.constant 0 : index
    %c0_83 = arith.constant 0 : index
    %c0_84 = arith.constant 0 : index
    %202 = vector.load %arg10[%c0_82, %c0_83, %c0_84] : memref<1x2x128xf32, #tpu.memory_space<vmem>>, vector<1x2x128xf32>
    %203 = arith.addf %202, %198 : vector<1x2x128xf32>
    %c0_85 = arith.constant 0 : index
    %c0_86 = arith.constant 0 : index
    %c0_87 = arith.constant 0 : index
    %204 = vector.load %arg10[%c0_85, %c0_86, %c0_87] : memref<1x2x128xf32, #tpu.memory_space<vmem>>, vector<1x2x128xf32>
    tpu.vector_store %arg10[%c0_85, %c0_86, %c0_87], %203 {strides = array<i32>} : memref<1x2x128xf32, #tpu.memory_space<vmem>>, vector<1x2x128xf32>,
    return
  }
  func.func @transform_0(%arg0: i32, %arg1: i32) -> (i32, i32, i32, i32) {
    %c16_i32 = arith.constant 16 : i32
    %0 = arith.muli %arg1, %c16_i32 : i32
    %c1_i32 = arith.constant 1 : i32
    %1 = arith.subi %0, %c1_i32 : i32
    %c0_i32 = arith.constant 0 : i32
    %2 = arith.maxsi %1, %c0_i32 : i32
    %c0_i32_0 = arith.constant 0 : i32
    %c0_i32_1 = arith.constant 0 : i32
    %c0_i32_2 = arith.constant 0 : i32
    return %arg0, %2, %c0_i32_0, %c0_i32_1 : i32, i32, i32, i32
  }
  func.func @transform_1(%arg0: i32, %arg1: i32) -> (i32, i32, i32, i32) {
    %c0_i32 = arith.constant 0 : i32
    %c0_i32_0 = arith.constant 0 : i32
    %c0_i32_1 = arith.constant 0 : i32
    return %arg0, %arg1, %c0_i32, %c0_i32_0 : i32, i32, i32, i32
  }
  func.func @transform_2(%arg0: i32, %arg1: i32) -> (i32, i32, i32, i32) {
    %c1_i32 = arith.constant 1 : i32
    %0 = arith.addi %arg1, %c1_i32 : i32
    %c16_i32 = arith.constant 16 : i32
    %1 = arith.muli %0, %c16_i32 : i32
    %c15_i32 = arith.constant 15 : i32
    %2 = arith.minsi %1, %c15_i32 : i32
    %c0_i32 = arith.constant 0 : i32
    %c0_i32_0 = arith.constant 0 : i32
    %c0_i32_1 = arith.constant 0 : i32
    return %arg0, %2, %c0_i32, %c0_i32_0 : i32, i32, i32, i32
  }
  func.func @transform_3(%arg0: i32, %arg1: i32) -> (i32, i32) {
    %c0_i32 = arith.constant 0 : i32
    %c0_i32_0 = arith.constant 0 : i32
    %c0_i32_1 = arith.constant 0 : i32
    return %c0_i32, %c0_i32_0 : i32, i32
  }
  func.func @transform_4(%arg0: i32, %arg1: i32) -> (i32, i32) {
    %c0_i32 = arith.constant 0 : i32
    %c0_i32_0 = arith.constant 0 : i32
    %c0_i32_1 = arith.constant 0 : i32
    return %c0_i32, %c0_i32_0 : i32, i32
  }
  func.func @transform_5(%arg0: i32, %arg1: i32) -> (i32, i32) {
    %c0_i32 = arith.constant 0 : i32
    %c0_i32_0 = arith.constant 0 : i32
    %c0_i32_1 = arith.constant 0 : i32
    return %c0_i32, %c0_i32_0 : i32, i32
  }
  func.func @transform_6(%arg0: i32, %arg1: i32) -> (i32, i32) {
    %c0_i32 = arith.constant 0 : i32
    %c0_i32_0 = arith.constant 0 : i32
    %c0_i32_1 = arith.constant 0 : i32
    return %c0_i32, %c0_i32_0 : i32, i32
  }
  func.func @transform_7(%arg0: i32, %arg1: i32) -> (i32, i32, i32, i32) {
    %c0_i32 = arith.constant 0 : i32
    %c0_i32_0 = arith.constant 0 : i32
    %c0_i32_1 = arith.constant 0 : i32
    return %arg0, %arg1, %c0_i32, %c0_i32_0 : i32, i32, i32, i32
  }
  func.func @transform_8(%arg0: i32, %arg1: i32) -> (i32, i32, i32) {
    %c0_i32 = arith.constant 0 : i32
    %c0_i32_0 = arith.constant 0 : i32
    %c0_i32_1 = arith.constant 0 : i32
    return %arg0, %c0_i32, %c0_i32_0 : i32, i32, i32
  }
}

module attributes {stable_mosaic.version = 11 : i64} {
  func.func @_bn_gelu_pool_kernel(%arg0: i32, %arg1: i32, %arg2: memref<1x16x16x128xbf16, #tpu.memory_space<vmem>>, %arg3: memref<1x128xf32, #tpu.memory_space<vmem>>, %arg4: memref<1x128xf32, #tpu.memory_space<vmem>>, %arg5: memref<64x128xf32, #tpu.memory_space<vmem>>, %arg6: memref<64x128xf32, #tpu.memory_space<vmem>>, %arg7: memref<1x8x8x128xf32, #tpu.memory_space<vmem>>) attributes {dimension_semantics = [#tpu.dimension_semantics<parallel>, #tpu.dimension_semantics<parallel>], iteration_bounds = array<i64: 2, 1>, scalar_prefetch = 0 : i64, scratch_operands = 0 : i64, tpu.core_type = #tpu.core_type<tc>, window_params = [{transform_indices = @transform_0, window_bounds = array<i64: 1, 16, 16, 128>}, {pipeline_mode = #tpu.pipeline_mode<synchronous>, transform_indices = @transform_1, window_bounds = array<i64: 1, 128>}, {pipeline_mode = #tpu.pipeline_mode<synchronous>, transform_indices = @transform_2, window_bounds = array<i64: 1, 128>}, {pipeline_mode = #tpu.pipeline_mode<synchronous>, transform_indices = @transform_3, window_bounds = array<i64: 64, 128>}, {pipeline_mode = #tpu.pipeline_mode<synchronous>, transform_indices = @transform_4, window_bounds = array<i64: 64, 128>}, {transform_indices = @transform_5, window_bounds = array<i64: 1, 8, 8, 128>}]} {
    %c0 = arith.constant 0 : index
    %c0_0 = arith.constant 0 : index
    %c0_1 = arith.constant 0 : index
    %c0_2 = arith.constant 0 : index
    %0 = vector.load %arg2[%c0, %c0_0, %c0_1, %c0_2] : memref<1x16x16x128xbf16, #tpu.memory_space<vmem>>, vector<1x16x16x128xbf16>
    %1 = vector.shape_cast %0 : vector<1x16x16x128xbf16> to vector<16x16x128xbf16>
    %2 = arith.extf %1 : vector<16x16x128xbf16> to vector<16x16x128xf32>
    %c0_3 = arith.constant 0 : index
    %c0_4 = arith.constant 0 : index
    %3 = vector.load %arg3[%c0_3, %c0_4] : memref<1x128xf32, #tpu.memory_space<vmem>>, vector<1x128xf32>
    %4 = vector.shape_cast %3 : vector<1x128xf32> to vector<1x1x128xf32>
    %5 = vector.broadcast %4 : vector<1x1x128xf32> to vector<16x16x128xf32>
    %6 = arith.mulf %2, %5 : vector<16x16x128xf32>
    %c0_5 = arith.constant 0 : index
    %c0_6 = arith.constant 0 : index
    %7 = vector.load %arg4[%c0_5, %c0_6] : memref<1x128xf32, #tpu.memory_space<vmem>>, vector<1x128xf32>
    %8 = vector.shape_cast %7 : vector<1x128xf32> to vector<1x1x128xf32>
    %9 = vector.broadcast %8 : vector<1x1x128xf32> to vector<16x16x128xf32>
    %10 = arith.addf %6, %9 : vector<16x16x128xf32>
    %cst = arith.constant 5.000000e-01 : f32
    %11 = vector.broadcast %cst : f32 to vector<16x16x128xf32>
    %12 = arith.mulf %11, %10 : vector<16x16x128xf32>
    %cst_7 = arith.constant 0.707106769 : f32
    %13 = vector.broadcast %cst_7 : f32 to vector<16x16x128xf32>
    %14 = arith.mulf %10, %13 : vector<16x16x128xf32>
    %15 = math.absf %14 : vector<16x16x128xf32>
    %cst_8 = arith.constant 0.327591091 : f32
    %16 = vector.broadcast %cst_8 : f32 to vector<16x16x128xf32>
    %17 = arith.mulf %16, %15 : vector<16x16x128xf32>
    %cst_9 = arith.constant 1.000000e+00 : f32
    %18 = vector.broadcast %cst_9 : f32 to vector<16x16x128xf32>
    %19 = arith.addf %18, %17 : vector<16x16x128xf32>
    %cst_10 = arith.constant 1.000000e+00 : f32
    %20 = vector.broadcast %cst_10 : f32 to vector<16x16x128xf32>
    %21 = arith.divf %20, %19 : vector<16x16x128xf32>
    %cst_11 = arith.constant 1.06140542 : f32
    %22 = vector.broadcast %cst_11 : f32 to vector<16x16x128xf32>
    %23 = arith.mulf %22, %21 : vector<16x16x128xf32>
    %cst_12 = arith.constant -1.45315206 : f32
    %24 = vector.broadcast %cst_12 : f32 to vector<16x16x128xf32>
    %25 = arith.addf %23, %24 : vector<16x16x128xf32>
    %26 = arith.mulf %25, %21 : vector<16x16x128xf32>
    %cst_13 = arith.constant 1.42141378 : f32
    %27 = vector.broadcast %cst_13 : f32 to vector<16x16x128xf32>
    %28 = arith.addf %26, %27 : vector<16x16x128xf32>
    %29 = arith.mulf %28, %21 : vector<16x16x128xf32>
    %cst_14 = arith.constant -0.284496725 : f32
    %30 = vector.broadcast %cst_14 : f32 to vector<16x16x128xf32>
    %31 = arith.addf %29, %30 : vector<16x16x128xf32>
    %32 = arith.mulf %31, %21 : vector<16x16x128xf32>
    %cst_15 = arith.constant 0.254829586 : f32
    %33 = vector.broadcast %cst_15 : f32 to vector<16x16x128xf32>
    %34 = arith.addf %32, %33 : vector<16x16x128xf32>
    %35 = arith.mulf %34, %21 : vector<16x16x128xf32>
    %cst_16 = arith.constant 0.000000e+00 : f32
    %36 = vector.broadcast %cst_16 : f32 to vector<16x16x128xf32>
    %37 = arith.subf %36, %15 : vector<16x16x128xf32>
    %38 = arith.mulf %37, %15 : vector<16x16x128xf32>
    %39 = math.exp %38 : vector<16x16x128xf32>
    %40 = arith.mulf %35, %39 : vector<16x16x128xf32>
    %cst_17 = arith.constant 1.000000e+00 : f32
    %41 = vector.broadcast %cst_17 : f32 to vector<16x16x128xf32>
    %42 = arith.subf %41, %40 : vector<16x16x128xf32>
    %cst_18 = arith.constant 0.000000e+00 : f32
    %43 = vector.broadcast %cst_18 : f32 to vector<16x16x128xf32>
    %44 = arith.cmpf oge, %14, %43 : vector<16x16x128xf32>
    %cst_19 = arith.constant 0.000000e+00 : f32
    %45 = vector.broadcast %cst_19 : f32 to vector<16x16x128xf32>
    %46 = arith.subf %45, %42 : vector<16x16x128xf32>
    %47 = arith.select %44, %42, %46 : vector<16x16x128xi1>, vector<16x16x128xf32>
    %cst_20 = arith.constant 1.000000e+00 : f32
    %48 = vector.broadcast %cst_20 : f32 to vector<16x16x128xf32>
    %49 = arith.addf %48, %47 : vector<16x16x128xf32>
    %50 = arith.mulf %12, %49 : vector<16x16x128xf32>
    %51 = vector.shape_cast %50 : vector<16x16x128xf32> to vector<8x2x16x128xf32>
    %52 = vector.extract_strided_slice %51 {offsets = [0, 0, 0, 0], sizes = [8, 1, 16, 128], strides = [1, 1, 1, 1]} : vector<8x2x16x128xf32> to vector<8x1x16x128xf32>
    %53 = vector.shape_cast %52 : vector<8x1x16x128xf32> to vector<8x16x128xf32>
    %54 = vector.extract_strided_slice %51 {offsets = [0, 1, 0, 0], sizes = [8, 1, 16, 128], strides = [1, 1, 1, 1]} : vector<8x2x16x128xf32> to vector<8x1x16x128xf32>
    %55 = vector.shape_cast %54 : vector<8x1x16x128xf32> to vector<8x16x128xf32>
    %56 = arith.maximumf %53, %55 : vector<8x16x128xf32>
    %57 = vector.shape_cast %56 : vector<8x16x128xf32> to vector<128x128xf32>
    %c0_21 = arith.constant 0 : index
    %c0_22 = arith.constant 0 : index
    %58 = vector.load %arg5[%c0_21, %c0_22] : memref<64x128xf32, #tpu.memory_space<vmem>>, vector<64x128xf32>
    %cst_23 = arith.constant dense<0.000000e+00> : vector<64x128xf32>
    %59 = tpu.matmul %58, %57, %cst_23 {dimension_numbers = #tpu.dot_dimension_numbers<[1], [0], [0], [1], [0, 0, 1, 1], [], []>} : vector<64x128xf32>, vector<128x128xf32>, vector<64x128xf32> -> vector<64x128xf32>
    %c0_24 = arith.constant 0 : index
    %c0_25 = arith.constant 0 : index
    %60 = vector.load %arg6[%c0_24, %c0_25] : memref<64x128xf32, #tpu.memory_space<vmem>>, vector<64x128xf32>
    %cst_26 = arith.constant dense<0.000000e+00> : vector<64x128xf32>
    %61 = tpu.matmul %60, %57, %cst_26 {dimension_numbers = #tpu.dot_dimension_numbers<[1], [0], [0], [1], [0, 0, 1, 1], [], []>} : vector<64x128xf32>, vector<128x128xf32>, vector<64x128xf32> -> vector<64x128xf32>
    %62 = arith.maximumf %59, %61 : vector<64x128xf32>
    %63 = vector.shape_cast %62 : vector<64x128xf32> to vector<8x8x128xf32>
    %c0_27 = arith.constant 0 : index
    %c0_28 = arith.constant 0 : index
    %c0_29 = arith.constant 0 : index
    %c0_30 = arith.constant 0 : index
    %64 = vector.load %arg7[%c0_27, %c0_28, %c0_29, %c0_30] : memref<1x8x8x128xf32, #tpu.memory_space<vmem>>, vector<1x8x8x128xf32>
    %65 = vector.shape_cast %64 : vector<1x8x8x128xf32> to vector<8x8x128xf32>
    %66 = vector.shape_cast %63 : vector<8x8x128xf32> to vector<1x8x8x128xf32>
    tpu.vector_store %arg7[%c0_27, %c0_28, %c0_29, %c0_30], %66 {strides = array<i32>} : memref<1x8x8x128xf32, #tpu.memory_space<vmem>>, vector<1x8x8x128xf32>,
    return
  }
  func.func @transform_0(%arg0: i32, %arg1: i32) -> (i32, i32, i32, i32) {
    %c0_i32 = arith.constant 0 : i32
    %c0_i32_0 = arith.constant 0 : i32
    %c0_i32_1 = arith.constant 0 : i32
    return %arg0, %arg1, %c0_i32, %c0_i32_0 : i32, i32, i32, i32
  }
  func.func @transform_1(%arg0: i32, %arg1: i32) -> (i32, i32) {
    %c0_i32 = arith.constant 0 : i32
    %c0_i32_0 = arith.constant 0 : i32
    %c0_i32_1 = arith.constant 0 : i32
    return %c0_i32, %c0_i32_0 : i32, i32
  }
  func.func @transform_2(%arg0: i32, %arg1: i32) -> (i32, i32) {
    %c0_i32 = arith.constant 0 : i32
    %c0_i32_0 = arith.constant 0 : i32
    %c0_i32_1 = arith.constant 0 : i32
    return %c0_i32, %c0_i32_0 : i32, i32
  }
  func.func @transform_3(%arg0: i32, %arg1: i32) -> (i32, i32) {
    %c0_i32 = arith.constant 0 : i32
    %c0_i32_0 = arith.constant 0 : i32
    %c0_i32_1 = arith.constant 0 : i32
    return %c0_i32, %c0_i32_0 : i32, i32
  }
  func.func @transform_4(%arg0: i32, %arg1: i32) -> (i32, i32) {
    %c0_i32 = arith.constant 0 : i32
    %c0_i32_0 = arith.constant 0 : i32
    %c0_i32_1 = arith.constant 0 : i32
    return %c0_i32, %c0_i32_0 : i32, i32
  }
  func.func @transform_5(%arg0: i32, %arg1: i32) -> (i32, i32, i32, i32) {
    %c0_i32 = arith.constant 0 : i32
    %c0_i32_0 = arith.constant 0 : i32
    %c0_i32_1 = arith.constant 0 : i32
    return %arg0, %arg1, %c0_i32, %c0_i32_0 : i32, i32, i32, i32
  }
}

</mosaic_0001>

<llo_original>
// kernel: unet_down.5
$region0: #{unet_down.5}
  #allocation0 [shape = 'u32[]', space=smem, size = 0x4, offset = 0x4, fixed_abs, tag = 'smem constant byte address 0x4 - core index']
  #allocation1 [shape = 'u32[144,128]{1,0:T(1,128)}', space=vmem, size = 0x12000, scoped, tag = 'internal scratch']
  %s0 = inlined_call_operand.vmem [shape: bf16[2,16,16,128], index: 0, kind: input, shape index: {}]
  %s1 = inlined_call_operand.vmem [shape: f32[1,128], index: 1, kind: input, shape index: {}]
  %s2 = inlined_call_operand.vmem [shape: f32[1,128], index: 2, kind: input, shape index: {}]
  %s3 = inlined_call_operand.vmem [shape: f32[64,128], index: 3, kind: input, shape index: {}]
  %s4 = inlined_call_operand.vmem [shape: f32[64,128], index: 4, kind: input, shape index: {}]
  %s5 = inlined_call_operand.vmem [shape: f32[2,8,8,128], index: 5, kind: output, shape index: {}]
  %s6 = sld [smem:[#allocation0]]
  $region53: #{unet_down.5} parent=0
    _
  %s8 = ssub.s32 1, %s6
  %s9 = scalar_select 0, %s8, %s6
  loop: start=0, step=1, limit=4
  $region2: #{unet_down.5} parent=0 // loop_pre_header
    _
  $region3: #{unet_down.5} parent=0 // loop_header
    %s11 = sphi 0, %s15
    %p12 = scmp.ge.s32.totalorder %s11, 4
    %s18 = sphi 0, %s30
    %s19 = sphi 0, %s26
    %s20 = sphi 0, %s18
    %s21 = sphi 0, %s19
    %s22 = sphi 0, %s20
    %s23 = sphi 0, %s21
    %s35 = sphi 0, %s37
    %s38 = sphi 0, %s35
    %s39 = sphi 0, %s38
    %s55 = sphi 0, %s39
    %s59 = sphi 0, %s59
    %s61 = sphi 0, %s59
    %s62 = sphi 0, %s61
    %s76 = sphi 0, %s62
    %s80 = sphi 0, %s80
    %s82 = sphi 0, %s80
    %s83 = sphi 0, %s82
    %s97 = sphi 0, %s83
    %s101 = sphi 0, %s101
    %s103 = sphi 0, %s101
    %s104 = sphi 0, %s103
    %s118 = sphi 0, %s104
    %s122 = sphi 0, %s122
    %s124 = sphi 0, %s122
    %s125 = sphi 0, %s124
    %s139 = sphi 0, %s125
    %s147 = sphi 0, %s149
    %s150 = sphi 0, %s147
    %s151 = sphi 0, %s150
    %s167 = sphi 0, %s151
  $region4: #{unet_down.5} parent=0 // loop_header_branch
    %14 = sbr.rel (%p12) target = $region8
  $region5: #{unet_down.5} parent=0 // loop_body
    %s16 = ssub.s32 %s11, 1
    %s17 = ssub.s32 %s11, 2
    %s24 = sadd.s32 1, %s19
    %p25 = scmp.ge.s32.totalorder %s24, 1
    %s26 = scalar_select %p25, 0, %s24
    %s27 = sadd.s32 1, %s18
    %s28 = scalar_select %p25, %s27, %s18
    %p29 = scmp.ge.s32.totalorder %s28, 2
    %s30 = scalar_select %p29, 0, %s28
    %s31 = ssub.s32 %s18, %s30
    %s32 = ssub.s32 %s19, %s26
    %s33 = sor.u32 %s31, %s32
    %p34 = scmp.eq.s32.totalorder %s33, 0
    %s36 = sadd.s32 %s35, 1
    %s37 = scalar_select %p34, %s35, %s36
    %p40 = pneg %p34
    %p41 = scmp.eq.s32.totalorder %s11, 1
    %p42 = por %p40, %p41
    %p43 = scmp.ne.s32.totalorder %s35, %s38
    %p44 = scmp.eq.s32.totalorder %s11, 0
    %p45 = por %p43, %p44
    %p46 = scmp.ne.s32.totalorder %s35, %s38
    %p47 = scmp.eq.s32.totalorder %s16, 1
    %p48 = por %p46, %p47
    %p49 = scmp.ne.s32.totalorder %s38, %s39
    %p50 = scmp.eq.s32.totalorder %s16, 0
    %p51 = por %p49, %p50
    %p52 = scmp.ne.s32.totalorder %s38, %s39
    %p53 = scmp.eq.s32.totalorder %s17, 1
    %p54 = por %p52, %p53
    %p56 = scmp.ne.s32.totalorder %s39, %s55
    %p57 = scmp.eq.s32.totalorder %s17, 0
    %p58 = por %p56, %p57
    %s60 = sadd.s32 %s59, 1
    %p63 = scmp.eq.s32.totalorder %s11, 1
    %p64 = scmp.ne.s32.totalorder %s59, %s61
    %p65 = scmp.eq.s32.totalorder %s11, 0
    %p66 = por %p64, %p65
    %p67 = scmp.ne.s32.totalorder %s59, %s61
    %p68 = scmp.eq.s32.totalorder %s16, 1
    %p69 = por %p67, %p68
    %p70 = scmp.ne.s32.totalorder %s61, %s62
    %p71 = scmp.eq.s32.totalorder %s16, 0
    %p72 = por %p70, %p71
    %p73 = scmp.ne.s32.totalorder %s61, %s62
    %p74 = scmp.eq.s32.totalorder %s17, 1
    %p75 = por %p73, %p74
    %p77 = scmp.ne.s32.totalorder %s62, %s76
    %p78 = scmp.eq.s32.totalorder %s17, 0
    %p79 = por %p77, %p78
    %s81 = sadd.s32 %s80, 1
    %p84 = scmp.eq.s32.totalorder %s11, 1
    %p85 = scmp.ne.s32.totalorder %s80, %s82
    %p86 = scmp.eq.s32.totalorder %s11, 0
    %p87 = por %p85, %p86
    %p88 = scmp.ne.s32.totalorder %s80, %s82
    %p89 = scmp.eq.s32.totalorder %s16, 1
    %p90 = por %p88, %p89
    %p91 = scmp.ne.s32.totalorder %s82, %s83
    %p92 = scmp.eq.s32.totalorder %s16, 0
    %p93 = por %p91, %p92
    %p94 = scmp.ne.s32.totalorder %s82, %s83
    %p95 = scmp.eq.s32.totalorder %s17, 1
    %p96 = por %p94, %p95
    %p98 = scmp.ne.s32.totalorder %s83, %s97
    %p99 = scmp.eq.s32.totalorder %s17, 0
    %p100 = por %p98, %p99
    %s102 = sadd.s32 %s101, 1
    %p105 = scmp.eq.s32.totalorder %s11, 1
    %p106 = scmp.ne.s32.totalorder %s101, %s103
    %p107 = scmp.eq.s32.totalorder %s11, 0
    %p108 = por %p106, %p107
    %p109 = scmp.ne.s32.totalorder %s101, %s103
    %p110 = scmp.eq.s32.totalorder %s16, 1
    %p111 = por %p109, %p110
    %p112 = scmp.ne.s32.totalorder %s103, %s104
    %p113 = scmp.eq.s32.totalorder %s16, 0
    %p114 = por %p112, %p113
    %p115 = scmp.ne.s32.totalorder %s103, %s104
    %p116 = scmp.eq.s32.totalorder %s17, 1
    %p117 = por %p115, %p116
    %p119 = scmp.ne.s32.totalorder %s104, %s118
    %p120 = scmp.eq.s32.totalorder %s17, 0
    %p121 = por %p119, %p120
    %s123 = sadd.s32 %s122, 1
    %p126 = scmp.eq.s32.totalorder %s11, 1
    %p127 = scmp.ne.s32.totalorder %s122, %s124
    %p128 = scmp.eq.s32.totalorder %s11, 0
    %p129 = por %p127, %p128
    %p130 = scmp.ne.s32.totalorder %s122, %s124
    %p131 = scmp.eq.s32.totalorder %s16, 1
    %p132 = por %p130, %p131
    %p133 = scmp.ne.s32.totalorder %s124, %s125
    %p134 = scmp.eq.s32.totalorder %s16, 0
    %p135 = por %p133, %p134
    %p136 = scmp.ne.s32.totalorder %s124, %s125
    %p137 = scmp.eq.s32.totalorder %s17, 1
    %p138 = por %p136, %p137
    %p140 = scmp.ne.s32.totalorder %s125, %s139
    %p141 = scmp.eq.s32.totalorder %s17, 0
    %p142 = por %p140, %p141
    %s143 = ssub.s32 %s18, %s30
    %s144 = ssub.s32 %s19, %s26
    %s145 = sor.u32 %s143, %s144
    %p146 = scmp.eq.s32.totalorder %s145, 0
    %s148 = sadd.s32 %s147, 1
    %s149 = scalar_select %p146, %s147, %s148
    %p152 = pneg %p146
    %p153 = scmp.eq.s32.totalorder %s11, 1
    %p154 = por %p152, %p153
    %p155 = scmp.ne.s32.totalorder %s147, %s150
    %p156 = scmp.eq.s32.totalorder %s11, 0
    %p157 = por %p155, %p156
    %p158 = scmp.ne.s32.totalorder %s147, %s150
    %p159 = scmp.eq.s32.totalorder %s16, 1
    %p160 = por %p158, %p159
    %p161 = scmp.ne.s32.totalorder %s150, %s151
    %p162 = scmp.eq.s32.totalorder %s16, 0
    %p163 = por %p161, %p162
    %p164 = scmp.ne.s32.totalorder %s150, %s151
    %p165 = scmp.eq.s32.totalorder %s17, 1
    %p166 = por %p164, %p165
    %p168 = scmp.ne.s32.totalorder %s151, %s167
    %p169 = scmp.eq.s32.totalorder %s17, 0
    %p170 = por %p168, %p169
    %p171 = scmp.le.s32.totalorder 1, %s11
    %p172 = scmp.lt.s32.totalorder %s11, 3
    %p173 = pnand %p171, %p172
    %p174 = pneg %p173
    // Predicated region
    $region9: #{unet_down.5} parent=5 // pred_check
      _
    $region10: #{unet_down.5} parent=5 // pred_check_branch
      %176 = sbr.rel (%p173) target = $region12
    $region11: #{unet_down.5} parent=5 // pred_region
      %s177 = ssub.s32 %s11, 1
      // Predicated region
      $region13: #{unet_down.5} parent=11 // pred_check
        %p178 = pneg %p72
      $region14: #{unet_down.5} parent=11 // pred_check_branch
        %180 = sbr.rel (%p178) target = $region16
      $region15: #{unet_down.5} parent=11 // pred_region
        _
      $region16: #{unet_down.5} parent=11 // pred_fallthru
        _
      // Predicated region
      $region17: #{unet_down.5} parent=11 // pred_check
        %p181 = pneg %p93
      $region18: #{unet_down.5} parent=11 // pred_check_branch
        %183 = sbr.rel (%p181) target = $region20
      $region19: #{unet_down.5} parent=11 // pred_region
        _
      $region20: #{unet_down.5} parent=11 // pred_fallthru
        _
      // Predicated region
      $region21: #{unet_down.5} parent=11 // pred_check
        %p184 = pneg %p114
      $region22: #{unet_down.5} parent=11 // pred_check_branch
        %186 = sbr.rel (%p184) target = $region24
      $region23: #{unet_down.5} parent=11 // pred_region
        _
      $region24: #{unet_down.5} parent=11 // pred_fallthru
        _
      // Predicated region
      $region25: #{unet_down.5} parent=11 // pred_check
        %p187 = pneg %p135
      $region26: #{unet_down.5} parent=11 // pred_check_branch
        %189 = sbr.rel (%p187) target = $region28
      $region27: #{unet_down.5} parent=11 // pred_region
        _
      $region28: #{unet_down.5} parent=11 // pred_fallthru
        _
    $region12: #{unet_down.5} parent=5 // pred_fallthru
      _
    %p190 = scmp.lt.s32.totalorder %s11, 2
    // Predicated region
    $region29: #{unet_down.5} parent=5 // pred_check
      %p191 = pneg %p190
    $region30: #{unet_down.5} parent=5 // pred_check_branch
      %193 = sbr.rel (%p191) target = $region32
    $region31: #{unet_down.5} parent=5 // pred_region
      // Predicated region
      $region33: #{unet_down.5} parent=31 // pred_check
        %p194 = pneg %p45
      $region34: #{unet_down.5} parent=31 // pred_check_branch
        %196 = sbr.rel (%p194) target = $region36
      $region35: #{unet_down.5} parent=31 // pred_region
        %s197 = smul.u32 16, %s19
        %p198 = scmp.lt.s32.totalorder %s18, 1
        %s199 = scalar_select %p198, %s18, 1
        %p200 = scmp.lt.s32.totalorder %s197, 15
        %s201 = scalar_select %p200, %s197, 15
        %s202 = smul.addr %s201, 2
        %s203 = smul.addr %s199, 32
        %s204 = sadd.s32 %s202, %s203
        %s205 = smul.addr %s204, 4
        %s206 = scalar_lea.vmem %s0, %s205
        %s207 = smul.u32 16, %s19
      $region36: #{unet_down.5} parent=31 // pred_fallthru
        _
    $region32: #{unet_down.5} parent=5 // pred_fallthru
      _
    %p208 = scmp.le.s32.totalorder 1, %s11
    %p209 = scmp.lt.s32.totalorder %s11, 3
    %p210 = pnand %p208, %p209
    %p211 = pneg %p210
    // Predicated region
    $region37: #{unet_down.5} parent=5 // pred_check
      _
    $region38: #{unet_down.5} parent=5 // pred_check_branch
      %213 = sbr.rel (%p210) target = $region40
    $region39: #{unet_down.5} parent=5 // pred_region
      %s214 = ssub.s32 %s11, 1
      %s215 = smul.u32 16, %s21
      %p216 = scmp.lt.s32.totalorder %s20, 1
      %s217 = scalar_select %p216, %s20, 1
      %p218 = scmp.lt.s32.totalorder %s215, 15
      %s219 = scalar_select %p218, %s215, 15
      %s220 = smul.addr %s219, 2
      %s221 = smul.addr %s217, 32
      %s222 = sadd.s32 %s220, %s221
      %s223 = smul.addr %s222, 4
      %s224 = scalar_lea.vmem %s0, %s223
      %p225 = pneg %p51
      %p226 = pneg %p48
      %p227 = pneg %p72
      %p228 = pneg %p69
      %p229 = pneg %p93
      %p230 = pneg %p90
      %p231 = pneg %p114
      %p232 = pneg %p111
      %p233 = pneg %p135
      %p234 = pneg %p132
      %p235 = pneg %p163
      %p236 = pneg %p160
      %s237 = smul.u32 8, %s21
      %p238 = scmp.lt.s32.totalorder %s20, 1
      %s239 = scalar_select %p238, %s20, 1
      %p240 = scmp.lt.s32.totalorder %s237, 7
      %s241 = scalar_select %p240, %s237, 7
      %s242 = smul.addr %s239, 8
      %s243 = sadd.s32 %s241, %s242
      %s244 = smul.addr %s243, 8
      %s245 = scalar_lea.vmem %s5, %s244
      %s246 = smul.u32 16, %s21
      %p247 = scmp.lt.s32.totalorder %s20, 1
      %s248 = scalar_select %p247, %s20, 1
      %p249 = scmp.lt.s32.totalorder %s246, 15
      %s250 = scalar_select %p249, %s246, 15
      %s251 = smul.addr %s250, 2
      %s252 = smul.addr %s248, 32
      %s253 = sadd.s32 %s251, %s252
      %s254 = smul.addr %s253, 4
      %s255 = scalar_lea.vmem %s0, %s254
      %s256 = smul.u32 16, %s21
      %s257 = smul.u32 8, %s21
      %p258 = scmp.lt.s32.totalorder %s20, 1
      %s259 = scalar_select %p258, %s20, 1
      %p260 = scmp.lt.s32.totalorder %s257, 7
      %s261 = scalar_select %p260, %s257, 7
      %s262 = smul.addr %s259, 8
      %s263 = sadd.s32 %s261, %s262
      %s264 = smul.addr %s263, 8
      %s265 = scalar_lea.vmem %s5, %s264
      %s266 = smul.u32 8, %s21
      %v267 = vld [vmem:[%s255] sm:$0xf]
      %v268 = vld [vmem:[%s255 + $0x4] sm:$0xf]
      %v269 = vld [vmem:[%s255 + $0x8] sm:$0xf]
      %v270 = vld [vmem:[%s255 + $0xc] sm:$0xf]
      %v271 = vld [vmem:[%s255 + $0x10] sm:$0xf]
      %v272 = vld [vmem:[%s255 + $0x14] sm:$0xf]
      %v273 = vld [vmem:[%s255 + $0x18] sm:$0xf]
      %v274 = vld [vmem:[%s255 + $0x1c] sm:$0xf]
      %v275 = vld [vmem:[%s255 + $0x20] sm:$0xf]
      %v276 = vld [vmem:[%s255 + $0x24] sm:$0xf]
      %v277 = vld [vmem:[%s255 + $0x28] sm:$0xf]
      %v278 = vld [vmem:[%s255 + $0x2c] sm:$0xf]
      %v279 = vld [vmem:[%s255 + $0x30] sm:$0xf]
      %v280 = vld [vmem:[%s255 + $0x34] sm:$0xf]
      %v281 = vld [vmem:[%s255 + $0x38] sm:$0xf]
      %v282 = vld [vmem:[%s255 + $0x3c] sm:$0xf]
      %v283 = vld [vmem:[%s255 + $0x40] sm:$0xf]
      %v284 = vld [vmem:[%s255 + $0x44] sm:$0xf]
      %v285 = vld [vmem:[%s255 + $0x48] sm:$0xf]
      %v286 = vld [vmem:[%s255 + $0x4c] sm:$0xf]
      %v287 = vld [vmem:[%s255 + $0x50] sm:$0xf]
      %v288 = vld [vmem:[%s255 + $0x54] sm:$0xf]
      %v289 = vld [vmem:[%s255 + $0x58] sm:$0xf]
      %v290 = vld [vmem:[%s255 + $0x5c] sm:$0xf]
      %v291 = vld [vmem:[%s255 + $0x60] sm:$0xf]
      %v292 = vld [vmem:[%s255 + $0x64] sm:$0xf]
      %v293 = vld [vmem:[%s255 + $0x68] sm:$0xf]
      %v294 = vld [vmem:[%s255 + $0x6c] sm:$0xf]
      %v295 = vld [vmem:[%s255 + $0x70] sm:$0xf]
      %v296 = vld [vmem:[%s255 + $0x74] sm:$0xf]
      %v297 = vld [vmem:[%s255 + $0x78] sm:$0xf]
      %v298 = vld [vmem:[%s255 + $0x7c] sm:$0xf]
      %v299 = vunpack.c.l.bf16 %v267
      %v300 = vunpack.c.l.bf16 %v268
      %v301 = vunpack.c.l.bf16 %v269
      %v302 = vunpack.c.l.bf16 %v270
      %v303 = vunpack.c.l.bf16 %v271
      %v304 = vunpack.c.l.bf16 %v272
      %v305 = vunpack.c.l.bf16 %v273
      %v306 = vunpack.c.l.bf16 %v274
      %v307 = vunpack.c.l.bf16 %v275
      %v308 = vunpack.c.l.bf16 %v276
      %v309 = vunpack.c.l.bf16 %v277
      %v310 = vunpack.c.l.bf16 %v278
      %v311 = vunpack.c.l.bf16 %v279
      %v312 = vunpack.c.l.bf16 %v280
      %v313 = vunpack.c.l.bf16 %v281
      %v314 = vunpack.c.l.bf16 %v282
      %v315 = vunpack.c.l.bf16 %v283
      %v316 = vunpack.c.l.bf16 %v284
      %v317 = vunpack.c.l.bf16 %v285
      %v318 = vunpack.c.l.bf16 %v286
      %v319 = vunpack.c.l.bf16 %v287
      %v320 = vunpack.c.l.bf16 %v288
      %v321 = vunpack.c.l.bf16 %v289
      %v322 = vunpack.c.l.bf16 %v290
      %v323 = vunpack.c.l.bf16 %v291
      %v324 = vunpack.c.l.bf16 %v292
      %v325 = vunpack.c.l.bf16 %v293
      %v326 = vunpack.c.l.bf16 %v294
      %v327 = vunpack.c.l.bf16 %v295
      %v328 = vunpack.c.l.bf16 %v296
      %v329 = vunpack.c.l.bf16 %v297
      %v330 = vunpack.c.l.bf16 %v298
      %v331 = vld [vmem:[%s1] sm:$0x1]
      %v333 = vlaneseq
      %v334 = vshrl.u32 %v333, 7
      %v335 = vsub.s32 0, %v334
      %v336 = vrot.slane %v331, %v335
      %v338 = vmul.f32 %v299, %v336
      %v339 = vmul.f32 %v300, %v336
      %v340 = vmul.f32 %v301, %v336
      %v341 = vmul.f32 %v302, %v336
      %v342 = vmul.f32 %v303, %v336
      %v343 = vmul.f32 %v304, %v336
      %v344 = vmul.f32 %v305, %v336
      %v345 = vmul.f32 %v306, %v336
      %v346 = vmul.f32 %v307, %v336
      %v347 = vmul.f32 %v308, %v336
      %v348 = vmul.f32 %v309, %v336
      %v349 = vmul.f32 %v310, %v336
      %v350 = vmul.f32 %v311, %v336
      %v351 = vmul.f32 %v312, %v336
      %v352 = vmul.f32 %v313, %v336
      %v353 = vmul.f32 %v314, %v336
      %v354 = vmul.f32 %v315, %v336
      %v355 = vmul.f32 %v316, %v336
      %v356 = vmul.f32 %v317, %v336
      %v357 = vmul.f32 %v318, %v336
      %v358 = vmul.f32 %v319, %v336
      %v359 = vmul.f32 %v320, %v336
      %v360 = vmul.f32 %v321, %v336
      %v361 = vmul.f32 %v322, %v336
      %v362 = vmul.f32 %v323, %v336
      %v363 = vmul.f32 %v324, %v336
      %v364 = vmul.f32 %v325, %v336
      %v365 = vmul.f32 %v326, %v336
      %v366 = vmul.f32 %v327, %v336
      %v367 = vmul.f32 %v328, %v336
      %v368 = vmul.f32 %v329, %v336
      %v369 = vmul.f32 %v330, %v336
      %v370 = vld [vmem:[%s2] sm:$0x1]
      %v372 = vlaneseq
      %v373 = vshrl.u32 %v372, 7
      %v374 = vsub.s32 0, %v373
      %v375 = vrot.slane %v370, %v374
      %v377 = vadd.f32 %v338, %v375
      %v378 = vadd.f32 %v339, %v375
      %v379 = vadd.f32 %v340, %v375
      %v380 = vadd.f32 %v341, %v375
      %v381 = vadd.f32 %v342, %v375
      %v382 = vadd.f32 %v343, %v375
      %v383 = vadd.f32 %v344, %v375
      %v384 = vadd.f32 %v345, %v375
      %v385 = vadd.f32 %v346, %v375
      %v386 = vadd.f32 %v347, %v375
      %v387 = vadd.f32 %v348, %v375
      %v388 = vadd.f32 %v349, %v375
      %v389 = vadd.f32 %v350, %v375
      %v390 = vadd.f32 %v351, %v375
      %v391 = vadd.f32 %v352, %v375
      %v392 = vadd.f32 %v353, %v375
      %v393 = vadd.f32 %v354, %v375
      %v394 = vadd.f32 %v355, %v375
      %v395 = vadd.f32 %v356, %v375
      %v396 = vadd.f32 %v357, %v375
      %v397 = vadd.f32 %v358, %v375
      %v398 = vadd.f32 %v359, %v375
      %v399 = vadd.f32 %v360, %v375
      %v400 = vadd.f32 %v361, %v375
      %v401 = vadd.f32 %v362, %v375
      %v402 = vadd.f32 %v363, %v375
      %v403 = vadd.f32 %v364, %v375
      %v404 = vadd.f32 %v365, %v375
      %v405 = vadd.f32 %v366, %v375
      %v406 = vadd.f32 %v367, %v375
      %v407 = vadd.f32 %v368, %v375
      %v408 = vadd.f32 %v369, %v375
      %v409 = vmul.f32 %v377, 0.5
      %v410 = vmul.f32 %v378, 0.5
      %v411 = vmul.f32 %v379, 0.5
      %v412 = vmul.f32 %v380, 0.5
      %v413 = vmul.f32 %v381, 0.5
      %v414 = vmul.f32 %v382, 0.5
      %v415 = vmul.f32 %v383, 0.5
      %v416 = vmul.f32 %v384, 0.5
      %v417 = vmul.f32 %v385, 0.5
      %v418 = vmul.f32 %v386, 0.5
      %v419 = vmul.f32 %v387, 0.5
      %v420 = vmul.f32 %v388, 0.5
      %v421 = vmul.f32 %v389, 0.5
      %v422 = vmul.f32 %v390, 0.5
      %v423 = vmul.f32 %v391, 0.5
      %v424 = vmul.f32 %v392, 0.5
      %v425 = vmul.f32 %v393, 0.5
      %v426 = vmul.f32 %v394, 0.5
      %v427 = vmul.f32 %v395, 0.5
      %v428 = vmul.f32 %v396, 0.5
      %v429 = vmul.f32 %v397, 0.5
      %v430 = vmul.f32 %v398, 0.5
      %v431 = vmul.f32 %v399, 0.5
      %v432 = vmul.f32 %v400, 0.5
      %v433 = vmul.f32 %v401, 0.5
      %v434 = vmul.f32 %v402, 0.5
      %v435 = vmul.f32 %v403, 0.5
      %v436 = vmul.f32 %v404, 0.5
      %v437 = vmul.f32 %v405, 0.5
      %v438 = vmul.f32 %v406, 0.5
      %v439 = vmul.f32 %v407, 0.5
      %v440 = vmul.f32 %v408, 0.5
      %v441 = vmul.f32 %v377, 0.70710677
      %v442 = vmul.f32 %v378, 0.70710677
      %v443 = vmul.f32 %v379, 0.70710677
      %v444 = vmul.f32 %v380, 0.70710677
      %v445 = vmul.f32 %v381, 0.70710677
      %v446 = vmul.f32 %v382, 0.70710677
      %v447 = vmul.f32 %v383, 0.70710677
      %v448 = vmul.f32 %v384, 0.70710677
      %v449 = vmul.f32 %v385, 0.70710677
      %v450 = vmul.f32 %v386, 0.70710677
      %v451 = vmul.f32 %v387, 0.70710677
      %v452 = vmul.f32 %v388, 0.70710677
      %v453 = vmul.f32 %v389, 0.70710677
      %v454 = vmul.f32 %v390, 0.70710677
      %v455 = vmul.f32 %v391, 0.70710677
      %v456 = vmul.f32 %v392, 0.70710677
      %v457 = vmul.f32 %v393, 0.70710677
      %v458 = vmul.f32 %v394, 0.70710677
      %v459 = vmul.f32 %v395, 0.70710677
      %v460 = vmul.f32 %v396, 0.70710677
      %v461 = vmul.f32 %v397, 0.70710677
      %v462 = vmul.f32 %v398, 0.70710677
      %v463 = vmul.f32 %v399, 0.70710677
      %v464 = vmul.f32 %v400, 0.70710677
      %v465 = vmul.f32 %v401, 0.70710677
      %v466 = vmul.f32 %v402, 0.70710677
      %v467 = vmul.f32 %v403, 0.70710677
      %v468 = vmul.f32 %v404, 0.70710677
      %v469 = vmul.f32 %v405, 0.70710677
      %v470 = vmul.f32 %v406, 0.70710677
      %v471 = vmul.f32 %v407, 0.70710677
      %v472 = vmul.f32 %v408, 0.70710677
      %v473 = vand.u32 2147483647, %v441
      %v474 = vand.u32 2147483647, %v442
      %v475 = vand.u32 2147483647, %v443
      %v476 = vand.u32 2147483647, %v444
      %v477 = vand.u32 2147483647, %v445
      %v478 = vand.u32 2147483647, %v446
      %v479 = vand.u32 2147483647, %v447
      %v480 = vand.u32 2147483647, %v448
      %v481 = vand.u32 2147483647, %v449
      %v482 = vand.u32 2147483647, %v450
      %v483 = vand.u32 2147483647, %v451
      %v484 = vand.u32 2147483647, %v452
      %v485 = vand.u32 2147483647, %v453
      %v486 = vand.u32 2147483647, %v454
      %v487 = vand.u32 2147483647, %v455
      %v488 = vand.u32 2147483647, %v456
      %v489 = vand.u32 2147483647, %v457
      %v490 = vand.u32 2147483647, %v458
      %v491 = vand.u32 2147483647, %v459
      %v492 = vand.u32 2147483647, %v460
      %v493 = vand.u32 2147483647, %v461
      %v494 = vand.u32 2147483647, %v462
      %v495 = vand.u32 2147483647, %v463
      %v496 = vand.u32 2147483647, %v464
      %v497 = vand.u32 2147483647, %v465
      %v498 = vand.u32 2147483647, %v466
      %v499 = vand.u32 2147483647, %v467
      %v500 = vand.u32 2147483647, %v468
      %v501 = vand.u32 2147483647, %v469
      %v502 = vand.u32 2147483647, %v470
      %v503 = vand.u32 2147483647, %v471
      %v504 = vand.u32 2147483647, %v472
      %v505 = vmul.f32 %v473, 0.3275911
      %v506 = vmul.f32 %v474, 0.3275911
      %v507 = vmul.f32 %v475, 0.3275911
      %v508 = vmul.f32 %v476, 0.3275911
      %v509 = vmul.f32 %v477, 0.3275911
      %v510 = vmul.f32 %v478, 0.3275911
      %v511 = vmul.f32 %v479, 0.3275911
      %v512 = vmul.f32 %v480, 0.3275911
      %v513 = vmul.f32 %v481, 0.3275911
      %v514 = vmul.f32 %v482, 0.3275911
      %v515 = vmul.f32 %v483, 0.3275911
      %v516 = vmul.f32 %v484, 0.3275911
      %v517 = vmul.f32 %v485, 0.3275911
      %v518 = vmul.f32 %v486, 0.3275911
      %v519 = vmul.f32 %v487, 0.3275911
      %v520 = vmul.f32 %v488, 0.3275911
      %v521 = vmul.f32 %v489, 0.3275911
      %v522 = vmul.f32 %v490, 0.3275911
      %v523 = vmul.f32 %v491, 0.3275911
      %v524 = vmul.f32 %v492, 0.3275911
      %v525 = vmul.f32 %v493, 0.3275911
      %v526 = vmul.f32 %v494, 0.3275911
      %v527 = vmul.f32 %v495, 0.3275911
      %v528 = vmul.f32 %v496, 0.3275911
      %v529 = vmul.f32 %v497, 0.3275911
      %v530 = vmul.f32 %v498, 0.3275911
      %v531 = vmul.f32 %v499, 0.3275911
      %v532 = vmul.f32 %v500, 0.3275911
      %v533 = vmul.f32 %v501, 0.3275911
      %v534 = vmul.f32 %v502, 0.3275911
      %v535 = vmul.f32 %v503, 0.3275911
      %v536 = vmul.f32 %v504, 0.3275911
      %v537 = vadd.f32 %v505, 1.0
      %v538 = vadd.f32 %v506, 1.0
      %v539 = vadd.f32 %v507, 1.0
      %v540 = vadd.f32 %v508, 1.0
      %v541 = vadd.f32 %v509, 1.0
      %v542 = vadd.f32 %v510, 1.0
      %v543 = vadd.f32 %v511, 1.0
      %v544 = vadd.f32 %v512, 1.0
      %v545 = vadd.f32 %v513, 1.0
      %v546 = vadd.f32 %v514, 1.0
      %v547 = vadd.f32 %v515, 1.0
      %v548 = vadd.f32 %v516, 1.0
      %v549 = vadd.f32 %v517, 1.0
      %v550 = vadd.f32 %v518, 1.0
      %v551 = vadd.f32 %v519, 1.0
      %v552 = vadd.f32 %v520, 1.0
      %v553 = vadd.f32 %v521, 1.0
      %v554 = vadd.f32 %v522, 1.0
      %v555 = vadd.f32 %v523, 1.0
      %v556 = vadd.f32 %v524, 1.0
      %v557 = vadd.f32 %v525, 1.0
      %v558 = vadd.f32 %v526, 1.0
      %v559 = vadd.f32 %v527, 1.0
      %v560 = vadd.f32 %v528, 1.0
      %v561 = vadd.f32 %v529, 1.0
      %v562 = vadd.f32 %v530, 1.0
      %v563 = vadd.f32 %v531, 1.0
      %v564 = vadd.f32 %v532, 1.0
      %v565 = vadd.f32 %v533, 1.0
      %v566 = vadd.f32 %v534, 1.0
      %v567 = vadd.f32 %v535, 1.0
      %v568 = vadd.f32 %v536, 1.0
      %v569 = vrcp.pop %v537
      %v570 = vmul.f32 1.0, %v569
      %v571 = vrcp.pop %v538
      %v572 = vmul.f32 1.0, %v571
      %v573 = vrcp.pop %v539
      %v574 = vmul.f32 1.0, %v573
      %v575 = vrcp.pop %v540
      %v576 = vmul.f32 1.0, %v575
      %v577 = vrcp.pop %v541
      %v578 = vmul.f32 1.0, %v577
      %v579 = vrcp.pop %v542
      %v580 = vmul.f32 1.0, %v579
      %v581 = vrcp.pop %v543
      %v582 = vmul.f32 1.0, %v581
      %v583 = vrcp.pop %v544
      %v584 = vmul.f32 1.0, %v583
      %v585 = vrcp.pop %v545
      %v586 = vmul.f32 1.0, %v585
      %v587 = vrcp.pop %v546
      %v588 = vmul.f32 1.0, %v587
      %v589 = vrcp.pop %v547
      %v590 = vmul.f32 1.0, %v589
      %v591 = vrcp.pop %v548
      %v592 = vmul.f32 1.0, %v591
      %v593 = vrcp.pop %v549
      %v594 = vmul.f32 1.0, %v593
      %v595 = vrcp.pop %v550
      %v596 = vmul.f32 1.0, %v595
      %v597 = vrcp.pop %v551
      %v598 = vmul.f32 1.0, %v597
      %v599 = vrcp.pop %v552
      %v600 = vmul.f32 1.0, %v599
      %v601 = vrcp.pop %v553
      %v602 = vmul.f32 1.0, %v601
      %v603 = vrcp.pop %v554
      %v604 = vmul.f32 1.0, %v603
      %v605 = vrcp.pop %v555
      %v606 = vmul.f32 1.0, %v605
      %v607 = vrcp.pop %v556
      %v608 = vmul.f32 1.0, %v607
      %v609 = vrcp.pop %v557
      %v610 = vmul.f32 1.0, %v609
      %v611 = vrcp.pop %v558
      %v612 = vmul.f32 1.0, %v611
      %v613 = vrcp.pop %v559
      %v614 = vmul.f32 1.0, %v613
      %v615 = vrcp.pop %v560
      %v616 = vmul.f32 1.0, %v615
      %v617 = vrcp.pop %v561
      %v618 = vmul.f32 1.0, %v617
      %v619 = vrcp.pop %v562
      %v620 = vmul.f32 1.0, %v619
      %v621 = vrcp.pop %v563
      %v622 = vmul.f32 1.0, %v621
      %v623 = vrcp.pop %v564
      %v624 = vmul.f32 1.0, %v623
      %v625 = vrcp.pop %v565
      %v626 = vmul.f32 1.0, %v625
      %v627 = vrcp.pop %v566
      %v628 = vmul.f32 1.0, %v627
      %v629 = vrcp.pop %v567
      %v630 = vmul.f32 1.0, %v629
      %v631 = vrcp.pop %v568
      %v632 = vmul.f32 1.0, %v631
      %v633 = vmul.f32 %v570, 1.0614054
      %v634 = vmul.f32 %v572, 1.0614054
      %v635 = vmul.f32 %v574, 1.0614054
      %v636 = vmul.f32 %v576, 1.0614054
      %v637 = vmul.f32 %v578, 1.0614054
      %v638 = vmul.f32 %v580, 1.0614054
      %v639 = vmul.f32 %v582, 1.0614054
      %v640 = vmul.f32 %v584, 1.0614054
      %v641 = vmul.f32 %v586, 1.0614054
      %v642 = vmul.f32 %v588, 1.0614054
      %v643 = vmul.f32 %v590, 1.0614054
      %v644 = vmul.f32 %v592, 1.0614054
      %v645 = vmul.f32 %v594, 1.0614054
      %v646 = vmul.f32 %v596, 1.0614054
      %v647 = vmul.f32 %v598, 1.0614054
      %v648 = vmul.f32 %v600, 1.0614054
      %v649 = vmul.f32 %v602, 1.0614054
      %v650 = vmul.f32 %v604, 1.0614054
      %v651 = vmul.f32 %v606, 1.0614054
      %v652 = vmul.f32 %v608, 1.0614054
      %v653 = vmul.f32 %v610, 1.0614054
      %v654 = vmul.f32 %v612, 1.0614054
      %v655 = vmul.f32 %v614, 1.0614054
      %v656 = vmul.f32 %v616, 1.0614054
      %v657 = vmul.f32 %v618, 1.0614054
      %v658 = vmul.f32 %v620, 1.0614054
      %v659 = vmul.f32 %v622, 1.0614054
      %v660 = vmul.f32 %v624, 1.0614054
      %v661 = vmul.f32 %v626, 1.0614054
      %v662 = vmul.f32 %v628, 1.0614054
      %v663 = vmul.f32 %v630, 1.0614054
      %v664 = vmul.f32 %v632, 1.0614054
      %v665 = vadd.f32 %v633, -1.4531521
      %v666 = vadd.f32 %v634, -1.4531521
      %v667 = vadd.f32 %v635, -1.4531521
      %v668 = vadd.f32 %v636, -1.4531521
      %v669 = vadd.f32 %v637, -1.4531521
      %v670 = vadd.f32 %v638, -1.4531521
      %v671 = vadd.f32 %v639, -1.4531521
      %v672 = vadd.f32 %v640, -1.4531521
      %v673 = vadd.f32 %v641, -1.4531521
      %v674 = vadd.f32 %v642, -1.4531521
      %v675 = vadd.f32 %v643, -1.4531521
      %v676 = vadd.f32 %v644, -1.4531521
      %v677 = vadd.f32 %v645, -1.4531521
      %v678 = vadd.f32 %v646, -1.4531521
      %v679 = vadd.f32 %v647, -1.4531521
      %v680 = vadd.f32 %v648, -1.4531521
      %v681 = vadd.f32 %v649, -1.4531521
      %v682 = vadd.f32 %v650, -1.4531521
      %v683 = vadd.f32 %v651, -1.4531521
      %v684 = vadd.f32 %v652, -1.4531521
      %v685 = vadd.f32 %v653, -1.4531521
      %v686 = vadd.f32 %v654, -1.4531521
      %v687 = vadd.f32 %v655, -1.4531521
      %v688 = vadd.f32 %v656, -1.4531521
      %v689 = vadd.f32 %v657, -1.4531521
      %v690 = vadd.f32 %v658, -1.4531521
      %v691 = vadd.f32 %v659, -1.4531521
      %v692 = vadd.f32 %v660, -1.4531521
      %v693 = vadd.f32 %v661, -1.4531521
      %v694 = vadd.f32 %v662, -1.4531521
      %v695 = vadd.f32 %v663, -1.4531521
      %v696 = vadd.f32 %v664, -1.4531521
      %v697 = vmul.f32 %v665, %v570
      %v698 = vmul.f32 %v666, %v572
      %v699 = vmul.f32 %v667, %v574
      %v700 = vmul.f32 %v668, %v576
      %v701 = vmul.f32 %v669, %v578
      %v702 = vmul.f32 %v670, %v580
      %v703 = vmul.f32 %v671, %v582
      %v704 = vmul.f32 %v672, %v584
      %v705 = vmul.f32 %v673, %v586
      %v706 = vmul.f32 %v674, %v588
      %v707 = vmul.f32 %v675, %v590
      %v708 = vmul.f32 %v676, %v592
      %v709 = vmul.f32 %v677, %v594
      %v710 = vmul.f32 %v678, %v596
      %v711 = vmul.f32 %v679, %v598
      %v712 = vmul.f32 %v680, %v600
      %v713 = vmul.f32 %v681, %v602
      %v714 = vmul.f32 %v682, %v604
      %v715 = vmul.f32 %v683, %v606
      %v716 = vmul.f32 %v684, %v608
      %v717 = vmul.f32 %v685, %v610
      %v718 = vmul.f32 %v686, %v612
      %v719 = vmul.f32 %v687, %v614
      %v720 = vmul.f32 %v688, %v616
      %v721 = vmul.f32 %v689, %v618
      %v722 = vmul.f32 %v690, %v620
      %v723 = vmul.f32 %v691, %v622
      %v724 = vmul.f32 %v692, %v624
      %v725 = vmul.f32 %v693, %v626
      %v726 = vmul.f32 %v694, %v628
      %v727 = vmul.f32 %v695, %v630
      %v728 = vmul.f32 %v696, %v632
      %v729 = vadd.f32 %v697, 1.4214138
      %v730 = vadd.f32 %v698, 1.4214138
      %v731 = vadd.f32 %v699, 1.4214138
      %v732 = vadd.f32 %v700, 1.4214138
      %v733 = vadd.f32 %v701, 1.4214138
      %v734 = vadd.f32 %v702, 1.4214138
      %v735 = vadd.f32 %v703, 1.4214138
      %v736 = vadd.f32 %v704, 1.4214138
      %v737 = vadd.f32 %v705, 1.4214138
      %v738 = vadd.f32 %v706, 1.4214138
      %v739 = vadd.f32 %v707, 1.4214138
      %v740 = vadd.f32 %v708, 1.4214138
      %v741 = vadd.f32 %v709, 1.4214138
      %v742 = vadd.f32 %v710, 1.4214138
      %v743 = vadd.f32 %v711, 1.4214138
      %v744 = vadd.f32 %v712, 1.4214138
      %v745 = vadd.f32 %v713, 1.4214138
      %v746 = vadd.f32 %v714, 1.4214138
      %v747 = vadd.f32 %v715, 1.4214138
      %v748 = vadd.f32 %v716, 1.4214138
      %v749 = vadd.f32 %v717, 1.4214138
      %v750 = vadd.f32 %v718, 1.4214138
      %v751 = vadd.f32 %v719, 1.4214138
      %v752 = vadd.f32 %v720, 1.4214138
      %v753 = vadd.f32 %v721, 1.4214138
      %v754 = vadd.f32 %v722, 1.4214138
      %v755 = vadd.f32 %v723, 1.4214138
      %v756 = vadd.f32 %v724, 1.4214138
      %v757 = vadd.f32 %v725, 1.4214138
      %v758 = vadd.f32 %v726, 1.4214138
      %v759 = vadd.f32 %v727, 1.4214138
      %v760 = vadd.f32 %v728, 1.4214138
      %v761 = vmul.f32 %v729, %v570
      %v762 = vmul.f32 %v730, %v572
      %v763 = vmul.f32 %v731, %v574
      %v764 = vmul.f32 %v732, %v576
      %v765 = vmul.f32 %v733, %v578
      %v766 = vmul.f32 %v734, %v580
      %v767 = vmul.f32 %v735, %v582
      %v768 = vmul.f32 %v736, %v584
      %v769 = vmul.f32 %v737, %v586
      %v770 = vmul.f32 %v738, %v588
      %v771 = vmul.f32 %v739, %v590
      %v772 = vmul.f32 %v740, %v592
      %v773 = vmul.f32 %v741, %v594
      %v774 = vmul.f32 %v742, %v596
      %v775 = vmul.f32 %v743, %v598
      %v776 = vmul.f32 %v744, %v600
      %v777 = vmul.f32 %v745, %v602
      %v778 = vmul.f32 %v746, %v604
      %v779 = vmul.f32 %v747, %v606
      %v780 = vmul.f32 %v748, %v608
      %v781 = vmul.f32 %v749, %v610
      %v782 = vmul.f32 %v750, %v612
      %v783 = vmul.f32 %v751, %v614
      %v784 = vmul.f32 %v752, %v616
      %v785 = vmul.f32 %v753, %v618
      %v786 = vmul.f32 %v754, %v620
      %v787 = vmul.f32 %v755, %v622
      %v788 = vmul.f32 %v756, %v624
      %v789 = vmul.f32 %v757, %v626
      %v790 = vmul.f32 %v758, %v628
      %v791 = vmul.f32 %v759, %v630
      %v792 = vmul.f32 %v760, %v632
      %v793 = vadd.f32 %v761, -0.28449672
      %v794 = vadd.f32 %v762, -0.28449672
      %v795 = vadd.f32 %v763, -0.28449672
      %v796 = vadd.f32 %v764, -0.28449672
      %v797 = vadd.f32 %v765, -0.28449672
      %v798 = vadd.f32 %v766, -0.28449672
      %v799 = vadd.f32 %v767, -0.28449672
      %v800 = vadd.f32 %v768, -0.28449672
      %v801 = vadd.f32 %v769, -0.28449672
      %v802 = vadd.f32 %v770, -0.28449672
      %v803 = vadd.f32 %v771, -0.28449672
      %v804 = vadd.f32 %v772, -0.28449672
      %v805 = vadd.f32 %v773, -0.28449672
      %v806 = vadd.f32 %v774, -0.28449672
      %v807 = vadd.f32 %v775, -0.28449672
      %v808 = vadd.f32 %v776, -0.28449672
      %v809 = vadd.f32 %v777, -0.28449672
      %v810 = vadd.f32 %v778, -0.28449672
      %v811 = vadd.f32 %v779, -0.28449672
      %v812 = vadd.f32 %v780, -0.28449672
      %v813 = vadd.f32 %v781, -0.28449672
      %v814 = vadd.f32 %v782, -0.28449672
      %v815 = vadd.f32 %v783, -0.28449672
      %v816 = vadd.f32 %v784, -0.28449672
      %v817 = vadd.f32 %v785, -0.28449672
      %v818 = vadd.f32 %v786, -0.28449672
      %v819 = vadd.f32 %v787, -0.28449672
      %v820 = vadd.f32 %v788, -0.28449672
      %v821 = vadd.f32 %v789, -0.28449672
      %v822 = vadd.f32 %v790, -0.28449672
      %v823 = vadd.f32 %v791, -0.28449672
      %v824 = vadd.f32 %v792, -0.28449672
      %v825 = vmul.f32 %v793, %v570
      %v826 = vmul.f32 %v794, %v572
      %v827 = vmul.f32 %v795, %v574
      %v828 = vmul.f32 %v796, %v576
      %v829 = vmul.f32 %v797, %v578
      %v830 = vmul.f32 %v798, %v580
      %v831 = vmul.f32 %v799, %v582
      %v832 = vmul.f32 %v800, %v584
      %v833 = vmul.f32 %v801, %v586
      %v834 = vmul.f32 %v802, %v588
      %v835 = vmul.f32 %v803, %v590
      %v836 = vmul.f32 %v804, %v592
      %v837 = vmul.f32 %v805, %v594
      %v838 = vmul.f32 %v806, %v596
      %v839 = vmul.f32 %v807, %v598
      %v840 = vmul.f32 %v808, %v600
      %v841 = vmul.f32 %v809, %v602
      %v842 = vmul.f32 %v810, %v604
      %v843 = vmul.f32 %v811, %v606
      %v844 = vmul.f32 %v812, %v608
      %v845 = vmul.f32 %v813, %v610
      %v846 = vmul.f32 %v814, %v612
      %v847 = vmul.f32 %v815, %v614
      %v848 = vmul.f32 %v816, %v616
      %v849 = vmul.f32 %v817, %v618
      %v850 = vmul.f32 %v818, %v620
      %v851 = vmul.f32 %v819, %v622
      %v852 = vmul.f32 %v820, %v624
      %v853 = vmul.f32 %v821, %v626
      %v854 = vmul.f32 %v822, %v628
      %v855 = vmul.f32 %v823, %v630
      %v856 = vmul.f32 %v824, %v632
      %v857 = vadd.f32 %v825, 0.2548296
      %v858 = vadd.f32 %v826, 0.2548296
      %v859 = vadd.f32 %v827, 0.2548296
      %v860 = vadd.f32 %v828, 0.2548296
      %v861 = vadd.f32 %v829, 0.2548296
      %v862 = vadd.f32 %v830, 0.2548296
      %v863 = vadd.f32 %v831, 0.2548296
      %v864 = vadd.f32 %v832, 0.2548296
      %v865 = vadd.f32 %v833, 0.2548296
      %v866 = vadd.f32 %v834, 0.2548296
      %v867 = vadd.f32 %v835, 0.2548296
      %v868 = vadd.f32 %v836, 0.2548296
      %v869 = vadd.f32 %v837, 0.2548296
      %v870 = vadd.f32 %v838, 0.2548296
      %v871 = vadd.f32 %v839, 0.2548296
      %v872 = vadd.f32 %v840, 0.2548296
      %v873 = vadd.f32 %v841, 0.2548296
      %v874 = vadd.f32 %v842, 0.2548296
      %v875 = vadd.f32 %v843, 0.2548296
      %v876 = vadd.f32 %v844, 0.2548296
      %v877 = vadd.f32 %v845, 0.2548296
      %v878 = vadd.f32 %v846, 0.2548296
      %v879 = vadd.f32 %v847, 0.2548296
      %v880 = vadd.f32 %v848, 0.2548296
      %v881 = vadd.f32 %v849, 0.2548296
      %v882 = vadd.f32 %v850, 0.2548296
      %v883 = vadd.f32 %v851, 0.2548296
      %v884 = vadd.f32 %v852, 0.2548296
      %v885 = vadd.f32 %v853, 0.2548296
      %v886 = vadd.f32 %v854, 0.2548296
      %v887 = vadd.f32 %v855, 0.2548296
      %v888 = vadd.f32 %v856, 0.2548296
      %v889 = vmul.f32 %v857, %v570
      %v890 = vmul.f32 %v858, %v572
      %v891 = vmul.f32 %v859, %v574
      %v892 = vmul.f32 %v860, %v576
      %v893 = vmul.f32 %v861, %v578
      %v894 = vmul.f32 %v862, %v580
      %v895 = vmul.f32 %v863, %v582
      %v896 = vmul.f32 %v864, %v584
      %v897 = vmul.f32 %v865, %v586
      %v898 = vmul.f32 %v866, %v588
      %v899 = vmul.f32 %v867, %v590
      %v900 = vmul.f32 %v868, %v592
      %v901 = vmul.f32 %v869, %v594
      %v902 = vmul.f32 %v870, %v596
      %v903 = vmul.f32 %v871, %v598
      %v904 = vmul.f32 %v872, %v600
      %v905 = vmul.f32 %v873, %v602
      %v906 = vmul.f32 %v874, %v604
      %v907 = vmul.f32 %v875, %v606
      %v908 = vmul.f32 %v876, %v608
      %v909 = vmul.f32 %v877, %v610
      %v910 = vmul.f32 %v878, %v612
      %v911 = vmul.f32 %v879, %v614
      %v912 = vmul.f32 %v880, %v616
      %v913 = vmul.f32 %v881, %v618
      %v914 = vmul.f32 %v882, %v620
      %v915 = vmul.f32 %v883, %v622
      %v916 = vmul.f32 %v884, %v624
      %v917 = vmul.f32 %v885, %v626
      %v918 = vmul.f32 %v886, %v628
      %v919 = vmul.f32 %v887, %v630
      %v920 = vmul.f32 %v888, %v632
      %v921 = vsub.f32 0.0, %v473
      %v922 = vsub.f32 0.0, %v474
      %v923 = vsub.f32 0.0, %v475
      %v924 = vsub.f32 0.0, %v476
      %v925 = vsub.f32 0.0, %v477
      %v926 = vsub.f32 0.0, %v478
      %v927 = vsub.f32 0.0, %v479
      %v928 = vsub.f32 0.0, %v480
      %v929 = vsub.f32 0.0, %v481
      %v930 = vsub.f32 0.0, %v482
      %v931 = vsub.f32 0.0, %v483
      %v932 = vsub.f32 0.0, %v484
      %v933 = vsub.f32 0.0, %v485
      %v934 = vsub.f32 0.0, %v486
      %v935 = vsub.f32 0.0, %v487
      %v936 = vsub.f32 0.0, %v488
      %v937 = vsub.f32 0.0, %v489
      %v938 = vsub.f32 0.0, %v490
      %v939 = vsub.f32 0.0, %v491
      %v940 = vsub.f32 0.0, %v492
      %v941 = vsub.f32 0.0, %v493
      %v942 = vsub.f32 0.0, %v494
      %v943 = vsub.f32 0.0, %v495
      %v944 = vsub.f32 0.0, %v496
      %v945 = vsub.f32 0.0, %v497
      %v946 = vsub.f32 0.0, %v498
      %v947 = vsub.f32 0.0, %v499
      %v948 = vsub.f32 0.0, %v500
      %v949 = vsub.f32 0.0, %v501
      %v950 = vsub.f32 0.0, %v502
      %v951 = vsub.f32 0.0, %v503
      %v952 = vsub.f32 0.0, %v504
      %v953 = vmul.f32 %v921, %v473
      %v954 = vmul.f32 %v922, %v474
      %v955 = vmul.f32 %v923, %v475
      %v956 = vmul.f32 %v924, %v476
      %v957 = vmul.f32 %v925, %v477
      %v958 = vmul.f32 %v926, %v478
      %v959 = vmul.f32 %v927, %v479
      %v960 = vmul.f32 %v928, %v480
      %v961 = vmul.f32 %v929, %v481
      %v962 = vmul.f32 %v930, %v482
      %v963 = vmul.f32 %v931, %v483
      %v964 = vmul.f32 %v932, %v484
      %v965 = vmul.f32 %v933, %v485
      %v966 = vmul.f32 %v934, %v486
      %v967 = vmul.f32 %v935, %v487
      %v968 = vmul.f32 %v936, %v488
      %v969 = vmul.f32 %v937, %v489
      %v970 = vmul.f32 %v938, %v490
      %v971 = vmul.f32 %v939, %v491
      %v972 = vmul.f32 %v940, %v492
      %v973 = vmul.f32 %v941, %v493
      %v974 = vmul.f32 %v942, %v494
      %v975 = vmul.f32 %v943, %v495
      %v976 = vmul.f32 %v944, %v496
      %v977 = vmul.f32 %v945, %v497
      %v978 = vmul.f32 %v946, %v498
      %v979 = vmul.f32 %v947, %v499
      %v980 = vmul.f32 %v948, %v500
      %v981 = vmul.f32 %v949, %v501
      %v982 = vmul.f32 %v950, %v502
      %v983 = vmul.f32 %v951, %v503
      %v984 = vmul.f32 %v952, %v504
      %v985 = vmul.f32 %v953, 1.442695
      %v986 = vpow.pop %v985
      %v987 = vmul.f32 %v954, 1.442695
      %v988 = vpow.pop %v987
      %v989 = vmul.f32 %v955, 1.442695
      %v990 = vpow.pop %v989
      %v991 = vmul.f32 %v956, 1.442695
      %v992 = vpow.pop %v991
      %v993 = vmul.f32 %v957, 1.442695
      %v994 = vpow.pop %v993
      %v995 = vmul.f32 %v958, 1.442695
      %v996 = vpow.pop %v995
      %v997 = vmul.f32 %v959, 1.442695
      %v998 = vpow.pop %v997
      %v999 = vmul.f32 %v960, 1.442695
      %v1000 = vpow.pop %v999
      %v1001 = vmul.f32 %v961, 1.442695
      %v1002 = vpow.pop %v1001
      %v1003 = vmul.f32 %v962, 1.442695
      %v1004 = vpow.pop %v1003
      %v1005 = vmul.f32 %v963, 1.442695
      %v1006 = vpow.pop %v1005
      %v1007 = vmul.f32 %v964, 1.442695
      %v1008 = vpow.pop %v1007
      %v1009 = vmul.f32 %v965, 1.442695
      %v1010 = vpow.pop %v1009
      %v1011 = vmul.f32 %v966, 1.442695
      %v1012 = vpow.pop %v1011
      %v1013 = vmul.f32 %v967, 1.442695
      %v1014 = vpow.pop %v1013
      %v1015 = vmul.f32 %v968, 1.442695
      %v1016 = vpow.pop %v1015
      %v1017 = vmul.f32 %v969, 1.442695
      %v1018 = vpow.pop %v1017
      %v1019 = vmul.f32 %v970, 1.442695
      %v1020 = vpow.pop %v1019
      %v1021 = vmul.f32 %v971, 1.442695
      %v1022 = vpow.pop %v1021
      %v1023 = vmul.f32 %v972, 1.442695
      %v1024 = vpow.pop %v1023
      %v1025 = vmul.f32 %v973, 1.442695
      %v1026 = vpow.pop %v1025
      %v1027 = vmul.f32 %v974, 1.442695
      %v1028 = vpow.pop %v1027
      %v1029 = vmul.f32 %v975, 1.442695
      %v1030 = vpow.pop %v1029
      %v1031 = vmul.f32 %v976, 1.442695
      %v1032 = vpow.pop %v1031
      %v1033 = vmul.f32 %v977, 1.442695
      %v1034 = vpow.pop %v1033
      %v1035 = vmul.f32 %v978, 1.442695
      %v1036 = vpow.pop %v1035
      %v1037 = vmul.f32 %v979, 1.442695
      %v1038 = vpow.pop %v1037
      %v1039 = vmul.f32 %v980, 1.442695
      %v1040 = vpow.pop %v1039
      %v1041 = vmul.f32 %v981, 1.442695
      %v1042 = vpow.pop %v1041
      %v1043 = vmul.f32 %v982, 1.442695
      %v1044 = vpow.pop %v1043
      %v1045 = vmul.f32 %v983, 1.442695
      %v1046 = vpow.pop %v1045
      %v1047 = vmul.f32 %v984, 1.442695
      %v1048 = vpow.pop %v1047
      %v1049 = vmul.f32 %v889, %v986
      %v1050 = vmul.f32 %v890, %v988
      %v1051 = vmul.f32 %v891, %v990
      %v1052 = vmul.f32 %v892, %v992
      %v1053 = vmul.f32 %v893, %v994
      %v1054 = vmul.f32 %v894, %v996
      %v1055 = vmul.f32 %v895, %v998
      %v1056 = vmul.f32 %v896, %v1000
      %v1057 = vmul.f32 %v897, %v1002
      %v1058 = vmul.f32 %v898, %v1004
      %v1059 = vmul.f32 %v899, %v1006
      %v1060 = vmul.f32 %v900, %v1008
      %v1061 = vmul.f32 %v901, %v1010
      %v1062 = vmul.f32 %v902, %v1012
      %v1063 = vmul.f32 %v903, %v1014
      %v1064 = vmul.f32 %v904, %v1016
      %v1065 = vmul.f32 %v905, %v1018
      %v1066 = vmul.f32 %v906, %v1020
      %v1067 = vmul.f32 %v907, %v1022
      %v1068 = vmul.f32 %v908, %v1024
      %v1069 = vmul.f32 %v909, %v1026
      %v1070 = vmul.f32 %v910, %v1028
      %v1071 = vmul.f32 %v911, %v1030
      %v1072 = vmul.f32 %v912, %v1032
      %v1073 = vmul.f32 %v913, %v1034
      %v1074 = vmul.f32 %v914, %v1036
      %v1075 = vmul.f32 %v915, %v1038
      %v1076 = vmul.f32 %v916, %v1040
      %v1077 = vmul.f32 %v917, %v1042
      %v1078 = vmul.f32 %v918, %v1044
      %v1079 = vmul.f32 %v919, %v1046
      %v1080 = vmul.f32 %v920, %v1048
      %v1081 = vsub.f32 1.0, %v1049
      %v1082 = vsub.f32 1.0, %v1050
      %v1083 = vsub.f32 1.0, %v1051
      %v1084 = vsub.f32 1.0, %v1052
      %v1085 = vsub.f32 1.0, %v1053
      %v1086 = vsub.f32 1.0, %v1054
      %v1087 = vsub.f32 1.0, %v1055
      %v1088 = vsub.f32 1.0, %v1056
      %v1089 = vsub.f32 1.0, %v1057
      %v1090 = vsub.f32 1.0, %v1058
      %v1091 = vsub.f32 1.0, %v1059
      %v1092 = vsub.f32 1.0, %v1060
      %v1093 = vsub.f32 1.0, %v1061
      %v1094 = vsub.f32 1.0, %v1062
      %v1095 = vsub.f32 1.0, %v1063
      %v1096 = vsub.f32 1.0, %v1064
      %v1097 = vsub.f32 1.0, %v1065
      %v1098 = vsub.f32 1.0, %v1066
      %v1099 = vsub.f32 1.0, %v1067
      %v1100 = vsub.f32 1.0, %v1068
      %v1101 = vsub.f32 1.0, %v1069
      %v1102 = vsub.f32 1.0, %v1070
      %v1103 = vsub.f32 1.0, %v1071
      %v1104 = vsub.f32 1.0, %v1072
      %v1105 = vsub.f32 1.0, %v1073
      %v1106 = vsub.f32 1.0, %v1074
      %v1107 = vsub.f32 1.0, %v1075
      %v1108 = vsub.f32 1.0, %v1076
      %v1109 = vsub.f32 1.0, %v1077
      %v1110 = vsub.f32 1.0, %v1078
      %v1111 = vsub.f32 1.0, %v1079
      %v1112 = vsub.f32 1.0, %v1080
      %vm1113 = vcmp.ge.f32.partialorder %v441, 0.0
      %vm1114 = vcmp.ge.f32.partialorder %v442, 0.0
      %vm1115 = vcmp.ge.f32.partialorder %v443, 0.0
      %vm1116 = vcmp.ge.f32.partialorder %v444, 0.0
      %vm1117 = vcmp.ge.f32.partialorder %v445, 0.0
      %vm1118 = vcmp.ge.f32.partialorder %v446, 0.0
      %vm1119 = vcmp.ge.f32.partialorder %v447, 0.0
      %vm1120 = vcmp.ge.f32.partialorder %v448, 0.0
      %vm1121 = vcmp.ge.f32.partialorder %v449, 0.0
      %vm1122 = vcmp.ge.f32.partialorder %v450, 0.0
      %vm1123 = vcmp.ge.f32.partialorder %v451, 0.0
      %vm1124 = vcmp.ge.f32.partialorder %v452, 0.0
      %vm1125 = vcmp.ge.f32.partialorder %v453, 0.0
      %vm1126 = vcmp.ge.f32.partialorder %v454, 0.0
      %vm1127 = vcmp.ge.f32.partialorder %v455, 0.0
      %vm1128 = vcmp.ge.f32.partialorder %v456, 0.0
      %vm1129 = vcmp.ge.f32.partialorder %v457, 0.0
      %vm1130 = vcmp.ge.f32.partialorder %v458, 0.0
      %vm1131 = vcmp.ge.f32.partialorder %v459, 0.0
      %vm1132 = vcmp.ge.f32.partialorder %v460, 0.0
      %vm1133 = vcmp.ge.f32.partialorder %v461, 0.0
      %vm1134 = vcmp.ge.f32.partialorder %v462, 0.0
      %vm1135 = vcmp.ge.f32.partialorder %v463, 0.0
      %vm1136 = vcmp.ge.f32.partialorder %v464, 0.0
      %vm1137 = vcmp.ge.f32.partialorder %v465, 0.0
      %vm1138 = vcmp.ge.f32.partialorder %v466, 0.0
      %vm1139 = vcmp.ge.f32.partialorder %v467, 0.0
      %vm1140 = vcmp.ge.f32.partialorder %v468, 0.0
      %vm1141 = vcmp.ge.f32.partialorder %v469, 0.0
      %vm1142 = vcmp.ge.f32.partialorder %v470, 0.0
      %vm1143 = vcmp.ge.f32.partialorder %v471, 0.0
      %vm1144 = vcmp.ge.f32.partialorder %v472, 0.0
      %v1145 = vsub.f32 0.0, %v1081
      %v1146 = vsub.f32 0.0, %v1082
      %v1147 = vsub.f32 0.0, %v1083
      %v1148 = vsub.f32 0.0, %v1084
      %v1149 = vsub.f32 0.0, %v1085
      %v1150 = vsub.f32 0.0, %v1086
      %v1151 = vsub.f32 0.0, %v1087
      %v1152 = vsub.f32 0.0, %v1088
      %v1153 = vsub.f32 0.0, %v1089
      %v1154 = vsub.f32 0.0, %v1090
      %v1155 = vsub.f32 0.0, %v1091
      %v1156 = vsub.f32 0.0, %v1092
      %v1157 = vsub.f32 0.0, %v1093
      %v1158 = vsub.f32 0.0, %v1094
      %v1159 = vsub.f32 0.0, %v1095
      %v1160 = vsub.f32 0.0, %v1096
      %v1161 = vsub.f32 0.0, %v1097
      %v1162 = vsub.f32 0.0, %v1098
      %v1163 = vsub.f32 0.0, %v1099
      %v1164 = vsub.f32 0.0, %v1100
      %v1165 = vsub.f32 0.0, %v1101
      %v1166 = vsub.f32 0.0, %v1102
      %v1167 = vsub.f32 0.0, %v1103
      %v1168 = vsub.f32 0.0, %v1104
      %v1169 = vsub.f32 0.0, %v1105
      %v1170 = vsub.f32 0.0, %v1106
      %v1171 = vsub.f32 0.0, %v1107
      %v1172 = vsub.f32 0.0, %v1108
      %v1173 = vsub.f32 0.0, %v1109
      %v1174 = vsub.f32 0.0, %v1110
      %v1175 = vsub.f32 0.0, %v1111
      %v1176 = vsub.f32 0.0, %v1112
      %v1177 = vsel %vm1113, %v1081, %v1145
      %v1178 = vsel %vm1114, %v1082, %v1146
      %v1179 = vsel %vm1115, %v1083, %v1147
      %v1180 = vsel %vm1116, %v1084, %v1148
      %v1181 = vsel %vm1117, %v1085, %v1149
      %v1182 = vsel %vm1118, %v1086, %v1150
      %v1183 = vsel %vm1119, %v1087, %v1151
      %v1184 = vsel %vm1120, %v1088, %v1152
      %v1185 = vsel %vm1121, %v1089, %v1153
      %v1186 = vsel %vm1122, %v1090, %v1154
      %v1187 = vsel %vm1123, %v1091, %v1155
      %v1188 = vsel %vm1124, %v1092, %v1156
      %v1189 = vsel %vm1125, %v1093, %v1157
      %v1190 = vsel %vm1126, %v1094, %v1158
      %v1191 = vsel %vm1127, %v1095, %v1159
      %v1192 = vsel %vm1128, %v1096, %v1160
      %v1193 = vsel %vm1129, %v1097, %v1161
      %v1194 = vsel %vm1130, %v1098, %v1162
      %v1195 = vsel %vm1131, %v1099, %v1163
      %v1196 = vsel %vm1132, %v1100, %v1164
      %v1197 = vsel %vm1133, %v1101, %v1165
      %v1198 = vsel %vm1134, %v1102, %v1166
      %v1199 = vsel %vm1135, %v1103, %v1167
      %v1200 = vsel %vm1136, %v1104, %v1168
      %v1201 = vsel %vm1137, %v1105, %v1169
      %v1202 = vsel %vm1138, %v1106, %v1170
      %v1203 = vsel %vm1139, %v1107, %v1171
      %v1204 = vsel %vm1140, %v1108, %v1172
      %v1205 = vsel %vm1141, %v1109, %v1173
      %v1206 = vsel %vm1142, %v1110, %v1174
      %v1207 = vsel %vm1143, %v1111, %v1175
      %v1208 = vsel %vm1144, %v1112, %v1176
      %v1209 = vadd.f32 %v1177, 1.0
      %v1210 = vadd.f32 %v1178, 1.0
      %v1211 = vadd.f32 %v1179, 1.0
      %v1212 = vadd.f32 %v1180, 1.0
      %v1213 = vadd.f32 %v1181, 1.0
      %v1214 = vadd.f32 %v1182, 1.0
      %v1215 = vadd.f32 %v1183, 1.0
      %v1216 = vadd.f32 %v1184, 1.0
      %v1217 = vadd.f32 %v1185, 1.0
      %v1218 = vadd.f32 %v1186, 1.0
      %v1219 = vadd.f32 %v1187, 1.0
      %v1220 = vadd.f32 %v1188, 1.0
      %v1221 = vadd.f32 %v1189, 1.0
      %v1222 = vadd.f32 %v1190, 1.0
      %v1223 = vadd.f32 %v1191, 1.0
      %v1224 = vadd.f32 %v1192, 1.0
      %v1225 = vadd.f32 %v1193, 1.0
      %v1226 = vadd.f32 %v1194, 1.0
      %v1227 = vadd.f32 %v1195, 1.0
      %v1228 = vadd.f32 %v1196, 1.0
      %v1229 = vadd.f32 %v1197, 1.0
      %v1230 = vadd.f32 %v1198, 1.0
      %v1231 = vadd.f32 %v1199, 1.0
      %v1232 = vadd.f32 %v1200, 1.0
      %v1233 = vadd.f32 %v1201, 1.0
      %v1234 = vadd.f32 %v1202, 1.0
      %v1235 = vadd.f32 %v1203, 1.0
      %v1236 = vadd.f32 %v1204, 1.0
      %v1237 = vadd.f32 %v1205, 1.0
      %v1238 = vadd.f32 %v1206, 1.0
      %v1239 = vadd.f32 %v1207, 1.0
      %v1240 = vadd.f32 %v1208, 1.0
      %v1241 = vmul.f32 %v409, %v1209
      %v1242 = vmul.f32 %v410, %v1210
      %v1243 = vmul.f32 %v411, %v1211
      %v1244 = vmul.f32 %v412, %v1212
      %v1245 = vmul.f32 %v413, %v1213
      %v1246 = vmul.f32 %v414, %v1214
      %v1247 = vmul.f32 %v415, %v1215
      %v1248 = vmul.f32 %v416, %v1216
      %v1249 = vmul.f32 %v417, %v1217
      %v1250 = vmul.f32 %v418, %v1218
      %v1251 = vmul.f32 %v419, %v1219
      %v1252 = vmul.f32 %v420, %v1220
      %v1253 = vmul.f32 %v421, %v1221
      %v1254 = vmul.f32 %v422, %v1222
      %v1255 = vmul.f32 %v423, %v1223
      %v1256 = vmul.f32 %v424, %v1224
      %v1257 = vmul.f32 %v425, %v1225
      %v1258 = vmul.f32 %v426, %v1226
      %v1259 = vmul.f32 %v427, %v1227
      %v1260 = vmul.f32 %v428, %v1228
      %v1261 = vmul.f32 %v429, %v1229
      %v1262 = vmul.f32 %v430, %v1230
      %v1263 = vmul.f32 %v431, %v1231
      %v1264 = vmul.f32 %v432, %v1232
      %v1265 = vmul.f32 %v433, %v1233
      %v1266 = vmul.f32 %v434, %v1234
      %v1267 = vmul.f32 %v435, %v1235
      %v1268 = vmul.f32 %v436, %v1236
      %v1269 = vmul.f32 %v437, %v1237
      %v1270 = vmul.f32 %v438, %v1238
      %v1271 = vmul.f32 %v439, %v1239
      %v1272 = vmul.f32 %v440, %v1240
      %v1273 = vmax.f32 %v1241, %v1243
      %v1274 = vmax.f32 %v1242, %v1244
      %v1275 = vmax.f32 %v1245, %v1247
      %v1276 = vmax.f32 %v1246, %v1248
      %v1277 = vmax.f32 %v1249, %v1251
      %v1278 = vmax.f32 %v1250, %v1252
      %v1279 = vmax.f32 %v1253, %v1255
      %v1280 = vmax.f32 %v1254, %v1256
      %v1281 = vmax.f32 %v1257, %v1259
      %v1282 = vmax.f32 %v1258, %v1260
      %v1283 = vmax.f32 %v1261, %v1263
      %v1284 = vmax.f32 %v1262, %v1264
      %v1285 = vmax.f32 %v1265, %v1267
      %v1286 = vmax.f32 %v1266, %v1268
      %v1287 = vmax.f32 %v1269, %v1271
      %v1288 = vmax.f32 %v1270, %v1272
      %v1289 = vld [vmem:[%s3] sm:$0xff]
      %v1290 = vld [vmem:[%s3 + $0x8] sm:$0xff]
      %v1291 = vld [vmem:[%s3 + $0x10] sm:$0xff]
      %v1292 = vld [vmem:[%s3 + $0x18] sm:$0xff]
      %v1293 = vld [vmem:[%s3 + $0x20] sm:$0xff]
      %v1294 = vld [vmem:[%s3 + $0x28] sm:$0xff]
      %v1295 = vld [vmem:[%s3 + $0x30] sm:$0xff]
      %v1296 = vld [vmem:[%s3 + $0x38] sm:$0xff]
      %1297 = vmatprep.subr.mxu0 0.0
      %1298 = vmatpush1.msra.mxu0 %v1273
      %1299 = vmatprep.subr.mxu0 0.0
      %1300 = vmatpush1.msra.mxu0 %v1274
      %1301 = vmatprep.subr.mxu0 0.0
      %1302 = vmatpush1.msra.mxu0 %v1275
      %1303 = vmatprep.subr.mxu0 0.0
      %1304 = vmatpush1.msra.mxu0 %v1276
      %1305 = vmatprep.subr.mxu0 0.0
      %1306 = vmatpush1.msra.mxu0 %v1277
      %1307 = vmatprep.subr.mxu0 0.0
      %1308 = vmatpush1.msra.mxu0 %v1278
      %1309 = vmatprep.subr.mxu0 0.0
      %1310 = vmatpush1.msra.mxu0 %v1279
      %1311 = vmatprep.subr.mxu0 0.0
      %1312 = vmatpush1.msra.mxu0 %v1280
      %1313 = vmatprep.subr.mxu0 0.0
      %1314 = vmatpush1.msra.mxu0 %v1281
      %1315 = vmatprep.subr.mxu0 0.0
      %1316 = vmatpush1.msra.mxu0 %v1282
      %1317 = vmatprep.subr.mxu0 0.0
      %1318 = vmatpush1.msra.mxu0 %v1283
      %1319 = vmatprep.subr.mxu0 0.0
      %1320 = vmatpush1.msra.mxu0 %v1284
      %1321 = vmatprep.subr.mxu0 0.0
      %1322 = vmatpush1.msra.mxu0 %v1285
      %1323 = vmatprep.subr.mxu0 0.0
      %1324 = vmatpush1.msra.mxu0 %v1286
      %1325 = vmatprep.subr.mxu0 0.0
      %1326 = vmatpush1.msra.mxu0 %v1287
      %1327 = vmatprep.subr.mxu0 0.0
      %1328 = vmatpush1.msra.mxu0 %v1288
      %1329 = vmatprep.subr.mxu0 0.0
      %1330 = vmatpush1.msra.mxu0 0.0
      %1331 = vmatprep.subr.mxu0 0.0
      %1332 = vmatpush1.msra.mxu0 0.0
      %1333 = vmatprep.subr.mxu0 0.0
      %1334 = vmatpush1.msra.mxu0 0.0
      %1335 = vmatprep.subr.mxu0 0.0
      %1336 = vmatpush1.msra.mxu0 0.0
      %1337 = vmatprep.subr.mxu0 0.0
      %1338 = vmatpush1.msra.mxu0 0.0
      %1339 = vmatprep.subr.mxu0 0.0
      %1340 = vmatpush1.msra.mxu0 0.0
      %1341 = vmatprep.subr.mxu0 0.0
      %1342 = vmatpush1.msra.mxu0 0.0
      %1343 = vmatprep.subr.mxu0 0.0
      %1344 = vmatpush1.msra.mxu0 0.0
      %1345 = vmatprep.subr.mxu0 0.0
      %1346 = vmatpush1.msra.mxu0 0.0
      %1347 = vmatprep.subr.mxu0 0.0
      %1348 = vmatpush1.msra.mxu0 0.0
      %1349 = vmatprep.subr.mxu0 0.0
      %1350 = vmatpush1.msra.mxu0 0.0
      %1351 = vmatprep.subr.mxu0 0.0
      %1352 = vmatpush1.msra.mxu0 0.0
      %1353 = vmatprep.subr.mxu0 0.0
      %1354 = vmatpush1.msra.mxu0 0.0
      %1355 = vmatprep.subr.mxu0 0.0
      %1356 = vmatpush1.msra.mxu0 0.0
      %1357 = vmatprep.subr.mxu0 0.0
      %1358 = vmatpush1.msra.mxu0 0.0
      %1359 = vmatprep.subr.mxu0 0.0
      %1360 = vmatpush1.msra.mxu0 0.0
      %1361 = vmatprep.mubr.f32.mxu0 0.0
      %1362 = vmatmul.mubr.f32.gmra.mrb[0].mxu0 %v1289
      %v1363 = vpop.f32.mrb[0].mxu0
      %v1364 = vadd.f32 0.0, %v1363
      %v1365 = vpop.f32.mrb[0].mxu0
      %1366 = vmatprep.mubr.f32.mxu0 0.0
      %1367 = vmatmul.mubr.f32.gmra.mrb[0].mxu0 %v1290
      %v1368 = vpop.f32.mrb[0].mxu0
      %v1369 = vadd.f32 0.0, %v1368
      %v1370 = vpop.f32.mrb[0].mxu0
      %1371 = vmatprep.mubr.f32.mxu0 0.0
      %1372 = vmatmul.mubr.f32.gmra.mrb[0].mxu0 %v1291
      %v1373 = vpop.f32.mrb[0].mxu0
      %v1374 = vadd.f32 0.0, %v1373
      %v1375 = vpop.f32.mrb[0].mxu0
      %1376 = vmatprep.mubr.f32.mxu0 0.0
      %1377 = vmatmul.mubr.f32.gmra.mrb[0].mxu0 %v1292
      %v1378 = vpop.f32.mrb[0].mxu0
      %v1379 = vadd.f32 0.0, %v1378
      %v1380 = vpop.f32.mrb[0].mxu0
      %1381 = vmatprep.mubr.f32.mxu0 0.0
      %1382 = vmatmul.mubr.f32.gmra.mrb[0].mxu0 %v1293
      %v1383 = vpop.f32.mrb[0].mxu0
      %v1384 = vadd.f32 0.0, %v1383
      %v1385 = vpop.f32.mrb[0].mxu0
      %1386 = vmatprep.mubr.f32.mxu0 0.0
      %1387 = vmatmul.mubr.f32.gmra.mrb[0].mxu0 %v1294
      %v1388 = vpop.f32.mrb[0].mxu0
      %v1389 = vadd.f32 0.0, %v1388
      %v1390 = vpop.f32.mrb[0].mxu0
      %1391 = vmatprep.mubr.f32.mxu0 0.0
      %1392 = vmatmul.mubr.f32.gmra.mrb[0].mxu0 %v1295
      %v1393 = vpop.f32.mrb[0].mxu0
      %v1394 = vadd.f32 0.0, %v1393
      %v1395 = vpop.f32.mrb[0].mxu0
      %1396 = vmatprep.mubr.f32.mxu0 0.0
      %1397 = vmatmul.mubr.f32.gmra.mrb[0].mxu0 %v1296
      %v1398 = vpop.f32.mrb[0].mxu0
      %v1399 = vadd.f32 0.0, %v1398
      %v1400 = vpop.f32.mrb[0].mxu0
      %1401 = vdwg.mxu0
      %v1402 = vld [vmem:[%s4] sm:$0xff]
      %v1403 = vld [vmem:[%s4 + $0x8] sm:$0xff]
      %v1404 = vld [vmem:[%s4 + $0x10] sm:$0xff]
      %v1405 = vld [vmem:[%s4 + $0x18] sm:$0xff]
      %v1406 = vld [vmem:[%s4 + $0x20] sm:$0xff]
      %v1407 = vld [vmem:[%s4 + $0x28] sm:$0xff]
      %v1408 = vld [vmem:[%s4 + $0x30] sm:$0xff]
      %v1409 = vld [vmem:[%s4 + $0x38] sm:$0xff]
      %1410 = vmatprep.subr.mxu0 0.0
      %1411 = vmatpush1.msra.mxu0 %v1273
      %1412 = vmatprep.subr.mxu0 0.0
      %1413 = vmatpush1.msra.mxu0 %v1274
      %1414 = vmatprep.subr.mxu0 0.0
      %1415 = vmatpush1.msra.mxu0 %v1275
      %1416 = vmatprep.subr.mxu0 0.0
      %1417 = vmatpush1.msra.mxu0 %v1276
      %1418 = vmatprep.subr.mxu0 0.0
      %1419 = vmatpush1.msra.mxu0 %v1277
      %1420 = vmatprep.subr.mxu0 0.0
      %1421 = vmatpush1.msra.mxu0 %v1278
      %1422 = vmatprep.subr.mxu0 0.0
      %1423 = vmatpush1.msra.mxu0 %v1279
      %1424 = vmatprep.subr.mxu0 0.0
      %1425 = vmatpush1.msra.mxu0 %v1280
      %1426 = vmatprep.subr.mxu0 0.0
      %1427 = vmatpush1.msra.mxu0 %v1281
      %1428 = vmatprep.subr.mxu0 0.0
      %1429 = vmatpush1.msra.mxu0 %v1282
      %1430 = vmatprep.subr.mxu0 0.0
      %1431 = vmatpush1.msra.mxu0 %v1283
      %1432 = vmatprep.subr.mxu0 0.0
      %1433 = vmatpush1.msra.mxu0 %v1284
      %1434 = vmatprep.subr.mxu0 0.0
      %1435 = vmatpush1.msra.mxu0 %v1285
      %1436 = vmatprep.subr.mxu0 0.0
      %1437 = vmatpush1.msra.mxu0 %v1286
      %1438 = vmatprep.subr.mxu0 0.0
      %1439 = vmatpush1.msra.mxu0 %v1287
      %1440 = vmatprep.subr.mxu0 0.0
      %1441 = vmatpush1.msra.mxu0 %v1288
      %1442 = vmatprep.subr.mxu0 0.0
      %1443 = vmatpush1.msra.mxu0 0.0
      %1444 = vmatprep.subr.mxu0 0.0
      %1445 = vmatpush1.msra.mxu0 0.0
      %1446 = vmatprep.subr.mxu0 0.0
      %1447 = vmatpush1.msra.mxu0 0.0
      %1448 = vmatprep.subr.mxu0 0.0
      %1449 = vmatpush1.msra.mxu0 0.0
      %1450 = vmatprep.subr.mxu0 0.0
      %1451 = vmatpush1.msra.mxu0 0.0
      %1452 = vmatprep.subr.mxu0 0.0
      %1453 = vmatpush1.msra.mxu0 0.0
      %1454 = vmatprep.subr.mxu0 0.0
      %1455 = vmatpush1.msra.mxu0 0.0
      %1456 = vmatprep.subr.mxu0 0.0
      %1457 = vmatpush1.msra.mxu0 0.0
      %1458 = vmatprep.subr.mxu0 0.0
      %1459 = vmatpush1.msra.mxu0 0.0
      %1460 = vmatprep.subr.mxu0 0.0
      %1461 = vmatpush1.msra.mxu0 0.0
      %1462 = vmatprep.subr.mxu0 0.0
      %1463 = vmatpush1.msra.mxu0 0.0
      %1464 = vmatprep.subr.mxu0 0.0
      %1465 = vmatpush1.msra.mxu0 0.0
      %1466 = vmatprep.subr.mxu0 0.0
      %1467 = vmatpush1.msra.mxu0 0.0
      %1468 = vmatprep.subr.mxu0 0.0
      %1469 = vmatpush1.msra.mxu0 0.0
      %1470 = vmatprep.subr.mxu0 0.0
      %1471 = vmatpush1.msra.mxu0 0.0
      %1472 = vmatprep.subr.mxu0 0.0
      %1473 = vmatpush1.msra.mxu0 0.0
      %1474 = vmatprep.mubr.f32.mxu0 0.0
      %1475 = vmatmul.mubr.f32.gmra.mrb[0].mxu0 %v1402
      %v1476 = vpop.f32.mrb[0].mxu0
      %v1477 = vadd.f32 0.0, %v1476
      %v1478 = vpop.f32.mrb[0].mxu0
      %1479 = vmatprep.mubr.f32.mxu0 0.0
      %1480 = vmatmul.mubr.f32.gmra.mrb[0].mxu0 %v1403
      %v1481 = vpop.f32.mrb[0].mxu0
      %v1482 = vadd.f32 0.0, %v1481
      %v1483 = vpop.f32.mrb[0].mxu0
      %1484 = vmatprep.mubr.f32.mxu0 0.0
      %1485 = vmatmul.mubr.f32.gmra.mrb[0].mxu0 %v1404
      %v1486 = vpop.f32.mrb[0].mxu0
      %v1487 = vadd.f32 0.0, %v1486
      %v1488 = vpop.f32.mrb[0].mxu0
      %1489 = vmatprep.mubr.f32.mxu0 0.0
      %1490 = vmatmul.mubr.f32.gmra.mrb[0].mxu0 %v1405
      %v1491 = vpop.f32.mrb[0].mxu0
      %v1492 = vadd.f32 0.0, %v1491
      %v1493 = vpop.f32.mrb[0].mxu0
      %1494 = vmatprep.mubr.f32.mxu0 0.0
      %1495 = vmatmul.mubr.f32.gmra.mrb[0].mxu0 %v1406
      %v1496 = vpop.f32.mrb[0].mxu0
      %v1497 = vadd.f32 0.0, %v1496
      %v1498 = vpop.f32.mrb[0].mxu0
      %1499 = vmatprep.mubr.f32.mxu0 0.0
      %1500 = vmatmul.mubr.f32.gmra.mrb[0].mxu0 %v1407
      %v1501 = vpop.f32.mrb[0].mxu0
      %v1502 = vadd.f32 0.0, %v1501
      %v1503 = vpop.f32.mrb[0].mxu0
      %1504 = vmatprep.mubr.f32.mxu0 0.0
      %1505 = vmatmul.mubr.f32.gmra.mrb[0].mxu0 %v1408
      %v1506 = vpop.f32.mrb[0].mxu0
      %v1507 = vadd.f32 0.0, %v1506
      %v1508 = vpop.f32.mrb[0].mxu0
      %1509 = vmatprep.mubr.f32.mxu0 0.0
      %1510 = vmatmul.mubr.f32.gmra.mrb[0].mxu0 %v1409
      %v1511 = vpop.f32.mrb[0].mxu0
      %v1512 = vadd.f32 0.0, %v1511
      %v1513 = vpop.f32.mrb[0].mxu0
      %1514 = vdwg.mxu0
      %v1515 = vmax.f32 %v1364, %v1477
      %v1516 = vmax.f32 %v1369, %v1482
      %v1517 = vmax.f32 %v1374, %v1487
      %v1518 = vmax.f32 %v1379, %v1492
      %v1519 = vmax.f32 %v1384, %v1497
      %v1520 = vmax.f32 %v1389, %v1502
      %v1521 = vmax.f32 %v1394, %v1507
      %v1522 = vmax.f32 %v1399, %v1512
      %1523 = vst [vmem:[%s265] sm:$0xff] %v1515
      %1524 = vst [vmem:[%s265 + $0x8] sm:$0xff] %v1516
      %1525 = vst [vmem:[%s265 + $0x10] sm:$0xff] %v1517
      %1526 = vst [vmem:[%s265 + $0x18] sm:$0xff] %v1518
      %1527 = vst [vmem:[%s265 + $0x20] sm:$0xff] %v1519
      %1528 = vst [vmem:[%s265 + $0x28] sm:$0xff] %v1520
      %1529 = vst [vmem:[%s265 + $0x30] sm:$0xff] %v1521
      %1530 = vst [vmem:[%s265 + $0x38] sm:$0xff] %v1522
      %s1531 = smul.u32 8, %s21
      %p1532 = scmp.lt.s32.totalorder %s20, 1
      %s1533 = scalar_select %p1532, %s20, 1
      %p1534 = scmp.lt.s32.totalorder %s1531, 7
      %s1535 = scalar_select %p1534, %s1531, 7
      %s1536 = smul.addr %s1533, 8
      %s1537 = sadd.s32 %s1535, %s1536
      %s1538 = smul.addr %s1537, 8
      %s1539 = scalar_lea.vmem %s5, %s1538
      // Predicated region
      $region41: #{unet_down.5} parent=39 // pred_check
        %p1540 = pneg %p160
      $region42: #{unet_down.5} parent=39 // pred_check_branch
        %1542 = sbr.rel (%p1540) target = $region44
      $region43: #{unet_down.5} parent=39 // pred_region
        %s1543 = smul.u32 8, %s21
      $region44: #{unet_down.5} parent=39 // pred_fallthru
        _
    $region40: #{unet_down.5} parent=5 // pred_fallthru
      _
    %p1544 = scmp.le.s32.totalorder 2, %s11
    // Predicated region
    $region45: #{unet_down.5} parent=5 // pred_check
      %p1545 = pneg %p1544
    $region46: #{unet_down.5} parent=5 // pred_check_branch
      %1547 = sbr.rel (%p1545) target = $region48
    $region47: #{unet_down.5} parent=5 // pred_region
      %s1548 = ssub.s32 %s11, 2
      // Predicated region
      $region49: #{unet_down.5} parent=47 // pred_check
        %p1549 = pneg %p166
      $region50: #{unet_down.5} parent=47 // pred_check_branch
        %1551 = sbr.rel (%p1549) target = $region52
      $region51: #{unet_down.5} parent=47 // pred_region
        %s1552 = smul.u32 8, %s23
        %p1553 = scmp.lt.s32.totalorder %s22, 1
        %s1554 = scalar_select %p1553, %s22, 1
        %p1555 = scmp.lt.s32.totalorder %s1552, 7
        %s1556 = scalar_select %p1555, %s1552, 7
        %s1557 = smul.addr %s1554, 8
        %s1558 = sadd.s32 %s1556, %s1557
        %s1559 = smul.addr %s1558, 8
        %s1560 = scalar_lea.vmem %s5, %s1559
      $region52: #{unet_down.5} parent=47 // pred_fallthru
        _
    $region48: #{unet_down.5} parent=5 // pred_fallthru
      _
  $region6: #{unet_down.5} parent=0 // loop_footer
    %s15 = sadd.s32 1, %s11
  $region7: #{unet_down.5} parent=0 // loop_footer_branch
    %10 = sbr.rel target = $region3
  $region8: #{unet_down.5} parent=0 // loop_exit
    _

// kernel: unet_down.3
$region0: #{unet_down.3}
  #allocation0 [shape = 'u32[]', space=smem, size = 0x4, offset = 0x4, fixed_abs, tag = 'smem constant byte address 0x4 - core index']
  #allocation1 [shape = 'u32[144,128]{1,0:T(1,128)}', space=vmem, size = 0x12000, scoped, tag = 'internal scratch']
  %s0 = inlined_call_operand.vmem [shape: bf16[2,16,16,128], index: 0, kind: input, shape index: {}, may-alias: {0,1,2}]
  %s1 = inlined_call_operand.vmem [shape: bf16[2,16,16,128], index: 1, kind: input, shape index: {}, may-alias: {0,1,2}]
  %s2 = inlined_call_operand.vmem [shape: bf16[2,16,16,128], index: 2, kind: input, shape index: {}, may-alias: {0,1,2}]
  %s3 = inlined_call_operand.vmem [shape: bf16[1152,128], index: 3, kind: input, shape index: {}]
  %s4 = inlined_call_operand.vmem [shape: f32[1,128], index: 4, kind: input, shape index: {}]
  %s5 = inlined_call_operand.vmem [shape: bf16[2,16,16,128], index: 5, kind: output, shape index: {0}]
  %s6 = inlined_call_operand.vmem [shape: f32[2,2,128], index: 6, kind: output, shape index: {1}]
  %7 = xla_tuple %s5, %s6
  %s8 = sld [smem:[#allocation0]]
  $region65: #{unet_down.3} parent=0
    _
  %s10 = ssub.s32 1, %s8
  %s11 = scalar_select 0, %s10, %s8
  loop: start=0, step=1, limit=4
  $region2: #{unet_down.3} parent=0 // loop_pre_header
    _
  $region3: #{unet_down.3} parent=0 // loop_header
    %s13 = sphi 0, %s17
    %p14 = scmp.ge.s32.totalorder %s13, 4
    %s20 = sphi 0, %s32
    %s21 = sphi 0, %s28
    %s22 = sphi 0, %s20
    %s23 = sphi 0, %s21
    %s24 = sphi 0, %s22
    %s25 = sphi 0, %s23
    %s45 = sphi 0, %s47
    %s48 = sphi 0, %s45
    %s49 = sphi 0, %s48
    %s65 = sphi 0, %s49
    %s73 = sphi 0, %s75
    %s76 = sphi 0, %s73
    %s77 = sphi 0, %s76
    %s93 = sphi 0, %s77
    %s109 = sphi 0, %s111
    %s112 = sphi 0, %s109
    %s113 = sphi 0, %s112
    %s129 = sphi 0, %s113
    %s133 = sphi 0, %s133
    %s135 = sphi 0, %s133
    %s136 = sphi 0, %s135
    %s150 = sphi 0, %s136
    %s154 = sphi 0, %s154
    %s156 = sphi 0, %s154
    %s157 = sphi 0, %s156
    %s171 = sphi 0, %s157
    %s179 = sphi 0, %s181
    %s182 = sphi 0, %s179
    %s183 = sphi 0, %s182
    %s199 = sphi 0, %s183
    %s205 = sphi 0, %s207
    %s208 = sphi 0, %s205
    %s209 = sphi 0, %s208
    %s225 = sphi 0, %s209
  $region4: #{unet_down.3} parent=0 // loop_header_branch
    %16 = sbr.rel (%p14) target = $region8
  $region5: #{unet_down.3} parent=0 // loop_body
    %s18 = ssub.s32 %s13, 1
    %s19 = ssub.s32 %s13, 2
    %s26 = sadd.s32 1, %s21
    %p27 = scmp.ge.s32.totalorder %s26, 1
    %s28 = scalar_select %p27, 0, %s26
    %s29 = sadd.s32 1, %s20
    %s30 = scalar_select %p27, %s29, %s20
    %p31 = scmp.ge.s32.totalorder %s30, 2
    %s32 = scalar_select %p31, 0, %s30
    %s33 = smul.u32 %s21, 16
    %s34 = ssub.s32 %s33, 1
    %p35 = scmp.gt.s32.totalorder %s34, 0
    %s36 = scalar_select %p35, %s34, 0
    %s37 = smul.u32 %s28, 16
    %s38 = ssub.s32 %s37, 1
    %p39 = scmp.gt.s32.totalorder %s38, 0
    %s40 = scalar_select %p39, %s38, 0
    %s41 = ssub.s32 %s20, %s32
    %s42 = ssub.s32 %s36, %s40
    %s43 = sor.u32 %s41, %s42
    %p44 = scmp.eq.s32.totalorder %s43, 0
    %s46 = sadd.s32 %s45, 1
    %s47 = scalar_select %p44, %s45, %s46
    %p50 = pneg %p44
    %p51 = scmp.eq.s32.totalorder %s13, 1
    %p52 = por %p50, %p51
    %p53 = scmp.ne.s32.totalorder %s45, %s48
    %p54 = scmp.eq.s32.totalorder %s13, 0
    %p55 = por %p53, %p54
    %p56 = scmp.ne.s32.totalorder %s45, %s48
    %p57 = scmp.eq.s32.totalorder %s18, 1
    %p58 = por %p56, %p57
    %p59 = scmp.ne.s32.totalorder %s48, %s49
    %p60 = scmp.eq.s32.totalorder %s18, 0
    %p61 = por %p59, %p60
    %p62 = scmp.ne.s32.totalorder %s48, %s49
    %p63 = scmp.eq.s32.totalorder %s19, 1
    %p64 = por %p62, %p63
    %p66 = scmp.ne.s32.totalorder %s49, %s65
    %p67 = scmp.eq.s32.totalorder %s19, 0
    %p68 = por %p66, %p67
    %s69 = ssub.s32 %s20, %s32
    %s70 = ssub.s32 %s21, %s28
    %s71 = sor.u32 %s69, %s70
    %p72 = scmp.eq.s32.totalorder %s71, 0
    %s74 = sadd.s32 %s73, 1
    %s75 = scalar_select %p72, %s73, %s74
    %p78 = pneg %p72
    %p79 = scmp.eq.s32.totalorder %s13, 1
    %p80 = por %p78, %p79
    %p81 = scmp.ne.s32.totalorder %s73, %s76
    %p82 = scmp.eq.s32.totalorder %s13, 0
    %p83 = por %p81, %p82
    %p84 = scmp.ne.s32.totalorder %s73, %s76
    %p85 = scmp.eq.s32.totalorder %s18, 1
    %p86 = por %p84, %p85
    %p87 = scmp.ne.s32.totalorder %s76, %s77
    %p88 = scmp.eq.s32.totalorder %s18, 0
    %p89 = por %p87, %p88
    %p90 = scmp.ne.s32.totalorder %s76, %s77
    %p91 = scmp.eq.s32.totalorder %s19, 1
    %p92 = por %p90, %p91
    %p94 = scmp.ne.s32.totalorder %s77, %s93
    %p95 = scmp.eq.s32.totalorder %s19, 0
    %p96 = por %p94, %p95
    %s97 = sadd.s32 %s21, 1
    %s98 = smul.u32 %s97, 16
    %p99 = scmp.lt.s32.totalorder %s98, 15
    %s100 = scalar_select %p99, %s98, 15
    %s101 = sadd.s32 %s28, 1
    %s102 = smul.u32 %s101, 16
    %p103 = scmp.lt.s32.totalorder %s102, 15
    %s104 = scalar_select %p103, %s102, 15
    %s105 = ssub.s32 %s20, %s32
    %s106 = ssub.s32 %s100, %s104
    %s107 = sor.u32 %s105, %s106
    %p108 = scmp.eq.s32.totalorder %s107, 0
    %s110 = sadd.s32 %s109, 1
    %s111 = scalar_select %p108, %s109, %s110
    %p114 = pneg %p108
    %p115 = scmp.eq.s32.totalorder %s13, 1
    %p116 = por %p114, %p115
    %p117 = scmp.ne.s32.totalorder %s109, %s112
    %p118 = scmp.eq.s32.totalorder %s13, 0
    %p119 = por %p117, %p118
    %p120 = scmp.ne.s32.totalorder %s109, %s112
    %p121 = scmp.eq.s32.totalorder %s18, 1
    %p122 = por %p120, %p121
    %p123 = scmp.ne.s32.totalorder %s112, %s113
    %p124 = scmp.eq.s32.totalorder %s18, 0
    %p125 = por %p123, %p124
    %p126 = scmp.ne.s32.totalorder %s112, %s113
    %p127 = scmp.eq.s32.totalorder %s19, 1
    %p128 = por %p126, %p127
    %p130 = scmp.ne.s32.totalorder %s113, %s129
    %p131 = scmp.eq.s32.totalorder %s19, 0
    %p132 = por %p130, %p131
    %s134 = sadd.s32 %s133, 1
    %p137 = scmp.eq.s32.totalorder %s13, 1
    %p138 = scmp.ne.s32.totalorder %s133, %s135
    %p139 = scmp.eq.s32.totalorder %s13, 0
    %p140 = por %p138, %p139
    %p141 = scmp.ne.s32.totalorder %s133, %s135
    %p142 = scmp.eq.s32.totalorder %s18, 1
    %p143 = por %p141, %p142
    %p144 = scmp.ne.s32.totalorder %s135, %s136
    %p145 = scmp.eq.s32.totalorder %s18, 0
    %p146 = por %p144, %p145
    %p147 = scmp.ne.s32.totalorder %s135, %s136
    %p148 = scmp.eq.s32.totalorder %s19, 1
    %p149 = por %p147, %p148
    %p151 = scmp.ne.s32.totalorder %s136, %s150
    %p152 = scmp.eq.s32.totalorder %s19, 0
    %p153 = por %p151, %p152
    %s155 = sadd.s32 %s154, 1
    %p158 = scmp.eq.s32.totalorder %s13, 1
    %p159 = scmp.ne.s32.totalorder %s154, %s156
    %p160 = scmp.eq.s32.totalorder %s13, 0
    %p161 = por %p159, %p160
    %p162 = scmp.ne.s32.totalorder %s154, %s156
    %p163 = scmp.eq.s32.totalorder %s18, 1
    %p164 = por %p162, %p163
    %p165 = scmp.ne.s32.totalorder %s156, %s157
    %p166 = scmp.eq.s32.totalorder %s18, 0
    %p167 = por %p165, %p166
    %p168 = scmp.ne.s32.totalorder %s156, %s157
    %p169 = scmp.eq.s32.totalorder %s19, 1
    %p170 = por %p168, %p169
    %p172 = scmp.ne.s32.totalorder %s157, %s171
    %p173 = scmp.eq.s32.totalorder %s19, 0
    %p174 = por %p172, %p173
    %s175 = ssub.s32 %s20, %s32
    %s176 = ssub.s32 %s21, %s28
    %s177 = sor.u32 %s175, %s176
    %p178 = scmp.eq.s32.totalorder %s177, 0
    %s180 = sadd.s32 %s179, 1
    %s181 = scalar_select %p178, %s179, %s180
    %p184 = pneg %p178
    %p185 = scmp.eq.s32.totalorder %s13, 1
    %p186 = por %p184, %p185
    %p187 = scmp.ne.s32.totalorder %s179, %s182
    %p188 = scmp.eq.s32.totalorder %s13, 0
    %p189 = por %p187, %p188
    %p190 = scmp.ne.s32.totalorder %s179, %s182
    %p191 = scmp.eq.s32.totalorder %s18, 1
    %p192 = por %p190, %p191
    %p193 = scmp.ne.s32.totalorder %s182, %s183
    %p194 = scmp.eq.s32.totalorder %s18, 0
    %p195 = por %p193, %p194
    %p196 = scmp.ne.s32.totalorder %s182, %s183
    %p197 = scmp.eq.s32.totalorder %s19, 1
    %p198 = por %p196, %p197
    %p200 = scmp.ne.s32.totalorder %s183, %s199
    %p201 = scmp.eq.s32.totalorder %s19, 0
    %p202 = por %p200, %p201
    %s203 = ssub.s32 %s20, %s32
    %p204 = scmp.eq.s32.totalorder %s203, 0
    %s206 = sadd.s32 %s205, 1
    %s207 = scalar_select %p204, %s205, %s206
    %p210 = pneg %p204
    %p211 = scmp.eq.s32.totalorder %s13, 1
    %p212 = por %p210, %p211
    %p213 = scmp.ne.s32.totalorder %s205, %s208
    %p214 = scmp.eq.s32.totalorder %s13, 0
    %p215 = por %p213, %p214
    %p216 = scmp.ne.s32.totalorder %s205, %s208
    %p217 = scmp.eq.s32.totalorder %s18, 1
    %p218 = por %p216, %p217
    %p219 = scmp.ne.s32.totalorder %s208, %s209
    %p220 = scmp.eq.s32.totalorder %s18, 0
    %p221 = por %p219, %p220
    %p222 = scmp.ne.s32.totalorder %s208, %s209
    %p223 = scmp.eq.s32.totalorder %s19, 1
    %p224 = por %p222, %p223
    %p226 = scmp.ne.s32.totalorder %s209, %s225
    %p227 = scmp.eq.s32.totalorder %s19, 0
    %p228 = por %p226, %p227
    %p229 = scmp.le.s32.totalorder 1, %s13
    %p230 = scmp.lt.s32.totalorder %s13, 3
    %p231 = pnand %p229, %p230
    %p232 = pneg %p231
    // Predicated region
    $region9: #{unet_down.3} parent=5 // pred_check
      _
    $region10: #{unet_down.3} parent=5 // pred_check_branch
      %234 = sbr.rel (%p231) target = $region12
    $region11: #{unet_down.3} parent=5 // pred_region
      %s235 = ssub.s32 %s13, 1
      // Predicated region
      $region13: #{unet_down.3} parent=11 // pred_check
        %p236 = pneg %p146
      $region14: #{unet_down.3} parent=11 // pred_check_branch
        %238 = sbr.rel (%p236) target = $region16
      $region15: #{unet_down.3} parent=11 // pred_region
        _
      $region16: #{unet_down.3} parent=11 // pred_fallthru
        _
      // Predicated region
      $region17: #{unet_down.3} parent=11 // pred_check
        %p239 = pneg %p167
      $region18: #{unet_down.3} parent=11 // pred_check_branch
        %241 = sbr.rel (%p239) target = $region20
      $region19: #{unet_down.3} parent=11 // pred_region
        _
      $region20: #{unet_down.3} parent=11 // pred_fallthru
        _
    $region12: #{unet_down.3} parent=5 // pred_fallthru
      _
    %p242 = scmp.lt.s32.totalorder %s13, 2
    // Predicated region
    $region21: #{unet_down.3} parent=5 // pred_check
      %p243 = pneg %p242
    $region22: #{unet_down.3} parent=5 // pred_check_branch
      %245 = sbr.rel (%p243) target = $region24
    $region23: #{unet_down.3} parent=5 // pred_region
      // Predicated region
      $region25: #{unet_down.3} parent=23 // pred_check
        %p246 = pneg %p55
      $region26: #{unet_down.3} parent=23 // pred_check_branch
        %248 = sbr.rel (%p246) target = $region28
      $region27: #{unet_down.3} parent=23 // pred_region
        %s249 = smul.u32 %s21, 16
        %s250 = ssub.s32 %s249, 1
        %p251 = scmp.gt.s32.totalorder %s250, 0
        %s252 = scalar_select %p251, %s250, 0
        %p253 = scmp.lt.s32.totalorder %s20, 1
        %s254 = scalar_select %p253, %s20, 1
        %p255 = scmp.lt.s32.totalorder %s252, 15
        %s256 = scalar_select %p255, %s252, 15
        %s257 = smul.addr %s256, 2
        %s258 = smul.addr %s254, 32
        %s259 = sadd.s32 %s257, %s258
        %s260 = smul.addr %s259, 4
        %s261 = scalar_lea.vmem %s0, %s260
        %s262 = smul.u32 %s21, 16
        %s263 = ssub.s32 %s262, 1
        %p264 = scmp.gt.s32.totalorder %s263, 0
        %s265 = scalar_select %p264, %s263, 0
      $region28: #{unet_down.3} parent=23 // pred_fallthru
        _
      // Predicated region
      $region29: #{unet_down.3} parent=23 // pred_check
        %p266 = pneg %p83
      $region30: #{unet_down.3} parent=23 // pred_check_branch
        %268 = sbr.rel (%p266) target = $region32
      $region31: #{unet_down.3} parent=23 // pred_region
        %s269 = smul.u32 16, %s21
        %p270 = scmp.lt.s32.totalorder %s20, 1
        %s271 = scalar_select %p270, %s20, 1
        %p272 = scmp.lt.s32.totalorder %s269, 15
        %s273 = scalar_select %p272, %s269, 15
        %s274 = smul.addr %s273, 2
        %s275 = smul.addr %s271, 32
        %s276 = sadd.s32 %s274, %s275
        %s277 = smul.addr %s276, 4
        %s278 = scalar_lea.vmem %s1, %s277
        %s279 = smul.u32 16, %s21
      $region32: #{unet_down.3} parent=23 // pred_fallthru
        _
      // Predicated region
      $region33: #{unet_down.3} parent=23 // pred_check
        %p280 = pneg %p119
      $region34: #{unet_down.3} parent=23 // pred_check_branch
        %282 = sbr.rel (%p280) target = $region36
      $region35: #{unet_down.3} parent=23 // pred_region
        %s283 = sadd.s32 %s21, 1
        %s284 = smul.u32 %s283, 16
        %p285 = scmp.lt.s32.totalorder %s284, 15
        %s286 = scalar_select %p285, %s284, 15
        %p287 = scmp.lt.s32.totalorder %s20, 1
        %s288 = scalar_select %p287, %s20, 1
        %p289 = scmp.lt.s32.totalorder %s286, 15
        %s290 = scalar_select %p289, %s286, 15
        %s291 = smul.addr %s290, 2
        %s292 = smul.addr %s288, 32
        %s293 = sadd.s32 %s291, %s292
        %s294 = smul.addr %s293, 4
        %s295 = scalar_lea.vmem %s2, %s294
        %s296 = sadd.s32 %s21, 1
        %s297 = smul.u32 %s296, 16
        %p298 = scmp.lt.s32.totalorder %s297, 15
        %s299 = scalar_select %p298, %s297, 15
      $region36: #{unet_down.3} parent=23 // pred_fallthru
        _
    $region24: #{unet_down.3} parent=5 // pred_fallthru
      _
    %p300 = scmp.le.s32.totalorder 1, %s13
    %p301 = scmp.lt.s32.totalorder %s13, 3
    %p302 = pnand %p300, %p301
    %p303 = pneg %p302
    // Predicated region
    $region37: #{unet_down.3} parent=5 // pred_check
      _
    $region38: #{unet_down.3} parent=5 // pred_check_branch
      %305 = sbr.rel (%p302) target = $region40
    $region39: #{unet_down.3} parent=5 // pred_region
      %s306 = ssub.s32 %s13, 1
      %s307 = smul.u32 %s23, 16
      %s308 = ssub.s32 %s307, 1
      %p309 = scmp.gt.s32.totalorder %s308, 0
      %s310 = scalar_select %p309, %s308, 0
      %p311 = scmp.lt.s32.totalorder %s22, 1
      %s312 = scalar_select %p311, %s22, 1
      %p313 = scmp.lt.s32.totalorder %s310, 15
      %s314 = scalar_select %p313, %s310, 15
      %s315 = smul.addr %s314, 2
      %s316 = smul.addr %s312, 32
      %s317 = sadd.s32 %s315, %s316
      %s318 = smul.addr %s317, 4
      %s319 = scalar_lea.vmem %s0, %s318
      %p320 = pneg %p61
      %p321 = pneg %p58
      %s322 = smul.u32 16, %s23
      %p323 = scmp.lt.s32.totalorder %s22, 1
      %s324 = scalar_select %p323, %s22, 1
      %p325 = scmp.lt.s32.totalorder %s322, 15
      %s326 = scalar_select %p325, %s322, 15
      %s327 = smul.addr %s326, 2
      %s328 = smul.addr %s324, 32
      %s329 = sadd.s32 %s327, %s328
      %s330 = smul.addr %s329, 4
      %s331 = scalar_lea.vmem %s1, %s330
      %p332 = pneg %p89
      %p333 = pneg %p86
      %s334 = sadd.s32 %s23, 1
      %s335 = smul.u32 %s334, 16
      %p336 = scmp.lt.s32.totalorder %s335, 15
      %s337 = scalar_select %p336, %s335, 15
      %p338 = scmp.lt.s32.totalorder %s22, 1
      %s339 = scalar_select %p338, %s22, 1
      %p340 = scmp.lt.s32.totalorder %s337, 15
      %s341 = scalar_select %p340, %s337, 15
      %s342 = smul.addr %s341, 2
      %s343 = smul.addr %s339, 32
      %s344 = sadd.s32 %s342, %s343
      %s345 = smul.addr %s344, 4
      %s346 = scalar_lea.vmem %s2, %s345
      %p347 = pneg %p125
      %p348 = pneg %p122
      %p349 = pneg %p146
      %p350 = pneg %p143
      %p351 = pneg %p167
      %p352 = pneg %p164
      %p353 = pneg %p195
      %p354 = pneg %p192
      %s355 = smul.u32 16, %s23
      %p356 = scmp.lt.s32.totalorder %s22, 1
      %s357 = scalar_select %p356, %s22, 1
      %p358 = scmp.lt.s32.totalorder %s355, 15
      %s359 = scalar_select %p358, %s355, 15
      %s360 = smul.addr %s359, 2
      %s361 = smul.addr %s357, 32
      %s362 = sadd.s32 %s360, %s361
      %s363 = smul.addr %s362, 4
      %s364 = scalar_lea.vmem %s5, %s363
      %p365 = pneg %p221
      %p366 = pneg %p218
      %p367 = scmp.lt.s32.totalorder %s22, 1
      %s368 = scalar_select %p367, %s22, 1
      %s369 = smul.addr %s368, 2
      %s370 = scalar_lea.vmem %s6, %s369
      %s371 = smul.u32 %s23, 16
      %s372 = ssub.s32 %s371, 1
      %p373 = scmp.gt.s32.totalorder %s372, 0
      %s374 = scalar_select %p373, %s372, 0
      %p375 = scmp.lt.s32.totalorder %s22, 1
      %s376 = scalar_select %p375, %s22, 1
      %p377 = scmp.lt.s32.totalorder %s374, 15
      %s378 = scalar_select %p377, %s374, 15
      %s379 = smul.addr %s378, 2
      %s380 = smul.addr %s376, 32
      %s381 = sadd.s32 %s379, %s380
      %s382 = smul.addr %s381, 4
      %s383 = scalar_lea.vmem %s0, %s382
      %s384 = smul.u32 %s23, 16
      %s385 = ssub.s32 %s384, 1
      %p386 = scmp.gt.s32.totalorder %s385, 0
      %s387 = scalar_select %p386, %s385, 0
      %s388 = smul.u32 16, %s23
      %p389 = scmp.lt.s32.totalorder %s22, 1
      %s390 = scalar_select %p389, %s22, 1
      %p391 = scmp.lt.s32.totalorder %s388, 15
      %s392 = scalar_select %p391, %s388, 15
      %s393 = smul.addr %s392, 2
      %s394 = smul.addr %s390, 32
      %s395 = sadd.s32 %s393, %s394
      %s396 = smul.addr %s395, 4
      %s397 = scalar_lea.vmem %s1, %s396
      %s398 = smul.u32 16, %s23
      %s399 = sadd.s32 %s23, 1
      %s400 = smul.u32 %s399, 16
      %p401 = scmp.lt.s32.totalorder %s400, 15
      %s402 = scalar_select %p401, %s400, 15
      %p403 = scmp.lt.s32.totalorder %s22, 1
      %s404 = scalar_select %p403, %s22, 1
      %p405 = scmp.lt.s32.totalorder %s402, 15
      %s406 = scalar_select %p405, %s402, 15
      %s407 = smul.addr %s406, 2
      %s408 = smul.addr %s404, 32
      %s409 = sadd.s32 %s407, %s408
      %s410 = smul.addr %s409, 4
      %s411 = scalar_lea.vmem %s2, %s410
      %s412 = sadd.s32 %s23, 1
      %s413 = smul.u32 %s412, 16
      %p414 = scmp.lt.s32.totalorder %s413, 15
      %s415 = scalar_select %p414, %s413, 15
      %s416 = smul.u32 16, %s23
      %p417 = scmp.lt.s32.totalorder %s22, 1
      %s418 = scalar_select %p417, %s22, 1
      %p419 = scmp.lt.s32.totalorder %s416, 15
      %s420 = scalar_select %p419, %s416, 15
      %s421 = smul.addr %s420, 2
      %s422 = smul.addr %s418, 32
      %s423 = sadd.s32 %s421, %s422
      %s424 = smul.addr %s423, 4
      %s425 = scalar_lea.vmem %s5, %s424
      %s426 = smul.u32 16, %s23
      %p427 = scmp.lt.s32.totalorder %s22, 1
      %s428 = scalar_select %p427, %s22, 1
      %s429 = smul.addr %s428, 2
      %s430 = scalar_lea.vmem %s6, %s429
      %v432 = vld [vmem:[%s397] sm:$0xf]
      %v433 = vld [vmem:[%s397 + $0x4] sm:$0xf]
      %v434 = vld [vmem:[%s397 + $0x8] sm:$0xf]
      %v435 = vld [vmem:[%s397 + $0xc] sm:$0xf]
      %v436 = vld [vmem:[%s397 + $0x10] sm:$0xf]
      %v437 = vld [vmem:[%s397 + $0x14] sm:$0xf]
      %v438 = vld [vmem:[%s397 + $0x18] sm:$0xf]
      %v439 = vld [vmem:[%s397 + $0x1c] sm:$0xf]
      %v440 = vld [vmem:[%s397 + $0x20] sm:$0xf]
      %v441 = vld [vmem:[%s397 + $0x24] sm:$0xf]
      %v442 = vld [vmem:[%s397 + $0x28] sm:$0xf]
      %v443 = vld [vmem:[%s397 + $0x2c] sm:$0xf]
      %v444 = vld [vmem:[%s397 + $0x30] sm:$0xf]
      %v445 = vld [vmem:[%s397 + $0x34] sm:$0xf]
      %v446 = vld [vmem:[%s397 + $0x38] sm:$0xf]
      %v447 = vld [vmem:[%s397 + $0x3c] sm:$0xf]
      %v448 = vld [vmem:[%s397 + $0x40] sm:$0xf]
      %v449 = vld [vmem:[%s397 + $0x44] sm:$0xf]
      %v450 = vld [vmem:[%s397 + $0x48] sm:$0xf]
      %v451 = vld [vmem:[%s397 + $0x4c] sm:$0xf]
      %v452 = vld [vmem:[%s397 + $0x50] sm:$0xf]
      %v453 = vld [vmem:[%s397 + $0x54] sm:$0xf]
      %v454 = vld [vmem:[%s397 + $0x58] sm:$0xf]
      %v455 = vld [vmem:[%s397 + $0x5c] sm:$0xf]
      %v456 = vld [vmem:[%s397 + $0x60] sm:$0xf]
      %v457 = vld [vmem:[%s397 + $0x64] sm:$0xf]
      %v458 = vld [vmem:[%s397 + $0x68] sm:$0xf]
      %v459 = vld [vmem:[%s397 + $0x6c] sm:$0xf]
      %v460 = vld [vmem:[%s397 + $0x70] sm:$0xf]
      %v461 = vld [vmem:[%s397 + $0x74] sm:$0xf]
      %v462 = vld [vmem:[%s397 + $0x78] sm:$0xf]
      %v463 = vld [vmem:[%s397 + $0x7c] sm:$0xf]
      %v464 = vld [vmem:[%s383] sm:$0xf]
      %v465 = vld [vmem:[%s383 + $0x4] sm:$0xf]
      %v466 = vunpack.c.l.bf16 %v464
      %v467 = vunpack.c.l.bf16 %v465
      %p468 = scmp.gt.s32.totalorder %s23, 0
      %s469 = scalar_select %p468, 1, 0
      %s470 = scvt.s32.f32 %s469
      %v471 = vstv %s470
      %v472 = vmul.f32 %v466, %v471
      %v473 = vmul.f32 %v467, %v471
      %v474 = vpack.c.bf16 %v473, %v472
      %v475 = vld [vmem:[%s411] sm:$0xf]
      %v476 = vld [vmem:[%s411 + $0x4] sm:$0xf]
      %v477 = vunpack.c.l.bf16 %v475
      %v478 = vunpack.c.l.bf16 %v476
      %s479 = sadd.s32 %s23, 1
      %p480 = scmp.lt.s32.totalorder %s479, 1
      %s481 = scalar_select %p480, 1, 0
      %s482 = scvt.s32.f32 %s481
      %v483 = vstv %s482
      %v484 = vmul.f32 %v477, %v483
      %v485 = vmul.f32 %v478, %v483
      %v486 = vpack.c.bf16 %v485, %v484
      %v519 = vunpack.c.l.b16 %v432
      %v520 = vunpack.c.l.b16 %v433
      %v521 = vunpack.c.l.b16 %v434
      %v522 = vunpack.c.l.b16 %v435
      %v523 = vunpack.c.l.b16 %v436
      %v524 = vunpack.c.l.b16 %v437
      %v525 = vunpack.c.l.b16 %v438
      %v526 = vunpack.c.l.b16 %v439
      %v527 = vunpack.c.l.b16 %v440
      %v528 = vunpack.c.l.b16 %v441
      %v529 = vunpack.c.l.b16 %v442
      %v530 = vunpack.c.l.b16 %v443
      %v531 = vunpack.c.l.b16 %v444
      %v532 = vunpack.c.l.b16 %v445
      %v533 = vunpack.c.l.b16 %v446
      %v534 = vunpack.c.l.b16 %v447
      %v535 = vunpack.c.l.b16 %v448
      %v536 = vunpack.c.l.b16 %v449
      %v537 = vunpack.c.l.b16 %v450
      %v538 = vunpack.c.l.b16 %v451
      %v539 = vunpack.c.l.b16 %v452
      %v540 = vunpack.c.l.b16 %v453
      %v541 = vunpack.c.l.b16 %v454
      %v542 = vunpack.c.l.b16 %v455
      %v543 = vunpack.c.l.b16 %v456
      %v544 = vunpack.c.l.b16 %v457
      %v545 = vunpack.c.l.b16 %v458
      %v546 = vunpack.c.l.b16 %v459
      %v547 = vunpack.c.l.b16 %v460
      %v548 = vunpack.c.l.b16 %v461
      %v549 = vunpack.c.l.b16 %v462
      %v550 = vunpack.c.l.b16 %v463
      %v551 = vpack.c.b16 %v520, %v519
      %v552 = vpack.c.b16 %v522, %v521
      %v553 = vpack.c.b16 %v524, %v523
      %v554 = vpack.c.b16 %v526, %v525
      %v555 = vpack.c.b16 %v528, %v527
      %v556 = vpack.c.b16 %v530, %v529
      %v557 = vpack.c.b16 %v532, %v531
      %v558 = vpack.c.b16 %v534, %v533
      %v559 = vpack.c.b16 %v536, %v535
      %v560 = vpack.c.b16 %v538, %v537
      %v561 = vpack.c.b16 %v540, %v539
      %v562 = vpack.c.b16 %v542, %v541
      %v563 = vpack.c.b16 %v544, %v543
      %v564 = vpack.c.b16 %v546, %v545
      %v565 = vpack.c.b16 %v548, %v547
      %v566 = vpack.c.b16 %v550, %v549
      %v568 = vshrl.u32 %v474, 16
      %v570 = vrot.slane %v568, 7
      %v571 = vshll.u32 %v474, 16
      %v573 = vor.u32 %v570, %v571
      %v575 = vshrl.u32 %v551, 16
      %v577 = vrot.slane %v575, 7
      %v578 = vshll.u32 %v551, 16
      %v580 = vor.u32 %v577, %v578
      %v582 = vshrl.u32 %v552, 16
      %v584 = vrot.slane %v582, 7
      %v585 = vshll.u32 %v552, 16
      %v587 = vor.u32 %v584, %v585
      %v589 = vshrl.u32 %v553, 16
      %v591 = vrot.slane %v589, 7
      %v592 = vshll.u32 %v553, 16
      %v594 = vor.u32 %v591, %v592
      %v596 = vshrl.u32 %v554, 16
      %v598 = vrot.slane %v596, 7
      %v599 = vshll.u32 %v554, 16
      %v601 = vor.u32 %v598, %v599
      %v603 = vshrl.u32 %v555, 16
      %v605 = vrot.slane %v603, 7
      %v606 = vshll.u32 %v555, 16
      %v608 = vor.u32 %v605, %v606
      %v610 = vshrl.u32 %v556, 16
      %v612 = vrot.slane %v610, 7
      %v613 = vshll.u32 %v556, 16
      %v615 = vor.u32 %v612, %v613
      %v617 = vshrl.u32 %v557, 16
      %v619 = vrot.slane %v617, 7
      %v620 = vshll.u32 %v557, 16
      %v622 = vor.u32 %v619, %v620
      %v624 = vshrl.u32 %v558, 16
      %v626 = vrot.slane %v624, 7
      %v627 = vshll.u32 %v558, 16
      %v629 = vor.u32 %v626, %v627
      %v631 = vshrl.u32 %v559, 16
      %v633 = vrot.slane %v631, 7
      %v634 = vshll.u32 %v559, 16
      %v636 = vor.u32 %v633, %v634
      %v638 = vshrl.u32 %v560, 16
      %v640 = vrot.slane %v638, 7
      %v641 = vshll.u32 %v560, 16
      %v643 = vor.u32 %v640, %v641
      %v645 = vshrl.u32 %v561, 16
      %v647 = vrot.slane %v645, 7
      %v648 = vshll.u32 %v561, 16
      %v650 = vor.u32 %v647, %v648
      %v652 = vshrl.u32 %v562, 16
      %v654 = vrot.slane %v652, 7
      %v655 = vshll.u32 %v562, 16
      %v657 = vor.u32 %v654, %v655
      %v659 = vshrl.u32 %v563, 16
      %v661 = vrot.slane %v659, 7
      %v662 = vshll.u32 %v563, 16
      %v664 = vor.u32 %v661, %v662
      %v666 = vshrl.u32 %v564, 16
      %v668 = vrot.slane %v666, 7
      %v669 = vshll.u32 %v564, 16
      %v671 = vor.u32 %v668, %v669
      %v673 = vshrl.u32 %v565, 16
      %v675 = vrot.slane %v673, 7
      %v676 = vshll.u32 %v565, 16
      %v678 = vor.u32 %v675, %v676
      %v680 = vshrl.u32 %v566, 16
      %v682 = vrot.slane %v680, 7
      %v683 = vshll.u32 %v566, 16
      %v685 = vor.u32 %v682, %v683
      %v687 = vshrl.u32 %v486, 16
      %v689 = vrot.slane %v687, 7
      %v690 = vshll.u32 %v486, 16
      %v692 = vor.u32 %v689, %v690
      %vm729 = vcmask 1040384
      %vm730 = vsmask.f32 256
      %vm731 = vmand %vm729, %vm730
      %v732 = vsel %vm731, 0, %v573
      %v733 = vsel %vm731, 0, %v580
      %v734 = vsel %vm731, 0, %v587
      %v735 = vsel %vm731, 0, %v594
      %v736 = vsel %vm731, 0, %v601
      %v737 = vsel %vm731, 0, %v608
      %v738 = vsel %vm731, 0, %v615
      %v739 = vsel %vm731, 0, %v622
      %v740 = vsel %vm731, 0, %v629
      %v741 = vsel %vm731, 0, %v636
      %v742 = vsel %vm731, 0, %v643
      %v743 = vsel %vm731, 0, %v650
      %v744 = vsel %vm731, 0, %v657
      %v745 = vsel %vm731, 0, %v664
      %v746 = vsel %vm731, 0, %v671
      %v747 = vsel %vm731, 0, %v678
      %v748 = vsel %vm731, 0, %v685
      %v749 = vsel %vm731, 0, %v692
      %v750 = vsel %vm731, %v570, 0
      %v751 = vsel %vm731, %v577, 0
      %v752 = vsel %vm731, %v584, 0
      %v753 = vsel %vm731, %v591, 0
      %v754 = vsel %vm731, %v598, 0
      %v755 = vsel %vm731, %v605, 0
      %v756 = vsel %vm731, %v612, 0
      %v757 = vsel %vm731, %v619, 0
      %v758 = vsel %vm731, %v626, 0
      %v759 = vsel %vm731, %v633, 0
      %v760 = vsel %vm731, %v640, 0
      %v761 = vsel %vm731, %v647, 0
      %v762 = vsel %vm731, %v654, 0
      %v763 = vsel %vm731, %v661, 0
      %v764 = vsel %vm731, %v668, 0
      %v765 = vsel %vm731, %v675, 0
      %v766 = vsel %vm731, %v682, 0
      %v767 = vsel %vm731, %v689, 0
      %vm768 = vsmask.f32 7424
      %v770 = vshrl.u32 %v732, 16
      %v772 = vshll.u32 %v732, 16
      %v774 = vrot.slane %v772, 1
      %v775 = vor.u32 %v770, %v774
      %v777 = vshll.u32 %v750, 16
      %v779 = vrot.slane %v777, 1
      %v780 = vsel %vm768, %v775, %v779
      %v782 = vshrl.u32 %v733, 16
      %v784 = vshll.u32 %v733, 16
      %v786 = vrot.slane %v784, 1
      %v787 = vor.u32 %v782, %v786
      %v789 = vshll.u32 %v751, 16
      %v791 = vrot.slane %v789, 1
      %v792 = vsel %vm768, %v787, %v791
      %v794 = vshrl.u32 %v734, 16
      %v796 = vshll.u32 %v734, 16
      %v798 = vrot.slane %v796, 1
      %v799 = vor.u32 %v794, %v798
      %v801 = vshll.u32 %v752, 16
      %v803 = vrot.slane %v801, 1
      %v804 = vsel %vm768, %v799, %v803
      %v806 = vshrl.u32 %v735, 16
      %v808 = vshll.u32 %v735, 16
      %v810 = vrot.slane %v808, 1
      %v811 = vor.u32 %v806, %v810
      %v813 = vshll.u32 %v753, 16
      %v815 = vrot.slane %v813, 1
      %v816 = vsel %vm768, %v811, %v815
      %v818 = vshrl.u32 %v736, 16
      %v820 = vshll.u32 %v736, 16
      %v822 = vrot.slane %v820, 1
      %v823 = vor.u32 %v818, %v822
      %v825 = vshll.u32 %v754, 16
      %v827 = vrot.slane %v825, 1
      %v828 = vsel %vm768, %v823, %v827
      %v830 = vshrl.u32 %v737, 16
      %v832 = vshll.u32 %v737, 16
      %v834 = vrot.slane %v832, 1
      %v835 = vor.u32 %v830, %v834
      %v837 = vshll.u32 %v755, 16
      %v839 = vrot.slane %v837, 1
      %v840 = vsel %vm768, %v835, %v839
      %v842 = vshrl.u32 %v738, 16
      %v844 = vshll.u32 %v738, 16
      %v846 = vrot.slane %v844, 1
      %v847 = vor.u32 %v842, %v846
      %v849 = vshll.u32 %v756, 16
      %v851 = vrot.slane %v849, 1
      %v852 = vsel %vm768, %v847, %v851
      %v854 = vshrl.u32 %v739, 16
      %v856 = vshll.u32 %v739, 16
      %v858 = vrot.slane %v856, 1
      %v859 = vor.u32 %v854, %v858
      %v861 = vshll.u32 %v757, 16
      %v863 = vrot.slane %v861, 1
      %v864 = vsel %vm768, %v859, %v863
      %v866 = vshrl.u32 %v740, 16
      %v868 = vshll.u32 %v740, 16
      %v870 = vrot.slane %v868, 1
      %v871 = vor.u32 %v866, %v870
      %v873 = vshll.u32 %v758, 16
      %v875 = vrot.slane %v873, 1
      %v876 = vsel %vm768, %v871, %v875
      %v878 = vshrl.u32 %v741, 16
      %v880 = vshll.u32 %v741, 16
      %v882 = vrot.slane %v880, 1
      %v883 = vor.u32 %v878, %v882
      %v885 = vshll.u32 %v759, 16
      %v887 = vrot.slane %v885, 1
      %v888 = vsel %vm768, %v883, %v887
      %v890 = vshrl.u32 %v742, 16
      %v892 = vshll.u32 %v742, 16
      %v894 = vrot.slane %v892, 1
      %v895 = vor.u32 %v890, %v894
      %v897 = vshll.u32 %v760, 16
      %v899 = vrot.slane %v897, 1
      %v900 = vsel %vm768, %v895, %v899
      %v902 = vshrl.u32 %v743, 16
      %v904 = vshll.u32 %v743, 16
      %v906 = vrot.slane %v904, 1
      %v907 = vor.u32 %v902, %v906
      %v909 = vshll.u32 %v761, 16
      %v911 = vrot.slane %v909, 1
      %v912 = vsel %vm768, %v907, %v911
      %v914 = vshrl.u32 %v744, 16
      %v916 = vshll.u32 %v744, 16
      %v918 = vrot.slane %v916, 1
      %v919 = vor.u32 %v914, %v918
      %v921 = vshll.u32 %v762, 16
      %v923 = vrot.slane %v921, 1
      %v924 = vsel %vm768, %v919, %v923
      %v926 = vshrl.u32 %v745, 16
      %v928 = vshll.u32 %v745, 16
      %v930 = vrot.slane %v928, 1
      %v931 = vor.u32 %v926, %v930
      %v933 = vshll.u32 %v763, 16
      %v935 = vrot.slane %v933, 1
      %v936 = vsel %vm768, %v931, %v935
      %v938 = vshrl.u32 %v746, 16
      %v940 = vshll.u32 %v746, 16
      %v942 = vrot.slane %v940, 1
      %v943 = vor.u32 %v938, %v942
      %v945 = vshll.u32 %v764, 16
      %v947 = vrot.slane %v945, 1
      %v948 = vsel %vm768, %v943, %v947
      %v950 = vshrl.u32 %v747, 16
      %v952 = vshll.u32 %v747, 16
      %v954 = vrot.slane %v952, 1
      %v955 = vor.u32 %v950, %v954
      %v957 = vshll.u32 %v765, 16
      %v959 = vrot.slane %v957, 1
      %v960 = vsel %vm768, %v955, %v959
      %vm1009 = vcmask 1046528
      %v1010 = vrot.slane %v732, 1
      %v1011 = vrot.slane %v750, 1
      %v1012 = vsel %vm1009, %v1010, %v1011
      %v1013 = vrot.slane %v733, 1
      %v1014 = vrot.slane %v751, 1
      %v1015 = vsel %vm1009, %v1013, %v1014
      %v1016 = vrot.slane %v734, 1
      %v1017 = vrot.slane %v752, 1
      %v1018 = vsel %vm1009, %v1016, %v1017
      %v1019 = vrot.slane %v735, 1
      %v1020 = vrot.slane %v753, 1
      %v1021 = vsel %vm1009, %v1019, %v1020
      %v1022 = vrot.slane %v736, 1
      %v1023 = vrot.slane %v754, 1
      %v1024 = vsel %vm1009, %v1022, %v1023
      %v1025 = vrot.slane %v737, 1
      %v1026 = vrot.slane %v755, 1
      %v1027 = vsel %vm1009, %v1025, %v1026
      %v1028 = vrot.slane %v738, 1
      %v1029 = vrot.slane %v756, 1
      %v1030 = vsel %vm1009, %v1028, %v1029
      %v1031 = vrot.slane %v739, 1
      %v1032 = vrot.slane %v757, 1
      %v1033 = vsel %vm1009, %v1031, %v1032
      %v1034 = vrot.slane %v740, 1
      %v1035 = vrot.slane %v758, 1
      %v1036 = vsel %vm1009, %v1034, %v1035
      %v1037 = vrot.slane %v741, 1
      %v1038 = vrot.slane %v759, 1
      %v1039 = vsel %vm1009, %v1037, %v1038
      %v1040 = vrot.slane %v742, 1
      %v1041 = vrot.slane %v760, 1
      %v1042 = vsel %vm1009, %v1040, %v1041
      %v1043 = vrot.slane %v743, 1
      %v1044 = vrot.slane %v761, 1
      %v1045 = vsel %vm1009, %v1043, %v1044
      %v1046 = vrot.slane %v744, 1
      %v1047 = vrot.slane %v762, 1
      %v1048 = vsel %vm1009, %v1046, %v1047
      %v1049 = vrot.slane %v745, 1
      %v1050 = vrot.slane %v763, 1
      %v1051 = vsel %vm1009, %v1049, %v1050
      %v1052 = vrot.slane %v746, 1
      %v1053 = vrot.slane %v764, 1
      %v1054 = vsel %vm1009, %v1052, %v1053
      %v1055 = vrot.slane %v747, 1
      %v1056 = vrot.slane %v765, 1
      %v1057 = vsel %vm1009, %v1055, %v1056
      %v1075 = vshrl.u32 %v748, 16
      %v1077 = vshll.u32 %v748, 16
      %v1079 = vrot.slane %v1077, 1
      %v1080 = vor.u32 %v1075, %v1079
      %v1082 = vshll.u32 %v766, 16
      %v1084 = vrot.slane %v1082, 1
      %v1085 = vsel %vm768, %v1080, %v1084
      %v1089 = vrot.slane %v748, 1
      %v1090 = vrot.slane %v766, 1
      %v1091 = vsel %vm1009, %v1089, %v1090
      %v1094 = vshrl.u32 %v749, 16
      %v1096 = vshll.u32 %v749, 16
      %v1098 = vrot.slane %v1096, 1
      %v1099 = vor.u32 %v1094, %v1098
      %v1101 = vshll.u32 %v767, 16
      %v1103 = vrot.slane %v1101, 1
      %v1104 = vsel %vm768, %v1099, %v1103
      %v1108 = vrot.slane %v749, 1
      %v1109 = vrot.slane %v767, 1
      %v1110 = vsel %vm1009, %v1108, %v1109
      %v1112 = vld [vmem:[%s3] sm:$0xf]
      %v1113 = vld [vmem:[%s3 + $0x4] sm:$0xf]
      %v1114 = vld [vmem:[%s3 + $0x8] sm:$0xf]
      %v1115 = vld [vmem:[%s3 + $0xc] sm:$0xf]
      %v1116 = vld [vmem:[%s3 + $0x10] sm:$0xf]
      %v1117 = vld [vmem:[%s3 + $0x14] sm:$0xf]
      %v1118 = vld [vmem:[%s3 + $0x18] sm:$0xf]
      %v1119 = vld [vmem:[%s3 + $0x1c] sm:$0xf]
      %v1120 = vld [vmem:[%s3 + $0x20] sm:$0xf]
      %v1121 = vld [vmem:[%s3 + $0x24] sm:$0xf]
      %v1122 = vld [vmem:[%s3 + $0x28] sm:$0xf]
      %v1123 = vld [vmem:[%s3 + $0x2c] sm:$0xf]
      %v1124 = vld [vmem:[%s3 + $0x30] sm:$0xf]
      %v1125 = vld [vmem:[%s3 + $0x34] sm:$0xf]
      %v1126 = vld [vmem:[%s3 + $0x38] sm:$0xf]
      %v1127 = vld [vmem:[%s3 + $0x3c] sm:$0xf]
      %v1128 = vld [vmem:[%s3 + $0x40] sm:$0xf]
      %v1129 = vld [vmem:[%s3 + $0x44] sm:$0xf]
      %v1130 = vld [vmem:[%s3 + $0x48] sm:$0xf]
      %v1131 = vld [vmem:[%s3 + $0x4c] sm:$0xf]
      %v1132 = vld [vmem:[%s3 + $0x50] sm:$0xf]
      %v1133 = vld [vmem:[%s3 + $0x54] sm:$0xf]
      %v1134 = vld [vmem:[%s3 + $0x58] sm:$0xf]
      %v1135 = vld [vmem:[%s3 + $0x5c] sm:$0xf]
      %v1136 = vld [vmem:[%s3 + $0x60] sm:$0xf]
      %v1137 = vld [vmem:[%s3 + $0x64] sm:$0xf]
      %v1138 = vld [vmem:[%s3 + $0x68] sm:$0xf]
      %v1139 = vld [vmem:[%s3 + $0x6c] sm:$0xf]
      %v1140 = vld [vmem:[%s3 + $0x70] sm:$0xf]
      %v1141 = vld [vmem:[%s3 + $0x74] sm:$0xf]
      %v1142 = vld [vmem:[%s3 + $0x78] sm:$0xf]
      %v1143 = vld [vmem:[%s3 + $0x7c] sm:$0xf]
      %v1144 = vld [vmem:[%s3 + $0x80] sm:$0xf]
      %v1145 = vld [vmem:[%s3 + $0x84] sm:$0xf]
      %v1146 = vld [vmem:[%s3 + $0x88] sm:$0xf]
      %v1147 = vld [vmem:[%s3 + $0x8c] sm:$0xf]
      %v1148 = vld [vmem:[%s3 + $0x90] sm:$0xf]
      %v1149 = vld [vmem:[%s3 + $0x94] sm:$0xf]
      %v1150 = vld [vmem:[%s3 + $0x98] sm:$0xf]
      %v1151 = vld [vmem:[%s3 + $0x9c] sm:$0xf]
      %v1152 = vld [vmem:[%s3 + $0xa0] sm:$0xf]
      %v1153 = vld [vmem:[%s3 + $0xa4] sm:$0xf]
      %v1154 = vld [vmem:[%s3 + $0xa8] sm:$0xf]
      %v1155 = vld [vmem:[%s3 + $0xac] sm:$0xf]
      %v1156 = vld [vmem:[%s3 + $0xb0] sm:$0xf]
      %v1157 = vld [vmem:[%s3 + $0xb4] sm:$0xf]
      %v1158 = vld [vmem:[%s3 + $0xb8] sm:$0xf]
      %v1159 = vld [vmem:[%s3 + $0xbc] sm:$0xf]
      %v1160 = vld [vmem:[%s3 + $0xc0] sm:$0xf]
      %v1161 = vld [vmem:[%s3 + $0xc4] sm:$0xf]
      %v1162 = vld [vmem:[%s3 + $0xc8] sm:$0xf]
      %v1163 = vld [vmem:[%s3 + $0xcc] sm:$0xf]
      %v1164 = vld [vmem:[%s3 + $0xd0] sm:$0xf]
      %v1165 = vld [vmem:[%s3 + $0xd4] sm:$0xf]
      %v1166 = vld [vmem:[%s3 + $0xd8] sm:$0xf]
      %v1167 = vld [vmem:[%s3 + $0xdc] sm:$0xf]
      %v1168 = vld [vmem:[%s3 + $0xe0] sm:$0xf]
      %v1169 = vld [vmem:[%s3 + $0xe4] sm:$0xf]
      %v1170 = vld [vmem:[%s3 + $0xe8] sm:$0xf]
      %v1171 = vld [vmem:[%s3 + $0xec] sm:$0xf]
      %v1172 = vld [vmem:[%s3 + $0xf0] sm:$0xf]
      %v1173 = vld [vmem:[%s3 + $0xf4] sm:$0xf]
      %v1174 = vld [vmem:[%s3 + $0xf8] sm:$0xf]
      %v1175 = vld [vmem:[%s3 + $0xfc] sm:$0xf]
      %v1176 = vld [vmem:[%s3 + $0x100] sm:$0xf]
      %v1177 = vld [vmem:[%s3 + $0x104] sm:$0xf]
      %v1178 = vld [vmem:[%s3 + $0x108] sm:$0xf]
      %v1179 = vld [vmem:[%s3 + $0x10c] sm:$0xf]
      %v1180 = vld [vmem:[%s3 + $0x110] sm:$0xf]
      %v1181 = vld [vmem:[%s3 + $0x114] sm:$0xf]
      %v1182 = vld [vmem:[%s3 + $0x118] sm:$0xf]
      %v1183 = vld [vmem:[%s3 + $0x11c] sm:$0xf]
      %v1184 = vld [vmem:[%s3 + $0x120] sm:$0xf]
      %v1185 = vld [vmem:[%s3 + $0x124] sm:$0xf]
      %v1186 = vld [vmem:[%s3 + $0x128] sm:$0xf]
      %v1187 = vld [vmem:[%s3 + $0x12c] sm:$0xf]
      %v1188 = vld [vmem:[%s3 + $0x130] sm:$0xf]
      %v1189 = vld [vmem:[%s3 + $0x134] sm:$0xf]
      %v1190 = vld [vmem:[%s3 + $0x138] sm:$0xf]
      %v1191 = vld [vmem:[%s3 + $0x13c] sm:$0xf]
      %v1192 = vld [vmem:[%s3 + $0x140] sm:$0xf]
      %v1193 = vld [vmem:[%s3 + $0x144] sm:$0xf]
      %v1194 = vld [vmem:[%s3 + $0x148] sm:$0xf]
      %v1195 = vld [vmem:[%s3 + $0x14c] sm:$0xf]
      %v1196 = vld [vmem:[%s3 + $0x150] sm:$0xf]
      %v1197 = vld [vmem:[%s3 + $0x154] sm:$0xf]
      %v1198 = vld [vmem:[%s3 + $0x158] sm:$0xf]
      %v1199 = vld [vmem:[%s3 + $0x15c] sm:$0xf]
      %v1200 = vld [vmem:[%s3 + $0x160] sm:$0xf]
      %v1201 = vld [vmem:[%s3 + $0x164] sm:$0xf]
      %v1202 = vld [vmem:[%s3 + $0x168] sm:$0xf]
      %v1203 = vld [vmem:[%s3 + $0x16c] sm:$0xf]
      %v1204 = vld [vmem:[%s3 + $0x170] sm:$0xf]
      %v1205 = vld [vmem:[%s3 + $0x174] sm:$0xf]
      %v1206 = vld [vmem:[%s3 + $0x178] sm:$0xf]
      %v1207 = vld [vmem:[%s3 + $0x17c] sm:$0xf]
      %v1208 = vld [vmem:[%s3 + $0x180] sm:$0xf]
      %v1209 = vld [vmem:[%s3 + $0x184] sm:$0xf]
      %v1210 = vld [vmem:[%s3 + $0x188] sm:$0xf]
      %v1211 = vld [vmem:[%s3 + $0x18c] sm:$0xf]
      %v1212 = vld [vmem:[%s3 + $0x190] sm:$0xf]
      %v1213 = vld [vmem:[%s3 + $0x194] sm:$0xf]
      %v1214 = vld [vmem:[%s3 + $0x198] sm:$0xf]
      %v1215 = vld [vmem:[%s3 + $0x19c] sm:$0xf]
      %v1216 = vld [vmem:[%s3 + $0x1a0] sm:$0xf]
      %v1217 = vld [vmem:[%s3 + $0x1a4] sm:$0xf]
      %v1218 = vld [vmem:[%s3 + $0x1a8] sm:$0xf]
      %v1219 = vld [vmem:[%s3 + $0x1ac] sm:$0xf]
      %v1220 = vld [vmem:[%s3 + $0x1b0] sm:$0xf]
      %v1221 = vld [vmem:[%s3 + $0x1b4] sm:$0xf]
      %v1222 = vld [vmem:[%s3 + $0x1b8] sm:$0xf]
      %v1223 = vld [vmem:[%s3 + $0x1bc] sm:$0xf]
      %v1224 = vld [vmem:[%s3 + $0x1c0] sm:$0xf]
      %v1225 = vld [vmem:[%s3 + $0x1c4] sm:$0xf]
      %v1226 = vld [vmem:[%s3 + $0x1c8] sm:$0xf]
      %v1227 = vld [vmem:[%s3 + $0x1cc] sm:$0xf]
      %v1228 = vld [vmem:[%s3 + $0x1d0] sm:$0xf]
      %v1229 = vld [vmem:[%s3 + $0x1d4] sm:$0xf]
      %v1230 = vld [vmem:[%s3 + $0x1d8] sm:$0xf]
      %v1231 = vld [vmem:[%s3 + $0x1dc] sm:$0xf]
      %v1232 = vld [vmem:[%s3 + $0x1e0] sm:$0xf]
      %v1233 = vld [vmem:[%s3 + $0x1e4] sm:$0xf]
      %v1234 = vld [vmem:[%s3 + $0x1e8] sm:$0xf]
      %v1235 = vld [vmem:[%s3 + $0x1ec] sm:$0xf]
      %v1236 = vld [vmem:[%s3 + $0x1f0] sm:$0xf]
      %v1237 = vld [vmem:[%s3 + $0x1f4] sm:$0xf]
      %v1238 = vld [vmem:[%s3 + $0x1f8] sm:$0xf]
      %v1239 = vld [vmem:[%s3 + $0x1fc] sm:$0xf]
      %v1240 = vld [vmem:[%s3 + $0x200] sm:$0xf]
      %v1241 = vld [vmem:[%s3 + $0x204] sm:$0xf]
      %v1242 = vld [vmem:[%s3 + $0x208] sm:$0xf]
      %v1243 = vld [vmem:[%s3 + $0x20c] sm:$0xf]
      %v1244 = vld [vmem:[%s3 + $0x210] sm:$0xf]
      %v1245 = vld [vmem:[%s3 + $0x214] sm:$0xf]
      %v1246 = vld [vmem:[%s3 + $0x218] sm:$0xf]
      %v1247 = vld [vmem:[%s3 + $0x21c] sm:$0xf]
      %v1248 = vld [vmem:[%s3 + $0x220] sm:$0xf]
      %v1249 = vld [vmem:[%s3 + $0x224] sm:$0xf]
      %v1250 = vld [vmem:[%s3 + $0x228] sm:$0xf]
      %v1251 = vld [vmem:[%s3 + $0x22c] sm:$0xf]
      %v1252 = vld [vmem:[%s3 + $0x230] sm:$0xf]
      %v1253 = vld [vmem:[%s3 + $0x234] sm:$0xf]
      %v1254 = vld [vmem:[%s3 + $0x238] sm:$0xf]
      %v1255 = vld [vmem:[%s3 + $0x23c] sm:$0xf]
      %v1256 = vld [vmem:[%s4] sm:$0x1]
      %v1258 = vlaneseq
      %v1259 = vshrl.u32 %v1258, 7
      %v1260 = vsub.s32 0, %v1259
      %v1261 = vrot.slane %v1256, %v1260
      %v1407 = vunpack.c.l.b16 %v1112
      %v1408 = vunpack.c.l.b16 %v1113
      %v1409 = vunpack.c.l.b16 %v1114
      %v1410 = vunpack.c.l.b16 %v1115
      %v1411 = vunpack.c.l.b16 %v1116
      %v1412 = vunpack.c.l.b16 %v1117
      %v1413 = vunpack.c.l.b16 %v1118
      %v1414 = vunpack.c.l.b16 %v1119
      %v1415 = vunpack.c.l.b16 %v1120
      %v1416 = vunpack.c.l.b16 %v1121
      %v1417 = vunpack.c.l.b16 %v1122
      %v1418 = vunpack.c.l.b16 %v1123
      %v1419 = vunpack.c.l.b16 %v1124
      %v1420 = vunpack.c.l.b16 %v1125
      %v1421 = vunpack.c.l.b16 %v1126
      %v1422 = vunpack.c.l.b16 %v1127
      %v1423 = vunpack.c.l.b16 %v1128
      %v1424 = vunpack.c.l.b16 %v1129
      %v1425 = vunpack.c.l.b16 %v1130
      %v1426 = vunpack.c.l.b16 %v1131
      %v1427 = vunpack.c.l.b16 %v1132
      %v1428 = vunpack.c.l.b16 %v1133
      %v1429 = vunpack.c.l.b16 %v1134
      %v1430 = vunpack.c.l.b16 %v1135
      %v1431 = vunpack.c.l.b16 %v1136
      %v1432 = vunpack.c.l.b16 %v1137
      %v1433 = vunpack.c.l.b16 %v1138
      %v1434 = vunpack.c.l.b16 %v1139
      %v1435 = vunpack.c.l.b16 %v1140
      %v1436 = vunpack.c.l.b16 %v1141
      %v1437 = vunpack.c.l.b16 %v1142
      %v1438 = vunpack.c.l.b16 %v1143
      %v1439 = vunpack.c.l.b16 %v1144
      %v1440 = vunpack.c.l.b16 %v1145
      %v1441 = vunpack.c.l.b16 %v1146
      %v1442 = vunpack.c.l.b16 %v1147
      %v1443 = vunpack.c.l.b16 %v1148
      %v1444 = vunpack.c.l.b16 %v1149
      %v1445 = vunpack.c.l.b16 %v1150
      %v1446 = vunpack.c.l.b16 %v1151
      %v1447 = vunpack.c.l.b16 %v1152
      %v1448 = vunpack.c.l.b16 %v1153
      %v1449 = vunpack.c.l.b16 %v1154
      %v1450 = vunpack.c.l.b16 %v1155
      %v1451 = vunpack.c.l.b16 %v1156
      %v1452 = vunpack.c.l.b16 %v1157
      %v1453 = vunpack.c.l.b16 %v1158
      %v1454 = vunpack.c.l.b16 %v1159
      %v1455 = vunpack.c.l.b16 %v1160
      %v1456 = vunpack.c.l.b16 %v1161
      %v1457 = vunpack.c.l.b16 %v1162
      %v1458 = vunpack.c.l.b16 %v1163
      %v1459 = vunpack.c.l.b16 %v1164
      %v1460 = vunpack.c.l.b16 %v1165
      %v1461 = vunpack.c.l.b16 %v1166
      %v1462 = vunpack.c.l.b16 %v1167
      %v1463 = vunpack.c.l.b16 %v1168
      %v1464 = vunpack.c.l.b16 %v1169
      %v1465 = vunpack.c.l.b16 %v1170
      %v1466 = vunpack.c.l.b16 %v1171
      %v1467 = vunpack.c.l.b16 %v1172
      %v1468 = vunpack.c.l.b16 %v1173
      %v1469 = vunpack.c.l.b16 %v1174
      %v1470 = vunpack.c.l.b16 %v1175
      %v1471 = vunpack.c.l.b16 %v1176
      %v1472 = vunpack.c.l.b16 %v1177
      %v1473 = vunpack.c.l.b16 %v1178
      %v1474 = vunpack.c.l.b16 %v1179
      %v1475 = vunpack.c.l.b16 %v1180
      %v1476 = vunpack.c.l.b16 %v1181
      %v1477 = vunpack.c.l.b16 %v1182
      %v1478 = vunpack.c.l.b16 %v1183
      %v1479 = vunpack.c.l.b16 %v1184
      %v1480 = vunpack.c.l.b16 %v1185
      %v1481 = vunpack.c.l.b16 %v1186
      %v1482 = vunpack.c.l.b16 %v1187
      %v1483 = vunpack.c.l.b16 %v1188
      %v1484 = vunpack.c.l.b16 %v1189
      %v1485 = vunpack.c.l.b16 %v1190
      %v1486 = vunpack.c.l.b16 %v1191
      %v1487 = vunpack.c.l.b16 %v1192
      %v1488 = vunpack.c.l.b16 %v1193
      %v1489 = vunpack.c.l.b16 %v1194
      %v1490 = vunpack.c.l.b16 %v1195
      %v1491 = vunpack.c.l.b16 %v1196
      %v1492 = vunpack.c.l.b16 %v1197
      %v1493 = vunpack.c.l.b16 %v1198
      %v1494 = vunpack.c.l.b16 %v1199
      %v1495 = vunpack.c.l.b16 %v1200
      %v1496 = vunpack.c.l.b16 %v1201
      %v1497 = vunpack.c.l.b16 %v1202
      %v1498 = vunpack.c.l.b16 %v1203
      %v1499 = vunpack.c.l.b16 %v1204
      %v1500 = vunpack.c.l.b16 %v1205
      %v1501 = vunpack.c.l.b16 %v1206
      %v1502 = vunpack.c.l.b16 %v1207
      %v1503 = vunpack.c.l.b16 %v1208
      %v1504 = vunpack.c.l.b16 %v1209
      %v1505 = vunpack.c.l.b16 %v1210
      %v1506 = vunpack.c.l.b16 %v1211
      %v1507 = vunpack.c.l.b16 %v1212
      %v1508 = vunpack.c.l.b16 %v1213
      %v1509 = vunpack.c.l.b16 %v1214
      %v1510 = vunpack.c.l.b16 %v1215
      %v1511 = vunpack.c.l.b16 %v1216
      %v1512 = vunpack.c.l.b16 %v1217
      %v1513 = vunpack.c.l.b16 %v1218
      %v1514 = vunpack.c.l.b16 %v1219
      %v1515 = vunpack.c.l.b16 %v1220
      %v1516 = vunpack.c.l.b16 %v1221
      %v1517 = vunpack.c.l.b16 %v1222
      %v1518 = vunpack.c.l.b16 %v1223
      %v1519 = vunpack.c.l.b16 %v1224
      %v1520 = vunpack.c.l.b16 %v1225
      %v1521 = vunpack.c.l.b16 %v1226
      %v1522 = vunpack.c.l.b16 %v1227
      %v1523 = vunpack.c.l.b16 %v1228
      %v1524 = vunpack.c.l.b16 %v1229
      %v1525 = vunpack.c.l.b16 %v1230
      %v1526 = vunpack.c.l.b16 %v1231
      %v1527 = vunpack.c.l.b16 %v1232
      %v1528 = vunpack.c.l.b16 %v1233
      %v1529 = vunpack.c.l.b16 %v1234
      %v1530 = vunpack.c.l.b16 %v1235
      %v1531 = vunpack.c.l.b16 %v1236
      %v1532 = vunpack.c.l.b16 %v1237
      %v1533 = vunpack.c.l.b16 %v1238
      %v1534 = vunpack.c.l.b16 %v1239
      %v1535 = vunpack.c.l.b16 %v1240
      %v1536 = vunpack.c.l.b16 %v1241
      %v1537 = vunpack.c.l.b16 %v1242
      %v1538 = vunpack.c.l.b16 %v1243
      %v1539 = vunpack.c.l.b16 %v1244
      %v1540 = vunpack.c.l.b16 %v1245
      %v1541 = vunpack.c.l.b16 %v1246
      %v1542 = vunpack.c.l.b16 %v1247
      %v1543 = vunpack.c.l.b16 %v1248
      %v1544 = vunpack.c.l.b16 %v1249
      %v1545 = vunpack.c.l.b16 %v1250
      %v1546 = vunpack.c.l.b16 %v1251
      %v1547 = vunpack.c.l.b16 %v1252
      %v1548 = vunpack.c.l.b16 %v1253
      %v1549 = vunpack.c.l.b16 %v1254
      %v1550 = vunpack.c.l.b16 %v1255
      %v1551 = vpack.c.b16 %v1408, %v1407
      %v1552 = vpack.c.b16 %v1410, %v1409
      %v1553 = vpack.c.b16 %v1412, %v1411
      %v1554 = vpack.c.b16 %v1414, %v1413
      %v1555 = vpack.c.b16 %v1416, %v1415
      %v1556 = vpack.c.b16 %v1418, %v1417
      %v1557 = vpack.c.b16 %v1420, %v1419
      %v1558 = vpack.c.b16 %v1422, %v1421
      %v1559 = vpack.c.b16 %v1424, %v1423
      %v1560 = vpack.c.b16 %v1426, %v1425
      %v1561 = vpack.c.b16 %v1428, %v1427
      %v1562 = vpack.c.b16 %v1430, %v1429
      %v1563 = vpack.c.b16 %v1432, %v1431
      %v1564 = vpack.c.b16 %v1434, %v1433
      %v1565 = vpack.c.b16 %v1436, %v1435
      %v1566 = vpack.c.b16 %v1438, %v1437
      %v1567 = vpack.c.b16 %v1440, %v1439
      %v1568 = vpack.c.b16 %v1442, %v1441
      %v1569 = vpack.c.b16 %v1444, %v1443
      %v1570 = vpack.c.b16 %v1446, %v1445
      %v1571 = vpack.c.b16 %v1448, %v1447
      %v1572 = vpack.c.b16 %v1450, %v1449
      %v1573 = vpack.c.b16 %v1452, %v1451
      %v1574 = vpack.c.b16 %v1454, %v1453
      %v1575 = vpack.c.b16 %v1456, %v1455
      %v1576 = vpack.c.b16 %v1458, %v1457
      %v1577 = vpack.c.b16 %v1460, %v1459
      %v1578 = vpack.c.b16 %v1462, %v1461
      %v1579 = vpack.c.b16 %v1464, %v1463
      %v1580 = vpack.c.b16 %v1466, %v1465
      %v1581 = vpack.c.b16 %v1468, %v1467
      %v1582 = vpack.c.b16 %v1470, %v1469
      %v1583 = vpack.c.b16 %v1472, %v1471
      %v1584 = vpack.c.b16 %v1474, %v1473
      %v1585 = vpack.c.b16 %v1476, %v1475
      %v1586 = vpack.c.b16 %v1478, %v1477
      %v1587 = vpack.c.b16 %v1480, %v1479
      %v1588 = vpack.c.b16 %v1482, %v1481
      %v1589 = vpack.c.b16 %v1484, %v1483
      %v1590 = vpack.c.b16 %v1486, %v1485
      %v1591 = vpack.c.b16 %v1488, %v1487
      %v1592 = vpack.c.b16 %v1490, %v1489
      %v1593 = vpack.c.b16 %v1492, %v1491
      %v1594 = vpack.c.b16 %v1494, %v1493
      %v1595 = vpack.c.b16 %v1496, %v1495
      %v1596 = vpack.c.b16 %v1498, %v1497
      %v1597 = vpack.c.b16 %v1500, %v1499
      %v1598 = vpack.c.b16 %v1502, %v1501
      %v1599 = vpack.c.b16 %v1504, %v1503
      %v1600 = vpack.c.b16 %v1506, %v1505
      %v1601 = vpack.c.b16 %v1508, %v1507
      %v1602 = vpack.c.b16 %v1510, %v1509
      %v1603 = vpack.c.b16 %v1512, %v1511
      %v1604 = vpack.c.b16 %v1514, %v1513
      %v1605 = vpack.c.b16 %v1516, %v1515
      %v1606 = vpack.c.b16 %v1518, %v1517
      %v1607 = vpack.c.b16 %v1520, %v1519
      %v1608 = vpack.c.b16 %v1522, %v1521
      %v1609 = vpack.c.b16 %v1524, %v1523
      %v1610 = vpack.c.b16 %v1526, %v1525
      %v1611 = vpack.c.b16 %v1528, %v1527
      %v1612 = vpack.c.b16 %v1530, %v1529
      %v1613 = vpack.c.b16 %v1532, %v1531
      %v1614 = vpack.c.b16 %v1534, %v1533
      %v1615 = vpack.c.b16 %v1536, %v1535
      %v1616 = vpack.c.b16 %v1538, %v1537
      %v1617 = vpack.c.b16 %v1540, %v1539
      %v1618 = vpack.c.b16 %v1542, %v1541
      %v1619 = vpack.c.b16 %v1544, %v1543
      %v1620 = vpack.c.b16 %v1546, %v1545
      %v1621 = vpack.c.b16 %v1548, %v1547
      %v1622 = vpack.c.b16 %v1550, %v1549
      %1695 = vmatprep.subr.bf16.mxu0 0
      %1696 = vmatpush1.bf16.msra.mxu0 %v1551
      %1697 = vmatprep.subr.bf16.mxu0 0
      %1698 = vmatpush1.bf16.msra.mxu0 %v1552
      %1699 = vmatprep.subr.bf16.mxu0 0
      %1700 = vmatpush1.bf16.msra.mxu0 %v1553
      %1701 = vmatprep.subr.bf16.mxu0 0
      %1702 = vmatpush1.bf16.msra.mxu0 %v1554
      %1703 = vmatprep.subr.bf16.mxu0 0
      %1704 = vmatpush1.bf16.msra.mxu0 %v1555
      %1705 = vmatprep.subr.bf16.mxu0 0
      %1706 = vmatpush1.bf16.msra.mxu0 %v1556
      %1707 = vmatprep.subr.bf16.mxu0 0
      %1708 = vmatpush1.bf16.msra.mxu0 %v1557
      %1709 = vmatprep.subr.bf16.mxu0 0
      %1710 = vmatpush1.bf16.msra.mxu0 %v1558
      %1711 = vmatprep.subr.bf16.mxu0 0
      %1712 = vmatpush1.bf16.msra.mxu0 %v1559
      %1713 = vmatprep.subr.bf16.mxu0 0
      %1714 = vmatpush1.bf16.msra.mxu0 %v1560
      %1715 = vmatprep.subr.bf16.mxu0 0
      %1716 = vmatpush1.bf16.msra.mxu0 %v1561
      %1717 = vmatprep.subr.bf16.mxu0 0
      %1718 = vmatpush1.bf16.msra.mxu0 %v1562
      %1719 = vmatprep.subr.bf16.mxu0 0
      %1720 = vmatpush1.bf16.msra.mxu0 %v1563
      %1721 = vmatprep.subr.bf16.mxu0 0
      %1722 = vmatpush1.bf16.msra.mxu0 %v1564
      %1723 = vmatprep.subr.bf16.mxu0 0
      %1724 = vmatpush1.bf16.msra.mxu0 %v1565
      %1725 = vmatprep.subr.bf16.mxu0 0
      %1726 = vmatpush1.bf16.msra.mxu0 %v1566
      %1727 = vmatprep.mubr.bf16.mxu0 %v780
      %1728 = vmatmul.mubr.bf16.gmra.mrb[0].mxu0 %v732
      %v1729 = vpop.f32.mrb[0].mxu0
      %v1730 = vadd.f32 %v1261, %v1729
      %v1731 = vpop.f32.mrb[0].mxu0
      %v1732 = vpop.f32.mrb[0].mxu0
      %v1733 = vadd.f32 %v1261, %v1732
      %v1734 = vpop.f32.mrb[0].mxu0
      %1735 = vmatprep.mubr.bf16.mxu0 %v792
      %1736 = vmatmul.mubr.bf16.gmra.mrb[0].mxu0 %v733
      %v1737 = vpop.f32.mrb[0].mxu0
      %v1738 = vadd.f32 %v1261, %v1737
      %v1739 = vpop.f32.mrb[0].mxu0
      %v1740 = vpop.f32.mrb[0].mxu0
      %v1741 = vadd.f32 %v1261, %v1740
      %v1742 = vpop.f32.mrb[0].mxu0
      %1743 = vmatprep.mubr.bf16.mxu0 %v804
      %1744 = vmatmul.mubr.bf16.gmra.mrb[0].mxu0 %v734
      %v1745 = vpop.f32.mrb[0].mxu0
      %v1746 = vadd.f32 %v1261, %v1745
      %v1747 = vpop.f32.mrb[0].mxu0
      %v1748 = vpop.f32.mrb[0].mxu0
      %v1749 = vadd.f32 %v1261, %v1748
      %v1750 = vpop.f32.mrb[0].mxu0
      %1751 = vmatprep.mubr.bf16.mxu0 %v816
      %1752 = vmatmul.mubr.bf16.gmra.mrb[0].mxu0 %v735
      %v1753 = vpop.f32.mrb[0].mxu0
      %v1754 = vadd.f32 %v1261, %v1753
      %v1755 = vpop.f32.mrb[0].mxu0
      %v1756 = vpop.f32.mrb[0].mxu0
      %v1757 = vadd.f32 %v1261, %v1756
      %v1758 = vpop.f32.mrb[0].mxu0
      %1759 = vmatprep.mubr.bf16.mxu0 %v828
      %1760 = vmatmul.mubr.bf16.gmra.mrb[0].mxu0 %v736
      %v1761 = vpop.f32.mrb[0].mxu0
      %v1762 = vadd.f32 %v1261, %v1761
      %v1763 = vpop.f32.mrb[0].mxu0
      %v1764 = vpop.f32.mrb[0].mxu0
      %v1765 = vadd.f32 %v1261, %v1764
      %v1766 = vpop.f32.mrb[0].mxu0
      %1767 = vmatprep.mubr.bf16.mxu0 %v840
      %1768 = vmatmul.mubr.bf16.gmra.mrb[0].mxu0 %v737
      %v1769 = vpop.f32.mrb[0].mxu0
      %v1770 = vadd.f32 %v1261, %v1769
      %v1771 = vpop.f32.mrb[0].mxu0
      %v1772 = vpop.f32.mrb[0].mxu0
      %v1773 = vadd.f32 %v1261, %v1772
      %v1774 = vpop.f32.mrb[0].mxu0
      %1775 = vmatprep.mubr.bf16.mxu0 %v852
      %1776 = vmatmul.mubr.bf16.gmra.mrb[0].mxu0 %v738
      %v1777 = vpop.f32.mrb[0].mxu0
      %v1778 = vadd.f32 %v1261, %v1777
      %v1779 = vpop.f32.mrb[0].mxu0
      %v1780 = vpop.f32.mrb[0].mxu0
      %v1781 = vadd.f32 %v1261, %v1780
      %v1782 = vpop.f32.mrb[0].mxu0
      %1783 = vmatprep.mubr.bf16.mxu0 %v864
      %1784 = vmatmul.mubr.bf16.gmra.mrb[0].mxu0 %v739
      %v1785 = vpop.f32.mrb[0].mxu0
      %v1786 = vadd.f32 %v1261, %v1785
      %v1787 = vpop.f32.mrb[0].mxu0
      %v1788 = vpop.f32.mrb[0].mxu0
      %v1789 = vadd.f32 %v1261, %v1788
      %v1790 = vpop.f32.mrb[0].mxu0
      %1791 = vmatprep.mubr.bf16.mxu0 %v876
      %1792 = vmatmul.mubr.bf16.gmra.mrb[0].mxu0 %v740
      %v1793 = vpop.f32.mrb[0].mxu0
      %v1794 = vadd.f32 %v1261, %v1793
      %v1795 = vpop.f32.mrb[0].mxu0
      %v1796 = vpop.f32.mrb[0].mxu0
      %v1797 = vadd.f32 %v1261, %v1796
      %v1798 = vpop.f32.mrb[0].mxu0
      %1799 = vmatprep.mubr.bf16.mxu0 %v888
      %1800 = vmatmul.mubr.bf16.gmra.mrb[0].mxu0 %v741
      %v1801 = vpop.f32.mrb[0].mxu0
      %v1802 = vadd.f32 %v1261, %v1801
      %v1803 = vpop.f32.mrb[0].mxu0
      %v1804 = vpop.f32.mrb[0].mxu0
      %v1805 = vadd.f32 %v1261, %v1804
      %v1806 = vpop.f32.mrb[0].mxu0
      %1807 = vmatprep.mubr.bf16.mxu0 %v900
      %1808 = vmatmul.mubr.bf16.gmra.mrb[0].mxu0 %v742
      %v1809 = vpop.f32.mrb[0].mxu0
      %v1810 = vadd.f32 %v1261, %v1809
      %v1811 = vpop.f32.mrb[0].mxu0
      %v1812 = vpop.f32.mrb[0].mxu0
      %v1813 = vadd.f32 %v1261, %v1812
      %v1814 = vpop.f32.mrb[0].mxu0
      %1815 = vmatprep.mubr.bf16.mxu0 %v912
      %1816 = vmatmul.mubr.bf16.gmra.mrb[0].mxu0 %v743
      %v1817 = vpop.f32.mrb[0].mxu0
      %v1818 = vadd.f32 %v1261, %v1817
      %v1819 = vpop.f32.mrb[0].mxu0
      %v1820 = vpop.f32.mrb[0].mxu0
      %v1821 = vadd.f32 %v1261, %v1820
      %v1822 = vpop.f32.mrb[0].mxu0
      %1823 = vmatprep.mubr.bf16.mxu0 %v924
      %1824 = vmatmul.mubr.bf16.gmra.mrb[0].mxu0 %v744
      %v1825 = vpop.f32.mrb[0].mxu0
      %v1826 = vadd.f32 %v1261, %v1825
      %v1827 = vpop.f32.mrb[0].mxu0
      %v1828 = vpop.f32.mrb[0].mxu0
      %v1829 = vadd.f32 %v1261, %v1828
      %v1830 = vpop.f32.mrb[0].mxu0
      %1831 = vmatprep.mubr.bf16.mxu0 %v936
      %1832 = vmatmul.mubr.bf16.gmra.mrb[0].mxu0 %v745
      %v1833 = vpop.f32.mrb[0].mxu0
      %v1834 = vadd.f32 %v1261, %v1833
      %v1835 = vpop.f32.mrb[0].mxu0
      %v1836 = vpop.f32.mrb[0].mxu0
      %v1837 = vadd.f32 %v1261, %v1836
      %v1838 = vpop.f32.mrb[0].mxu0
      %1839 = vmatprep.mubr.bf16.mxu0 %v948
      %1840 = vmatmul.mubr.bf16.gmra.mrb[0].mxu0 %v746
      %v1841 = vpop.f32.mrb[0].mxu0
      %v1842 = vadd.f32 %v1261, %v1841
      %v1843 = vpop.f32.mrb[0].mxu0
      %v1844 = vpop.f32.mrb[0].mxu0
      %v1845 = vadd.f32 %v1261, %v1844
      %v1846 = vpop.f32.mrb[0].mxu0
      %1847 = vmatprep.mubr.bf16.mxu0 %v960
      %1848 = vmatmul.mubr.bf16.gmra.mrb[0].mxu0 %v747
      %v1849 = vpop.f32.mrb[0].mxu0
      %v1850 = vadd.f32 %v1261, %v1849
      %v1851 = vpop.f32.mrb[0].mxu0
      %v1852 = vpop.f32.mrb[0].mxu0
      %v1853 = vadd.f32 %v1261, %v1852
      %v1854 = vpop.f32.mrb[0].mxu0
      %1855 = vdwg.mxu0
      %1856 = vmatprep.subr.bf16.mxu0 0
      %1857 = vmatpush1.bf16.msra.mxu0 %v1567
      %1858 = vmatprep.subr.bf16.mxu0 0
      %1859 = vmatpush1.bf16.msra.mxu0 %v1568
      %1860 = vmatprep.subr.bf16.mxu0 0
      %1861 = vmatpush1.bf16.msra.mxu0 %v1569
      %1862 = vmatprep.subr.bf16.mxu0 0
      %1863 = vmatpush1.bf16.msra.mxu0 %v1570
      %1864 = vmatprep.subr.bf16.mxu0 0
      %1865 = vmatpush1.bf16.msra.mxu0 %v1571
      %1866 = vmatprep.subr.bf16.mxu0 0
      %1867 = vmatpush1.bf16.msra.mxu0 %v1572
      %1868 = vmatprep.subr.bf16.mxu0 0
      %1869 = vmatpush1.bf16.msra.mxu0 %v1573
      %1870 = vmatprep.subr.bf16.mxu0 0
      %1871 = vmatpush1.bf16.msra.mxu0 %v1574
      %1872 = vmatprep.subr.bf16.mxu0 0
      %1873 = vmatpush1.bf16.msra.mxu0 %v1575
      %1874 = vmatprep.subr.bf16.mxu0 0
      %1875 = vmatpush1.bf16.msra.mxu0 %v1576
      %1876 = vmatprep.subr.bf16.mxu0 0
      %1877 = vmatpush1.bf16.msra.mxu0 %v1577
      %1878 = vmatprep.subr.bf16.mxu0 0
      %1879 = vmatpush1.bf16.msra.mxu0 %v1578
      %1880 = vmatprep.subr.bf16.mxu0 0
      %1881 = vmatpush1.bf16.msra.mxu0 %v1579
      %1882 = vmatprep.subr.bf16.mxu0 0
      %1883 = vmatpush1.bf16.msra.mxu0 %v1580
      %1884 = vmatprep.subr.bf16.mxu0 0
      %1885 = vmatpush1.bf16.msra.mxu0 %v1581
      %1886 = vmatprep.subr.bf16.mxu0 0
      %1887 = vmatpush1.bf16.msra.mxu0 %v1582
      %1888 = vmatprep.mubr.bf16.mxu0 %v733
      %1889 = vmatmul.mubr.bf16.gmra.mrb[0].mxu0 %v1012
      %v1890 = vpop.f32.mrb[0].mxu0
      %v1891 = vadd.f32 %v1730, %v1890
      %v1892 = vpop.f32.mrb[0].mxu0
      %v1893 = vpop.f32.mrb[0].mxu0
      %v1894 = vadd.f32 %v1733, %v1893
      %v1895 = vpop.f32.mrb[0].mxu0
      %1896 = vmatprep.mubr.bf16.mxu0 %v734
      %1897 = vmatmul.mubr.bf16.gmra.mrb[0].mxu0 %v1015
      %v1898 = vpop.f32.mrb[0].mxu0
      %v1899 = vadd.f32 %v1738, %v1898
      %v1900 = vpop.f32.mrb[0].mxu0
      %v1901 = vpop.f32.mrb[0].mxu0
      %v1902 = vadd.f32 %v1741, %v1901
      %v1903 = vpop.f32.mrb[0].mxu0
      %1904 = vmatprep.mubr.bf16.mxu0 %v735
      %1905 = vmatmul.mubr.bf16.gmra.mrb[0].mxu0 %v1018
      %v1906 = vpop.f32.mrb[0].mxu0
      %v1907 = vadd.f32 %v1746, %v1906
      %v1908 = vpop.f32.mrb[0].mxu0
      %v1909 = vpop.f32.mrb[0].mxu0
      %v1910 = vadd.f32 %v1749, %v1909
      %v1911 = vpop.f32.mrb[0].mxu0
      %1912 = vmatprep.mubr.bf16.mxu0 %v736
      %1913 = vmatmul.mubr.bf16.gmra.mrb[0].mxu0 %v1021
      %v1914 = vpop.f32.mrb[0].mxu0
      %v1915 = vadd.f32 %v1754, %v1914
      %v1916 = vpop.f32.mrb[0].mxu0
      %v1917 = vpop.f32.mrb[0].mxu0
      %v1918 = vadd.f32 %v1757, %v1917
      %v1919 = vpop.f32.mrb[0].mxu0
      %1920 = vmatprep.mubr.bf16.mxu0 %v737
      %1921 = vmatmul.mubr.bf16.gmra.mrb[0].mxu0 %v1024
      %v1922 = vpop.f32.mrb[0].mxu0
      %v1923 = vadd.f32 %v1762, %v1922
      %v1924 = vpop.f32.mrb[0].mxu0
      %v1925 = vpop.f32.mrb[0].mxu0
      %v1926 = vadd.f32 %v1765, %v1925
      %v1927 = vpop.f32.mrb[0].mxu0
      %1928 = vmatprep.mubr.bf16.mxu0 %v738
      %1929 = vmatmul.mubr.bf16.gmra.mrb[0].mxu0 %v1027
      %v1930 = vpop.f32.mrb[0].mxu0
      %v1931 = vadd.f32 %v1770, %v1930
      %v1932 = vpop.f32.mrb[0].mxu0
      %v1933 = vpop.f32.mrb[0].mxu0
      %v1934 = vadd.f32 %v1773, %v1933
      %v1935 = vpop.f32.mrb[0].mxu0
      %1936 = vmatprep.mubr.bf16.mxu0 %v739
      %1937 = vmatmul.mubr.bf16.gmra.mrb[0].mxu0 %v1030
      %v1938 = vpop.f32.mrb[0].mxu0
      %v1939 = vadd.f32 %v1778, %v1938
      %v1940 = vpop.f32.mrb[0].mxu0
      %v1941 = vpop.f32.mrb[0].mxu0
      %v1942 = vadd.f32 %v1781, %v1941
      %v1943 = vpop.f32.mrb[0].mxu0
      %1944 = vmatprep.mubr.bf16.mxu0 %v740
      %1945 = vmatmul.mubr.bf16.gmra.mrb[0].mxu0 %v1033
      %v1946 = vpop.f32.mrb[0].mxu0
      %v1947 = vadd.f32 %v1786, %v1946
      %v1948 = vpop.f32.mrb[0].mxu0
      %v1949 = vpop.f32.mrb[0].mxu0
      %v1950 = vadd.f32 %v1789, %v1949
      %v1951 = vpop.f32.mrb[0].mxu0
      %1952 = vmatprep.mubr.bf16.mxu0 %v741
      %1953 = vmatmul.mubr.bf16.gmra.mrb[0].mxu0 %v1036
      %v1954 = vpop.f32.mrb[0].mxu0
      %v1955 = vadd.f32 %v1794, %v1954
      %v1956 = vpop.f32.mrb[0].mxu0
      %v1957 = vpop.f32.mrb[0].mxu0
      %v1958 = vadd.f32 %v1797, %v1957
      %v1959 = vpop.f32.mrb[0].mxu0
      %1960 = vmatprep.mubr.bf16.mxu0 %v742
      %1961 = vmatmul.mubr.bf16.gmra.mrb[0].mxu0 %v1039
      %v1962 = vpop.f32.mrb[0].mxu0
      %v1963 = vadd.f32 %v1802, %v1962
      %v1964 = vpop.f32.mrb[0].mxu0
      %v1965 = vpop.f32.mrb[0].mxu0
      %v1966 = vadd.f32 %v1805, %v1965
      %v1967 = vpop.f32.mrb[0].mxu0
      %1968 = vmatprep.mubr.bf16.mxu0 %v743
      %1969 = vmatmul.mubr.bf16.gmra.mrb[0].mxu0 %v1042
      %v1970 = vpop.f32.mrb[0].mxu0
      %v1971 = vadd.f32 %v1810, %v1970
      %v1972 = vpop.f32.mrb[0].mxu0
      %v1973 = vpop.f32.mrb[0].mxu0
      %v1974 = vadd.f32 %v1813, %v1973
      %v1975 = vpop.f32.mrb[0].mxu0
      %1976 = vmatprep.mubr.bf16.mxu0 %v744
      %1977 = vmatmul.mubr.bf16.gmra.mrb[0].mxu0 %v1045
      %v1978 = vpop.f32.mrb[0].mxu0
      %v1979 = vadd.f32 %v1818, %v1978
      %v1980 = vpop.f32.mrb[0].mxu0
      %v1981 = vpop.f32.mrb[0].mxu0
      %v1982 = vadd.f32 %v1821, %v1981
      %v1983 = vpop.f32.mrb[0].mxu0
      %1984 = vmatprep.mubr.bf16.mxu0 %v745
      %1985 = vmatmul.mubr.bf16.gmra.mrb[0].mxu0 %v1048
      %v1986 = vpop.f32.mrb[0].mxu0
      %v1987 = vadd.f32 %v1826, %v1986
      %v1988 = vpop.f32.mrb[0].mxu0
      %v1989 = vpop.f32.mrb[0].mxu0
      %v1990 = vadd.f32 %v1829, %v1989
      %v1991 = vpop.f32.mrb[0].mxu0
      %1992 = vmatprep.mubr.bf16.mxu0 %v746
      %1993 = vmatmul.mubr.bf16.gmra.mrb[0].mxu0 %v1051
      %v1994 = vpop.f32.mrb[0].mxu0
      %v1995 = vadd.f32 %v1834, %v1994
      %v1996 = vpop.f32.mrb[0].mxu0
      %v1997 = vpop.f32.mrb[0].mxu0
      %v1998 = vadd.f32 %v1837, %v1997
      %v1999 = vpop.f32.mrb[0].mxu0
      %2000 = vmatprep.mubr.bf16.mxu0 %v747
      %2001 = vmatmul.mubr.bf16.gmra.mrb[0].mxu0 %v1054
      %v2002 = vpop.f32.mrb[0].mxu0
      %v2003 = vadd.f32 %v1842, %v2002
      %v2004 = vpop.f32.mrb[0].mxu0
      %v2005 = vpop.f32.mrb[0].mxu0
      %v2006 = vadd.f32 %v1845, %v2005
      %v2007 = vpop.f32.mrb[0].mxu0
      %2008 = vmatprep.mubr.bf16.mxu0 %v748
      %2009 = vmatmul.mubr.bf16.gmra.mrb[0].mxu0 %v1057
      %v2010 = vpop.f32.mrb[0].mxu0
      %v2011 = vadd.f32 %v1850, %v2010
      %v2012 = vpop.f32.mrb[0].mxu0
      %v2013 = vpop.f32.mrb[0].mxu0
      %v2014 = vadd.f32 %v1853, %v2013
      %v2015 = vpop.f32.mrb[0].mxu0
      %2016 = vdwg.mxu0
      %2017 = vmatprep.subr.bf16.mxu0 0
      %2018 = vmatpush1.bf16.msra.mxu0 %v1583
      %2019 = vmatprep.subr.bf16.mxu0 0
      %2020 = vmatpush1.bf16.msra.mxu0 %v1584
      %2021 = vmatprep.subr.bf16.mxu0 0
      %2022 = vmatpush1.bf16.msra.mxu0 %v1585
      %2023 = vmatprep.subr.bf16.mxu0 0
      %2024 = vmatpush1.bf16.msra.mxu0 %v1586
      %2025 = vmatprep.subr.bf16.mxu0 0
      %2026 = vmatpush1.bf16.msra.mxu0 %v1587
      %2027 = vmatprep.subr.bf16.mxu0 0
      %2028 = vmatpush1.bf16.msra.mxu0 %v1588
      %2029 = vmatprep.subr.bf16.mxu0 0
      %2030 = vmatpush1.bf16.msra.mxu0 %v1589
      %2031 = vmatprep.subr.bf16.mxu0 0
      %2032 = vmatpush1.bf16.msra.mxu0 %v1590
      %2033 = vmatprep.subr.bf16.mxu0 0
      %2034 = vmatpush1.bf16.msra.mxu0 %v1591
      %2035 = vmatprep.subr.bf16.mxu0 0
      %2036 = vmatpush1.bf16.msra.mxu0 %v1592
      %2037 = vmatprep.subr.bf16.mxu0 0
      %2038 = vmatpush1.bf16.msra.mxu0 %v1593
      %2039 = vmatprep.subr.bf16.mxu0 0
      %2040 = vmatpush1.bf16.msra.mxu0 %v1594
      %2041 = vmatprep.subr.bf16.mxu0 0
      %2042 = vmatpush1.bf16.msra.mxu0 %v1595
      %2043 = vmatprep.subr.bf16.mxu0 0
      %2044 = vmatpush1.bf16.msra.mxu0 %v1596
      %2045 = vmatprep.subr.bf16.mxu0 0
      %2046 = vmatpush1.bf16.msra.mxu0 %v1597
      %2047 = vmatprep.subr.bf16.mxu0 0
      %2048 = vmatpush1.bf16.msra.mxu0 %v1598
      %2049 = vmatprep.mubr.bf16.mxu0 %v1015
      %2050 = vmatmul.mubr.bf16.gmra.mrb[0].mxu0 %v792
      %v2051 = vpop.f32.mrb[0].mxu0
      %v2052 = vadd.f32 %v1891, %v2051
      %v2053 = vpop.f32.mrb[0].mxu0
      %v2054 = vpop.f32.mrb[0].mxu0
      %v2055 = vadd.f32 %v1894, %v2054
      %v2056 = vpop.f32.mrb[0].mxu0
      %2057 = vmatprep.mubr.bf16.mxu0 %v1018
      %2058 = vmatmul.mubr.bf16.gmra.mrb[0].mxu0 %v804
      %v2059 = vpop.f32.mrb[0].mxu0
      %v2060 = vadd.f32 %v1899, %v2059
      %v2061 = vpop.f32.mrb[0].mxu0
      %v2062 = vpop.f32.mrb[0].mxu0
      %v2063 = vadd.f32 %v1902, %v2062
      %v2064 = vpop.f32.mrb[0].mxu0
      %2065 = vmatprep.mubr.bf16.mxu0 %v1021
      %2066 = vmatmul.mubr.bf16.gmra.mrb[0].mxu0 %v816
      %v2067 = vpop.f32.mrb[0].mxu0
      %v2068 = vadd.f32 %v1907, %v2067
      %v2069 = vpop.f32.mrb[0].mxu0
      %v2070 = vpop.f32.mrb[0].mxu0
      %v2071 = vadd.f32 %v1910, %v2070
      %v2072 = vpop.f32.mrb[0].mxu0
      %2073 = vmatprep.mubr.bf16.mxu0 %v1024
      %2074 = vmatmul.mubr.bf16.gmra.mrb[0].mxu0 %v828
      %v2075 = vpop.f32.mrb[0].mxu0
      %v2076 = vadd.f32 %v1915, %v2075
      %v2077 = vpop.f32.mrb[0].mxu0
      %v2078 = vpop.f32.mrb[0].mxu0
      %v2079 = vadd.f32 %v1918, %v2078
      %v2080 = vpop.f32.mrb[0].mxu0
      %2081 = vmatprep.mubr.bf16.mxu0 %v1027
      %2082 = vmatmul.mubr.bf16.gmra.mrb[0].mxu0 %v840
      %v2083 = vpop.f32.mrb[0].mxu0
      %v2084 = vadd.f32 %v1923, %v2083
      %v2085 = vpop.f32.mrb[0].mxu0
      %v2086 = vpop.f32.mrb[0].mxu0
      %v2087 = vadd.f32 %v1926, %v2086
      %v2088 = vpop.f32.mrb[0].mxu0
      %2089 = vmatprep.mubr.bf16.mxu0 %v1030
      %2090 = vmatmul.mubr.bf16.gmra.mrb[0].mxu0 %v852
      %v2091 = vpop.f32.mrb[0].mxu0
      %v2092 = vadd.f32 %v1931, %v2091
      %v2093 = vpop.f32.mrb[0].mxu0
      %v2094 = vpop.f32.mrb[0].mxu0
      %v2095 = vadd.f32 %v1934, %v2094
      %v2096 = vpop.f32.mrb[0].mxu0
      %2097 = vmatprep.mubr.bf16.mxu0 %v1033
      %2098 = vmatmul.mubr.bf16.gmra.mrb[0].mxu0 %v864
      %v2099 = vpop.f32.mrb[0].mxu0
      %v2100 = vadd.f32 %v1939, %v2099
      %v2101 = vpop.f32.mrb[0].mxu0
      %v2102 = vpop.f32.mrb[0].mxu0
      %v2103 = vadd.f32 %v1942, %v2102
      %v2104 = vpop.f32.mrb[0].mxu0
      %2105 = vmatprep.mubr.bf16.mxu0 %v1036
      %2106 = vmatmul.mubr.bf16.gmra.mrb[0].mxu0 %v876
      %v2107 = vpop.f32.mrb[0].mxu0
      %v2108 = vadd.f32 %v1947, %v2107
      %v2109 = vpop.f32.mrb[0].mxu0
      %v2110 = vpop.f32.mrb[0].mxu0
      %v2111 = vadd.f32 %v1950, %v2110
      %v2112 = vpop.f32.mrb[0].mxu0
      %2113 = vmatprep.mubr.bf16.mxu0 %v1039
      %2114 = vmatmul.mubr.bf16.gmra.mrb[0].mxu0 %v888
      %v2115 = vpop.f32.mrb[0].mxu0
      %v2116 = vadd.f32 %v1955, %v2115
      %v2117 = vpop.f32.mrb[0].mxu0
      %v2118 = vpop.f32.mrb[0].mxu0
      %v2119 = vadd.f32 %v1958, %v2118
      %v2120 = vpop.f32.mrb[0].mxu0
      %2121 = vmatprep.mubr.bf16.mxu0 %v1042
      %2122 = vmatmul.mubr.bf16.gmra.mrb[0].mxu0 %v900
      %v2123 = vpop.f32.mrb[0].mxu0
      %v2124 = vadd.f32 %v1963, %v2123
      %v2125 = vpop.f32.mrb[0].mxu0
      %v2126 = vpop.f32.mrb[0].mxu0
      %v2127 = vadd.f32 %v1966, %v2126
      %v2128 = vpop.f32.mrb[0].mxu0
      %2129 = vmatprep.mubr.bf16.mxu0 %v1045
      %2130 = vmatmul.mubr.bf16.gmra.mrb[0].mxu0 %v912
      %v2131 = vpop.f32.mrb[0].mxu0
      %v2132 = vadd.f32 %v1971, %v2131
      %v2133 = vpop.f32.mrb[0].mxu0
      %v2134 = vpop.f32.mrb[0].mxu0
      %v2135 = vadd.f32 %v1974, %v2134
      %v2136 = vpop.f32.mrb[0].mxu0
      %2137 = vmatprep.mubr.bf16.mxu0 %v1048
      %2138 = vmatmul.mubr.bf16.gmra.mrb[0].mxu0 %v924
      %v2139 = vpop.f32.mrb[0].mxu0
      %v2140 = vadd.f32 %v1979, %v2139
      %v2141 = vpop.f32.mrb[0].mxu0
      %v2142 = vpop.f32.mrb[0].mxu0
      %v2143 = vadd.f32 %v1982, %v2142
      %v2144 = vpop.f32.mrb[0].mxu0
      %2145 = vmatprep.mubr.bf16.mxu0 %v1051
      %2146 = vmatmul.mubr.bf16.gmra.mrb[0].mxu0 %v936
      %v2147 = vpop.f32.mrb[0].mxu0
      %v2148 = vadd.f32 %v1987, %v2147
      %v2149 = vpop.f32.mrb[0].mxu0
      %v2150 = vpop.f32.mrb[0].mxu0
      %v2151 = vadd.f32 %v1990, %v2150
      %v2152 = vpop.f32.mrb[0].mxu0
      %2153 = vmatprep.mubr.bf16.mxu0 %v1054
      %2154 = vmatmul.mubr.bf16.gmra.mrb[0].mxu0 %v948
      %v2155 = vpop.f32.mrb[0].mxu0
      %v2156 = vadd.f32 %v1995, %v2155
      %v2157 = vpop.f32.mrb[0].mxu0
      %v2158 = vpop.f32.mrb[0].mxu0
      %v2159 = vadd.f32 %v1998, %v2158
      %v2160 = vpop.f32.mrb[0].mxu0
      %2161 = vmatprep.mubr.bf16.mxu0 %v1057
      %2162 = vmatmul.mubr.bf16.gmra.mrb[0].mxu0 %v960
      %v2163 = vpop.f32.mrb[0].mxu0
      %v2164 = vadd.f32 %v2003, %v2163
      %v2165 = vpop.f32.mrb[0].mxu0
      %v2166 = vpop.f32.mrb[0].mxu0
      %v2167 = vadd.f32 %v2006, %v2166
      %v2168 = vpop.f32.mrb[0].mxu0
      %2169 = vmatprep.mubr.bf16.mxu0 %v1091
      %2170 = vmatmul.mubr.bf16.gmra.mrb[0].mxu0 %v1085
      %v2171 = vpop.f32.mrb[0].mxu0
      %v2172 = vadd.f32 %v2011, %v2171
      %v2173 = vpop.f32.mrb[0].mxu0
      %v2174 = vpop.f32.mrb[0].mxu0
      %v2175 = vadd.f32 %v2014, %v2174
      %v2176 = vpop.f32.mrb[0].mxu0
      %2177 = vdwg.mxu0
      %2178 = vmatprep.subr.bf16.mxu0 0
      %2179 = vmatpush1.bf16.msra.mxu0 %v1599
      %2180 = vmatprep.subr.bf16.mxu0 0
      %2181 = vmatpush1.bf16.msra.mxu0 %v1600
      %2182 = vmatprep.subr.bf16.mxu0 0
      %2183 = vmatpush1.bf16.msra.mxu0 %v1601
      %2184 = vmatprep.subr.bf16.mxu0 0
      %2185 = vmatpush1.bf16.msra.mxu0 %v1602
      %2186 = vmatprep.subr.bf16.mxu0 0
      %2187 = vmatpush1.bf16.msra.mxu0 %v1603
      %2188 = vmatprep.subr.bf16.mxu0 0
      %2189 = vmatpush1.bf16.msra.mxu0 %v1604
      %2190 = vmatprep.subr.bf16.mxu0 0
      %2191 = vmatpush1.bf16.msra.mxu0 %v1605
      %2192 = vmatprep.subr.bf16.mxu0 0
      %2193 = vmatpush1.bf16.msra.mxu0 %v1606
      %2194 = vmatprep.subr.bf16.mxu0 0
      %2195 = vmatpush1.bf16.msra.mxu0 %v1607
      %2196 = vmatprep.subr.bf16.mxu0 0
      %2197 = vmatpush1.bf16.msra.mxu0 %v1608
      %2198 = vmatprep.subr.bf16.mxu0 0
      %2199 = vmatpush1.bf16.msra.mxu0 %v1609
      %2200 = vmatprep.subr.bf16.mxu0 0
      %2201 = vmatpush1.bf16.msra.mxu0 %v1610
      %2202 = vmatprep.subr.bf16.mxu0 0
      %2203 = vmatpush1.bf16.msra.mxu0 %v1611
      %2204 = vmatprep.subr.bf16.mxu0 0
      %2205 = vmatpush1.bf16.msra.mxu0 %v1612
      %2206 = vmatprep.subr.bf16.mxu0 0
      %2207 = vmatpush1.bf16.msra.mxu0 %v1613
      %2208 = vmatprep.subr.bf16.mxu0 0
      %2209 = vmatpush1.bf16.msra.mxu0 %v1614
      %2210 = vmatprep.mubr.bf16.mxu0 %v804
      %2211 = vmatmul.mubr.bf16.gmra.mrb[0].mxu0 %v734
      %v2212 = vpop.f32.mrb[0].mxu0
      %v2213 = vadd.f32 %v2052, %v2212
      %v2214 = vpop.f32.mrb[0].mxu0
      %v2215 = vpop.f32.mrb[0].mxu0
      %v2216 = vadd.f32 %v2055, %v2215
      %v2217 = vpop.f32.mrb[0].mxu0
      %2218 = vmatprep.mubr.bf16.mxu0 %v816
      %2219 = vmatmul.mubr.bf16.gmra.mrb[0].mxu0 %v735
      %v2220 = vpop.f32.mrb[0].mxu0
      %v2221 = vadd.f32 %v2060, %v2220
      %v2222 = vpop.f32.mrb[0].mxu0
      %v2223 = vpop.f32.mrb[0].mxu0
      %v2224 = vadd.f32 %v2063, %v2223
      %v2225 = vpop.f32.mrb[0].mxu0
      %2226 = vmatprep.mubr.bf16.mxu0 %v828
      %2227 = vmatmul.mubr.bf16.gmra.mrb[0].mxu0 %v736
      %v2228 = vpop.f32.mrb[0].mxu0
      %v2229 = vadd.f32 %v2068, %v2228
      %v2230 = vpop.f32.mrb[0].mxu0
      %v2231 = vpop.f32.mrb[0].mxu0
      %v2232 = vadd.f32 %v2071, %v2231
      %v2233 = vpop.f32.mrb[0].mxu0
      %2234 = vmatprep.mubr.bf16.mxu0 %v840
      %2235 = vmatmul.mubr.bf16.gmra.mrb[0].mxu0 %v737
      %v2236 = vpop.f32.mrb[0].mxu0
      %v2237 = vadd.f32 %v2076, %v2236
      %v2238 = vpop.f32.mrb[0].mxu0
      %v2239 = vpop.f32.mrb[0].mxu0
      %v2240 = vadd.f32 %v2079, %v2239
      %v2241 = vpop.f32.mrb[0].mxu0
      %2242 = vmatprep.mubr.bf16.mxu0 %v852
      %2243 = vmatmul.mubr.bf16.gmra.mrb[0].mxu0 %v738
      %v2244 = vpop.f32.mrb[0].mxu0
      %v2245 = vadd.f32 %v2084, %v2244
      %v2246 = vpop.f32.mrb[0].mxu0
      %v2247 = vpop.f32.mrb[0].mxu0
      %v2248 = vadd.f32 %v2087, %v2247
      %v2249 = vpop.f32.mrb[0].mxu0
      %2250 = vmatprep.mubr.bf16.mxu0 %v864
      %2251 = vmatmul.mubr.bf16.gmra.mrb[0].mxu0 %v739
      %v2252 = vpop.f32.mrb[0].mxu0
      %v2253 = vadd.f32 %v2092, %v2252
      %v2254 = vpop.f32.mrb[0].mxu0
      %v2255 = vpop.f32.mrb[0].mxu0
      %v2256 = vadd.f32 %v2095, %v2255
      %v2257 = vpop.f32.mrb[0].mxu0
      %2258 = vmatprep.mubr.bf16.mxu0 %v876
      %2259 = vmatmul.mubr.bf16.gmra.mrb[0].mxu0 %v740
      %v2260 = vpop.f32.mrb[0].mxu0
      %v2261 = vadd.f32 %v2100, %v2260
      %v2262 = vpop.f32.mrb[0].mxu0
      %v2263 = vpop.f32.mrb[0].mxu0
      %v2264 = vadd.f32 %v2103, %v2263
      %v2265 = vpop.f32.mrb[0].mxu0
      %2266 = vmatprep.mubr.bf16.mxu0 %v888
      %2267 = vmatmul.mubr.bf16.gmra.mrb[0].mxu0 %v741
      %v2268 = vpop.f32.mrb[0].mxu0
      %v2269 = vadd.f32 %v2108, %v2268
      %v2270 = vpop.f32.mrb[0].mxu0
      %v2271 = vpop.f32.mrb[0].mxu0
      %v2272 = vadd.f32 %v2111, %v2271
      %v2273 = vpop.f32.mrb[0].mxu0
      %2274 = vmatprep.mubr.bf16.mxu0 %v900
      %2275 = vmatmul.mubr.bf16.gmra.mrb[0].mxu0 %v742
      %v2276 = vpop.f32.mrb[0].mxu0
      %v2277 = vadd.f32 %v2116, %v2276
      %v2278 = vpop.f32.mrb[0].mxu0
      %v2279 = vpop.f32.mrb[0].mxu0
      %v2280 = vadd.f32 %v2119, %v2279
      %v2281 = vpop.f32.mrb[0].mxu0
      %2282 = vmatprep.mubr.bf16.mxu0 %v912
      %2283 = vmatmul.mubr.bf16.gmra.mrb[0].mxu0 %v743
      %v2284 = vpop.f32.mrb[0].mxu0
      %v2285 = vadd.f32 %v2124, %v2284
      %v2286 = vpop.f32.mrb[0].mxu0
      %v2287 = vpop.f32.mrb[0].mxu0
      %v2288 = vadd.f32 %v2127, %v2287
      %v2289 = vpop.f32.mrb[0].mxu0
      %2290 = vmatprep.mubr.bf16.mxu0 %v924
      %2291 = vmatmul.mubr.bf16.gmra.mrb[0].mxu0 %v744
      %v2292 = vpop.f32.mrb[0].mxu0
      %v2293 = vadd.f32 %v2132, %v2292
      %v2294 = vpop.f32.mrb[0].mxu0
      %v2295 = vpop.f32.mrb[0].mxu0
      %v2296 = vadd.f32 %v2135, %v2295
      %v2297 = vpop.f32.mrb[0].mxu0
      %2298 = vmatprep.mubr.bf16.mxu0 %v936
      %2299 = vmatmul.mubr.bf16.gmra.mrb[0].mxu0 %v745
      %v2300 = vpop.f32.mrb[0].mxu0
      %v2301 = vadd.f32 %v2140, %v2300
      %v2302 = vpop.f32.mrb[0].mxu0
      %v2303 = vpop.f32.mrb[0].mxu0
      %v2304 = vadd.f32 %v2143, %v2303
      %v2305 = vpop.f32.mrb[0].mxu0
      %2306 = vmatprep.mubr.bf16.mxu0 %v948
      %2307 = vmatmul.mubr.bf16.gmra.mrb[0].mxu0 %v746
      %v2308 = vpop.f32.mrb[0].mxu0
      %v2309 = vadd.f32 %v2148, %v2308
      %v2310 = vpop.f32.mrb[0].mxu0
      %v2311 = vpop.f32.mrb[0].mxu0
      %v2312 = vadd.f32 %v2151, %v2311
      %v2313 = vpop.f32.mrb[0].mxu0
      %2314 = vmatprep.mubr.bf16.mxu0 %v960
      %2315 = vmatmul.mubr.bf16.gmra.mrb[0].mxu0 %v747
      %v2316 = vpop.f32.mrb[0].mxu0
      %v2317 = vadd.f32 %v2156, %v2316
      %v2318 = vpop.f32.mrb[0].mxu0
      %v2319 = vpop.f32.mrb[0].mxu0
      %v2320 = vadd.f32 %v2159, %v2319
      %v2321 = vpop.f32.mrb[0].mxu0
      %2322 = vmatprep.mubr.bf16.mxu0 %v1085
      %2323 = vmatmul.mubr.bf16.gmra.mrb[0].mxu0 %v748
      %v2324 = vpop.f32.mrb[0].mxu0
      %v2325 = vadd.f32 %v2164, %v2324
      %v2326 = vpop.f32.mrb[0].mxu0
      %v2327 = vpop.f32.mrb[0].mxu0
      %v2328 = vadd.f32 %v2167, %v2327
      %v2329 = vpop.f32.mrb[0].mxu0
      %2330 = vmatprep.mubr.bf16.mxu0 %v1104
      %2331 = vmatmul.mubr.bf16.gmra.mrb[0].mxu0 %v749
      %v2332 = vpop.f32.mrb[0].mxu0
      %v2333 = vadd.f32 %v2172, %v2332
      %v2334 = vpop.f32.mrb[0].mxu0
      %v2335 = vpop.f32.mrb[0].mxu0
      %v2336 = vadd.f32 %v2175, %v2335
      %v2337 = vpop.f32.mrb[0].mxu0
      %2338 = vdwg.mxu0
      %2339 = vmatprep.subr.bf16.mxu0 0
      %2340 = vmatpush1.bf16.msra.mxu0 %v1615
      %2341 = vmatprep.subr.bf16.mxu0 0
      %2342 = vmatpush1.bf16.msra.mxu0 %v1616
      %2343 = vmatprep.subr.bf16.mxu0 0
      %2344 = vmatpush1.bf16.msra.mxu0 %v1617
      %2345 = vmatprep.subr.bf16.mxu0 0
      %2346 = vmatpush1.bf16.msra.mxu0 %v1618
      %2347 = vmatprep.subr.bf16.mxu0 0
      %2348 = vmatpush1.bf16.msra.mxu0 %v1619
      %2349 = vmatprep.subr.bf16.mxu0 0
      %2350 = vmatpush1.bf16.msra.mxu0 %v1620
      %2351 = vmatprep.subr.bf16.mxu0 0
      %2352 = vmatpush1.bf16.msra.mxu0 %v1621
      %2353 = vmatprep.subr.bf16.mxu0 0
      %2354 = vmatpush1.bf16.msra.mxu0 %v1622
      %2355 = vmatprep.subr.bf16.mxu0 0
      %2356 = vmatpush1.bf16.msra.mxu0 0
      %2357 = vmatprep.subr.bf16.mxu0 0
      %2358 = vmatpush1.bf16.msra.mxu0 0
      %2359 = vmatprep.subr.bf16.mxu0 0
      %2360 = vmatpush1.bf16.msra.mxu0 0
      %2361 = vmatprep.subr.bf16.mxu0 0
      %2362 = vmatpush1.bf16.msra.mxu0 0
      %2363 = vmatprep.subr.bf16.mxu0 0
      %2364 = vmatpush1.bf16.msra.mxu0 0
      %2365 = vmatprep.subr.bf16.mxu0 0
      %2366 = vmatpush1.bf16.msra.mxu0 0
      %2367 = vmatprep.subr.bf16.mxu0 0
      %2368 = vmatpush1.bf16.msra.mxu0 0
      %2369 = vmatprep.subr.bf16.mxu0 0
      %2370 = vmatpush1.bf16.msra.mxu0 0
      %2371 = vmatprep.mubr.bf16.mxu0 0
      %2372 = vmatmul.mubr.bf16.gmra.mrb[0].mxu0 %v1018
      %v2373 = vpop.f32.mrb[0].mxu0
      %v2374 = vadd.f32 %v2213, %v2373
      %v2375 = vpop.f32.mrb[0].mxu0
      %v2376 = vpop.f32.mrb[0].mxu0
      %v2377 = vadd.f32 %v2216, %v2376
      %v2378 = vpop.f32.mrb[0].mxu0
      %2379 = vmatprep.mubr.bf16.mxu0 0
      %2380 = vmatmul.mubr.bf16.gmra.mrb[0].mxu0 %v1021
      %v2381 = vpop.f32.mrb[0].mxu0
      %v2382 = vadd.f32 %v2221, %v2381
      %v2383 = vpop.f32.mrb[0].mxu0
      %v2384 = vpop.f32.mrb[0].mxu0
      %v2385 = vadd.f32 %v2224, %v2384
      %v2386 = vpop.f32.mrb[0].mxu0
      %2387 = vmatprep.mubr.bf16.mxu0 0
      %2388 = vmatmul.mubr.bf16.gmra.mrb[0].mxu0 %v1024
      %v2389 = vpop.f32.mrb[0].mxu0
      %v2390 = vadd.f32 %v2229, %v2389
      %v2391 = vpop.f32.mrb[0].mxu0
      %v2392 = vpop.f32.mrb[0].mxu0
      %v2393 = vadd.f32 %v2232, %v2392
      %v2394 = vpop.f32.mrb[0].mxu0
      %2395 = vmatprep.mubr.bf16.mxu0 0
      %2396 = vmatmul.mubr.bf16.gmra.mrb[0].mxu0 %v1027
      %v2397 = vpop.f32.mrb[0].mxu0
      %v2398 = vadd.f32 %v2237, %v2397
      %v2399 = vpop.f32.mrb[0].mxu0
      %v2400 = vpop.f32.mrb[0].mxu0
      %v2401 = vadd.f32 %v2240, %v2400
      %v2402 = vpop.f32.mrb[0].mxu0
      %2403 = vmatprep.mubr.bf16.mxu0 0
      %2404 = vmatmul.mubr.bf16.gmra.mrb[0].mxu0 %v1030
      %v2405 = vpop.f32.mrb[0].mxu0
      %v2406 = vadd.f32 %v2245, %v2405
      %v2407 = vpop.f32.mrb[0].mxu0
      %v2408 = vpop.f32.mrb[0].mxu0
      %v2409 = vadd.f32 %v2248, %v2408
      %v2410 = vpop.f32.mrb[0].mxu0
      %2411 = vmatprep.mubr.bf16.mxu0 0
      %2412 = vmatmul.mubr.bf16.gmra.mrb[0].mxu0 %v1033
      %v2413 = vpop.f32.mrb[0].mxu0
      %v2414 = vadd.f32 %v2253, %v2413
      %v2415 = vpop.f32.mrb[0].mxu0
      %v2416 = vpop.f32.mrb[0].mxu0
      %v2417 = vadd.f32 %v2256, %v2416
      %v2418 = vpop.f32.mrb[0].mxu0
      %2419 = vmatprep.mubr.bf16.mxu0 0
      %2420 = vmatmul.mubr.bf16.gmra.mrb[0].mxu0 %v1036
      %v2421 = vpop.f32.mrb[0].mxu0
      %v2422 = vadd.f32 %v2261, %v2421
      %v2423 = vpop.f32.mrb[0].mxu0
      %v2424 = vpop.f32.mrb[0].mxu0
      %v2425 = vadd.f32 %v2264, %v2424
      %v2426 = vpop.f32.mrb[0].mxu0
      %2427 = vmatprep.mubr.bf16.mxu0 0
      %2428 = vmatmul.mubr.bf16.gmra.mrb[0].mxu0 %v1039
      %v2429 = vpop.f32.mrb[0].mxu0
      %v2430 = vadd.f32 %v2269, %v2429
      %v2431 = vpop.f32.mrb[0].mxu0
      %v2432 = vpop.f32.mrb[0].mxu0
      %v2433 = vadd.f32 %v2272, %v2432
      %v2434 = vpop.f32.mrb[0].mxu0
      %2435 = vmatprep.mubr.bf16.mxu0 0
      %2436 = vmatmul.mubr.bf16.gmra.mrb[0].mxu0 %v1042
      %v2437 = vpop.f32.mrb[0].mxu0
      %v2438 = vadd.f32 %v2277, %v2437
      %v2439 = vpop.f32.mrb[0].mxu0
      %v2440 = vpop.f32.mrb[0].mxu0
      %v2441 = vadd.f32 %v2280, %v2440
      %v2442 = vpop.f32.mrb[0].mxu0
      %2443 = vmatprep.mubr.bf16.mxu0 0
      %2444 = vmatmul.mubr.bf16.gmra.mrb[0].mxu0 %v1045
      %v2445 = vpop.f32.mrb[0].mxu0
      %v2446 = vadd.f32 %v2285, %v2445
      %v2447 = vpop.f32.mrb[0].mxu0
      %v2448 = vpop.f32.mrb[0].mxu0
      %v2449 = vadd.f32 %v2288, %v2448
      %v2450 = vpop.f32.mrb[0].mxu0
      %2451 = vmatprep.mubr.bf16.mxu0 0
      %2452 = vmatmul.mubr.bf16.gmra.mrb[0].mxu0 %v1048
      %v2453 = vpop.f32.mrb[0].mxu0
      %v2454 = vadd.f32 %v2293, %v2453
      %v2455 = vpop.f32.mrb[0].mxu0
      %v2456 = vpop.f32.mrb[0].mxu0
      %v2457 = vadd.f32 %v2296, %v2456
      %v2458 = vpop.f32.mrb[0].mxu0
      %2459 = vmatprep.mubr.bf16.mxu0 0
      %2460 = vmatmul.mubr.bf16.gmra.mrb[0].mxu0 %v1051
      %v2461 = vpop.f32.mrb[0].mxu0
      %v2462 = vadd.f32 %v2301, %v2461
      %v2463 = vpop.f32.mrb[0].mxu0
      %v2464 = vpop.f32.mrb[0].mxu0
      %v2465 = vadd.f32 %v2304, %v2464
      %v2466 = vpop.f32.mrb[0].mxu0
      %2467 = vmatprep.mubr.bf16.mxu0 0
      %2468 = vmatmul.mubr.bf16.gmra.mrb[0].mxu0 %v1054
      %v2469 = vpop.f32.mrb[0].mxu0
      %v2470 = vadd.f32 %v2309, %v2469
      %v2471 = vpop.f32.mrb[0].mxu0
      %v2472 = vpop.f32.mrb[0].mxu0
      %v2473 = vadd.f32 %v2312, %v2472
      %v2474 = vpop.f32.mrb[0].mxu0
      %2475 = vmatprep.mubr.bf16.mxu0 0
      %2476 = vmatmul.mubr.bf16.gmra.mrb[0].mxu0 %v1057
      %v2477 = vpop.f32.mrb[0].mxu0
      %v2478 = vadd.f32 %v2317, %v2477
      %v2479 = vpop.f32.mrb[0].mxu0
      %v2480 = vpop.f32.mrb[0].mxu0
      %v2481 = vadd.f32 %v2320, %v2480
      %v2482 = vpop.f32.mrb[0].mxu0
      %2483 = vmatprep.mubr.bf16.mxu0 0
      %2484 = vmatmul.mubr.bf16.gmra.mrb[0].mxu0 %v1091
      %v2485 = vpop.f32.mrb[0].mxu0
      %v2486 = vadd.f32 %v2325, %v2485
      %v2487 = vpop.f32.mrb[0].mxu0
      %v2488 = vpop.f32.mrb[0].mxu0
      %v2489 = vadd.f32 %v2328, %v2488
      %v2490 = vpop.f32.mrb[0].mxu0
      %2491 = vmatprep.mubr.bf16.mxu0 0
      %2492 = vmatmul.mubr.bf16.gmra.mrb[0].mxu0 %v1110
      %v2493 = vpop.f32.mrb[0].mxu0
      %v2494 = vadd.f32 %v2333, %v2493
      %v2495 = vpop.f32.mrb[0].mxu0
      %v2496 = vpop.f32.mrb[0].mxu0
      %v2497 = vadd.f32 %v2336, %v2496
      %v2498 = vpop.f32.mrb[0].mxu0
      %2499 = vdwg.mxu0
      %v2500 = vpack.c.bf16 %v2377, %v2374
      %v2501 = vpack.c.bf16 %v2385, %v2382
      %v2502 = vpack.c.bf16 %v2393, %v2390
      %v2503 = vpack.c.bf16 %v2401, %v2398
      %v2504 = vpack.c.bf16 %v2409, %v2406
      %v2505 = vpack.c.bf16 %v2417, %v2414
      %v2506 = vpack.c.bf16 %v2425, %v2422
      %v2507 = vpack.c.bf16 %v2433, %v2430
      %v2508 = vpack.c.bf16 %v2441, %v2438
      %v2509 = vpack.c.bf16 %v2449, %v2446
      %v2510 = vpack.c.bf16 %v2457, %v2454
      %v2511 = vpack.c.bf16 %v2465, %v2462
      %v2512 = vpack.c.bf16 %v2473, %v2470
      %v2513 = vpack.c.bf16 %v2481, %v2478
      %v2514 = vpack.c.bf16 %v2489, %v2486
      %v2515 = vpack.c.bf16 %v2497, %v2494
      %v2532 = vunpack.c.l.b16 %v2500
      %v2533 = vunpack.c.h.b16 %v2500
      %v2534 = vunpack.c.l.b16 %v2501
      %v2535 = vunpack.c.h.b16 %v2501
      %v2536 = vunpack.c.l.b16 %v2502
      %v2537 = vunpack.c.h.b16 %v2502
      %v2538 = vunpack.c.l.b16 %v2503
      %v2539 = vunpack.c.h.b16 %v2503
      %v2540 = vunpack.c.l.b16 %v2504
      %v2541 = vunpack.c.h.b16 %v2504
      %v2542 = vunpack.c.l.b16 %v2505
      %v2543 = vunpack.c.h.b16 %v2505
      %v2544 = vunpack.c.l.b16 %v2506
      %v2545 = vunpack.c.h.b16 %v2506
      %v2546 = vunpack.c.l.b16 %v2507
      %v2547 = vunpack.c.h.b16 %v2507
      %v2548 = vunpack.c.l.b16 %v2508
      %v2549 = vunpack.c.h.b16 %v2508
      %v2550 = vunpack.c.l.b16 %v2509
      %v2551 = vunpack.c.h.b16 %v2509
      %v2552 = vunpack.c.l.b16 %v2510
      %v2553 = vunpack.c.h.b16 %v2510
      %v2554 = vunpack.c.l.b16 %v2511
      %v2555 = vunpack.c.h.b16 %v2511
      %v2556 = vunpack.c.l.b16 %v2512
      %v2557 = vunpack.c.h.b16 %v2512
      %v2558 = vunpack.c.l.b16 %v2513
      %v2559 = vunpack.c.h.b16 %v2513
      %v2560 = vunpack.c.l.b16 %v2514
      %v2561 = vunpack.c.h.b16 %v2514
      %v2562 = vunpack.c.l.b16 %v2515
      %v2563 = vunpack.c.h.b16 %v2515
      %v2564 = vpack.c.b16 %v2532, %v2532
      %v2565 = vpack.c.b16 %v2533, %v2533
      %v2566 = vpack.c.b16 %v2534, %v2534
      %v2567 = vpack.c.b16 %v2535, %v2535
      %v2568 = vpack.c.b16 %v2536, %v2536
      %v2569 = vpack.c.b16 %v2537, %v2537
      %v2570 = vpack.c.b16 %v2538, %v2538
      %v2571 = vpack.c.b16 %v2539, %v2539
      %v2572 = vpack.c.b16 %v2540, %v2540
      %v2573 = vpack.c.b16 %v2541, %v2541
      %v2574 = vpack.c.b16 %v2542, %v2542
      %v2575 = vpack.c.b16 %v2543, %v2543
      %v2576 = vpack.c.b16 %v2544, %v2544
      %v2577 = vpack.c.b16 %v2545, %v2545
      %v2578 = vpack.c.b16 %v2546, %v2546
      %v2579 = vpack.c.b16 %v2547, %v2547
      %v2580 = vpack.c.b16 %v2548, %v2548
      %v2581 = vpack.c.b16 %v2549, %v2549
      %v2582 = vpack.c.b16 %v2550, %v2550
      %v2583 = vpack.c.b16 %v2551, %v2551
      %v2584 = vpack.c.b16 %v2552, %v2552
      %v2585 = vpack.c.b16 %v2553, %v2553
      %v2586 = vpack.c.b16 %v2554, %v2554
      %v2587 = vpack.c.b16 %v2555, %v2555
      %v2588 = vpack.c.b16 %v2556, %v2556
      %v2589 = vpack.c.b16 %v2557, %v2557
      %v2590 = vpack.c.b16 %v2558, %v2558
      %v2591 = vpack.c.b16 %v2559, %v2559
      %v2592 = vpack.c.b16 %v2560, %v2560
      %v2593 = vpack.c.b16 %v2561, %v2561
      %v2594 = vpack.c.b16 %v2562, %v2562
      %v2595 = vpack.c.b16 %v2563, %v2563
      %2628 = vst [vmem:[%s425] sm:$0xf] %v2564
      %2629 = vst [vmem:[%s425 + $0x4] sm:$0xf] %v2565
      %2630 = vst [vmem:[%s425 + $0x8] sm:$0xf] %v2566
      %2631 = vst [vmem:[%s425 + $0xc] sm:$0xf] %v2567
      %2632 = vst [vmem:[%s425 + $0x10] sm:$0xf] %v2568
      %2633 = vst [vmem:[%s425 + $0x14] sm:$0xf] %v2569
      %2634 = vst [vmem:[%s425 + $0x18] sm:$0xf] %v2570
      %2635 = vst [vmem:[%s425 + $0x1c] sm:$0xf] %v2571
      %2636 = vst [vmem:[%s425 + $0x20] sm:$0xf] %v2572
      %2637 = vst [vmem:[%s425 + $0x24] sm:$0xf] %v2573
      %2638 = vst [vmem:[%s425 + $0x28] sm:$0xf] %v2574
      %2639 = vst [vmem:[%s425 + $0x2c] sm:$0xf] %v2575
      %2640 = vst [vmem:[%s425 + $0x30] sm:$0xf] %v2576
      %2641 = vst [vmem:[%s425 + $0x34] sm:$0xf] %v2577
      %2642 = vst [vmem:[%s425 + $0x38] sm:$0xf] %v2578
      %2643 = vst [vmem:[%s425 + $0x3c] sm:$0xf] %v2579
      %2644 = vst [vmem:[%s425 + $0x40] sm:$0xf] %v2580
      %2645 = vst [vmem:[%s425 + $0x44] sm:$0xf] %v2581
      %2646 = vst [vmem:[%s425 + $0x48] sm:$0xf] %v2582
      %2647 = vst [vmem:[%s425 + $0x4c] sm:$0xf] %v2583
      %2648 = vst [vmem:[%s425 + $0x50] sm:$0xf] %v2584
      %2649 = vst [vmem:[%s425 + $0x54] sm:$0xf] %v2585
      %2650 = vst [vmem:[%s425 + $0x58] sm:$0xf] %v2586
      %2651 = vst [vmem:[%s425 + $0x5c] sm:$0xf] %v2587
      %2652 = vst [vmem:[%s425 + $0x60] sm:$0xf] %v2588
      %2653 = vst [vmem:[%s425 + $0x64] sm:$0xf] %v2589
      %2654 = vst [vmem:[%s425 + $0x68] sm:$0xf] %v2590
      %2655 = vst [vmem:[%s425 + $0x6c] sm:$0xf] %v2591
      %2656 = vst [vmem:[%s425 + $0x70] sm:$0xf] %v2592
      %2657 = vst [vmem:[%s425 + $0x74] sm:$0xf] %v2593
      %2658 = vst [vmem:[%s425 + $0x78] sm:$0xf] %v2594
      %2659 = vst [vmem:[%s425 + $0x7c] sm:$0xf] %v2595
      %v2660 = vunpack.c.l.bf16 %v2500
      %v2661 = vunpack.c.h.bf16 %v2500
      %v2662 = vunpack.c.l.bf16 %v2501
      %v2663 = vunpack.c.h.bf16 %v2501
      %v2664 = vunpack.c.l.bf16 %v2502
      %v2665 = vunpack.c.h.bf16 %v2502
      %v2666 = vunpack.c.l.bf16 %v2503
      %v2667 = vunpack.c.h.bf16 %v2503
      %v2668 = vunpack.c.l.bf16 %v2504
      %v2669 = vunpack.c.h.bf16 %v2504
      %v2670 = vunpack.c.l.bf16 %v2505
      %v2671 = vunpack.c.h.bf16 %v2505
      %v2672 = vunpack.c.l.bf16 %v2506
      %v2673 = vunpack.c.h.bf16 %v2506
      %v2674 = vunpack.c.l.bf16 %v2507
      %v2675 = vunpack.c.h.bf16 %v2507
      %v2676 = vunpack.c.l.bf16 %v2508
      %v2677 = vunpack.c.h.bf16 %v2508
      %v2678 = vunpack.c.l.bf16 %v2509
      %v2679 = vunpack.c.h.bf16 %v2509
      %v2680 = vunpack.c.l.bf16 %v2510
      %v2681 = vunpack.c.h.bf16 %v2510
      %v2682 = vunpack.c.l.bf16 %v2511
      %v2683 = vunpack.c.h.bf16 %v2511
      %v2684 = vunpack.c.l.bf16 %v2512
      %v2685 = vunpack.c.h.bf16 %v2512
      %v2686 = vunpack.c.l.bf16 %v2513
      %v2687 = vunpack.c.h.bf16 %v2513
      %v2688 = vunpack.c.l.bf16 %v2514
      %v2689 = vunpack.c.h.bf16 %v2514
      %v2690 = vunpack.c.l.bf16 %v2515
      %v2691 = vunpack.c.h.bf16 %v2515
      %v2692 = vadd.f32 %v2660, %v2661
      %v2693 = vadd.f32 %v2692, %v2662
      %v2694 = vadd.f32 %v2693, %v2663
      %v2695 = vadd.f32 %v2694, %v2664
      %v2696 = vadd.f32 %v2695, %v2665
      %v2697 = vadd.f32 %v2696, %v2666
      %v2698 = vadd.f32 %v2697, %v2667
      %v2699 = vadd.f32 %v2698, %v2668
      %v2700 = vadd.f32 %v2699, %v2669
      %v2701 = vadd.f32 %v2700, %v2670
      %v2702 = vadd.f32 %v2701, %v2671
      %v2703 = vadd.f32 %v2702, %v2672
      %v2704 = vadd.f32 %v2703, %v2673
      %v2705 = vadd.f32 %v2704, %v2674
      %v2706 = vadd.f32 %v2705, %v2675
      %v2707 = vadd.f32 %v2706, %v2676
      %v2708 = vadd.f32 %v2707, %v2677
      %v2709 = vadd.f32 %v2708, %v2678
      %v2710 = vadd.f32 %v2709, %v2679
      %v2711 = vadd.f32 %v2710, %v2680
      %v2712 = vadd.f32 %v2711, %v2681
      %v2713 = vadd.f32 %v2712, %v2682
      %v2714 = vadd.f32 %v2713, %v2683
      %v2715 = vadd.f32 %v2714, %v2684
      %v2716 = vadd.f32 %v2715, %v2685
      %v2717 = vadd.f32 %v2716, %v2686
      %v2718 = vadd.f32 %v2717, %v2687
      %v2719 = vadd.f32 %v2718, %v2688
      %v2720 = vadd.f32 %v2719, %v2689
      %v2721 = vadd.f32 %v2720, %v2690
      %v2722 = vadd.f32 %v2721, %v2691
      %v2723 = vrot.slane %v2722, 4
      %v2724 = vadd.f32 %v2722, %v2723
      %v2725 = vrot.slane %v2724, 2
      %v2726 = vadd.f32 %v2724, %v2725
      %v2727 = vrot.slane %v2726, 1
      %v2728 = vadd.f32 %v2726, %v2727
      %v2729 = vmul.f32 %v2660, %v2660
      %v2730 = vmul.f32 %v2661, %v2661
      %v2731 = vmul.f32 %v2662, %v2662
      %v2732 = vmul.f32 %v2663, %v2663
      %v2733 = vmul.f32 %v2664, %v2664
      %v2734 = vmul.f32 %v2665, %v2665
      %v2735 = vmul.f32 %v2666, %v2666
      %v2736 = vmul.f32 %v2667, %v2667
      %v2737 = vmul.f32 %v2668, %v2668
      %v2738 = vmul.f32 %v2669, %v2669
      %v2739 = vmul.f32 %v2670, %v2670
      %v2740 = vmul.f32 %v2671, %v2671
      %v2741 = vmul.f32 %v2672, %v2672
      %v2742 = vmul.f32 %v2673, %v2673
      %v2743 = vmul.f32 %v2674, %v2674
      %v2744 = vmul.f32 %v2675, %v2675
      %v2745 = vmul.f32 %v2676, %v2676
      %v2746 = vmul.f32 %v2677, %v2677
      %v2747 = vmul.f32 %v2678, %v2678
      %v2748 = vmul.f32 %v2679, %v2679
      %v2749 = vmul.f32 %v2680, %v2680
      %v2750 = vmul.f32 %v2681, %v2681
      %v2751 = vmul.f32 %v2682, %v2682
      %v2752 = vmul.f32 %v2683, %v2683
      %v2753 = vmul.f32 %v2684, %v2684
      %v2754 = vmul.f32 %v2685, %v2685
      %v2755 = vmul.f32 %v2686, %v2686
      %v2756 = vmul.f32 %v2687, %v2687
      %v2757 = vmul.f32 %v2688, %v2688
      %v2758 = vmul.f32 %v2689, %v2689
      %v2759 = vmul.f32 %v2690, %v2690
      %v2760 = vmul.f32 %v2691, %v2691
      %v2761 = vadd.f32 %v2729, %v2730
      %v2762 = vadd.f32 %v2761, %v2731
      %v2763 = vadd.f32 %v2762, %v2732
      %v2764 = vadd.f32 %v2763, %v2733
      %v2765 = vadd.f32 %v2764, %v2734
      %v2766 = vadd.f32 %v2765, %v2735
      %v2767 = vadd.f32 %v2766, %v2736
      %v2768 = vadd.f32 %v2767, %v2737
      %v2769 = vadd.f32 %v2768, %v2738
      %v2770 = vadd.f32 %v2769, %v2739
      %v2771 = vadd.f32 %v2770, %v2740
      %v2772 = vadd.f32 %v2771, %v2741
      %v2773 = vadd.f32 %v2772, %v2742
      %v2774 = vadd.f32 %v2773, %v2743
      %v2775 = vadd.f32 %v2774, %v2744
      %v2776 = vadd.f32 %v2775, %v2745
      %v2777 = vadd.f32 %v2776, %v2746
      %v2778 = vadd.f32 %v2777, %v2747
      %v2779 = vadd.f32 %v2778, %v2748
      %v2780 = vadd.f32 %v2779, %v2749
      %v2781 = vadd.f32 %v2780, %v2750
      %v2782 = vadd.f32 %v2781, %v2751
      %v2783 = vadd.f32 %v2782, %v2752
      %v2784 = vadd.f32 %v2783, %v2753
      %v2785 = vadd.f32 %v2784, %v2754
      %v2786 = vadd.f32 %v2785, %v2755
      %v2787 = vadd.f32 %v2786, %v2756
      %v2788 = vadd.f32 %v2787, %v2757
      %v2789 = vadd.f32 %v2788, %v2758
      %v2790 = vadd.f32 %v2789, %v2759
      %v2791 = vadd.f32 %v2790, %v2760
      %v2792 = vrot.slane %v2791, 4
      %v2793 = vadd.f32 %v2791, %v2792
      %v2794 = vrot.slane %v2793, 2
      %v2795 = vadd.f32 %v2793, %v2794
      %v2796 = vrot.slane %v2795, 1
      %v2797 = vadd.f32 %v2795, %v2796
      %vm2798 = vcmask 1040384
      %v2799 = vsel %vm2798, %v2728, %v2797
      %p2800 = scmp.eq.s32.totalorder %s23, 0
      // Predicated region
      $region41: #{unet_down.3} parent=39 // pred_check
        %p2801 = pneg %p2800
      $region42: #{unet_down.3} parent=39 // pred_check_branch
        %2803 = sbr.rel (%p2801) target = $region44
      $region43: #{unet_down.3} parent=39 // pred_region
        %2804 = vst [vmem:[%s430] sm:$0x3] 0.0
      $region44: #{unet_down.3} parent=39 // pred_fallthru
        _
      %v2805 = vld [vmem:[%s430] sm:$0x3]
      %v2806 = vadd.f32 %v2805, %v2799
      %2807 = vst [vmem:[%s430] sm:$0x3] %v2806
      %s2808 = smul.u32 16, %s23
      %p2809 = scmp.lt.s32.totalorder %s22, 1
      %s2810 = scalar_select %p2809, %s22, 1
      %p2811 = scmp.lt.s32.totalorder %s2808, 15
      %s2812 = scalar_select %p2811, %s2808, 15
      %s2813 = smul.addr %s2812, 2
      %s2814 = smul.addr %s2810, 32
      %s2815 = sadd.s32 %s2813, %s2814
      %s2816 = smul.addr %s2815, 4
      %s2817 = scalar_lea.vmem %s5, %s2816
      %p2818 = scmp.lt.s32.totalorder %s22, 1
      %s2819 = scalar_select %p2818, %s22, 1
      %s2820 = smul.addr %s2819, 2
      %s2821 = scalar_lea.vmem %s6, %s2820
      // Predicated region
      $region45: #{unet_down.3} parent=39 // pred_check
        %p2822 = pneg %p192
      $region46: #{unet_down.3} parent=39 // pred_check_branch
        %2824 = sbr.rel (%p2822) target = $region48
      $region47: #{unet_down.3} parent=39 // pred_region
        %s2825 = smul.u32 16, %s23
      $region48: #{unet_down.3} parent=39 // pred_fallthru
        _
      // Predicated region
      $region49: #{unet_down.3} parent=39 // pred_check
        %p2826 = pneg %p218
      $region50: #{unet_down.3} parent=39 // pred_check_branch
        %2828 = sbr.rel (%p2826) target = $region52
      $region51: #{unet_down.3} parent=39 // pred_region
        _
      $region52: #{unet_down.3} parent=39 // pred_fallthru
        _
    $region40: #{unet_down.3} parent=5 // pred_fallthru
      _
    %p2829 = scmp.le.s32.totalorder 2, %s13
    // Predicated region
    $region53: #{unet_down.3} parent=5 // pred_check
      %p2830 = pneg %p2829
    $region54: #{unet_down.3} parent=5 // pred_check_branch
      %2832 = sbr.rel (%p2830) target = $region56
    $region55: #{unet_down.3} parent=5 // pred_region
      %s2833 = ssub.s32 %s13, 2
      // Predicated region
      $region57: #{unet_down.3} parent=55 // pred_check
        %p2834 = pneg %p198
      $region58: #{unet_down.3} parent=55 // pred_check_branch
        %2836 = sbr.rel (%p2834) target = $region60
      $region59: #{unet_down.3} parent=55 // pred_region
        %s2837 = smul.u32 16, %s25
        %p2838 = scmp.lt.s32.totalorder %s24, 1
        %s2839 = scalar_select %p2838, %s24, 1
        %p2840 = scmp.lt.s32.totalorder %s2837, 15
        %s2841 = scalar_select %p2840, %s2837, 15
        %s2842 = smul.addr %s2841, 2
        %s2843 = smul.addr %s2839, 32
        %s2844 = sadd.s32 %s2842, %s2843
        %s2845 = smul.addr %s2844, 4
        %s2846 = scalar_lea.vmem %s5, %s2845
      $region60: #{unet_down.3} parent=55 // pred_fallthru
        _
      // Predicated region
      $region61: #{unet_down.3} parent=55 // pred_check
        %p2847 = pneg %p224
      $region62: #{unet_down.3} parent=55 // pred_check_branch
        %2849 = sbr.rel (%p2847) target = $region64
      $region63: #{unet_down.3} parent=55 // pred_region
        %p2850 = scmp.lt.s32.totalorder %s24, 1
        %s2851 = scalar_select %p2850, %s24, 1
        %s2852 = smul.addr %s2851, 2
        %s2853 = scalar_lea.vmem %s6, %s2852
      $region64: #{unet_down.3} parent=55 // pred_fallthru
        _
    $region56: #{unet_down.3} parent=5 // pred_fallthru
      _
  $region6: #{unet_down.3} parent=0 // loop_footer
    %s17 = sadd.s32 1, %s13
  $region7: #{unet_down.3} parent=0 // loop_footer_branch
    %12 = sbr.rel target = $region3
  $region8: #{unet_down.3} parent=0 // loop_exit
    _

// kernel: unet_down.4
$region0: #{unet_down.4}
  #allocation0 [shape = 'u32[]', space=smem, size = 0x4, offset = 0x4, fixed_abs, tag = 'smem constant byte address 0x4 - core index']
  #allocation1 [shape = 'u32[144,128]{1,0:T(1,128)}', space=vmem, size = 0x12000, scoped, tag = 'internal scratch']
  %s0 = inlined_call_operand.vmem [shape: bf16[2,16,16,128], index: 0, kind: input, shape index: {}, may-alias: {0,1,2}]
  %s1 = inlined_call_operand.vmem [shape: bf16[2,16,16,128], index: 1, kind: input, shape index: {}, may-alias: {0,1,2}]
  %s2 = inlined_call_operand.vmem [shape: bf16[2,16,16,128], index: 2, kind: input, shape index: {}, may-alias: {0,1,2}]
  %s3 = inlined_call_operand.vmem [shape: bf16[1152,128], index: 3, kind: input, shape index: {}]
  %s4 = inlined_call_operand.vmem [shape: f32[1,128], index: 4, kind: input, shape index: {}]
  %s5 = inlined_call_operand.vmem [shape: f32[1,128], index: 5, kind: input, shape index: {}]
  %s6 = inlined_call_operand.vmem [shape: f32[1,128], index: 6, kind: input, shape index: {}]
  %s7 = inlined_call_operand.vmem [shape: bf16[2,16,16,128], index: 7, kind: output, shape index: {0}]
  %s8 = inlined_call_operand.vmem [shape: f32[2,2,128], index: 8, kind: output, shape index: {1}]
  %9 = xla_tuple %s7, %s8
  %s10 = sld [smem:[#allocation0]]
  $region73: #{unet_down.4} parent=0
    _
  %s12 = ssub.s32 1, %s10
  %s13 = scalar_select 0, %s12, %s10
  loop: start=0, step=1, limit=4
  $region2: #{unet_down.4} parent=0 // loop_pre_header
    _
  $region3: #{unet_down.4} parent=0 // loop_header
    %s15 = sphi 0, %s19
    %p16 = scmp.ge.s32.totalorder %s15, 4
    %s22 = sphi 0, %s34
    %s23 = sphi 0, %s30
    %s24 = sphi 0, %s22
    %s25 = sphi 0, %s23
    %s26 = sphi 0, %s24
    %s27 = sphi 0, %s25
    %s47 = sphi 0, %s49
    %s50 = sphi 0, %s47
    %s51 = sphi 0, %s50
    %s67 = sphi 0, %s51
    %s75 = sphi 0, %s77
    %s78 = sphi 0, %s75
    %s79 = sphi 0, %s78
    %s95 = sphi 0, %s79
    %s111 = sphi 0, %s113
    %s114 = sphi 0, %s111
    %s115 = sphi 0, %s114
    %s131 = sphi 0, %s115
    %s135 = sphi 0, %s135
    %s137 = sphi 0, %s135
    %s138 = sphi 0, %s137
    %s152 = sphi 0, %s138
    %s156 = sphi 0, %s156
    %s158 = sphi 0, %s156
    %s159 = sphi 0, %s158
    %s173 = sphi 0, %s159
    %s177 = sphi 0, %s177
    %s179 = sphi 0, %s177
    %s180 = sphi 0, %s179
    %s194 = sphi 0, %s180
    %s198 = sphi 0, %s198
    %s200 = sphi 0, %s198
    %s201 = sphi 0, %s200
    %s215 = sphi 0, %s201
    %s223 = sphi 0, %s225
    %s226 = sphi 0, %s223
    %s227 = sphi 0, %s226
    %s243 = sphi 0, %s227
    %s249 = sphi 0, %s251
    %s252 = sphi 0, %s249
    %s253 = sphi 0, %s252
    %s269 = sphi 0, %s253
  $region4: #{unet_down.4} parent=0 // loop_header_branch
    %18 = sbr.rel (%p16) target = $region8
  $region5: #{unet_down.4} parent=0 // loop_body
    %s20 = ssub.s32 %s15, 1
    %s21 = ssub.s32 %s15, 2
    %s28 = sadd.s32 1, %s23
    %p29 = scmp.ge.s32.totalorder %s28, 1
    %s30 = scalar_select %p29, 0, %s28
    %s31 = sadd.s32 1, %s22
    %s32 = scalar_select %p29, %s31, %s22
    %p33 = scmp.ge.s32.totalorder %s32, 2
    %s34 = scalar_select %p33, 0, %s32
    %s35 = smul.u32 %s23, 16
    %s36 = ssub.s32 %s35, 1
    %p37 = scmp.gt.s32.totalorder %s36, 0
    %s38 = scalar_select %p37, %s36, 0
    %s39 = smul.u32 %s30, 16
    %s40 = ssub.s32 %s39, 1
    %p41 = scmp.gt.s32.totalorder %s40, 0
    %s42 = scalar_select %p41, %s40, 0
    %s43 = ssub.s32 %s22, %s34
    %s44 = ssub.s32 %s38, %s42
    %s45 = sor.u32 %s43, %s44
    %p46 = scmp.eq.s32.totalorder %s45, 0
    %s48 = sadd.s32 %s47, 1
    %s49 = scalar_select %p46, %s47, %s48
    %p52 = pneg %p46
    %p53 = scmp.eq.s32.totalorder %s15, 1
    %p54 = por %p52, %p53
    %p55 = scmp.ne.s32.totalorder %s47, %s50
    %p56 = scmp.eq.s32.totalorder %s15, 0
    %p57 = por %p55, %p56
    %p58 = scmp.ne.s32.totalorder %s47, %s50
    %p59 = scmp.eq.s32.totalorder %s20, 1
    %p60 = por %p58, %p59
    %p61 = scmp.ne.s32.totalorder %s50, %s51
    %p62 = scmp.eq.s32.totalorder %s20, 0
    %p63 = por %p61, %p62
    %p64 = scmp.ne.s32.totalorder %s50, %s51
    %p65 = scmp.eq.s32.totalorder %s21, 1
    %p66 = por %p64, %p65
    %p68 = scmp.ne.s32.totalorder %s51, %s67
    %p69 = scmp.eq.s32.totalorder %s21, 0
    %p70 = por %p68, %p69
    %s71 = ssub.s32 %s22, %s34
    %s72 = ssub.s32 %s23, %s30
    %s73 = sor.u32 %s71, %s72
    %p74 = scmp.eq.s32.totalorder %s73, 0
    %s76 = sadd.s32 %s75, 1
    %s77 = scalar_select %p74, %s75, %s76
    %p80 = pneg %p74
    %p81 = scmp.eq.s32.totalorder %s15, 1
    %p82 = por %p80, %p81
    %p83 = scmp.ne.s32.totalorder %s75, %s78
    %p84 = scmp.eq.s32.totalorder %s15, 0
    %p85 = por %p83, %p84
    %p86 = scmp.ne.s32.totalorder %s75, %s78
    %p87 = scmp.eq.s32.totalorder %s20, 1
    %p88 = por %p86, %p87
    %p89 = scmp.ne.s32.totalorder %s78, %s79
    %p90 = scmp.eq.s32.totalorder %s20, 0
    %p91 = por %p89, %p90
    %p92 = scmp.ne.s32.totalorder %s78, %s79
    %p93 = scmp.eq.s32.totalorder %s21, 1
    %p94 = por %p92, %p93
    %p96 = scmp.ne.s32.totalorder %s79, %s95
    %p97 = scmp.eq.s32.totalorder %s21, 0
    %p98 = por %p96, %p97
    %s99 = sadd.s32 %s23, 1
    %s100 = smul.u32 %s99, 16
    %p101 = scmp.lt.s32.totalorder %s100, 15
    %s102 = scalar_select %p101, %s100, 15
    %s103 = sadd.s32 %s30, 1
    %s104 = smul.u32 %s103, 16
    %p105 = scmp.lt.s32.totalorder %s104, 15
    %s106 = scalar_select %p105, %s104, 15
    %s107 = ssub.s32 %s22, %s34
    %s108 = ssub.s32 %s102, %s106
    %s109 = sor.u32 %s107, %s108
    %p110 = scmp.eq.s32.totalorder %s109, 0
    %s112 = sadd.s32 %s111, 1
    %s113 = scalar_select %p110, %s111, %s112
    %p116 = pneg %p110
    %p117 = scmp.eq.s32.totalorder %s15, 1
    %p118 = por %p116, %p117
    %p119 = scmp.ne.s32.totalorder %s111, %s114
    %p120 = scmp.eq.s32.totalorder %s15, 0
    %p121 = por %p119, %p120
    %p122 = scmp.ne.s32.totalorder %s111, %s114
    %p123 = scmp.eq.s32.totalorder %s20, 1
    %p124 = por %p122, %p123
    %p125 = scmp.ne.s32.totalorder %s114, %s115
    %p126 = scmp.eq.s32.totalorder %s20, 0
    %p127 = por %p125, %p126
    %p128 = scmp.ne.s32.totalorder %s114, %s115
    %p129 = scmp.eq.s32.totalorder %s21, 1
    %p130 = por %p128, %p129
    %p132 = scmp.ne.s32.totalorder %s115, %s131
    %p133 = scmp.eq.s32.totalorder %s21, 0
    %p134 = por %p132, %p133
    %s136 = sadd.s32 %s135, 1
    %p139 = scmp.eq.s32.totalorder %s15, 1
    %p140 = scmp.ne.s32.totalorder %s135, %s137
    %p141 = scmp.eq.s32.totalorder %s15, 0
    %p142 = por %p140, %p141
    %p143 = scmp.ne.s32.totalorder %s135, %s137
    %p144 = scmp.eq.s32.totalorder %s20, 1
    %p145 = por %p143, %p144
    %p146 = scmp.ne.s32.totalorder %s137, %s138
    %p147 = scmp.eq.s32.totalorder %s20, 0
    %p148 = por %p146, %p147
    %p149 = scmp.ne.s32.totalorder %s137, %s138
    %p150 = scmp.eq.s32.totalorder %s21, 1
    %p151 = por %p149, %p150
    %p153 = scmp.ne.s32.totalorder %s138, %s152
    %p154 = scmp.eq.s32.totalorder %s21, 0
    %p155 = por %p153, %p154
    %s157 = sadd.s32 %s156, 1
    %p160 = scmp.eq.s32.totalorder %s15, 1
    %p161 = scmp.ne.s32.totalorder %s156, %s158
    %p162 = scmp.eq.s32.totalorder %s15, 0
    %p163 = por %p161, %p162
    %p164 = scmp.ne.s32.totalorder %s156, %s158
    %p165 = scmp.eq.s32.totalorder %s20, 1
    %p166 = por %p164, %p165
    %p167 = scmp.ne.s32.totalorder %s158, %s159
    %p168 = scmp.eq.s32.totalorder %s20, 0
    %p169 = por %p167, %p168
    %p170 = scmp.ne.s32.totalorder %s158, %s159
    %p171 = scmp.eq.s32.totalorder %s21, 1
    %p172 = por %p170, %p171
    %p174 = scmp.ne.s32.totalorder %s159, %s173
    %p175 = scmp.eq.s32.totalorder %s21, 0
    %p176 = por %p174, %p175
    %s178 = sadd.s32 %s177, 1
    %p181 = scmp.eq.s32.totalorder %s15, 1
    %p182 = scmp.ne.s32.totalorder %s177, %s179
    %p183 = scmp.eq.s32.totalorder %s15, 0
    %p184 = por %p182, %p183
    %p185 = scmp.ne.s32.totalorder %s177, %s179
    %p186 = scmp.eq.s32.totalorder %s20, 1
    %p187 = por %p185, %p186
    %p188 = scmp.ne.s32.totalorder %s179, %s180
    %p189 = scmp.eq.s32.totalorder %s20, 0
    %p190 = por %p188, %p189
    %p191 = scmp.ne.s32.totalorder %s179, %s180
    %p192 = scmp.eq.s32.totalorder %s21, 1
    %p193 = por %p191, %p192
    %p195 = scmp.ne.s32.totalorder %s180, %s194
    %p196 = scmp.eq.s32.totalorder %s21, 0
    %p197 = por %p195, %p196
    %s199 = sadd.s32 %s198, 1
    %p202 = scmp.eq.s32.totalorder %s15, 1
    %p203 = scmp.ne.s32.totalorder %s198, %s200
    %p204 = scmp.eq.s32.totalorder %s15, 0
    %p205 = por %p203, %p204
    %p206 = scmp.ne.s32.totalorder %s198, %s200
    %p207 = scmp.eq.s32.totalorder %s20, 1
    %p208 = por %p206, %p207
    %p209 = scmp.ne.s32.totalorder %s200, %s201
    %p210 = scmp.eq.s32.totalorder %s20, 0
    %p211 = por %p209, %p210
    %p212 = scmp.ne.s32.totalorder %s200, %s201
    %p213 = scmp.eq.s32.totalorder %s21, 1
    %p214 = por %p212, %p213
    %p216 = scmp.ne.s32.totalorder %s201, %s215
    %p217 = scmp.eq.s32.totalorder %s21, 0
    %p218 = por %p216, %p217
    %s219 = ssub.s32 %s22, %s34
    %s220 = ssub.s32 %s23, %s30
    %s221 = sor.u32 %s219, %s220
    %p222 = scmp.eq.s32.totalorder %s221, 0
    %s224 = sadd.s32 %s223, 1
    %s225 = scalar_select %p222, %s223, %s224
    %p228 = pneg %p222
    %p229 = scmp.eq.s32.totalorder %s15, 1
    %p230 = por %p228, %p229
    %p231 = scmp.ne.s32.totalorder %s223, %s226
    %p232 = scmp.eq.s32.totalorder %s15, 0
    %p233 = por %p231, %p232
    %p234 = scmp.ne.s32.totalorder %s223, %s226
    %p235 = scmp.eq.s32.totalorder %s20, 1
    %p236 = por %p234, %p235
    %p237 = scmp.ne.s32.totalorder %s226, %s227
    %p238 = scmp.eq.s32.totalorder %s20, 0
    %p239 = por %p237, %p238
    %p240 = scmp.ne.s32.totalorder %s226, %s227
    %p241 = scmp.eq.s32.totalorder %s21, 1
    %p242 = por %p240, %p241
    %p244 = scmp.ne.s32.totalorder %s227, %s243
    %p245 = scmp.eq.s32.totalorder %s21, 0
    %p246 = por %p244, %p245
    %s247 = ssub.s32 %s22, %s34
    %p248 = scmp.eq.s32.totalorder %s247, 0
    %s250 = sadd.s32 %s249, 1
    %s251 = scalar_select %p248, %s249, %s250
    %p254 = pneg %p248
    %p255 = scmp.eq.s32.totalorder %s15, 1
    %p256 = por %p254, %p255
    %p257 = scmp.ne.s32.totalorder %s249, %s252
    %p258 = scmp.eq.s32.totalorder %s15, 0
    %p259 = por %p257, %p258
    %p260 = scmp.ne.s32.totalorder %s249, %s252
    %p261 = scmp.eq.s32.totalorder %s20, 1
    %p262 = por %p260, %p261
    %p263 = scmp.ne.s32.totalorder %s252, %s253
    %p264 = scmp.eq.s32.totalorder %s20, 0
    %p265 = por %p263, %p264
    %p266 = scmp.ne.s32.totalorder %s252, %s253
    %p267 = scmp.eq.s32.totalorder %s21, 1
    %p268 = por %p266, %p267
    %p270 = scmp.ne.s32.totalorder %s253, %s269
    %p271 = scmp.eq.s32.totalorder %s21, 0
    %p272 = por %p270, %p271
    %p273 = scmp.le.s32.totalorder 1, %s15
    %p274 = scmp.lt.s32.totalorder %s15, 3
    %p275 = pnand %p273, %p274
    %p276 = pneg %p275
    // Predicated region
    $region9: #{unet_down.4} parent=5 // pred_check
      _
    $region10: #{unet_down.4} parent=5 // pred_check_branch
      %278 = sbr.rel (%p275) target = $region12
    $region11: #{unet_down.4} parent=5 // pred_region
      %s279 = ssub.s32 %s15, 1
      // Predicated region
      $region13: #{unet_down.4} parent=11 // pred_check
        %p280 = pneg %p148
      $region14: #{unet_down.4} parent=11 // pred_check_branch
        %282 = sbr.rel (%p280) target = $region16
      $region15: #{unet_down.4} parent=11 // pred_region
        _
      $region16: #{unet_down.4} parent=11 // pred_fallthru
        _
      // Predicated region
      $region17: #{unet_down.4} parent=11 // pred_check
        %p283 = pneg %p169
      $region18: #{unet_down.4} parent=11 // pred_check_branch
        %285 = sbr.rel (%p283) target = $region20
      $region19: #{unet_down.4} parent=11 // pred_region
        _
      $region20: #{unet_down.4} parent=11 // pred_fallthru
        _
      // Predicated region
      $region21: #{unet_down.4} parent=11 // pred_check
        %p286 = pneg %p190
      $region22: #{unet_down.4} parent=11 // pred_check_branch
        %288 = sbr.rel (%p286) target = $region24
      $region23: #{unet_down.4} parent=11 // pred_region
        _
      $region24: #{unet_down.4} parent=11 // pred_fallthru
        _
      // Predicated region
      $region25: #{unet_down.4} parent=11 // pred_check
        %p289 = pneg %p211
      $region26: #{unet_down.4} parent=11 // pred_check_branch
        %291 = sbr.rel (%p289) target = $region28
      $region27: #{unet_down.4} parent=11 // pred_region
        _
      $region28: #{unet_down.4} parent=11 // pred_fallthru
        _
    $region12: #{unet_down.4} parent=5 // pred_fallthru
      _
    %p292 = scmp.lt.s32.totalorder %s15, 2
    // Predicated region
    $region29: #{unet_down.4} parent=5 // pred_check
      %p293 = pneg %p292
    $region30: #{unet_down.4} parent=5 // pred_check_branch
      %295 = sbr.rel (%p293) target = $region32
    $region31: #{unet_down.4} parent=5 // pred_region
      // Predicated region
      $region33: #{unet_down.4} parent=31 // pred_check
        %p296 = pneg %p57
      $region34: #{unet_down.4} parent=31 // pred_check_branch
        %298 = sbr.rel (%p296) target = $region36
      $region35: #{unet_down.4} parent=31 // pred_region
        %s299 = smul.u32 %s23, 16
        %s300 = ssub.s32 %s299, 1
        %p301 = scmp.gt.s32.totalorder %s300, 0
        %s302 = scalar_select %p301, %s300, 0
        %p303 = scmp.lt.s32.totalorder %s22, 1
        %s304 = scalar_select %p303, %s22, 1
        %p305 = scmp.lt.s32.totalorder %s302, 15
        %s306 = scalar_select %p305, %s302, 15
        %s307 = smul.addr %s306, 2
        %s308 = smul.addr %s304, 32
        %s309 = sadd.s32 %s307, %s308
        %s310 = smul.addr %s309, 4
        %s311 = scalar_lea.vmem %s0, %s310
        %s312 = smul.u32 %s23, 16
        %s313 = ssub.s32 %s312, 1
        %p314 = scmp.gt.s32.totalorder %s313, 0
        %s315 = scalar_select %p314, %s313, 0
      $region36: #{unet_down.4} parent=31 // pred_fallthru
        _
      // Predicated region
      $region37: #{unet_down.4} parent=31 // pred_check
        %p316 = pneg %p85
      $region38: #{unet_down.4} parent=31 // pred_check_branch
        %318 = sbr.rel (%p316) target = $region40
      $region39: #{unet_down.4} parent=31 // pred_region
        %s319 = smul.u32 16, %s23
        %p320 = scmp.lt.s32.totalorder %s22, 1
        %s321 = scalar_select %p320, %s22, 1
        %p322 = scmp.lt.s32.totalorder %s319, 15
        %s323 = scalar_select %p322, %s319, 15
        %s324 = smul.addr %s323, 2
        %s325 = smul.addr %s321, 32
        %s326 = sadd.s32 %s324, %s325
        %s327 = smul.addr %s326, 4
        %s328 = scalar_lea.vmem %s1, %s327
        %s329 = smul.u32 16, %s23
      $region40: #{unet_down.4} parent=31 // pred_fallthru
        _
      // Predicated region
      $region41: #{unet_down.4} parent=31 // pred_check
        %p330 = pneg %p121
      $region42: #{unet_down.4} parent=31 // pred_check_branch
        %332 = sbr.rel (%p330) target = $region44
      $region43: #{unet_down.4} parent=31 // pred_region
        %s333 = sadd.s32 %s23, 1
        %s334 = smul.u32 %s333, 16
        %p335 = scmp.lt.s32.totalorder %s334, 15
        %s336 = scalar_select %p335, %s334, 15
        %p337 = scmp.lt.s32.totalorder %s22, 1
        %s338 = scalar_select %p337, %s22, 1
        %p339 = scmp.lt.s32.totalorder %s336, 15
        %s340 = scalar_select %p339, %s336, 15
        %s341 = smul.addr %s340, 2
        %s342 = smul.addr %s338, 32
        %s343 = sadd.s32 %s341, %s342
        %s344 = smul.addr %s343, 4
        %s345 = scalar_lea.vmem %s2, %s344
        %s346 = sadd.s32 %s23, 1
        %s347 = smul.u32 %s346, 16
        %p348 = scmp.lt.s32.totalorder %s347, 15
        %s349 = scalar_select %p348, %s347, 15
      $region44: #{unet_down.4} parent=31 // pred_fallthru
        _
    $region32: #{unet_down.4} parent=5 // pred_fallthru
      _
    %p350 = scmp.le.s32.totalorder 1, %s15
    %p351 = scmp.lt.s32.totalorder %s15, 3
    %p352 = pnand %p350, %p351
    %p353 = pneg %p352
    // Predicated region
    $region45: #{unet_down.4} parent=5 // pred_check
      _
    $region46: #{unet_down.4} parent=5 // pred_check_branch
      %355 = sbr.rel (%p352) target = $region48
    $region47: #{unet_down.4} parent=5 // pred_region
      %s356 = ssub.s32 %s15, 1
      %s357 = smul.u32 %s25, 16
      %s358 = ssub.s32 %s357, 1
      %p359 = scmp.gt.s32.totalorder %s358, 0
      %s360 = scalar_select %p359, %s358, 0
      %p361 = scmp.lt.s32.totalorder %s24, 1
      %s362 = scalar_select %p361, %s24, 1
      %p363 = scmp.lt.s32.totalorder %s360, 15
      %s364 = scalar_select %p363, %s360, 15
      %s365 = smul.addr %s364, 2
      %s366 = smul.addr %s362, 32
      %s367 = sadd.s32 %s365, %s366
      %s368 = smul.addr %s367, 4
      %s369 = scalar_lea.vmem %s0, %s368
      %p370 = pneg %p63
      %p371 = pneg %p60
      %s372 = smul.u32 16, %s25
      %p373 = scmp.lt.s32.totalorder %s24, 1
      %s374 = scalar_select %p373, %s24, 1
      %p375 = scmp.lt.s32.totalorder %s372, 15
      %s376 = scalar_select %p375, %s372, 15
      %s377 = smul.addr %s376, 2
      %s378 = smul.addr %s374, 32
      %s379 = sadd.s32 %s377, %s378
      %s380 = smul.addr %s379, 4
      %s381 = scalar_lea.vmem %s1, %s380
      %p382 = pneg %p91
      %p383 = pneg %p88
      %s384 = sadd.s32 %s25, 1
      %s385 = smul.u32 %s384, 16
      %p386 = scmp.lt.s32.totalorder %s385, 15
      %s387 = scalar_select %p386, %s385, 15
      %p388 = scmp.lt.s32.totalorder %s24, 1
      %s389 = scalar_select %p388, %s24, 1
      %p390 = scmp.lt.s32.totalorder %s387, 15
      %s391 = scalar_select %p390, %s387, 15
      %s392 = smul.addr %s391, 2
      %s393 = smul.addr %s389, 32
      %s394 = sadd.s32 %s392, %s393
      %s395 = smul.addr %s394, 4
      %s396 = scalar_lea.vmem %s2, %s395
      %p397 = pneg %p127
      %p398 = pneg %p124
      %p399 = pneg %p148
      %p400 = pneg %p145
      %p401 = pneg %p169
      %p402 = pneg %p166
      %p403 = pneg %p190
      %p404 = pneg %p187
      %p405 = pneg %p211
      %p406 = pneg %p208
      %p407 = pneg %p239
      %p408 = pneg %p236
      %s409 = smul.u32 16, %s25
      %p410 = scmp.lt.s32.totalorder %s24, 1
      %s411 = scalar_select %p410, %s24, 1
      %p412 = scmp.lt.s32.totalorder %s409, 15
      %s413 = scalar_select %p412, %s409, 15
      %s414 = smul.addr %s413, 2
      %s415 = smul.addr %s411, 32
      %s416 = sadd.s32 %s414, %s415
      %s417 = smul.addr %s416, 4
      %s418 = scalar_lea.vmem %s7, %s417
      %p419 = pneg %p265
      %p420 = pneg %p262
      %p421 = scmp.lt.s32.totalorder %s24, 1
      %s422 = scalar_select %p421, %s24, 1
      %s423 = smul.addr %s422, 2
      %s424 = scalar_lea.vmem %s8, %s423
      %s425 = smul.u32 %s25, 16
      %s426 = ssub.s32 %s425, 1
      %p427 = scmp.gt.s32.totalorder %s426, 0
      %s428 = scalar_select %p427, %s426, 0
      %p429 = scmp.lt.s32.totalorder %s24, 1
      %s430 = scalar_select %p429, %s24, 1
      %p431 = scmp.lt.s32.totalorder %s428, 15
      %s432 = scalar_select %p431, %s428, 15
      %s433 = smul.addr %s432, 2
      %s434 = smul.addr %s430, 32
      %s435 = sadd.s32 %s433, %s434
      %s436 = smul.addr %s435, 4
      %s437 = scalar_lea.vmem %s0, %s436
      %s438 = smul.u32 %s25, 16
      %s439 = ssub.s32 %s438, 1
      %p440 = scmp.gt.s32.totalorder %s439, 0
      %s441 = scalar_select %p440, %s439, 0
      %s442 = smul.u32 16, %s25
      %p443 = scmp.lt.s32.totalorder %s24, 1
      %s444 = scalar_select %p443, %s24, 1
      %p445 = scmp.lt.s32.totalorder %s442, 15
      %s446 = scalar_select %p445, %s442, 15
      %s447 = smul.addr %s446, 2
      %s448 = smul.addr %s444, 32
      %s449 = sadd.s32 %s447, %s448
      %s450 = smul.addr %s449, 4
      %s451 = scalar_lea.vmem %s1, %s450
      %s452 = smul.u32 16, %s25
      %s453 = sadd.s32 %s25, 1
      %s454 = smul.u32 %s453, 16
      %p455 = scmp.lt.s32.totalorder %s454, 15
      %s456 = scalar_select %p455, %s454, 15
      %p457 = scmp.lt.s32.totalorder %s24, 1
      %s458 = scalar_select %p457, %s24, 1
      %p459 = scmp.lt.s32.totalorder %s456, 15
      %s460 = scalar_select %p459, %s456, 15
      %s461 = smul.addr %s460, 2
      %s462 = smul.addr %s458, 32
      %s463 = sadd.s32 %s461, %s462
      %s464 = smul.addr %s463, 4
      %s465 = scalar_lea.vmem %s2, %s464
      %s466 = sadd.s32 %s25, 1
      %s467 = smul.u32 %s466, 16
      %p468 = scmp.lt.s32.totalorder %s467, 15
      %s469 = scalar_select %p468, %s467, 15
      %s470 = smul.u32 16, %s25
      %p471 = scmp.lt.s32.totalorder %s24, 1
      %s472 = scalar_select %p471, %s24, 1
      %p473 = scmp.lt.s32.totalorder %s470, 15
      %s474 = scalar_select %p473, %s470, 15
      %s475 = smul.addr %s474, 2
      %s476 = smul.addr %s472, 32
      %s477 = sadd.s32 %s475, %s476
      %s478 = smul.addr %s477, 4
      %s479 = scalar_lea.vmem %s7, %s478
      %s480 = smul.u32 16, %s25
      %p481 = scmp.lt.s32.totalorder %s24, 1
      %s482 = scalar_select %p481, %s24, 1
      %s483 = smul.addr %s482, 2
      %s484 = scalar_lea.vmem %s8, %s483
      %v486 = vld [vmem:[%s451] sm:$0xf]
      %v487 = vld [vmem:[%s451 + $0x4] sm:$0xf]
      %v488 = vld [vmem:[%s451 + $0x8] sm:$0xf]
      %v489 = vld [vmem:[%s451 + $0xc] sm:$0xf]
      %v490 = vld [vmem:[%s451 + $0x10] sm:$0xf]
      %v491 = vld [vmem:[%s451 + $0x14] sm:$0xf]
      %v492 = vld [vmem:[%s451 + $0x18] sm:$0xf]
      %v493 = vld [vmem:[%s451 + $0x1c] sm:$0xf]
      %v494 = vld [vmem:[%s451 + $0x20] sm:$0xf]
      %v495 = vld [vmem:[%s451 + $0x24] sm:$0xf]
      %v496 = vld [vmem:[%s451 + $0x28] sm:$0xf]
      %v497 = vld [vmem:[%s451 + $0x2c] sm:$0xf]
      %v498 = vld [vmem:[%s451 + $0x30] sm:$0xf]
      %v499 = vld [vmem:[%s451 + $0x34] sm:$0xf]
      %v500 = vld [vmem:[%s451 + $0x38] sm:$0xf]
      %v501 = vld [vmem:[%s451 + $0x3c] sm:$0xf]
      %v502 = vld [vmem:[%s451 + $0x40] sm:$0xf]
      %v503 = vld [vmem:[%s451 + $0x44] sm:$0xf]
      %v504 = vld [vmem:[%s451 + $0x48] sm:$0xf]
      %v505 = vld [vmem:[%s451 + $0x4c] sm:$0xf]
      %v506 = vld [vmem:[%s451 + $0x50] sm:$0xf]
      %v507 = vld [vmem:[%s451 + $0x54] sm:$0xf]
      %v508 = vld [vmem:[%s451 + $0x58] sm:$0xf]
      %v509 = vld [vmem:[%s451 + $0x5c] sm:$0xf]
      %v510 = vld [vmem:[%s451 + $0x60] sm:$0xf]
      %v511 = vld [vmem:[%s451 + $0x64] sm:$0xf]
      %v512 = vld [vmem:[%s451 + $0x68] sm:$0xf]
      %v513 = vld [vmem:[%s451 + $0x6c] sm:$0xf]
      %v514 = vld [vmem:[%s451 + $0x70] sm:$0xf]
      %v515 = vld [vmem:[%s451 + $0x74] sm:$0xf]
      %v516 = vld [vmem:[%s451 + $0x78] sm:$0xf]
      %v517 = vld [vmem:[%s451 + $0x7c] sm:$0xf]
      %v518 = vunpack.c.l.bf16 %v486
      %v519 = vunpack.c.l.bf16 %v487
      %v520 = vunpack.c.l.bf16 %v488
      %v521 = vunpack.c.l.bf16 %v489
      %v522 = vunpack.c.l.bf16 %v490
      %v523 = vunpack.c.l.bf16 %v491
      %v524 = vunpack.c.l.bf16 %v492
      %v525 = vunpack.c.l.bf16 %v493
      %v526 = vunpack.c.l.bf16 %v494
      %v527 = vunpack.c.l.bf16 %v495
      %v528 = vunpack.c.l.bf16 %v496
      %v529 = vunpack.c.l.bf16 %v497
      %v530 = vunpack.c.l.bf16 %v498
      %v531 = vunpack.c.l.bf16 %v499
      %v532 = vunpack.c.l.bf16 %v500
      %v533 = vunpack.c.l.bf16 %v501
      %v534 = vunpack.c.l.bf16 %v502
      %v535 = vunpack.c.l.bf16 %v503
      %v536 = vunpack.c.l.bf16 %v504
      %v537 = vunpack.c.l.bf16 %v505
      %v538 = vunpack.c.l.bf16 %v506
      %v539 = vunpack.c.l.bf16 %v507
      %v540 = vunpack.c.l.bf16 %v508
      %v541 = vunpack.c.l.bf16 %v509
      %v542 = vunpack.c.l.bf16 %v510
      %v543 = vunpack.c.l.bf16 %v511
      %v544 = vunpack.c.l.bf16 %v512
      %v545 = vunpack.c.l.bf16 %v513
      %v546 = vunpack.c.l.bf16 %v514
      %v547 = vunpack.c.l.bf16 %v515
      %v548 = vunpack.c.l.bf16 %v516
      %v549 = vunpack.c.l.bf16 %v517
      %v550 = vld [vmem:[%s5] sm:$0x1]
      %v552 = vlaneseq
      %v553 = vshrl.u32 %v552, 7
      %v554 = vsub.s32 0, %v553
      %v555 = vrot.slane %v550, %v554
      %v557 = vmul.f32 %v518, %v555
      %v558 = vmul.f32 %v519, %v555
      %v559 = vmul.f32 %v520, %v555
      %v560 = vmul.f32 %v521, %v555
      %v561 = vmul.f32 %v522, %v555
      %v562 = vmul.f32 %v523, %v555
      %v563 = vmul.f32 %v524, %v555
      %v564 = vmul.f32 %v525, %v555
      %v565 = vmul.f32 %v526, %v555
      %v566 = vmul.f32 %v527, %v555
      %v567 = vmul.f32 %v528, %v555
      %v568 = vmul.f32 %v529, %v555
      %v569 = vmul.f32 %v530, %v555
      %v570 = vmul.f32 %v531, %v555
      %v571 = vmul.f32 %v532, %v555
      %v572 = vmul.f32 %v533, %v555
      %v573 = vmul.f32 %v534, %v555
      %v574 = vmul.f32 %v535, %v555
      %v575 = vmul.f32 %v536, %v555
      %v576 = vmul.f32 %v537, %v555
      %v577 = vmul.f32 %v538, %v555
      %v578 = vmul.f32 %v539, %v555
      %v579 = vmul.f32 %v540, %v555
      %v580 = vmul.f32 %v541, %v555
      %v581 = vmul.f32 %v542, %v555
      %v582 = vmul.f32 %v543, %v555
      %v583 = vmul.f32 %v544, %v555
      %v584 = vmul.f32 %v545, %v555
      %v585 = vmul.f32 %v546, %v555
      %v586 = vmul.f32 %v547, %v555
      %v587 = vmul.f32 %v548, %v555
      %v588 = vmul.f32 %v549, %v555
      %v589 = vld [vmem:[%s6] sm:$0x1]
      %v591 = vlaneseq
      %v592 = vshrl.u32 %v591, 7
      %v593 = vsub.s32 0, %v592
      %v594 = vrot.slane %v589, %v593
      %v596 = vadd.f32 %v557, %v594
      %v597 = vadd.f32 %v558, %v594
      %v598 = vadd.f32 %v559, %v594
      %v599 = vadd.f32 %v560, %v594
      %v600 = vadd.f32 %v561, %v594
      %v601 = vadd.f32 %v562, %v594
      %v602 = vadd.f32 %v563, %v594
      %v603 = vadd.f32 %v564, %v594
      %v604 = vadd.f32 %v565, %v594
      %v605 = vadd.f32 %v566, %v594
      %v606 = vadd.f32 %v567, %v594
      %v607 = vadd.f32 %v568, %v594
      %v608 = vadd.f32 %v569, %v594
      %v609 = vadd.f32 %v570, %v594
      %v610 = vadd.f32 %v571, %v594
      %v611 = vadd.f32 %v572, %v594
      %v612 = vadd.f32 %v573, %v594
      %v613 = vadd.f32 %v574, %v594
      %v614 = vadd.f32 %v575, %v594
      %v615 = vadd.f32 %v576, %v594
      %v616 = vadd.f32 %v577, %v594
      %v617 = vadd.f32 %v578, %v594
      %v618 = vadd.f32 %v579, %v594
      %v619 = vadd.f32 %v580, %v594
      %v620 = vadd.f32 %v581, %v594
      %v621 = vadd.f32 %v582, %v594
      %v622 = vadd.f32 %v583, %v594
      %v623 = vadd.f32 %v584, %v594
      %v624 = vadd.f32 %v585, %v594
      %v625 = vadd.f32 %v586, %v594
      %v626 = vadd.f32 %v587, %v594
      %v627 = vadd.f32 %v588, %v594
      %v628 = vmul.f32 %v596, 0.5
      %v629 = vmul.f32 %v597, 0.5
      %v630 = vmul.f32 %v598, 0.5
      %v631 = vmul.f32 %v599, 0.5
      %v632 = vmul.f32 %v600, 0.5
      %v633 = vmul.f32 %v601, 0.5
      %v634 = vmul.f32 %v602, 0.5
      %v635 = vmul.f32 %v603, 0.5
      %v636 = vmul.f32 %v604, 0.5
      %v637 = vmul.f32 %v605, 0.5
      %v638 = vmul.f32 %v606, 0.5
      %v639 = vmul.f32 %v607, 0.5
      %v640 = vmul.f32 %v608, 0.5
      %v641 = vmul.f32 %v609, 0.5
      %v642 = vmul.f32 %v610, 0.5
      %v643 = vmul.f32 %v611, 0.5
      %v644 = vmul.f32 %v612, 0.5
      %v645 = vmul.f32 %v613, 0.5
      %v646 = vmul.f32 %v614, 0.5
      %v647 = vmul.f32 %v615, 0.5
      %v648 = vmul.f32 %v616, 0.5
      %v649 = vmul.f32 %v617, 0.5
      %v650 = vmul.f32 %v618, 0.5
      %v651 = vmul.f32 %v619, 0.5
      %v652 = vmul.f32 %v620, 0.5
      %v653 = vmul.f32 %v621, 0.5
      %v654 = vmul.f32 %v622, 0.5
      %v655 = vmul.f32 %v623, 0.5
      %v656 = vmul.f32 %v624, 0.5
      %v657 = vmul.f32 %v625, 0.5
      %v658 = vmul.f32 %v626, 0.5
      %v659 = vmul.f32 %v627, 0.5
      %v660 = vmul.f32 %v596, 0.70710677
      %v661 = vmul.f32 %v597, 0.70710677
      %v662 = vmul.f32 %v598, 0.70710677
      %v663 = vmul.f32 %v599, 0.70710677
      %v664 = vmul.f32 %v600, 0.70710677
      %v665 = vmul.f32 %v601, 0.70710677
      %v666 = vmul.f32 %v602, 0.70710677
      %v667 = vmul.f32 %v603, 0.70710677
      %v668 = vmul.f32 %v604, 0.70710677
      %v669 = vmul.f32 %v605, 0.70710677
      %v670 = vmul.f32 %v606, 0.70710677
      %v671 = vmul.f32 %v607, 0.70710677
      %v672 = vmul.f32 %v608, 0.70710677
      %v673 = vmul.f32 %v609, 0.70710677
      %v674 = vmul.f32 %v610, 0.70710677
      %v675 = vmul.f32 %v611, 0.70710677
      %v676 = vmul.f32 %v612, 0.70710677
      %v677 = vmul.f32 %v613, 0.70710677
      %v678 = vmul.f32 %v614, 0.70710677
      %v679 = vmul.f32 %v615, 0.70710677
      %v680 = vmul.f32 %v616, 0.70710677
      %v681 = vmul.f32 %v617, 0.70710677
      %v682 = vmul.f32 %v618, 0.70710677
      %v683 = vmul.f32 %v619, 0.70710677
      %v684 = vmul.f32 %v620, 0.70710677
      %v685 = vmul.f32 %v621, 0.70710677
      %v686 = vmul.f32 %v622, 0.70710677
      %v687 = vmul.f32 %v623, 0.70710677
      %v688 = vmul.f32 %v624, 0.70710677
      %v689 = vmul.f32 %v625, 0.70710677
      %v690 = vmul.f32 %v626, 0.70710677
      %v691 = vmul.f32 %v627, 0.70710677
      %v692 = vand.u32 2147483647, %v660
      %v693 = vand.u32 2147483647, %v661
      %v694 = vand.u32 2147483647, %v662
      %v695 = vand.u32 2147483647, %v663
      %v696 = vand.u32 2147483647, %v664
      %v697 = vand.u32 2147483647, %v665
      %v698 = vand.u32 2147483647, %v666
      %v699 = vand.u32 2147483647, %v667
      %v700 = vand.u32 2147483647, %v668
      %v701 = vand.u32 2147483647, %v669
      %v702 = vand.u32 2147483647, %v670
      %v703 = vand.u32 2147483647, %v671
      %v704 = vand.u32 2147483647, %v672
      %v705 = vand.u32 2147483647, %v673
      %v706 = vand.u32 2147483647, %v674
      %v707 = vand.u32 2147483647, %v675
      %v708 = vand.u32 2147483647, %v676
      %v709 = vand.u32 2147483647, %v677
      %v710 = vand.u32 2147483647, %v678
      %v711 = vand.u32 2147483647, %v679
      %v712 = vand.u32 2147483647, %v680
      %v713 = vand.u32 2147483647, %v681
      %v714 = vand.u32 2147483647, %v682
      %v715 = vand.u32 2147483647, %v683
      %v716 = vand.u32 2147483647, %v684
      %v717 = vand.u32 2147483647, %v685
      %v718 = vand.u32 2147483647, %v686
      %v719 = vand.u32 2147483647, %v687
      %v720 = vand.u32 2147483647, %v688
      %v721 = vand.u32 2147483647, %v689
      %v722 = vand.u32 2147483647, %v690
      %v723 = vand.u32 2147483647, %v691
      %v724 = vmul.f32 %v692, 0.3275911
      %v725 = vmul.f32 %v693, 0.3275911
      %v726 = vmul.f32 %v694, 0.3275911
      %v727 = vmul.f32 %v695, 0.3275911
      %v728 = vmul.f32 %v696, 0.3275911
      %v729 = vmul.f32 %v697, 0.3275911
      %v730 = vmul.f32 %v698, 0.3275911
      %v731 = vmul.f32 %v699, 0.3275911
      %v732 = vmul.f32 %v700, 0.3275911
      %v733 = vmul.f32 %v701, 0.3275911
      %v734 = vmul.f32 %v702, 0.3275911
      %v735 = vmul.f32 %v703, 0.3275911
      %v736 = vmul.f32 %v704, 0.3275911
      %v737 = vmul.f32 %v705, 0.3275911
      %v738 = vmul.f32 %v706, 0.3275911
      %v739 = vmul.f32 %v707, 0.3275911
      %v740 = vmul.f32 %v708, 0.3275911
      %v741 = vmul.f32 %v709, 0.3275911
      %v742 = vmul.f32 %v710, 0.3275911
      %v743 = vmul.f32 %v711, 0.3275911
      %v744 = vmul.f32 %v712, 0.3275911
      %v745 = vmul.f32 %v713, 0.3275911
      %v746 = vmul.f32 %v714, 0.3275911
      %v747 = vmul.f32 %v715, 0.3275911
      %v748 = vmul.f32 %v716, 0.3275911
      %v749 = vmul.f32 %v717, 0.3275911
      %v750 = vmul.f32 %v718, 0.3275911
      %v751 = vmul.f32 %v719, 0.3275911
      %v752 = vmul.f32 %v720, 0.3275911
      %v753 = vmul.f32 %v721, 0.3275911
      %v754 = vmul.f32 %v722, 0.3275911
      %v755 = vmul.f32 %v723, 0.3275911
      %v756 = vadd.f32 %v724, 1.0
      %v757 = vadd.f32 %v725, 1.0
      %v758 = vadd.f32 %v726, 1.0
      %v759 = vadd.f32 %v727, 1.0
      %v760 = vadd.f32 %v728, 1.0
      %v761 = vadd.f32 %v729, 1.0
      %v762 = vadd.f32 %v730, 1.0
      %v763 = vadd.f32 %v731, 1.0
      %v764 = vadd.f32 %v732, 1.0
      %v765 = vadd.f32 %v733, 1.0
      %v766 = vadd.f32 %v734, 1.0
      %v767 = vadd.f32 %v735, 1.0
      %v768 = vadd.f32 %v736, 1.0
      %v769 = vadd.f32 %v737, 1.0
      %v770 = vadd.f32 %v738, 1.0
      %v771 = vadd.f32 %v739, 1.0
      %v772 = vadd.f32 %v740, 1.0
      %v773 = vadd.f32 %v741, 1.0
      %v774 = vadd.f32 %v742, 1.0
      %v775 = vadd.f32 %v743, 1.0
      %v776 = vadd.f32 %v744, 1.0
      %v777 = vadd.f32 %v745, 1.0
      %v778 = vadd.f32 %v746, 1.0
      %v779 = vadd.f32 %v747, 1.0
      %v780 = vadd.f32 %v748, 1.0
      %v781 = vadd.f32 %v749, 1.0
      %v782 = vadd.f32 %v750, 1.0
      %v783 = vadd.f32 %v751, 1.0
      %v784 = vadd.f32 %v752, 1.0
      %v785 = vadd.f32 %v753, 1.0
      %v786 = vadd.f32 %v754, 1.0
      %v787 = vadd.f32 %v755, 1.0
      %v788 = vrcp.pop %v756
      %v789 = vmul.f32 1.0, %v788
      %v790 = vrcp.pop %v757
      %v791 = vmul.f32 1.0, %v790
      %v792 = vrcp.pop %v758
      %v793 = vmul.f32 1.0, %v792
      %v794 = vrcp.pop %v759
      %v795 = vmul.f32 1.0, %v794
      %v796 = vrcp.pop %v760
      %v797 = vmul.f32 1.0, %v796
      %v798 = vrcp.pop %v761
      %v799 = vmul.f32 1.0, %v798
      %v800 = vrcp.pop %v762
      %v801 = vmul.f32 1.0, %v800
      %v802 = vrcp.pop %v763
      %v803 = vmul.f32 1.0, %v802
      %v804 = vrcp.pop %v764
      %v805 = vmul.f32 1.0, %v804
      %v806 = vrcp.pop %v765
      %v807 = vmul.f32 1.0, %v806
      %v808 = vrcp.pop %v766
      %v809 = vmul.f32 1.0, %v808
      %v810 = vrcp.pop %v767
      %v811 = vmul.f32 1.0, %v810
      %v812 = vrcp.pop %v768
      %v813 = vmul.f32 1.0, %v812
      %v814 = vrcp.pop %v769
      %v815 = vmul.f32 1.0, %v814
      %v816 = vrcp.pop %v770
      %v817 = vmul.f32 1.0, %v816
      %v818 = vrcp.pop %v771
      %v819 = vmul.f32 1.0, %v818
      %v820 = vrcp.pop %v772
      %v821 = vmul.f32 1.0, %v820
      %v822 = vrcp.pop %v773
      %v823 = vmul.f32 1.0, %v822
      %v824 = vrcp.pop %v774
      %v825 = vmul.f32 1.0, %v824
      %v826 = vrcp.pop %v775
      %v827 = vmul.f32 1.0, %v826
      %v828 = vrcp.pop %v776
      %v829 = vmul.f32 1.0, %v828
      %v830 = vrcp.pop %v777
      %v831 = vmul.f32 1.0, %v830
      %v832 = vrcp.pop %v778
      %v833 = vmul.f32 1.0, %v832
      %v834 = vrcp.pop %v779
      %v835 = vmul.f32 1.0, %v834
      %v836 = vrcp.pop %v780
      %v837 = vmul.f32 1.0, %v836
      %v838 = vrcp.pop %v781
      %v839 = vmul.f32 1.0, %v838
      %v840 = vrcp.pop %v782
      %v841 = vmul.f32 1.0, %v840
      %v842 = vrcp.pop %v783
      %v843 = vmul.f32 1.0, %v842
      %v844 = vrcp.pop %v784
      %v845 = vmul.f32 1.0, %v844
      %v846 = vrcp.pop %v785
      %v847 = vmul.f32 1.0, %v846
      %v848 = vrcp.pop %v786
      %v849 = vmul.f32 1.0, %v848
      %v850 = vrcp.pop %v787
      %v851 = vmul.f32 1.0, %v850
      %v852 = vmul.f32 %v789, 1.0614054
      %v853 = vmul.f32 %v791, 1.0614054
      %v854 = vmul.f32 %v793, 1.0614054
      %v855 = vmul.f32 %v795, 1.0614054
      %v856 = vmul.f32 %v797, 1.0614054
      %v857 = vmul.f32 %v799, 1.0614054
      %v858 = vmul.f32 %v801, 1.0614054
      %v859 = vmul.f32 %v803, 1.0614054
      %v860 = vmul.f32 %v805, 1.0614054
      %v861 = vmul.f32 %v807, 1.0614054
      %v862 = vmul.f32 %v809, 1.0614054
      %v863 = vmul.f32 %v811, 1.0614054
      %v864 = vmul.f32 %v813, 1.0614054
      %v865 = vmul.f32 %v815, 1.0614054
      %v866 = vmul.f32 %v817, 1.0614054
      %v867 = vmul.f32 %v819, 1.0614054
      %v868 = vmul.f32 %v821, 1.0614054
      %v869 = vmul.f32 %v823, 1.0614054
      %v870 = vmul.f32 %v825, 1.0614054
      %v871 = vmul.f32 %v827, 1.0614054
      %v872 = vmul.f32 %v829, 1.0614054
      %v873 = vmul.f32 %v831, 1.0614054
      %v874 = vmul.f32 %v833, 1.0614054
      %v875 = vmul.f32 %v835, 1.0614054
      %v876 = vmul.f32 %v837, 1.0614054
      %v877 = vmul.f32 %v839, 1.0614054
      %v878 = vmul.f32 %v841, 1.0614054
      %v879 = vmul.f32 %v843, 1.0614054
      %v880 = vmul.f32 %v845, 1.0614054
      %v881 = vmul.f32 %v847, 1.0614054
      %v882 = vmul.f32 %v849, 1.0614054
      %v883 = vmul.f32 %v851, 1.0614054
      %v884 = vadd.f32 %v852, -1.4531521
      %v885 = vadd.f32 %v853, -1.4531521
      %v886 = vadd.f32 %v854, -1.4531521
      %v887 = vadd.f32 %v855, -1.4531521
      %v888 = vadd.f32 %v856, -1.4531521
      %v889 = vadd.f32 %v857, -1.4531521
      %v890 = vadd.f32 %v858, -1.4531521
      %v891 = vadd.f32 %v859, -1.4531521
      %v892 = vadd.f32 %v860, -1.4531521
      %v893 = vadd.f32 %v861, -1.4531521
      %v894 = vadd.f32 %v862, -1.4531521
      %v895 = vadd.f32 %v863, -1.4531521
      %v896 = vadd.f32 %v864, -1.4531521
      %v897 = vadd.f32 %v865, -1.4531521
      %v898 = vadd.f32 %v866, -1.4531521
      %v899 = vadd.f32 %v867, -1.4531521
      %v900 = vadd.f32 %v868, -1.4531521
      %v901 = vadd.f32 %v869, -1.4531521
      %v902 = vadd.f32 %v870, -1.4531521
      %v903 = vadd.f32 %v871, -1.4531521
      %v904 = vadd.f32 %v872, -1.4531521
      %v905 = vadd.f32 %v873, -1.4531521
      %v906 = vadd.f32 %v874, -1.4531521
      %v907 = vadd.f32 %v875, -1.4531521
      %v908 = vadd.f32 %v876, -1.4531521
      %v909 = vadd.f32 %v877, -1.4531521
      %v910 = vadd.f32 %v878, -1.4531521
      %v911 = vadd.f32 %v879, -1.4531521
      %v912 = vadd.f32 %v880, -1.4531521
      %v913 = vadd.f32 %v881, -1.4531521
      %v914 = vadd.f32 %v882, -1.4531521
      %v915 = vadd.f32 %v883, -1.4531521
      %v916 = vmul.f32 %v884, %v789
      %v917 = vmul.f32 %v885, %v791
      %v918 = vmul.f32 %v886, %v793
      %v919 = vmul.f32 %v887, %v795
      %v920 = vmul.f32 %v888, %v797
      %v921 = vmul.f32 %v889, %v799
      %v922 = vmul.f32 %v890, %v801
      %v923 = vmul.f32 %v891, %v803
      %v924 = vmul.f32 %v892, %v805
      %v925 = vmul.f32 %v893, %v807
      %v926 = vmul.f32 %v894, %v809
      %v927 = vmul.f32 %v895, %v811
      %v928 = vmul.f32 %v896, %v813
      %v929 = vmul.f32 %v897, %v815
      %v930 = vmul.f32 %v898, %v817
      %v931 = vmul.f32 %v899, %v819
      %v932 = vmul.f32 %v900, %v821
      %v933 = vmul.f32 %v901, %v823
      %v934 = vmul.f32 %v902, %v825
      %v935 = vmul.f32 %v903, %v827
      %v936 = vmul.f32 %v904, %v829
      %v937 = vmul.f32 %v905, %v831
      %v938 = vmul.f32 %v906, %v833
      %v939 = vmul.f32 %v907, %v835
      %v940 = vmul.f32 %v908, %v837
      %v941 = vmul.f32 %v909, %v839
      %v942 = vmul.f32 %v910, %v841
      %v943 = vmul.f32 %v911, %v843
      %v944 = vmul.f32 %v912, %v845
      %v945 = vmul.f32 %v913, %v847
      %v946 = vmul.f32 %v914, %v849
      %v947 = vmul.f32 %v915, %v851
      %v948 = vadd.f32 %v916, 1.4214138
      %v949 = vadd.f32 %v917, 1.4214138
      %v950 = vadd.f32 %v918, 1.4214138
      %v951 = vadd.f32 %v919, 1.4214138
      %v952 = vadd.f32 %v920, 1.4214138
      %v953 = vadd.f32 %v921, 1.4214138
      %v954 = vadd.f32 %v922, 1.4214138
      %v955 = vadd.f32 %v923, 1.4214138
      %v956 = vadd.f32 %v924, 1.4214138
      %v957 = vadd.f32 %v925, 1.4214138
      %v958 = vadd.f32 %v926, 1.4214138
      %v959 = vadd.f32 %v927, 1.4214138
      %v960 = vadd.f32 %v928, 1.4214138
      %v961 = vadd.f32 %v929, 1.4214138
      %v962 = vadd.f32 %v930, 1.4214138
      %v963 = vadd.f32 %v931, 1.4214138
      %v964 = vadd.f32 %v932, 1.4214138
      %v965 = vadd.f32 %v933, 1.4214138
      %v966 = vadd.f32 %v934, 1.4214138
      %v967 = vadd.f32 %v935, 1.4214138
      %v968 = vadd.f32 %v936, 1.4214138
      %v969 = vadd.f32 %v937, 1.4214138
      %v970 = vadd.f32 %v938, 1.4214138
      %v971 = vadd.f32 %v939, 1.4214138
      %v972 = vadd.f32 %v940, 1.4214138
      %v973 = vadd.f32 %v941, 1.4214138
      %v974 = vadd.f32 %v942, 1.4214138
      %v975 = vadd.f32 %v943, 1.4214138
      %v976 = vadd.f32 %v944, 1.4214138
      %v977 = vadd.f32 %v945, 1.4214138
      %v978 = vadd.f32 %v946, 1.4214138
      %v979 = vadd.f32 %v947, 1.4214138
      %v980 = vmul.f32 %v948, %v789
      %v981 = vmul.f32 %v949, %v791
      %v982 = vmul.f32 %v950, %v793
      %v983 = vmul.f32 %v951, %v795
      %v984 = vmul.f32 %v952, %v797
      %v985 = vmul.f32 %v953, %v799
      %v986 = vmul.f32 %v954, %v801
      %v987 = vmul.f32 %v955, %v803
      %v988 = vmul.f32 %v956, %v805
      %v989 = vmul.f32 %v957, %v807
      %v990 = vmul.f32 %v958, %v809
      %v991 = vmul.f32 %v959, %v811
      %v992 = vmul.f32 %v960, %v813
      %v993 = vmul.f32 %v961, %v815
      %v994 = vmul.f32 %v962, %v817
      %v995 = vmul.f32 %v963, %v819
      %v996 = vmul.f32 %v964, %v821
      %v997 = vmul.f32 %v965, %v823
      %v998 = vmul.f32 %v966, %v825
      %v999 = vmul.f32 %v967, %v827
      %v1000 = vmul.f32 %v968, %v829
      %v1001 = vmul.f32 %v969, %v831
      %v1002 = vmul.f32 %v970, %v833
      %v1003 = vmul.f32 %v971, %v835
      %v1004 = vmul.f32 %v972, %v837
      %v1005 = vmul.f32 %v973, %v839
      %v1006 = vmul.f32 %v974, %v841
      %v1007 = vmul.f32 %v975, %v843
      %v1008 = vmul.f32 %v976, %v845
      %v1009 = vmul.f32 %v977, %v847
      %v1010 = vmul.f32 %v978, %v849
      %v1011 = vmul.f32 %v979, %v851
      %v1012 = vadd.f32 %v980, -0.28449672
      %v1013 = vadd.f32 %v981, -0.28449672
      %v1014 = vadd.f32 %v982, -0.28449672
      %v1015 = vadd.f32 %v983, -0.28449672
      %v1016 = vadd.f32 %v984, -0.28449672
      %v1017 = vadd.f32 %v985, -0.28449672
      %v1018 = vadd.f32 %v986, -0.28449672
      %v1019 = vadd.f32 %v987, -0.28449672
      %v1020 = vadd.f32 %v988, -0.28449672
      %v1021 = vadd.f32 %v989, -0.28449672
      %v1022 = vadd.f32 %v990, -0.28449672
      %v1023 = vadd.f32 %v991, -0.28449672
      %v1024 = vadd.f32 %v992, -0.28449672
      %v1025 = vadd.f32 %v993, -0.28449672
      %v1026 = vadd.f32 %v994, -0.28449672
      %v1027 = vadd.f32 %v995, -0.28449672
      %v1028 = vadd.f32 %v996, -0.28449672
      %v1029 = vadd.f32 %v997, -0.28449672
      %v1030 = vadd.f32 %v998, -0.28449672
      %v1031 = vadd.f32 %v999, -0.28449672
      %v1032 = vadd.f32 %v1000, -0.28449672
      %v1033 = vadd.f32 %v1001, -0.28449672
      %v1034 = vadd.f32 %v1002, -0.28449672
      %v1035 = vadd.f32 %v1003, -0.28449672
      %v1036 = vadd.f32 %v1004, -0.28449672
      %v1037 = vadd.f32 %v1005, -0.28449672
      %v1038 = vadd.f32 %v1006, -0.28449672
      %v1039 = vadd.f32 %v1007, -0.28449672
      %v1040 = vadd.f32 %v1008, -0.28449672
      %v1041 = vadd.f32 %v1009, -0.28449672
      %v1042 = vadd.f32 %v1010, -0.28449672
      %v1043 = vadd.f32 %v1011, -0.28449672
      %v1044 = vmul.f32 %v1012, %v789
      %v1045 = vmul.f32 %v1013, %v791
      %v1046 = vmul.f32 %v1014, %v793
      %v1047 = vmul.f32 %v1015, %v795
      %v1048 = vmul.f32 %v1016, %v797
      %v1049 = vmul.f32 %v1017, %v799
      %v1050 = vmul.f32 %v1018, %v801
      %v1051 = vmul.f32 %v1019, %v803
      %v1052 = vmul.f32 %v1020, %v805
      %v1053 = vmul.f32 %v1021, %v807
      %v1054 = vmul.f32 %v1022, %v809
      %v1055 = vmul.f32 %v1023, %v811
      %v1056 = vmul.f32 %v1024, %v813
      %v1057 = vmul.f32 %v1025, %v815
      %v1058 = vmul.f32 %v1026, %v817
      %v1059 = vmul.f32 %v1027, %v819
      %v1060 = vmul.f32 %v1028, %v821
      %v1061 = vmul.f32 %v1029, %v823
      %v1062 = vmul.f32 %v1030, %v825
      %v1063 = vmul.f32 %v1031, %v827
      %v1064 = vmul.f32 %v1032, %v829
      %v1065 = vmul.f32 %v1033, %v831
      %v1066 = vmul.f32 %v1034, %v833
      %v1067 = vmul.f32 %v1035, %v835
      %v1068 = vmul.f32 %v1036, %v837
      %v1069 = vmul.f32 %v1037, %v839
      %v1070 = vmul.f32 %v1038, %v841
      %v1071 = vmul.f32 %v1039, %v843
      %v1072 = vmul.f32 %v1040, %v845
      %v1073 = vmul.f32 %v1041, %v847
      %v1074 = vmul.f32 %v1042, %v849
      %v1075 = vmul.f32 %v1043, %v851
      %v1076 = vadd.f32 %v1044, 0.2548296
      %v1077 = vadd.f32 %v1045, 0.2548296
      %v1078 = vadd.f32 %v1046, 0.2548296
      %v1079 = vadd.f32 %v1047, 0.2548296
      %v1080 = vadd.f32 %v1048, 0.2548296
      %v1081 = vadd.f32 %v1049, 0.2548296
      %v1082 = vadd.f32 %v1050, 0.2548296
      %v1083 = vadd.f32 %v1051, 0.2548296
      %v1084 = vadd.f32 %v1052, 0.2548296
      %v1085 = vadd.f32 %v1053, 0.2548296
      %v1086 = vadd.f32 %v1054, 0.2548296
      %v1087 = vadd.f32 %v1055, 0.2548296
      %v1088 = vadd.f32 %v1056, 0.2548296
      %v1089 = vadd.f32 %v1057, 0.2548296
      %v1090 = vadd.f32 %v1058, 0.2548296
      %v1091 = vadd.f32 %v1059, 0.2548296
      %v1092 = vadd.f32 %v1060, 0.2548296
      %v1093 = vadd.f32 %v1061, 0.2548296
      %v1094 = vadd.f32 %v1062, 0.2548296
      %v1095 = vadd.f32 %v1063, 0.2548296
      %v1096 = vadd.f32 %v1064, 0.2548296
      %v1097 = vadd.f32 %v1065, 0.2548296
      %v1098 = vadd.f32 %v1066, 0.2548296
      %v1099 = vadd.f32 %v1067, 0.2548296
      %v1100 = vadd.f32 %v1068, 0.2548296
      %v1101 = vadd.f32 %v1069, 0.2548296
      %v1102 = vadd.f32 %v1070, 0.2548296
      %v1103 = vadd.f32 %v1071, 0.2548296
      %v1104 = vadd.f32 %v1072, 0.2548296
      %v1105 = vadd.f32 %v1073, 0.2548296
      %v1106 = vadd.f32 %v1074, 0.2548296
      %v1107 = vadd.f32 %v1075, 0.2548296
      %v1108 = vmul.f32 %v1076, %v789
      %v1109 = vmul.f32 %v1077, %v791
      %v1110 = vmul.f32 %v1078, %v793
      %v1111 = vmul.f32 %v1079, %v795
      %v1112 = vmul.f32 %v1080, %v797
      %v1113 = vmul.f32 %v1081, %v799
      %v1114 = vmul.f32 %v1082, %v801
      %v1115 = vmul.f32 %v1083, %v803
      %v1116 = vmul.f32 %v1084, %v805
      %v1117 = vmul.f32 %v1085, %v807
      %v1118 = vmul.f32 %v1086, %v809
      %v1119 = vmul.f32 %v1087, %v811
      %v1120 = vmul.f32 %v1088, %v813
      %v1121 = vmul.f32 %v1089, %v815
      %v1122 = vmul.f32 %v1090, %v817
      %v1123 = vmul.f32 %v1091, %v819
      %v1124 = vmul.f32 %v1092, %v821
      %v1125 = vmul.f32 %v1093, %v823
      %v1126 = vmul.f32 %v1094, %v825
      %v1127 = vmul.f32 %v1095, %v827
      %v1128 = vmul.f32 %v1096, %v829
      %v1129 = vmul.f32 %v1097, %v831
      %v1130 = vmul.f32 %v1098, %v833
      %v1131 = vmul.f32 %v1099, %v835
      %v1132 = vmul.f32 %v1100, %v837
      %v1133 = vmul.f32 %v1101, %v839
      %v1134 = vmul.f32 %v1102, %v841
      %v1135 = vmul.f32 %v1103, %v843
      %v1136 = vmul.f32 %v1104, %v845
      %v1137 = vmul.f32 %v1105, %v847
      %v1138 = vmul.f32 %v1106, %v849
      %v1139 = vmul.f32 %v1107, %v851
      %v1140 = vsub.f32 0.0, %v692
      %v1141 = vsub.f32 0.0, %v693
      %v1142 = vsub.f32 0.0, %v694
      %v1143 = vsub.f32 0.0, %v695
      %v1144 = vsub.f32 0.0, %v696
      %v1145 = vsub.f32 0.0, %v697
      %v1146 = vsub.f32 0.0, %v698
      %v1147 = vsub.f32 0.0, %v699
      %v1148 = vsub.f32 0.0, %v700
      %v1149 = vsub.f32 0.0, %v701
      %v1150 = vsub.f32 0.0, %v702
      %v1151 = vsub.f32 0.0, %v703
      %v1152 = vsub.f32 0.0, %v704
      %v1153 = vsub.f32 0.0, %v705
      %v1154 = vsub.f32 0.0, %v706
      %v1155 = vsub.f32 0.0, %v707
      %v1156 = vsub.f32 0.0, %v708
      %v1157 = vsub.f32 0.0, %v709
      %v1158 = vsub.f32 0.0, %v710
      %v1159 = vsub.f32 0.0, %v711
      %v1160 = vsub.f32 0.0, %v712
      %v1161 = vsub.f32 0.0, %v713
      %v1162 = vsub.f32 0.0, %v714
      %v1163 = vsub.f32 0.0, %v715
      %v1164 = vsub.f32 0.0, %v716
      %v1165 = vsub.f32 0.0, %v717
      %v1166 = vsub.f32 0.0, %v718
      %v1167 = vsub.f32 0.0, %v719
      %v1168 = vsub.f32 0.0, %v720
      %v1169 = vsub.f32 0.0, %v721
      %v1170 = vsub.f32 0.0, %v722
      %v1171 = vsub.f32 0.0, %v723
      %v1172 = vmul.f32 %v1140, %v692
      %v1173 = vmul.f32 %v1141, %v693
      %v1174 = vmul.f32 %v1142, %v694
      %v1175 = vmul.f32 %v1143, %v695
      %v1176 = vmul.f32 %v1144, %v696
      %v1177 = vmul.f32 %v1145, %v697
      %v1178 = vmul.f32 %v1146, %v698
      %v1179 = vmul.f32 %v1147, %v699
      %v1180 = vmul.f32 %v1148, %v700
      %v1181 = vmul.f32 %v1149, %v701
      %v1182 = vmul.f32 %v1150, %v702
      %v1183 = vmul.f32 %v1151, %v703
      %v1184 = vmul.f32 %v1152, %v704
      %v1185 = vmul.f32 %v1153, %v705
      %v1186 = vmul.f32 %v1154, %v706
      %v1187 = vmul.f32 %v1155, %v707
      %v1188 = vmul.f32 %v1156, %v708
      %v1189 = vmul.f32 %v1157, %v709
      %v1190 = vmul.f32 %v1158, %v710
      %v1191 = vmul.f32 %v1159, %v711
      %v1192 = vmul.f32 %v1160, %v712
      %v1193 = vmul.f32 %v1161, %v713
      %v1194 = vmul.f32 %v1162, %v714
      %v1195 = vmul.f32 %v1163, %v715
      %v1196 = vmul.f32 %v1164, %v716
      %v1197 = vmul.f32 %v1165, %v717
      %v1198 = vmul.f32 %v1166, %v718
      %v1199 = vmul.f32 %v1167, %v719
      %v1200 = vmul.f32 %v1168, %v720
      %v1201 = vmul.f32 %v1169, %v721
      %v1202 = vmul.f32 %v1170, %v722
      %v1203 = vmul.f32 %v1171, %v723
      %v1204 = vmul.f32 %v1172, 1.442695
      %v1205 = vpow.pop %v1204
      %v1206 = vmul.f32 %v1173, 1.442695
      %v1207 = vpow.pop %v1206
      %v1208 = vmul.f32 %v1174, 1.442695
      %v1209 = vpow.pop %v1208
      %v1210 = vmul.f32 %v1175, 1.442695
      %v1211 = vpow.pop %v1210
      %v1212 = vmul.f32 %v1176, 1.442695
      %v1213 = vpow.pop %v1212
      %v1214 = vmul.f32 %v1177, 1.442695
      %v1215 = vpow.pop %v1214
      %v1216 = vmul.f32 %v1178, 1.442695
      %v1217 = vpow.pop %v1216
      %v1218 = vmul.f32 %v1179, 1.442695
      %v1219 = vpow.pop %v1218
      %v1220 = vmul.f32 %v1180, 1.442695
      %v1221 = vpow.pop %v1220
      %v1222 = vmul.f32 %v1181, 1.442695
      %v1223 = vpow.pop %v1222
      %v1224 = vmul.f32 %v1182, 1.442695
      %v1225 = vpow.pop %v1224
      %v1226 = vmul.f32 %v1183, 1.442695
      %v1227 = vpow.pop %v1226
      %v1228 = vmul.f32 %v1184, 1.442695
      %v1229 = vpow.pop %v1228
      %v1230 = vmul.f32 %v1185, 1.442695
      %v1231 = vpow.pop %v1230
      %v1232 = vmul.f32 %v1186, 1.442695
      %v1233 = vpow.pop %v1232
      %v1234 = vmul.f32 %v1187, 1.442695
      %v1235 = vpow.pop %v1234
      %v1236 = vmul.f32 %v1188, 1.442695
      %v1237 = vpow.pop %v1236
      %v1238 = vmul.f32 %v1189, 1.442695
      %v1239 = vpow.pop %v1238
      %v1240 = vmul.f32 %v1190, 1.442695
      %v1241 = vpow.pop %v1240
      %v1242 = vmul.f32 %v1191, 1.442695
      %v1243 = vpow.pop %v1242
      %v1244 = vmul.f32 %v1192, 1.442695
      %v1245 = vpow.pop %v1244
      %v1246 = vmul.f32 %v1193, 1.442695
      %v1247 = vpow.pop %v1246
      %v1248 = vmul.f32 %v1194, 1.442695
      %v1249 = vpow.pop %v1248
      %v1250 = vmul.f32 %v1195, 1.442695
      %v1251 = vpow.pop %v1250
      %v1252 = vmul.f32 %v1196, 1.442695
      %v1253 = vpow.pop %v1252
      %v1254 = vmul.f32 %v1197, 1.442695
      %v1255 = vpow.pop %v1254
      %v1256 = vmul.f32 %v1198, 1.442695
      %v1257 = vpow.pop %v1256
      %v1258 = vmul.f32 %v1199, 1.442695
      %v1259 = vpow.pop %v1258
      %v1260 = vmul.f32 %v1200, 1.442695
      %v1261 = vpow.pop %v1260
      %v1262 = vmul.f32 %v1201, 1.442695
      %v1263 = vpow.pop %v1262
      %v1264 = vmul.f32 %v1202, 1.442695
      %v1265 = vpow.pop %v1264
      %v1266 = vmul.f32 %v1203, 1.442695
      %v1267 = vpow.pop %v1266
      %v1268 = vmul.f32 %v1108, %v1205
      %v1269 = vmul.f32 %v1109, %v1207
      %v1270 = vmul.f32 %v1110, %v1209
      %v1271 = vmul.f32 %v1111, %v1211
      %v1272 = vmul.f32 %v1112, %v1213
      %v1273 = vmul.f32 %v1113, %v1215
      %v1274 = vmul.f32 %v1114, %v1217
      %v1275 = vmul.f32 %v1115, %v1219
      %v1276 = vmul.f32 %v1116, %v1221
      %v1277 = vmul.f32 %v1117, %v1223
      %v1278 = vmul.f32 %v1118, %v1225
      %v1279 = vmul.f32 %v1119, %v1227
      %v1280 = vmul.f32 %v1120, %v1229
      %v1281 = vmul.f32 %v1121, %v1231
      %v1282 = vmul.f32 %v1122, %v1233
      %v1283 = vmul.f32 %v1123, %v1235
      %v1284 = vmul.f32 %v1124, %v1237
      %v1285 = vmul.f32 %v1125, %v1239
      %v1286 = vmul.f32 %v1126, %v1241
      %v1287 = vmul.f32 %v1127, %v1243
      %v1288 = vmul.f32 %v1128, %v1245
      %v1289 = vmul.f32 %v1129, %v1247
      %v1290 = vmul.f32 %v1130, %v1249
      %v1291 = vmul.f32 %v1131, %v1251
      %v1292 = vmul.f32 %v1132, %v1253
      %v1293 = vmul.f32 %v1133, %v1255
      %v1294 = vmul.f32 %v1134, %v1257
      %v1295 = vmul.f32 %v1135, %v1259
      %v1296 = vmul.f32 %v1136, %v1261
      %v1297 = vmul.f32 %v1137, %v1263
      %v1298 = vmul.f32 %v1138, %v1265
      %v1299 = vmul.f32 %v1139, %v1267
      %v1300 = vsub.f32 1.0, %v1268
      %v1301 = vsub.f32 1.0, %v1269
      %v1302 = vsub.f32 1.0, %v1270
      %v1303 = vsub.f32 1.0, %v1271
      %v1304 = vsub.f32 1.0, %v1272
      %v1305 = vsub.f32 1.0, %v1273
      %v1306 = vsub.f32 1.0, %v1274
      %v1307 = vsub.f32 1.0, %v1275
      %v1308 = vsub.f32 1.0, %v1276
      %v1309 = vsub.f32 1.0, %v1277
      %v1310 = vsub.f32 1.0, %v1278
      %v1311 = vsub.f32 1.0, %v1279
      %v1312 = vsub.f32 1.0, %v1280
      %v1313 = vsub.f32 1.0, %v1281
      %v1314 = vsub.f32 1.0, %v1282
      %v1315 = vsub.f32 1.0, %v1283
      %v1316 = vsub.f32 1.0, %v1284
      %v1317 = vsub.f32 1.0, %v1285
      %v1318 = vsub.f32 1.0, %v1286
      %v1319 = vsub.f32 1.0, %v1287
      %v1320 = vsub.f32 1.0, %v1288
      %v1321 = vsub.f32 1.0, %v1289
      %v1322 = vsub.f32 1.0, %v1290
      %v1323 = vsub.f32 1.0, %v1291
      %v1324 = vsub.f32 1.0, %v1292
      %v1325 = vsub.f32 1.0, %v1293
      %v1326 = vsub.f32 1.0, %v1294
      %v1327 = vsub.f32 1.0, %v1295
      %v1328 = vsub.f32 1.0, %v1296
      %v1329 = vsub.f32 1.0, %v1297
      %v1330 = vsub.f32 1.0, %v1298
      %v1331 = vsub.f32 1.0, %v1299
      %vm1332 = vcmp.ge.f32.partialorder %v660, 0.0
      %vm1333 = vcmp.ge.f32.partialorder %v661, 0.0
      %vm1334 = vcmp.ge.f32.partialorder %v662, 0.0
      %vm1335 = vcmp.ge.f32.partialorder %v663, 0.0
      %vm1336 = vcmp.ge.f32.partialorder %v664, 0.0
      %vm1337 = vcmp.ge.f32.partialorder %v665, 0.0
      %vm1338 = vcmp.ge.f32.partialorder %v666, 0.0
      %vm1339 = vcmp.ge.f32.partialorder %v667, 0.0
      %vm1340 = vcmp.ge.f32.partialorder %v668, 0.0
      %vm1341 = vcmp.ge.f32.partialorder %v669, 0.0
      %vm1342 = vcmp.ge.f32.partialorder %v670, 0.0
      %vm1343 = vcmp.ge.f32.partialorder %v671, 0.0
      %vm1344 = vcmp.ge.f32.partialorder %v672, 0.0
      %vm1345 = vcmp.ge.f32.partialorder %v673, 0.0
      %vm1346 = vcmp.ge.f32.partialorder %v674, 0.0
      %vm1347 = vcmp.ge.f32.partialorder %v675, 0.0
      %vm1348 = vcmp.ge.f32.partialorder %v676, 0.0
      %vm1349 = vcmp.ge.f32.partialorder %v677, 0.0
      %vm1350 = vcmp.ge.f32.partialorder %v678, 0.0
      %vm1351 = vcmp.ge.f32.partialorder %v679, 0.0
      %vm1352 = vcmp.ge.f32.partialorder %v680, 0.0
      %vm1353 = vcmp.ge.f32.partialorder %v681, 0.0
      %vm1354 = vcmp.ge.f32.partialorder %v682, 0.0
      %vm1355 = vcmp.ge.f32.partialorder %v683, 0.0
      %vm1356 = vcmp.ge.f32.partialorder %v684, 0.0
      %vm1357 = vcmp.ge.f32.partialorder %v685, 0.0
      %vm1358 = vcmp.ge.f32.partialorder %v686, 0.0
      %vm1359 = vcmp.ge.f32.partialorder %v687, 0.0
      %vm1360 = vcmp.ge.f32.partialorder %v688, 0.0
      %vm1361 = vcmp.ge.f32.partialorder %v689, 0.0
      %vm1362 = vcmp.ge.f32.partialorder %v690, 0.0
      %vm1363 = vcmp.ge.f32.partialorder %v691, 0.0
      %v1364 = vsub.f32 0.0, %v1300
      %v1365 = vsub.f32 0.0, %v1301
      %v1366 = vsub.f32 0.0, %v1302
      %v1367 = vsub.f32 0.0, %v1303
      %v1368 = vsub.f32 0.0, %v1304
      %v1369 = vsub.f32 0.0, %v1305
      %v1370 = vsub.f32 0.0, %v1306
      %v1371 = vsub.f32 0.0, %v1307
      %v1372 = vsub.f32 0.0, %v1308
      %v1373 = vsub.f32 0.0, %v1309
      %v1374 = vsub.f32 0.0, %v1310
      %v1375 = vsub.f32 0.0, %v1311
      %v1376 = vsub.f32 0.0, %v1312
      %v1377 = vsub.f32 0.0, %v1313
      %v1378 = vsub.f32 0.0, %v1314
      %v1379 = vsub.f32 0.0, %v1315
      %v1380 = vsub.f32 0.0, %v1316
      %v1381 = vsub.f32 0.0, %v1317
      %v1382 = vsub.f32 0.0, %v1318
      %v1383 = vsub.f32 0.0, %v1319
      %v1384 = vsub.f32 0.0, %v1320
      %v1385 = vsub.f32 0.0, %v1321
      %v1386 = vsub.f32 0.0, %v1322
      %v1387 = vsub.f32 0.0, %v1323
      %v1388 = vsub.f32 0.0, %v1324
      %v1389 = vsub.f32 0.0, %v1325
      %v1390 = vsub.f32 0.0, %v1326
      %v1391 = vsub.f32 0.0, %v1327
      %v1392 = vsub.f32 0.0, %v1328
      %v1393 = vsub.f32 0.0, %v1329
      %v1394 = vsub.f32 0.0, %v1330
      %v1395 = vsub.f32 0.0, %v1331
      %v1396 = vsel %vm1332, %v1300, %v1364
      %v1397 = vsel %vm1333, %v1301, %v1365
      %v1398 = vsel %vm1334, %v1302, %v1366
      %v1399 = vsel %vm1335, %v1303, %v1367
      %v1400 = vsel %vm1336, %v1304, %v1368
      %v1401 = vsel %vm1337, %v1305, %v1369
      %v1402 = vsel %vm1338, %v1306, %v1370
      %v1403 = vsel %vm1339, %v1307, %v1371
      %v1404 = vsel %vm1340, %v1308, %v1372
      %v1405 = vsel %vm1341, %v1309, %v1373
      %v1406 = vsel %vm1342, %v1310, %v1374
      %v1407 = vsel %vm1343, %v1311, %v1375
      %v1408 = vsel %vm1344, %v1312, %v1376
      %v1409 = vsel %vm1345, %v1313, %v1377
      %v1410 = vsel %vm1346, %v1314, %v1378
      %v1411 = vsel %vm1347, %v1315, %v1379
      %v1412 = vsel %vm1348, %v1316, %v1380
      %v1413 = vsel %vm1349, %v1317, %v1381
      %v1414 = vsel %vm1350, %v1318, %v1382
      %v1415 = vsel %vm1351, %v1319, %v1383
      %v1416 = vsel %vm1352, %v1320, %v1384
      %v1417 = vsel %vm1353, %v1321, %v1385
      %v1418 = vsel %vm1354, %v1322, %v1386
      %v1419 = vsel %vm1355, %v1323, %v1387
      %v1420 = vsel %vm1356, %v1324, %v1388
      %v1421 = vsel %vm1357, %v1325, %v1389
      %v1422 = vsel %vm1358, %v1326, %v1390
      %v1423 = vsel %vm1359, %v1327, %v1391
      %v1424 = vsel %vm1360, %v1328, %v1392
      %v1425 = vsel %vm1361, %v1329, %v1393
      %v1426 = vsel %vm1362, %v1330, %v1394
      %v1427 = vsel %vm1363, %v1331, %v1395
      %v1428 = vadd.f32 %v1396, 1.0
      %v1429 = vadd.f32 %v1397, 1.0
      %v1430 = vadd.f32 %v1398, 1.0
      %v1431 = vadd.f32 %v1399, 1.0
      %v1432 = vadd.f32 %v1400, 1.0
      %v1433 = vadd.f32 %v1401, 1.0
      %v1434 = vadd.f32 %v1402, 1.0
      %v1435 = vadd.f32 %v1403, 1.0
      %v1436 = vadd.f32 %v1404, 1.0
      %v1437 = vadd.f32 %v1405, 1.0
      %v1438 = vadd.f32 %v1406, 1.0
      %v1439 = vadd.f32 %v1407, 1.0
      %v1440 = vadd.f32 %v1408, 1.0
      %v1441 = vadd.f32 %v1409, 1.0
      %v1442 = vadd.f32 %v1410, 1.0
      %v1443 = vadd.f32 %v1411, 1.0
      %v1444 = vadd.f32 %v1412, 1.0
      %v1445 = vadd.f32 %v1413, 1.0
      %v1446 = vadd.f32 %v1414, 1.0
      %v1447 = vadd.f32 %v1415, 1.0
      %v1448 = vadd.f32 %v1416, 1.0
      %v1449 = vadd.f32 %v1417, 1.0
      %v1450 = vadd.f32 %v1418, 1.0
      %v1451 = vadd.f32 %v1419, 1.0
      %v1452 = vadd.f32 %v1420, 1.0
      %v1453 = vadd.f32 %v1421, 1.0
      %v1454 = vadd.f32 %v1422, 1.0
      %v1455 = vadd.f32 %v1423, 1.0
      %v1456 = vadd.f32 %v1424, 1.0
      %v1457 = vadd.f32 %v1425, 1.0
      %v1458 = vadd.f32 %v1426, 1.0
      %v1459 = vadd.f32 %v1427, 1.0
      %v1460 = vmul.f32 %v628, %v1428
      %v1461 = vmul.f32 %v629, %v1429
      %v1462 = vmul.f32 %v630, %v1430
      %v1463 = vmul.f32 %v631, %v1431
      %v1464 = vmul.f32 %v632, %v1432
      %v1465 = vmul.f32 %v633, %v1433
      %v1466 = vmul.f32 %v634, %v1434
      %v1467 = vmul.f32 %v635, %v1435
      %v1468 = vmul.f32 %v636, %v1436
      %v1469 = vmul.f32 %v637, %v1437
      %v1470 = vmul.f32 %v638, %v1438
      %v1471 = vmul.f32 %v639, %v1439
      %v1472 = vmul.f32 %v640, %v1440
      %v1473 = vmul.f32 %v641, %v1441
      %v1474 = vmul.f32 %v642, %v1442
      %v1475 = vmul.f32 %v643, %v1443
      %v1476 = vmul.f32 %v644, %v1444
      %v1477 = vmul.f32 %v645, %v1445
      %v1478 = vmul.f32 %v646, %v1446
      %v1479 = vmul.f32 %v647, %v1447
      %v1480 = vmul.f32 %v648, %v1448
      %v1481 = vmul.f32 %v649, %v1449
      %v1482 = vmul.f32 %v650, %v1450
      %v1483 = vmul.f32 %v651, %v1451
      %v1484 = vmul.f32 %v652, %v1452
      %v1485 = vmul.f32 %v653, %v1453
      %v1486 = vmul.f32 %v654, %v1454
      %v1487 = vmul.f32 %v655, %v1455
      %v1488 = vmul.f32 %v656, %v1456
      %v1489 = vmul.f32 %v657, %v1457
      %v1490 = vmul.f32 %v658, %v1458
      %v1491 = vmul.f32 %v659, %v1459
      %v1492 = vpack.c.bf16 %v1461, %v1460
      %v1493 = vpack.c.bf16 %v1463, %v1462
      %v1494 = vpack.c.bf16 %v1465, %v1464
      %v1495 = vpack.c.bf16 %v1467, %v1466
      %v1496 = vpack.c.bf16 %v1469, %v1468
      %v1497 = vpack.c.bf16 %v1471, %v1470
      %v1498 = vpack.c.bf16 %v1473, %v1472
      %v1499 = vpack.c.bf16 %v1475, %v1474
      %v1500 = vpack.c.bf16 %v1477, %v1476
      %v1501 = vpack.c.bf16 %v1479, %v1478
      %v1502 = vpack.c.bf16 %v1481, %v1480
      %v1503 = vpack.c.bf16 %v1483, %v1482
      %v1504 = vpack.c.bf16 %v1485, %v1484
      %v1505 = vpack.c.bf16 %v1487, %v1486
      %v1506 = vpack.c.bf16 %v1489, %v1488
      %v1507 = vpack.c.bf16 %v1491, %v1490
      %v1508 = vld [vmem:[%s437] sm:$0xf]
      %v1509 = vld [vmem:[%s437 + $0x4] sm:$0xf]
      %v1510 = vunpack.c.l.bf16 %v1508
      %v1511 = vunpack.c.l.bf16 %v1509
      %v1512 = vmul.f32 %v1510, %v555
      %v1513 = vmul.f32 %v1511, %v555
      %v1514 = vadd.f32 %v1512, %v594
      %v1515 = vadd.f32 %v1513, %v594
      %v1516 = vmul.f32 %v1514, 0.5
      %v1517 = vmul.f32 %v1515, 0.5
      %v1518 = vmul.f32 %v1514, 0.70710677
      %v1519 = vmul.f32 %v1515, 0.70710677
      %v1520 = vand.u32 2147483647, %v1518
      %v1521 = vand.u32 2147483647, %v1519
      %v1522 = vmul.f32 %v1520, 0.3275911
      %v1523 = vmul.f32 %v1521, 0.3275911
      %v1524 = vadd.f32 %v1522, 1.0
      %v1525 = vadd.f32 %v1523, 1.0
      %v1526 = vrcp.pop %v1524
      %v1527 = vmul.f32 1.0, %v1526
      %v1528 = vrcp.pop %v1525
      %v1529 = vmul.f32 1.0, %v1528
      %v1530 = vmul.f32 %v1527, 1.0614054
      %v1531 = vmul.f32 %v1529, 1.0614054
      %v1532 = vadd.f32 %v1530, -1.4531521
      %v1533 = vadd.f32 %v1531, -1.4531521
      %v1534 = vmul.f32 %v1532, %v1527
      %v1535 = vmul.f32 %v1533, %v1529
      %v1536 = vadd.f32 %v1534, 1.4214138
      %v1537 = vadd.f32 %v1535, 1.4214138
      %v1538 = vmul.f32 %v1536, %v1527
      %v1539 = vmul.f32 %v1537, %v1529
      %v1540 = vadd.f32 %v1538, -0.28449672
      %v1541 = vadd.f32 %v1539, -0.28449672
      %v1542 = vmul.f32 %v1540, %v1527
      %v1543 = vmul.f32 %v1541, %v1529
      %v1544 = vadd.f32 %v1542, 0.2548296
      %v1545 = vadd.f32 %v1543, 0.2548296
      %v1546 = vmul.f32 %v1544, %v1527
      %v1547 = vmul.f32 %v1545, %v1529
      %v1548 = vsub.f32 0.0, %v1520
      %v1549 = vsub.f32 0.0, %v1521
      %v1550 = vmul.f32 %v1548, %v1520
      %v1551 = vmul.f32 %v1549, %v1521
      %v1552 = vmul.f32 %v1550, 1.442695
      %v1553 = vpow.pop %v1552
      %v1554 = vmul.f32 %v1551, 1.442695
      %v1555 = vpow.pop %v1554
      %v1556 = vmul.f32 %v1546, %v1553
      %v1557 = vmul.f32 %v1547, %v1555
      %v1558 = vsub.f32 1.0, %v1556
      %v1559 = vsub.f32 1.0, %v1557
      %vm1560 = vcmp.ge.f32.partialorder %v1518, 0.0
      %vm1561 = vcmp.ge.f32.partialorder %v1519, 0.0
      %v1562 = vsub.f32 0.0, %v1558
      %v1563 = vsub.f32 0.0, %v1559
      %v1564 = vsel %vm1560, %v1558, %v1562
      %v1565 = vsel %vm1561, %v1559, %v1563
      %v1566 = vadd.f32 %v1564, 1.0
      %v1567 = vadd.f32 %v1565, 1.0
      %v1568 = vmul.f32 %v1516, %v1566
      %v1569 = vmul.f32 %v1517, %v1567
      %p1570 = scmp.gt.s32.totalorder %s25, 0
      %s1571 = scalar_select %p1570, 1, 0
      %s1572 = scvt.s32.f32 %s1571
      %v1573 = vstv %s1572
      %v1574 = vmul.f32 %v1568, %v1573
      %v1575 = vmul.f32 %v1569, %v1573
      %v1576 = vpack.c.bf16 %v1575, %v1574
      %v1577 = vld [vmem:[%s465] sm:$0xf]
      %v1578 = vld [vmem:[%s465 + $0x4] sm:$0xf]
      %v1579 = vunpack.c.l.bf16 %v1577
      %v1580 = vunpack.c.l.bf16 %v1578
      %v1581 = vmul.f32 %v1579, %v555
      %v1582 = vmul.f32 %v1580, %v555
      %v1583 = vadd.f32 %v1581, %v594
      %v1584 = vadd.f32 %v1582, %v594
      %v1585 = vmul.f32 %v1583, 0.5
      %v1586 = vmul.f32 %v1584, 0.5
      %v1587 = vmul.f32 %v1583, 0.70710677
      %v1588 = vmul.f32 %v1584, 0.70710677
      %v1589 = vand.u32 2147483647, %v1587
      %v1590 = vand.u32 2147483647, %v1588
      %v1591 = vmul.f32 %v1589, 0.3275911
      %v1592 = vmul.f32 %v1590, 0.3275911
      %v1593 = vadd.f32 %v1591, 1.0
      %v1594 = vadd.f32 %v1592, 1.0
      %v1595 = vrcp.pop %v1593
      %v1596 = vmul.f32 1.0, %v1595
      %v1597 = vrcp.pop %v1594
      %v1598 = vmul.f32 1.0, %v1597
      %v1599 = vmul.f32 %v1596, 1.0614054
      %v1600 = vmul.f32 %v1598, 1.0614054
      %v1601 = vadd.f32 %v1599, -1.4531521
      %v1602 = vadd.f32 %v1600, -1.4531521
      %v1603 = vmul.f32 %v1601, %v1596
      %v1604 = vmul.f32 %v1602, %v1598
      %v1605 = vadd.f32 %v1603, 1.4214138
      %v1606 = vadd.f32 %v1604, 1.4214138
      %v1607 = vmul.f32 %v1605, %v1596
      %v1608 = vmul.f32 %v1606, %v1598
      %v1609 = vadd.f32 %v1607, -0.28449672
      %v1610 = vadd.f32 %v1608, -0.28449672
      %v1611 = vmul.f32 %v1609, %v1596
      %v1612 = vmul.f32 %v1610, %v1598
      %v1613 = vadd.f32 %v1611, 0.2548296
      %v1614 = vadd.f32 %v1612, 0.2548296
      %v1615 = vmul.f32 %v1613, %v1596
      %v1616 = vmul.f32 %v1614, %v1598
      %v1617 = vsub.f32 0.0, %v1589
      %v1618 = vsub.f32 0.0, %v1590
      %v1619 = vmul.f32 %v1617, %v1589
      %v1620 = vmul.f32 %v1618, %v1590
      %v1621 = vmul.f32 %v1619, 1.442695
      %v1622 = vpow.pop %v1621
      %v1623 = vmul.f32 %v1620, 1.442695
      %v1624 = vpow.pop %v1623
      %v1625 = vmul.f32 %v1615, %v1622
      %v1626 = vmul.f32 %v1616, %v1624
      %v1627 = vsub.f32 1.0, %v1625
      %v1628 = vsub.f32 1.0, %v1626
      %vm1629 = vcmp.ge.f32.partialorder %v1587, 0.0
      %vm1630 = vcmp.ge.f32.partialorder %v1588, 0.0
      %v1631 = vsub.f32 0.0, %v1627
      %v1632 = vsub.f32 0.0, %v1628
      %v1633 = vsel %vm1629, %v1627, %v1631
      %v1634 = vsel %vm1630, %v1628, %v1632
      %v1635 = vadd.f32 %v1633, 1.0
      %v1636 = vadd.f32 %v1634, 1.0
      %v1637 = vmul.f32 %v1585, %v1635
      %v1638 = vmul.f32 %v1586, %v1636
      %s1639 = sadd.s32 %s25, 1
      %p1640 = scmp.lt.s32.totalorder %s1639, 1
      %s1641 = scalar_select %p1640, 1, 0
      %s1642 = scvt.s32.f32 %s1641
      %v1643 = vstv %s1642
      %v1644 = vmul.f32 %v1637, %v1643
      %v1645 = vmul.f32 %v1638, %v1643
      %v1646 = vpack.c.bf16 %v1645, %v1644
      %v1648 = vshrl.u32 %v1576, 16
      %v1650 = vrot.slane %v1648, 7
      %v1651 = vshll.u32 %v1576, 16
      %v1653 = vor.u32 %v1650, %v1651
      %v1655 = vshrl.u32 %v1492, 16
      %v1657 = vrot.slane %v1655, 7
      %v1658 = vshll.u32 %v1492, 16
      %v1660 = vor.u32 %v1657, %v1658
      %v1662 = vshrl.u32 %v1493, 16
      %v1664 = vrot.slane %v1662, 7
      %v1665 = vshll.u32 %v1493, 16
      %v1667 = vor.u32 %v1664, %v1665
      %v1669 = vshrl.u32 %v1494, 16
      %v1671 = vrot.slane %v1669, 7
      %v1672 = vshll.u32 %v1494, 16
      %v1674 = vor.u32 %v1671, %v1672
      %v1676 = vshrl.u32 %v1495, 16
      %v1678 = vrot.slane %v1676, 7
      %v1679 = vshll.u32 %v1495, 16
      %v1681 = vor.u32 %v1678, %v1679
      %v1683 = vshrl.u32 %v1496, 16
      %v1685 = vrot.slane %v1683, 7
      %v1686 = vshll.u32 %v1496, 16
      %v1688 = vor.u32 %v1685, %v1686
      %v1690 = vshrl.u32 %v1497, 16
      %v1692 = vrot.slane %v1690, 7
      %v1693 = vshll.u32 %v1497, 16
      %v1695 = vor.u32 %v1692, %v1693
      %v1697 = vshrl.u32 %v1498, 16
      %v1699 = vrot.slane %v1697, 7
      %v1700 = vshll.u32 %v1498, 16
      %v1702 = vor.u32 %v1699, %v1700
      %v1704 = vshrl.u32 %v1499, 16
      %v1706 = vrot.slane %v1704, 7
      %v1707 = vshll.u32 %v1499, 16
      %v1709 = vor.u32 %v1706, %v1707
      %v1711 = vshrl.u32 %v1500, 16
      %v1713 = vrot.slane %v1711, 7
      %v1714 = vshll.u32 %v1500, 16
      %v1716 = vor.u32 %v1713, %v1714
      %v1718 = vshrl.u32 %v1501, 16
      %v1720 = vrot.slane %v1718, 7
      %v1721 = vshll.u32 %v1501, 16
      %v1723 = vor.u32 %v1720, %v1721
      %v1725 = vshrl.u32 %v1502, 16
      %v1727 = vrot.slane %v1725, 7
      %v1728 = vshll.u32 %v1502, 16
      %v1730 = vor.u32 %v1727, %v1728
      %v1732 = vshrl.u32 %v1503, 16
      %v1734 = vrot.slane %v1732, 7
      %v1735 = vshll.u32 %v1503, 16
      %v1737 = vor.u32 %v1734, %v1735
      %v1739 = vshrl.u32 %v1504, 16
      %v1741 = vrot.slane %v1739, 7
      %v1742 = vshll.u32 %v1504, 16
      %v1744 = vor.u32 %v1741, %v1742
      %v1746 = vshrl.u32 %v1505, 16
      %v1748 = vrot.slane %v1746, 7
      %v1749 = vshll.u32 %v1505, 16
      %v1751 = vor.u32 %v1748, %v1749
      %v1753 = vshrl.u32 %v1506, 16
      %v1755 = vrot.slane %v1753, 7
      %v1756 = vshll.u32 %v1506, 16
      %v1758 = vor.u32 %v1755, %v1756
      %v1760 = vshrl.u32 %v1507, 16
      %v1762 = vrot.slane %v1760, 7
      %v1763 = vshll.u32 %v1507, 16
      %v1765 = vor.u32 %v1762, %v1763
      %v1767 = vshrl.u32 %v1646, 16
      %v1769 = vrot.slane %v1767, 7
      %v1770 = vshll.u32 %v1646, 16
      %v1772 = vor.u32 %v1769, %v1770
      %vm1809 = vcmask 1040384
      %vm1810 = vsmask.f32 256
      %vm1811 = vmand %vm1809, %vm1810
      %v1812 = vsel %vm1811, 0, %v1653
      %v1813 = vsel %vm1811, 0, %v1660
      %v1814 = vsel %vm1811, 0, %v1667
      %v1815 = vsel %vm1811, 0, %v1674
      %v1816 = vsel %vm1811, 0, %v1681
      %v1817 = vsel %vm1811, 0, %v1688
      %v1818 = vsel %vm1811, 0, %v1695
      %v1819 = vsel %vm1811, 0, %v1702
      %v1820 = vsel %vm1811, 0, %v1709
      %v1821 = vsel %vm1811, 0, %v1716
      %v1822 = vsel %vm1811, 0, %v1723
      %v1823 = vsel %vm1811, 0, %v1730
      %v1824 = vsel %vm1811, 0, %v1737
      %v1825 = vsel %vm1811, 0, %v1744
      %v1826 = vsel %vm1811, 0, %v1751
      %v1827 = vsel %vm1811, 0, %v1758
      %v1828 = vsel %vm1811, 0, %v1765
      %v1829 = vsel %vm1811, 0, %v1772
      %v1830 = vsel %vm1811, %v1650, 0
      %v1831 = vsel %vm1811, %v1657, 0
      %v1832 = vsel %vm1811, %v1664, 0
      %v1833 = vsel %vm1811, %v1671, 0
      %v1834 = vsel %vm1811, %v1678, 0
      %v1835 = vsel %vm1811, %v1685, 0
      %v1836 = vsel %vm1811, %v1692, 0
      %v1837 = vsel %vm1811, %v1699, 0
      %v1838 = vsel %vm1811, %v1706, 0
      %v1839 = vsel %vm1811, %v1713, 0
      %v1840 = vsel %vm1811, %v1720, 0
      %v1841 = vsel %vm1811, %v1727, 0
      %v1842 = vsel %vm1811, %v1734, 0
      %v1843 = vsel %vm1811, %v1741, 0
      %v1844 = vsel %vm1811, %v1748, 0
      %v1845 = vsel %vm1811, %v1755, 0
      %v1846 = vsel %vm1811, %v1762, 0
      %v1847 = vsel %vm1811, %v1769, 0
      %vm1848 = vsmask.f32 7424
      %v1850 = vshrl.u32 %v1812, 16
      %v1852 = vshll.u32 %v1812, 16
      %v1854 = vrot.slane %v1852, 1
      %v1855 = vor.u32 %v1850, %v1854
      %v1857 = vshll.u32 %v1830, 16
      %v1859 = vrot.slane %v1857, 1
      %v1860 = vsel %vm1848, %v1855, %v1859
      %v1862 = vshrl.u32 %v1813, 16
      %v1864 = vshll.u32 %v1813, 16
      %v1866 = vrot.slane %v1864, 1
      %v1867 = vor.u32 %v1862, %v1866
      %v1869 = vshll.u32 %v1831, 16
      %v1871 = vrot.slane %v1869, 1
      %v1872 = vsel %vm1848, %v1867, %v1871
      %v1874 = vshrl.u32 %v1814, 16
      %v1876 = vshll.u32 %v1814, 16
      %v1878 = vrot.slane %v1876, 1
      %v1879 = vor.u32 %v1874, %v1878
      %v1881 = vshll.u32 %v1832, 16
      %v1883 = vrot.slane %v1881, 1
      %v1884 = vsel %vm1848, %v1879, %v1883
      %v1886 = vshrl.u32 %v1815, 16
      %v1888 = vshll.u32 %v1815, 16
      %v1890 = vrot.slane %v1888, 1
      %v1891 = vor.u32 %v1886, %v1890
      %v1893 = vshll.u32 %v1833, 16
      %v1895 = vrot.slane %v1893, 1
      %v1896 = vsel %vm1848, %v1891, %v1895
      %v1898 = vshrl.u32 %v1816, 16
      %v1900 = vshll.u32 %v1816, 16
      %v1902 = vrot.slane %v1900, 1
      %v1903 = vor.u32 %v1898, %v1902
      %v1905 = vshll.u32 %v1834, 16
      %v1907 = vrot.slane %v1905, 1
      %v1908 = vsel %vm1848, %v1903, %v1907
      %v1910 = vshrl.u32 %v1817, 16
      %v1912 = vshll.u32 %v1817, 16
      %v1914 = vrot.slane %v1912, 1
      %v1915 = vor.u32 %v1910, %v1914
      %v1917 = vshll.u32 %v1835, 16
      %v1919 = vrot.slane %v1917, 1
      %v1920 = vsel %vm1848, %v1915, %v1919
      %v1922 = vshrl.u32 %v1818, 16
      %v1924 = vshll.u32 %v1818, 16
      %v1926 = vrot.slane %v1924, 1
      %v1927 = vor.u32 %v1922, %v1926
      %v1929 = vshll.u32 %v1836, 16
      %v1931 = vrot.slane %v1929, 1
      %v1932 = vsel %vm1848, %v1927, %v1931
      %v1934 = vshrl.u32 %v1819, 16
      %v1936 = vshll.u32 %v1819, 16
      %v1938 = vrot.slane %v1936, 1
      %v1939 = vor.u32 %v1934, %v1938
      %v1941 = vshll.u32 %v1837, 16
      %v1943 = vrot.slane %v1941, 1
      %v1944 = vsel %vm1848, %v1939, %v1943
      %v1946 = vshrl.u32 %v1820, 16
      %v1948 = vshll.u32 %v1820, 16
      %v1950 = vrot.slane %v1948, 1
      %v1951 = vor.u32 %v1946, %v1950
      %v1953 = vshll.u32 %v1838, 16
      %v1955 = vrot.slane %v1953, 1
      %v1956 = vsel %vm1848, %v1951, %v1955
      %v1958 = vshrl.u32 %v1821, 16
      %v1960 = vshll.u32 %v1821, 16
      %v1962 = vrot.slane %v1960, 1
      %v1963 = vor.u32 %v1958, %v1962
      %v1965 = vshll.u32 %v1839, 16
      %v1967 = vrot.slane %v1965, 1
      %v1968 = vsel %vm1848, %v1963, %v1967
      %v1970 = vshrl.u32 %v1822, 16
      %v1972 = vshll.u32 %v1822, 16
      %v1974 = vrot.slane %v1972, 1
      %v1975 = vor.u32 %v1970, %v1974
      %v1977 = vshll.u32 %v1840, 16
      %v1979 = vrot.slane %v1977, 1
      %v1980 = vsel %vm1848, %v1975, %v1979
      %v1982 = vshrl.u32 %v1823, 16
      %v1984 = vshll.u32 %v1823, 16
      %v1986 = vrot.slane %v1984, 1
      %v1987 = vor.u32 %v1982, %v1986
      %v1989 = vshll.u32 %v1841, 16
      %v1991 = vrot.slane %v1989, 1
      %v1992 = vsel %vm1848, %v1987, %v1991
      %v1994 = vshrl.u32 %v1824, 16
      %v1996 = vshll.u32 %v1824, 16
      %v1998 = vrot.slane %v1996, 1
      %v1999 = vor.u32 %v1994, %v1998
      %v2001 = vshll.u32 %v1842, 16
      %v2003 = vrot.slane %v2001, 1
      %v2004 = vsel %vm1848, %v1999, %v2003
      %v2006 = vshrl.u32 %v1825, 16
      %v2008 = vshll.u32 %v1825, 16
      %v2010 = vrot.slane %v2008, 1
      %v2011 = vor.u32 %v2006, %v2010
      %v2013 = vshll.u32 %v1843, 16
      %v2015 = vrot.slane %v2013, 1
      %v2016 = vsel %vm1848, %v2011, %v2015
      %v2018 = vshrl.u32 %v1826, 16
      %v2020 = vshll.u32 %v1826, 16
      %v2022 = vrot.slane %v2020, 1
      %v2023 = vor.u32 %v2018, %v2022
      %v2025 = vshll.u32 %v1844, 16
      %v2027 = vrot.slane %v2025, 1
      %v2028 = vsel %vm1848, %v2023, %v2027
      %v2030 = vshrl.u32 %v1827, 16
      %v2032 = vshll.u32 %v1827, 16
      %v2034 = vrot.slane %v2032, 1
      %v2035 = vor.u32 %v2030, %v2034
      %v2037 = vshll.u32 %v1845, 16
      %v2039 = vrot.slane %v2037, 1
      %v2040 = vsel %vm1848, %v2035, %v2039
      %vm2089 = vcmask 1046528
      %v2090 = vrot.slane %v1812, 1
      %v2091 = vrot.slane %v1830, 1
      %v2092 = vsel %vm2089, %v2090, %v2091
      %v2093 = vrot.slane %v1813, 1
      %v2094 = vrot.slane %v1831, 1
      %v2095 = vsel %vm2089, %v2093, %v2094
      %v2096 = vrot.slane %v1814, 1
      %v2097 = vrot.slane %v1832, 1
      %v2098 = vsel %vm2089, %v2096, %v2097
      %v2099 = vrot.slane %v1815, 1
      %v2100 = vrot.slane %v1833, 1
      %v2101 = vsel %vm2089, %v2099, %v2100
      %v2102 = vrot.slane %v1816, 1
      %v2103 = vrot.slane %v1834, 1
      %v2104 = vsel %vm2089, %v2102, %v2103
      %v2105 = vrot.slane %v1817, 1
      %v2106 = vrot.slane %v1835, 1
      %v2107 = vsel %vm2089, %v2105, %v2106
      %v2108 = vrot.slane %v1818, 1
      %v2109 = vrot.slane %v1836, 1
      %v2110 = vsel %vm2089, %v2108, %v2109
      %v2111 = vrot.slane %v1819, 1
      %v2112 = vrot.slane %v1837, 1
      %v2113 = vsel %vm2089, %v2111, %v2112
      %v2114 = vrot.slane %v1820, 1
      %v2115 = vrot.slane %v1838, 1
      %v2116 = vsel %vm2089, %v2114, %v2115
      %v2117 = vrot.slane %v1821, 1
      %v2118 = vrot.slane %v1839, 1
      %v2119 = vsel %vm2089, %v2117, %v2118
      %v2120 = vrot.slane %v1822, 1
      %v2121 = vrot.slane %v1840, 1
      %v2122 = vsel %vm2089, %v2120, %v2121
      %v2123 = vrot.slane %v1823, 1
      %v2124 = vrot.slane %v1841, 1
      %v2125 = vsel %vm2089, %v2123, %v2124
      %v2126 = vrot.slane %v1824, 1
      %v2127 = vrot.slane %v1842, 1
      %v2128 = vsel %vm2089, %v2126, %v2127
      %v2129 = vrot.slane %v1825, 1
      %v2130 = vrot.slane %v1843, 1
      %v2131 = vsel %vm2089, %v2129, %v2130
      %v2132 = vrot.slane %v1826, 1
      %v2133 = vrot.slane %v1844, 1
      %v2134 = vsel %vm2089, %v2132, %v2133
      %v2135 = vrot.slane %v1827, 1
      %v2136 = vrot.slane %v1845, 1
      %v2137 = vsel %vm2089, %v2135, %v2136
      %v2155 = vshrl.u32 %v1828, 16
      %v2157 = vshll.u32 %v1828, 16
      %v2159 = vrot.slane %v2157, 1
      %v2160 = vor.u32 %v2155, %v2159
      %v2162 = vshll.u32 %v1846, 16
      %v2164 = vrot.slane %v2162, 1
      %v2165 = vsel %vm1848, %v2160, %v2164
      %v2169 = vrot.slane %v1828, 1
      %v2170 = vrot.slane %v1846, 1
      %v2171 = vsel %vm2089, %v2169, %v2170
      %v2174 = vshrl.u32 %v1829, 16
      %v2176 = vshll.u32 %v1829, 16
      %v2178 = vrot.slane %v2176, 1
      %v2179 = vor.u32 %v2174, %v2178
      %v2181 = vshll.u32 %v1847, 16
      %v2183 = vrot.slane %v2181, 1
      %v2184 = vsel %vm1848, %v2179, %v2183
      %v2188 = vrot.slane %v1829, 1
      %v2189 = vrot.slane %v1847, 1
      %v2190 = vsel %vm2089, %v2188, %v2189
      %v2192 = vld [vmem:[%s3] sm:$0xf]
      %v2193 = vld [vmem:[%s3 + $0x4] sm:$0xf]
      %v2194 = vld [vmem:[%s3 + $0x8] sm:$0xf]
      %v2195 = vld [vmem:[%s3 + $0xc] sm:$0xf]
      %v2196 = vld [vmem:[%s3 + $0x10] sm:$0xf]
      %v2197 = vld [vmem:[%s3 + $0x14] sm:$0xf]
      %v2198 = vld [vmem:[%s3 + $0x18] sm:$0xf]
      %v2199 = vld [vmem:[%s3 + $0x1c] sm:$0xf]
      %v2200 = vld [vmem:[%s3 + $0x20] sm:$0xf]
      %v2201 = vld [vmem:[%s3 + $0x24] sm:$0xf]
      %v2202 = vld [vmem:[%s3 + $0x28] sm:$0xf]
      %v2203 = vld [vmem:[%s3 + $0x2c] sm:$0xf]
      %v2204 = vld [vmem:[%s3 + $0x30] sm:$0xf]
      %v2205 = vld [vmem:[%s3 + $0x34] sm:$0xf]
      %v2206 = vld [vmem:[%s3 + $0x38] sm:$0xf]
      %v2207 = vld [vmem:[%s3 + $0x3c] sm:$0xf]
      %v2208 = vld [vmem:[%s3 + $0x40] sm:$0xf]
      %v2209 = vld [vmem:[%s3 + $0x44] sm:$0xf]
      %v2210 = vld [vmem:[%s3 + $0x48] sm:$0xf]
      %v2211 = vld [vmem:[%s3 + $0x4c] sm:$0xf]
      %v2212 = vld [vmem:[%s3 + $0x50] sm:$0xf]
      %v2213 = vld [vmem:[%s3 + $0x54] sm:$0xf]
      %v2214 = vld [vmem:[%s3 + $0x58] sm:$0xf]
      %v2215 = vld [vmem:[%s3 + $0x5c] sm:$0xf]
      %v2216 = vld [vmem:[%s3 + $0x60] sm:$0xf]
      %v2217 = vld [vmem:[%s3 + $0x64] sm:$0xf]
      %v2218 = vld [vmem:[%s3 + $0x68] sm:$0xf]
      %v2219 = vld [vmem:[%s3 + $0x6c] sm:$0xf]
      %v2220 = vld [vmem:[%s3 + $0x70] sm:$0xf]
      %v2221 = vld [vmem:[%s3 + $0x74] sm:$0xf]
      %v2222 = vld [vmem:[%s3 + $0x78] sm:$0xf]
      %v2223 = vld [vmem:[%s3 + $0x7c] sm:$0xf]
      %v2224 = vld [vmem:[%s3 + $0x80] sm:$0xf]
      %v2225 = vld [vmem:[%s3 + $0x84] sm:$0xf]
      %v2226 = vld [vmem:[%s3 + $0x88] sm:$0xf]
      %v2227 = vld [vmem:[%s3 + $0x8c] sm:$0xf]
      %v2228 = vld [vmem:[%s3 + $0x90] sm:$0xf]
      %v2229 = vld [vmem:[%s3 + $0x94] sm:$0xf]
      %v2230 = vld [vmem:[%s3 + $0x98] sm:$0xf]
      %v2231 = vld [vmem:[%s3 + $0x9c] sm:$0xf]
      %v2232 = vld [vmem:[%s3 + $0xa0] sm:$0xf]
      %v2233 = vld [vmem:[%s3 + $0xa4] sm:$0xf]
      %v2234 = vld [vmem:[%s3 + $0xa8] sm:$0xf]
      %v2235 = vld [vmem:[%s3 + $0xac] sm:$0xf]
      %v2236 = vld [vmem:[%s3 + $0xb0] sm:$0xf]
      %v2237 = vld [vmem:[%s3 + $0xb4] sm:$0xf]
      %v2238 = vld [vmem:[%s3 + $0xb8] sm:$0xf]
      %v2239 = vld [vmem:[%s3 + $0xbc] sm:$0xf]
      %v2240 = vld [vmem:[%s3 + $0xc0] sm:$0xf]
      %v2241 = vld [vmem:[%s3 + $0xc4] sm:$0xf]
      %v2242 = vld [vmem:[%s3 + $0xc8] sm:$0xf]
      %v2243 = vld [vmem:[%s3 + $0xcc] sm:$0xf]
      %v2244 = vld [vmem:[%s3 + $0xd0] sm:$0xf]
      %v2245 = vld [vmem:[%s3 + $0xd4] sm:$0xf]
      %v2246 = vld [vmem:[%s3 + $0xd8] sm:$0xf]
      %v2247 = vld [vmem:[%s3 + $0xdc] sm:$0xf]
      %v2248 = vld [vmem:[%s3 + $0xe0] sm:$0xf]
      %v2249 = vld [vmem:[%s3 + $0xe4] sm:$0xf]
      %v2250 = vld [vmem:[%s3 + $0xe8] sm:$0xf]
      %v2251 = vld [vmem:[%s3 + $0xec] sm:$0xf]
      %v2252 = vld [vmem:[%s3 + $0xf0] sm:$0xf]
      %v2253 = vld [vmem:[%s3 + $0xf4] sm:$0xf]
      %v2254 = vld [vmem:[%s3 + $0xf8] sm:$0xf]
      %v2255 = vld [vmem:[%s3 + $0xfc] sm:$0xf]
      %v2256 = vld [vmem:[%s3 + $0x100] sm:$0xf]
      %v2257 = vld [vmem:[%s3 + $0x104] sm:$0xf]
      %v2258 = vld [vmem:[%s3 + $0x108] sm:$0xf]
      %v2259 = vld [vmem:[%s3 + $0x10c] sm:$0xf]
      %v2260 = vld [vmem:[%s3 + $0x110] sm:$0xf]
      %v2261 = vld [vmem:[%s3 + $0x114] sm:$0xf]
      %v2262 = vld [vmem:[%s3 + $0x118] sm:$0xf]
      %v2263 = vld [vmem:[%s3 + $0x11c] sm:$0xf]
      %v2264 = vld [vmem:[%s3 + $0x120] sm:$0xf]
      %v2265 = vld [vmem:[%s3 + $0x124] sm:$0xf]
      %v2266 = vld [vmem:[%s3 + $0x128] sm:$0xf]
      %v2267 = vld [vmem:[%s3 + $0x12c] sm:$0xf]
      %v2268 = vld [vmem:[%s3 + $0x130] sm:$0xf]
      %v2269 = vld [vmem:[%s3 + $0x134] sm:$0xf]
      %v2270 = vld [vmem:[%s3 + $0x138] sm:$0xf]
      %v2271 = vld [vmem:[%s3 + $0x13c] sm:$0xf]
      %v2272 = vld [vmem:[%s3 + $0x140] sm:$0xf]
      %v2273 = vld [vmem:[%s3 + $0x144] sm:$0xf]
      %v2274 = vld [vmem:[%s3 + $0x148] sm:$0xf]
      %v2275 = vld [vmem:[%s3 + $0x14c] sm:$0xf]
      %v2276 = vld [vmem:[%s3 + $0x150] sm:$0xf]
      %v2277 = vld [vmem:[%s3 + $0x154] sm:$0xf]
      %v2278 = vld [vmem:[%s3 + $0x158] sm:$0xf]
      %v2279 = vld [vmem:[%s3 + $0x15c] sm:$0xf]
      %v2280 = vld [vmem:[%s3 + $0x160] sm:$0xf]
      %v2281 = vld [vmem:[%s3 + $0x164] sm:$0xf]
      %v2282 = vld [vmem:[%s3 + $0x168] sm:$0xf]
      %v2283 = vld [vmem:[%s3 + $0x16c] sm:$0xf]
      %v2284 = vld [vmem:[%s3 + $0x170] sm:$0xf]
      %v2285 = vld [vmem:[%s3 + $0x174] sm:$0xf]
      %v2286 = vld [vmem:[%s3 + $0x178] sm:$0xf]
      %v2287 = vld [vmem:[%s3 + $0x17c] sm:$0xf]
      %v2288 = vld [vmem:[%s3 + $0x180] sm:$0xf]
      %v2289 = vld [vmem:[%s3 + $0x184] sm:$0xf]
      %v2290 = vld [vmem:[%s3 + $0x188] sm:$0xf]
      %v2291 = vld [vmem:[%s3 + $0x18c] sm:$0xf]
      %v2292 = vld [vmem:[%s3 + $0x190] sm:$0xf]
      %v2293 = vld [vmem:[%s3 + $0x194] sm:$0xf]
      %v2294 = vld [vmem:[%s3 + $0x198] sm:$0xf]
      %v2295 = vld [vmem:[%s3 + $0x19c] sm:$0xf]
      %v2296 = vld [vmem:[%s3 + $0x1a0] sm:$0xf]
      %v2297 = vld [vmem:[%s3 + $0x1a4] sm:$0xf]
      %v2298 = vld [vmem:[%s3 + $0x1a8] sm:$0xf]
      %v2299 = vld [vmem:[%s3 + $0x1ac] sm:$0xf]
      %v2300 = vld [vmem:[%s3 + $0x1b0] sm:$0xf]
      %v2301 = vld [vmem:[%s3 + $0x1b4] sm:$0xf]
      %v2302 = vld [vmem:[%s3 + $0x1b8] sm:$0xf]
      %v2303 = vld [vmem:[%s3 + $0x1bc] sm:$0xf]
      %v2304 = vld [vmem:[%s3 + $0x1c0] sm:$0xf]
      %v2305 = vld [vmem:[%s3 + $0x1c4] sm:$0xf]
      %v2306 = vld [vmem:[%s3 + $0x1c8] sm:$0xf]
      %v2307 = vld [vmem:[%s3 + $0x1cc] sm:$0xf]
      %v2308 = vld [vmem:[%s3 + $0x1d0] sm:$0xf]
      %v2309 = vld [vmem:[%s3 + $0x1d4] sm:$0xf]
      %v2310 = vld [vmem:[%s3 + $0x1d8] sm:$0xf]
      %v2311 = vld [vmem:[%s3 + $0x1dc] sm:$0xf]
      %v2312 = vld [vmem:[%s3 + $0x1e0] sm:$0xf]
      %v2313 = vld [vmem:[%s3 + $0x1e4] sm:$0xf]
      %v2314 = vld [vmem:[%s3 + $0x1e8] sm:$0xf]
      %v2315 = vld [vmem:[%s3 + $0x1ec] sm:$0xf]
      %v2316 = vld [vmem:[%s3 + $0x1f0] sm:$0xf]
      %v2317 = vld [vmem:[%s3 + $0x1f4] sm:$0xf]
      %v2318 = vld [vmem:[%s3 + $0x1f8] sm:$0xf]
      %v2319 = vld [vmem:[%s3 + $0x1fc] sm:$0xf]
      %v2320 = vld [vmem:[%s3 + $0x200] sm:$0xf]
      %v2321 = vld [vmem:[%s3 + $0x204] sm:$0xf]
      %v2322 = vld [vmem:[%s3 + $0x208] sm:$0xf]
      %v2323 = vld [vmem:[%s3 + $0x20c] sm:$0xf]
      %v2324 = vld [vmem:[%s3 + $0x210] sm:$0xf]
      %v2325 = vld [vmem:[%s3 + $0x214] sm:$0xf]
      %v2326 = vld [vmem:[%s3 + $0x218] sm:$0xf]
      %v2327 = vld [vmem:[%s3 + $0x21c] sm:$0xf]
      %v2328 = vld [vmem:[%s3 + $0x220] sm:$0xf]
      %v2329 = vld [vmem:[%s3 + $0x224] sm:$0xf]
      %v2330 = vld [vmem:[%s3 + $0x228] sm:$0xf]
      %v2331 = vld [vmem:[%s3 + $0x22c] sm:$0xf]
      %v2332 = vld [vmem:[%s3 + $0x230] sm:$0xf]
      %v2333 = vld [vmem:[%s3 + $0x234] sm:$0xf]
      %v2334 = vld [vmem:[%s3 + $0x238] sm:$0xf]
      %v2335 = vld [vmem:[%s3 + $0x23c] sm:$0xf]
      %v2336 = vld [vmem:[%s4] sm:$0x1]
      %v2338 = vlaneseq
      %v2339 = vshrl.u32 %v2338, 7
      %v2340 = vsub.s32 0, %v2339
      %v2341 = vrot.slane %v2336, %v2340
      %v2487 = vunpack.c.l.b16 %v2192
      %v2488 = vunpack.c.l.b16 %v2193
      %v2489 = vunpack.c.l.b16 %v2194
      %v2490 = vunpack.c.l.b16 %v2195
      %v2491 = vunpack.c.l.b16 %v2196
      %v2492 = vunpack.c.l.b16 %v2197
      %v2493 = vunpack.c.l.b16 %v2198
      %v2494 = vunpack.c.l.b16 %v2199
      %v2495 = vunpack.c.l.b16 %v2200
      %v2496 = vunpack.c.l.b16 %v2201
      %v2497 = vunpack.c.l.b16 %v2202
      %v2498 = vunpack.c.l.b16 %v2203
      %v2499 = vunpack.c.l.b16 %v2204
      %v2500 = vunpack.c.l.b16 %v2205
      %v2501 = vunpack.c.l.b16 %v2206
      %v2502 = vunpack.c.l.b16 %v2207
      %v2503 = vunpack.c.l.b16 %v2208
      %v2504 = vunpack.c.l.b16 %v2209
      %v2505 = vunpack.c.l.b16 %v2210
      %v2506 = vunpack.c.l.b16 %v2211
      %v2507 = vunpack.c.l.b16 %v2212
      %v2508 = vunpack.c.l.b16 %v2213
      %v2509 = vunpack.c.l.b16 %v2214
      %v2510 = vunpack.c.l.b16 %v2215
      %v2511 = vunpack.c.l.b16 %v2216
      %v2512 = vunpack.c.l.b16 %v2217
      %v2513 = vunpack.c.l.b16 %v2218
      %v2514 = vunpack.c.l.b16 %v2219
      %v2515 = vunpack.c.l.b16 %v2220
      %v2516 = vunpack.c.l.b16 %v2221
      %v2517 = vunpack.c.l.b16 %v2222
      %v2518 = vunpack.c.l.b16 %v2223
      %v2519 = vunpack.c.l.b16 %v2224
      %v2520 = vunpack.c.l.b16 %v2225
      %v2521 = vunpack.c.l.b16 %v2226
      %v2522 = vunpack.c.l.b16 %v2227
      %v2523 = vunpack.c.l.b16 %v2228
      %v2524 = vunpack.c.l.b16 %v2229
      %v2525 = vunpack.c.l.b16 %v2230
      %v2526 = vunpack.c.l.b16 %v2231
      %v2527 = vunpack.c.l.b16 %v2232
      %v2528 = vunpack.c.l.b16 %v2233
      %v2529 = vunpack.c.l.b16 %v2234
      %v2530 = vunpack.c.l.b16 %v2235
      %v2531 = vunpack.c.l.b16 %v2236
      %v2532 = vunpack.c.l.b16 %v2237
      %v2533 = vunpack.c.l.b16 %v2238
      %v2534 = vunpack.c.l.b16 %v2239
      %v2535 = vunpack.c.l.b16 %v2240
      %v2536 = vunpack.c.l.b16 %v2241
      %v2537 = vunpack.c.l.b16 %v2242
      %v2538 = vunpack.c.l.b16 %v2243
      %v2539 = vunpack.c.l.b16 %v2244
      %v2540 = vunpack.c.l.b16 %v2245
      %v2541 = vunpack.c.l.b16 %v2246
      %v2542 = vunpack.c.l.b16 %v2247
      %v2543 = vunpack.c.l.b16 %v2248
      %v2544 = vunpack.c.l.b16 %v2249
      %v2545 = vunpack.c.l.b16 %v2250
      %v2546 = vunpack.c.l.b16 %v2251
      %v2547 = vunpack.c.l.b16 %v2252
      %v2548 = vunpack.c.l.b16 %v2253
      %v2549 = vunpack.c.l.b16 %v2254
      %v2550 = vunpack.c.l.b16 %v2255
      %v2551 = vunpack.c.l.b16 %v2256
      %v2552 = vunpack.c.l.b16 %v2257
      %v2553 = vunpack.c.l.b16 %v2258
      %v2554 = vunpack.c.l.b16 %v2259
      %v2555 = vunpack.c.l.b16 %v2260
      %v2556 = vunpack.c.l.b16 %v2261
      %v2557 = vunpack.c.l.b16 %v2262
      %v2558 = vunpack.c.l.b16 %v2263
      %v2559 = vunpack.c.l.b16 %v2264
      %v2560 = vunpack.c.l.b16 %v2265
      %v2561 = vunpack.c.l.b16 %v2266
      %v2562 = vunpack.c.l.b16 %v2267
      %v2563 = vunpack.c.l.b16 %v2268
      %v2564 = vunpack.c.l.b16 %v2269
      %v2565 = vunpack.c.l.b16 %v2270
      %v2566 = vunpack.c.l.b16 %v2271
      %v2567 = vunpack.c.l.b16 %v2272
      %v2568 = vunpack.c.l.b16 %v2273
      %v2569 = vunpack.c.l.b16 %v2274
      %v2570 = vunpack.c.l.b16 %v2275
      %v2571 = vunpack.c.l.b16 %v2276
      %v2572 = vunpack.c.l.b16 %v2277
      %v2573 = vunpack.c.l.b16 %v2278
      %v2574 = vunpack.c.l.b16 %v2279
      %v2575 = vunpack.c.l.b16 %v2280
      %v2576 = vunpack.c.l.b16 %v2281
      %v2577 = vunpack.c.l.b16 %v2282
      %v2578 = vunpack.c.l.b16 %v2283
      %v2579 = vunpack.c.l.b16 %v2284
      %v2580 = vunpack.c.l.b16 %v2285
      %v2581 = vunpack.c.l.b16 %v2286
      %v2582 = vunpack.c.l.b16 %v2287
      %v2583 = vunpack.c.l.b16 %v2288
      %v2584 = vunpack.c.l.b16 %v2289
      %v2585 = vunpack.c.l.b16 %v2290
      %v2586 = vunpack.c.l.b16 %v2291
      %v2587 = vunpack.c.l.b16 %v2292
      %v2588 = vunpack.c.l.b16 %v2293
      %v2589 = vunpack.c.l.b16 %v2294
      %v2590 = vunpack.c.l.b16 %v2295
      %v2591 = vunpack.c.l.b16 %v2296
      %v2592 = vunpack.c.l.b16 %v2297
      %v2593 = vunpack.c.l.b16 %v2298
      %v2594 = vunpack.c.l.b16 %v2299
      %v2595 = vunpack.c.l.b16 %v2300
      %v2596 = vunpack.c.l.b16 %v2301
      %v2597 = vunpack.c.l.b16 %v2302
      %v2598 = vunpack.c.l.b16 %v2303
      %v2599 = vunpack.c.l.b16 %v2304
      %v2600 = vunpack.c.l.b16 %v2305
      %v2601 = vunpack.c.l.b16 %v2306
      %v2602 = vunpack.c.l.b16 %v2307
      %v2603 = vunpack.c.l.b16 %v2308
      %v2604 = vunpack.c.l.b16 %v2309
      %v2605 = vunpack.c.l.b16 %v2310
      %v2606 = vunpack.c.l.b16 %v2311
      %v2607 = vunpack.c.l.b16 %v2312
      %v2608 = vunpack.c.l.b16 %v2313
      %v2609 = vunpack.c.l.b16 %v2314
      %v2610 = vunpack.c.l.b16 %v2315
      %v2611 = vunpack.c.l.b16 %v2316
      %v2612 = vunpack.c.l.b16 %v2317
      %v2613 = vunpack.c.l.b16 %v2318
      %v2614 = vunpack.c.l.b16 %v2319
      %v2615 = vunpack.c.l.b16 %v2320
      %v2616 = vunpack.c.l.b16 %v2321
      %v2617 = vunpack.c.l.b16 %v2322
      %v2618 = vunpack.c.l.b16 %v2323
      %v2619 = vunpack.c.l.b16 %v2324
      %v2620 = vunpack.c.l.b16 %v2325
      %v2621 = vunpack.c.l.b16 %v2326
      %v2622 = vunpack.c.l.b16 %v2327
      %v2623 = vunpack.c.l.b16 %v2328
      %v2624 = vunpack.c.l.b16 %v2329
      %v2625 = vunpack.c.l.b16 %v2330
      %v2626 = vunpack.c.l.b16 %v2331
      %v2627 = vunpack.c.l.b16 %v2332
      %v2628 = vunpack.c.l.b16 %v2333
      %v2629 = vunpack.c.l.b16 %v2334
      %v2630 = vunpack.c.l.b16 %v2335
      %v2631 = vpack.c.b16 %v2488, %v2487
      %v2632 = vpack.c.b16 %v2490, %v2489
      %v2633 = vpack.c.b16 %v2492, %v2491
      %v2634 = vpack.c.b16 %v2494, %v2493
      %v2635 = vpack.c.b16 %v2496, %v2495
      %v2636 = vpack.c.b16 %v2498, %v2497
      %v2637 = vpack.c.b16 %v2500, %v2499
      %v2638 = vpack.c.b16 %v2502, %v2501
      %v2639 = vpack.c.b16 %v2504, %v2503
      %v2640 = vpack.c.b16 %v2506, %v2505
      %v2641 = vpack.c.b16 %v2508, %v2507
      %v2642 = vpack.c.b16 %v2510, %v2509
      %v2643 = vpack.c.b16 %v2512, %v2511
      %v2644 = vpack.c.b16 %v2514, %v2513
      %v2645 = vpack.c.b16 %v2516, %v2515
      %v2646 = vpack.c.b16 %v2518, %v2517
      %v2647 = vpack.c.b16 %v2520, %v2519
      %v2648 = vpack.c.b16 %v2522, %v2521
      %v2649 = vpack.c.b16 %v2524, %v2523
      %v2650 = vpack.c.b16 %v2526, %v2525
      %v2651 = vpack.c.b16 %v2528, %v2527
      %v2652 = vpack.c.b16 %v2530, %v2529
      %v2653 = vpack.c.b16 %v2532, %v2531
      %v2654 = vpack.c.b16 %v2534, %v2533
      %v2655 = vpack.c.b16 %v2536, %v2535
      %v2656 = vpack.c.b16 %v2538, %v2537
      %v2657 = vpack.c.b16 %v2540, %v2539
      %v2658 = vpack.c.b16 %v2542, %v2541
      %v2659 = vpack.c.b16 %v2544, %v2543
      %v2660 = vpack.c.b16 %v2546, %v2545
      %v2661 = vpack.c.b16 %v2548, %v2547
      %v2662 = vpack.c.b16 %v2550, %v2549
      %v2663 = vpack.c.b16 %v2552, %v2551
      %v2664 = vpack.c.b16 %v2554, %v2553
      %v2665 = vpack.c.b16 %v2556, %v2555
      %v2666 = vpack.c.b16 %v2558, %v2557
      %v2667 = vpack.c.b16 %v2560, %v2559
      %v2668 = vpack.c.b16 %v2562, %v2561
      %v2669 = vpack.c.b16 %v2564, %v2563
      %v2670 = vpack.c.b16 %v2566, %v2565
      %v2671 = vpack.c.b16 %v2568, %v2567
      %v2672 = vpack.c.b16 %v2570, %v2569
      %v2673 = vpack.c.b16 %v2572, %v2571
      %v2674 = vpack.c.b16 %v2574, %v2573
      %v2675 = vpack.c.b16 %v2576, %v2575
      %v2676 = vpack.c.b16 %v2578, %v2577
      %v2677 = vpack.c.b16 %v2580, %v2579
      %v2678 = vpack.c.b16 %v2582, %v2581
      %v2679 = vpack.c.b16 %v2584, %v2583
      %v2680 = vpack.c.b16 %v2586, %v2585
      %v2681 = vpack.c.b16 %v2588, %v2587
      %v2682 = vpack.c.b16 %v2590, %v2589
      %v2683 = vpack.c.b16 %v2592, %v2591
      %v2684 = vpack.c.b16 %v2594, %v2593
      %v2685 = vpack.c.b16 %v2596, %v2595
      %v2686 = vpack.c.b16 %v2598, %v2597
      %v2687 = vpack.c.b16 %v2600, %v2599
      %v2688 = vpack.c.b16 %v2602, %v2601
      %v2689 = vpack.c.b16 %v2604, %v2603
      %v2690 = vpack.c.b16 %v2606, %v2605
      %v2691 = vpack.c.b16 %v2608, %v2607
      %v2692 = vpack.c.b16 %v2610, %v2609
      %v2693 = vpack.c.b16 %v2612, %v2611
      %v2694 = vpack.c.b16 %v2614, %v2613
      %v2695 = vpack.c.b16 %v2616, %v2615
      %v2696 = vpack.c.b16 %v2618, %v2617
      %v2697 = vpack.c.b16 %v2620, %v2619
      %v2698 = vpack.c.b16 %v2622, %v2621
      %v2699 = vpack.c.b16 %v2624, %v2623
      %v2700 = vpack.c.b16 %v2626, %v2625
      %v2701 = vpack.c.b16 %v2628, %v2627
      %v2702 = vpack.c.b16 %v2630, %v2629
      %2775 = vmatprep.subr.bf16.mxu0 0
      %2776 = vmatpush1.bf16.msra.mxu0 %v2631
      %2777 = vmatprep.subr.bf16.mxu0 0
      %2778 = vmatpush1.bf16.msra.mxu0 %v2632
      %2779 = vmatprep.subr.bf16.mxu0 0
      %2780 = vmatpush1.bf16.msra.mxu0 %v2633
      %2781 = vmatprep.subr.bf16.mxu0 0
      %2782 = vmatpush1.bf16.msra.mxu0 %v2634
      %2783 = vmatprep.subr.bf16.mxu0 0
      %2784 = vmatpush1.bf16.msra.mxu0 %v2635
      %2785 = vmatprep.subr.bf16.mxu0 0
      %2786 = vmatpush1.bf16.msra.mxu0 %v2636
      %2787 = vmatprep.subr.bf16.mxu0 0
      %2788 = vmatpush1.bf16.msra.mxu0 %v2637
      %2789 = vmatprep.subr.bf16.mxu0 0
      %2790 = vmatpush1.bf16.msra.mxu0 %v2638
      %2791 = vmatprep.subr.bf16.mxu0 0
      %2792 = vmatpush1.bf16.msra.mxu0 %v2639
      %2793 = vmatprep.subr.bf16.mxu0 0
      %2794 = vmatpush1.bf16.msra.mxu0 %v2640
      %2795 = vmatprep.subr.bf16.mxu0 0
      %2796 = vmatpush1.bf16.msra.mxu0 %v2641
      %2797 = vmatprep.subr.bf16.mxu0 0
      %2798 = vmatpush1.bf16.msra.mxu0 %v2642
      %2799 = vmatprep.subr.bf16.mxu0 0
      %2800 = vmatpush1.bf16.msra.mxu0 %v2643
      %2801 = vmatprep.subr.bf16.mxu0 0
      %2802 = vmatpush1.bf16.msra.mxu0 %v2644
      %2803 = vmatprep.subr.bf16.mxu0 0
      %2804 = vmatpush1.bf16.msra.mxu0 %v2645
      %2805 = vmatprep.subr.bf16.mxu0 0
      %2806 = vmatpush1.bf16.msra.mxu0 %v2646
      %2807 = vmatprep.mubr.bf16.mxu0 %v1860
      %2808 = vmatmul.mubr.bf16.gmra.mrb[0].mxu0 %v1812
      %v2809 = vpop.f32.mrb[0].mxu0
      %v2810 = vadd.f32 %v2341, %v2809
      %v2811 = vpop.f32.mrb[0].mxu0
      %v2812 = vpop.f32.mrb[0].mxu0
      %v2813 = vadd.f32 %v2341, %v2812
      %v2814 = vpop.f32.mrb[0].mxu0
      %2815 = vmatprep.mubr.bf16.mxu0 %v1872
      %2816 = vmatmul.mubr.bf16.gmra.mrb[0].mxu0 %v1813
      %v2817 = vpop.f32.mrb[0].mxu0
      %v2818 = vadd.f32 %v2341, %v2817
      %v2819 = vpop.f32.mrb[0].mxu0
      %v2820 = vpop.f32.mrb[0].mxu0
      %v2821 = vadd.f32 %v2341, %v2820
      %v2822 = vpop.f32.mrb[0].mxu0
      %2823 = vmatprep.mubr.bf16.mxu0 %v1884
      %2824 = vmatmul.mubr.bf16.gmra.mrb[0].mxu0 %v1814
      %v2825 = vpop.f32.mrb[0].mxu0
      %v2826 = vadd.f32 %v2341, %v2825
      %v2827 = vpop.f32.mrb[0].mxu0
      %v2828 = vpop.f32.mrb[0].mxu0
      %v2829 = vadd.f32 %v2341, %v2828
      %v2830 = vpop.f32.mrb[0].mxu0
      %2831 = vmatprep.mubr.bf16.mxu0 %v1896
      %2832 = vmatmul.mubr.bf16.gmra.mrb[0].mxu0 %v1815
      %v2833 = vpop.f32.mrb[0].mxu0
      %v2834 = vadd.f32 %v2341, %v2833
      %v2835 = vpop.f32.mrb[0].mxu0
      %v2836 = vpop.f32.mrb[0].mxu0
      %v2837 = vadd.f32 %v2341, %v2836
      %v2838 = vpop.f32.mrb[0].mxu0
      %2839 = vmatprep.mubr.bf16.mxu0 %v1908
      %2840 = vmatmul.mubr.bf16.gmra.mrb[0].mxu0 %v1816
      %v2841 = vpop.f32.mrb[0].mxu0
      %v2842 = vadd.f32 %v2341, %v2841
      %v2843 = vpop.f32.mrb[0].mxu0
      %v2844 = vpop.f32.mrb[0].mxu0
      %v2845 = vadd.f32 %v2341, %v2844
      %v2846 = vpop.f32.mrb[0].mxu0
      %2847 = vmatprep.mubr.bf16.mxu0 %v1920
      %2848 = vmatmul.mubr.bf16.gmra.mrb[0].mxu0 %v1817
      %v2849 = vpop.f32.mrb[0].mxu0
      %v2850 = vadd.f32 %v2341, %v2849
      %v2851 = vpop.f32.mrb[0].mxu0
      %v2852 = vpop.f32.mrb[0].mxu0
      %v2853 = vadd.f32 %v2341, %v2852
      %v2854 = vpop.f32.mrb[0].mxu0
      %2855 = vmatprep.mubr.bf16.mxu0 %v1932
      %2856 = vmatmul.mubr.bf16.gmra.mrb[0].mxu0 %v1818
      %v2857 = vpop.f32.mrb[0].mxu0
      %v2858 = vadd.f32 %v2341, %v2857
      %v2859 = vpop.f32.mrb[0].mxu0
      %v2860 = vpop.f32.mrb[0].mxu0
      %v2861 = vadd.f32 %v2341, %v2860
      %v2862 = vpop.f32.mrb[0].mxu0
      %2863 = vmatprep.mubr.bf16.mxu0 %v1944
      %2864 = vmatmul.mubr.bf16.gmra.mrb[0].mxu0 %v1819
      %v2865 = vpop.f32.mrb[0].mxu0
      %v2866 = vadd.f32 %v2341, %v2865
      %v2867 = vpop.f32.mrb[0].mxu0
      %v2868 = vpop.f32.mrb[0].mxu0
      %v2869 = vadd.f32 %v2341, %v2868
      %v2870 = vpop.f32.mrb[0].mxu0
      %2871 = vmatprep.mubr.bf16.mxu0 %v1956
      %2872 = vmatmul.mubr.bf16.gmra.mrb[0].mxu0 %v1820
      %v2873 = vpop.f32.mrb[0].mxu0
      %v2874 = vadd.f32 %v2341, %v2873
      %v2875 = vpop.f32.mrb[0].mxu0
      %v2876 = vpop.f32.mrb[0].mxu0
      %v2877 = vadd.f32 %v2341, %v2876
      %v2878 = vpop.f32.mrb[0].mxu0
      %2879 = vmatprep.mubr.bf16.mxu0 %v1968
      %2880 = vmatmul.mubr.bf16.gmra.mrb[0].mxu0 %v1821
      %v2881 = vpop.f32.mrb[0].mxu0
      %v2882 = vadd.f32 %v2341, %v2881
      %v2883 = vpop.f32.mrb[0].mxu0
      %v2884 = vpop.f32.mrb[0].mxu0
      %v2885 = vadd.f32 %v2341, %v2884
      %v2886 = vpop.f32.mrb[0].mxu0
      %2887 = vmatprep.mubr.bf16.mxu0 %v1980
      %2888 = vmatmul.mubr.bf16.gmra.mrb[0].mxu0 %v1822
      %v2889 = vpop.f32.mrb[0].mxu0
      %v2890 = vadd.f32 %v2341, %v2889
      %v2891 = vpop.f32.mrb[0].mxu0
      %v2892 = vpop.f32.mrb[0].mxu0
      %v2893 = vadd.f32 %v2341, %v2892
      %v2894 = vpop.f32.mrb[0].mxu0
      %2895 = vmatprep.mubr.bf16.mxu0 %v1992
      %2896 = vmatmul.mubr.bf16.gmra.mrb[0].mxu0 %v1823
      %v2897 = vpop.f32.mrb[0].mxu0
      %v2898 = vadd.f32 %v2341, %v2897
      %v2899 = vpop.f32.mrb[0].mxu0
      %v2900 = vpop.f32.mrb[0].mxu0
      %v2901 = vadd.f32 %v2341, %v2900
      %v2902 = vpop.f32.mrb[0].mxu0
      %2903 = vmatprep.mubr.bf16.mxu0 %v2004
      %2904 = vmatmul.mubr.bf16.gmra.mrb[0].mxu0 %v1824
      %v2905 = vpop.f32.mrb[0].mxu0
      %v2906 = vadd.f32 %v2341, %v2905
      %v2907 = vpop.f32.mrb[0].mxu0
      %v2908 = vpop.f32.mrb[0].mxu0
      %v2909 = vadd.f32 %v2341, %v2908
      %v2910 = vpop.f32.mrb[0].mxu0
      %2911 = vmatprep.mubr.bf16.mxu0 %v2016
      %2912 = vmatmul.mubr.bf16.gmra.mrb[0].mxu0 %v1825
      %v2913 = vpop.f32.mrb[0].mxu0
      %v2914 = vadd.f32 %v2341, %v2913
      %v2915 = vpop.f32.mrb[0].mxu0
      %v2916 = vpop.f32.mrb[0].mxu0
      %v2917 = vadd.f32 %v2341, %v2916
      %v2918 = vpop.f32.mrb[0].mxu0
      %2919 = vmatprep.mubr.bf16.mxu0 %v2028
      %2920 = vmatmul.mubr.bf16.gmra.mrb[0].mxu0 %v1826
      %v2921 = vpop.f32.mrb[0].mxu0
      %v2922 = vadd.f32 %v2341, %v2921
      %v2923 = vpop.f32.mrb[0].mxu0
      %v2924 = vpop.f32.mrb[0].mxu0
      %v2925 = vadd.f32 %v2341, %v2924
      %v2926 = vpop.f32.mrb[0].mxu0
      %2927 = vmatprep.mubr.bf16.mxu0 %v2040
      %2928 = vmatmul.mubr.bf16.gmra.mrb[0].mxu0 %v1827
      %v2929 = vpop.f32.mrb[0].mxu0
      %v2930 = vadd.f32 %v2341, %v2929
      %v2931 = vpop.f32.mrb[0].mxu0
      %v2932 = vpop.f32.mrb[0].mxu0
      %v2933 = vadd.f32 %v2341, %v2932
      %v2934 = vpop.f32.mrb[0].mxu0
      %2935 = vdwg.mxu0
      %2936 = vmatprep.subr.bf16.mxu0 0
      %2937 = vmatpush1.bf16.msra.mxu0 %v2647
      %2938 = vmatprep.subr.bf16.mxu0 0
      %2939 = vmatpush1.bf16.msra.mxu0 %v2648
      %2940 = vmatprep.subr.bf16.mxu0 0
      %2941 = vmatpush1.bf16.msra.mxu0 %v2649
      %2942 = vmatprep.subr.bf16.mxu0 0
      %2943 = vmatpush1.bf16.msra.mxu0 %v2650
      %2944 = vmatprep.subr.bf16.mxu0 0
      %2945 = vmatpush1.bf16.msra.mxu0 %v2651
      %2946 = vmatprep.subr.bf16.mxu0 0
      %2947 = vmatpush1.bf16.msra.mxu0 %v2652
      %2948 = vmatprep.subr.bf16.mxu0 0
      %2949 = vmatpush1.bf16.msra.mxu0 %v2653
      %2950 = vmatprep.subr.bf16.mxu0 0
      %2951 = vmatpush1.bf16.msra.mxu0 %v2654
      %2952 = vmatprep.subr.bf16.mxu0 0
      %2953 = vmatpush1.bf16.msra.mxu0 %v2655
      %2954 = vmatprep.subr.bf16.mxu0 0
      %2955 = vmatpush1.bf16.msra.mxu0 %v2656
      %2956 = vmatprep.subr.bf16.mxu0 0
      %2957 = vmatpush1.bf16.msra.mxu0 %v2657
      %2958 = vmatprep.subr.bf16.mxu0 0
      %2959 = vmatpush1.bf16.msra.mxu0 %v2658
      %2960 = vmatprep.subr.bf16.mxu0 0
      %2961 = vmatpush1.bf16.msra.mxu0 %v2659
      %2962 = vmatprep.subr.bf16.mxu0 0
      %2963 = vmatpush1.bf16.msra.mxu0 %v2660
      %2964 = vmatprep.subr.bf16.mxu0 0
      %2965 = vmatpush1.bf16.msra.mxu0 %v2661
      %2966 = vmatprep.subr.bf16.mxu0 0
      %2967 = vmatpush1.bf16.msra.mxu0 %v2662
      %2968 = vmatprep.mubr.bf16.mxu0 %v1813
      %2969 = vmatmul.mubr.bf16.gmra.mrb[0].mxu0 %v2092
      %v2970 = vpop.f32.mrb[0].mxu0
      %v2971 = vadd.f32 %v2810, %v2970
      %v2972 = vpop.f32.mrb[0].mxu0
      %v2973 = vpop.f32.mrb[0].mxu0
      %v2974 = vadd.f32 %v2813, %v2973
      %v2975 = vpop.f32.mrb[0].mxu0
      %2976 = vmatprep.mubr.bf16.mxu0 %v1814
      %2977 = vmatmul.mubr.bf16.gmra.mrb[0].mxu0 %v2095
      %v2978 = vpop.f32.mrb[0].mxu0
      %v2979 = vadd.f32 %v2818, %v2978
      %v2980 = vpop.f32.mrb[0].mxu0
      %v2981 = vpop.f32.mrb[0].mxu0
      %v2982 = vadd.f32 %v2821, %v2981
      %v2983 = vpop.f32.mrb[0].mxu0
      %2984 = vmatprep.mubr.bf16.mxu0 %v1815
      %2985 = vmatmul.mubr.bf16.gmra.mrb[0].mxu0 %v2098
      %v2986 = vpop.f32.mrb[0].mxu0
      %v2987 = vadd.f32 %v2826, %v2986
      %v2988 = vpop.f32.mrb[0].mxu0
      %v2989 = vpop.f32.mrb[0].mxu0
      %v2990 = vadd.f32 %v2829, %v2989
      %v2991 = vpop.f32.mrb[0].mxu0
      %2992 = vmatprep.mubr.bf16.mxu0 %v1816
      %2993 = vmatmul.mubr.bf16.gmra.mrb[0].mxu0 %v2101
      %v2994 = vpop.f32.mrb[0].mxu0
      %v2995 = vadd.f32 %v2834, %v2994
      %v2996 = vpop.f32.mrb[0].mxu0
      %v2997 = vpop.f32.mrb[0].mxu0
      %v2998 = vadd.f32 %v2837, %v2997
      %v2999 = vpop.f32.mrb[0].mxu0
      %3000 = vmatprep.mubr.bf16.mxu0 %v1817
      %3001 = vmatmul.mubr.bf16.gmra.mrb[0].mxu0 %v2104
      %v3002 = vpop.f32.mrb[0].mxu0
      %v3003 = vadd.f32 %v2842, %v3002
      %v3004 = vpop.f32.mrb[0].mxu0
      %v3005 = vpop.f32.mrb[0].mxu0
      %v3006 = vadd.f32 %v2845, %v3005
      %v3007 = vpop.f32.mrb[0].mxu0
      %3008 = vmatprep.mubr.bf16.mxu0 %v1818
      %3009 = vmatmul.mubr.bf16.gmra.mrb[0].mxu0 %v2107
      %v3010 = vpop.f32.mrb[0].mxu0
      %v3011 = vadd.f32 %v2850, %v3010
      %v3012 = vpop.f32.mrb[0].mxu0
      %v3013 = vpop.f32.mrb[0].mxu0
      %v3014 = vadd.f32 %v2853, %v3013
      %v3015 = vpop.f32.mrb[0].mxu0
      %3016 = vmatprep.mubr.bf16.mxu0 %v1819
      %3017 = vmatmul.mubr.bf16.gmra.mrb[0].mxu0 %v2110
      %v3018 = vpop.f32.mrb[0].mxu0
      %v3019 = vadd.f32 %v2858, %v3018
      %v3020 = vpop.f32.mrb[0].mxu0
      %v3021 = vpop.f32.mrb[0].mxu0
      %v3022 = vadd.f32 %v2861, %v3021
      %v3023 = vpop.f32.mrb[0].mxu0
      %3024 = vmatprep.mubr.bf16.mxu0 %v1820
      %3025 = vmatmul.mubr.bf16.gmra.mrb[0].mxu0 %v2113
      %v3026 = vpop.f32.mrb[0].mxu0
      %v3027 = vadd.f32 %v2866, %v3026
      %v3028 = vpop.f32.mrb[0].mxu0
      %v3029 = vpop.f32.mrb[0].mxu0
      %v3030 = vadd.f32 %v2869, %v3029
      %v3031 = vpop.f32.mrb[0].mxu0
      %3032 = vmatprep.mubr.bf16.mxu0 %v1821
      %3033 = vmatmul.mubr.bf16.gmra.mrb[0].mxu0 %v2116
      %v3034 = vpop.f32.mrb[0].mxu0
      %v3035 = vadd.f32 %v2874, %v3034
      %v3036 = vpop.f32.mrb[0].mxu0
      %v3037 = vpop.f32.mrb[0].mxu0
      %v3038 = vadd.f32 %v2877, %v3037
      %v3039 = vpop.f32.mrb[0].mxu0
      %3040 = vmatprep.mubr.bf16.mxu0 %v1822
      %3041 = vmatmul.mubr.bf16.gmra.mrb[0].mxu0 %v2119
      %v3042 = vpop.f32.mrb[0].mxu0
      %v3043 = vadd.f32 %v2882, %v3042
      %v3044 = vpop.f32.mrb[0].mxu0
      %v3045 = vpop.f32.mrb[0].mxu0
      %v3046 = vadd.f32 %v2885, %v3045
      %v3047 = vpop.f32.mrb[0].mxu0
      %3048 = vmatprep.mubr.bf16.mxu0 %v1823
      %3049 = vmatmul.mubr.bf16.gmra.mrb[0].mxu0 %v2122
      %v3050 = vpop.f32.mrb[0].mxu0
      %v3051 = vadd.f32 %v2890, %v3050
      %v3052 = vpop.f32.mrb[0].mxu0
      %v3053 = vpop.f32.mrb[0].mxu0
      %v3054 = vadd.f32 %v2893, %v3053
      %v3055 = vpop.f32.mrb[0].mxu0
      %3056 = vmatprep.mubr.bf16.mxu0 %v1824
      %3057 = vmatmul.mubr.bf16.gmra.mrb[0].mxu0 %v2125
      %v3058 = vpop.f32.mrb[0].mxu0
      %v3059 = vadd.f32 %v2898, %v3058
      %v3060 = vpop.f32.mrb[0].mxu0
      %v3061 = vpop.f32.mrb[0].mxu0
      %v3062 = vadd.f32 %v2901, %v3061
      %v3063 = vpop.f32.mrb[0].mxu0
      %3064 = vmatprep.mubr.bf16.mxu0 %v1825
      %3065 = vmatmul.mubr.bf16.gmra.mrb[0].mxu0 %v2128
      %v3066 = vpop.f32.mrb[0].mxu0
      %v3067 = vadd.f32 %v2906, %v3066
      %v3068 = vpop.f32.mrb[0].mxu0
      %v3069 = vpop.f32.mrb[0].mxu0
      %v3070 = vadd.f32 %v2909, %v3069
      %v3071 = vpop.f32.mrb[0].mxu0
      %3072 = vmatprep.mubr.bf16.mxu0 %v1826
      %3073 = vmatmul.mubr.bf16.gmra.mrb[0].mxu0 %v2131
      %v3074 = vpop.f32.mrb[0].mxu0
      %v3075 = vadd.f32 %v2914, %v3074
      %v3076 = vpop.f32.mrb[0].mxu0
      %v3077 = vpop.f32.mrb[0].mxu0
      %v3078 = vadd.f32 %v2917, %v3077
      %v3079 = vpop.f32.mrb[0].mxu0
      %3080 = vmatprep.mubr.bf16.mxu0 %v1827
      %3081 = vmatmul.mubr.bf16.gmra.mrb[0].mxu0 %v2134
      %v3082 = vpop.f32.mrb[0].mxu0
      %v3083 = vadd.f32 %v2922, %v3082
      %v3084 = vpop.f32.mrb[0].mxu0
      %v3085 = vpop.f32.mrb[0].mxu0
      %v3086 = vadd.f32 %v2925, %v3085
      %v3087 = vpop.f32.mrb[0].mxu0
      %3088 = vmatprep.mubr.bf16.mxu0 %v1828
      %3089 = vmatmul.mubr.bf16.gmra.mrb[0].mxu0 %v2137
      %v3090 = vpop.f32.mrb[0].mxu0
      %v3091 = vadd.f32 %v2930, %v3090
      %v3092 = vpop.f32.mrb[0].mxu0
      %v3093 = vpop.f32.mrb[0].mxu0
      %v3094 = vadd.f32 %v2933, %v3093
      %v3095 = vpop.f32.mrb[0].mxu0
      %3096 = vdwg.mxu0
      %3097 = vmatprep.subr.bf16.mxu0 0
      %3098 = vmatpush1.bf16.msra.mxu0 %v2663
      %3099 = vmatprep.subr.bf16.mxu0 0
      %3100 = vmatpush1.bf16.msra.mxu0 %v2664
      %3101 = vmatprep.subr.bf16.mxu0 0
      %3102 = vmatpush1.bf16.msra.mxu0 %v2665
      %3103 = vmatprep.subr.bf16.mxu0 0
      %3104 = vmatpush1.bf16.msra.mxu0 %v2666
      %3105 = vmatprep.subr.bf16.mxu0 0
      %3106 = vmatpush1.bf16.msra.mxu0 %v2667
      %3107 = vmatprep.subr.bf16.mxu0 0
      %3108 = vmatpush1.bf16.msra.mxu0 %v2668
      %3109 = vmatprep.subr.bf16.mxu0 0
      %3110 = vmatpush1.bf16.msra.mxu0 %v2669
      %3111 = vmatprep.subr.bf16.mxu0 0
      %3112 = vmatpush1.bf16.msra.mxu0 %v2670
      %3113 = vmatprep.subr.bf16.mxu0 0
      %3114 = vmatpush1.bf16.msra.mxu0 %v2671
      %3115 = vmatprep.subr.bf16.mxu0 0
      %3116 = vmatpush1.bf16.msra.mxu0 %v2672
      %3117 = vmatprep.subr.bf16.mxu0 0
      %3118 = vmatpush1.bf16.msra.mxu0 %v2673
      %3119 = vmatprep.subr.bf16.mxu0 0
      %3120 = vmatpush1.bf16.msra.mxu0 %v2674
      %3121 = vmatprep.subr.bf16.mxu0 0
      %3122 = vmatpush1.bf16.msra.mxu0 %v2675
      %3123 = vmatprep.subr.bf16.mxu0 0
      %3124 = vmatpush1.bf16.msra.mxu0 %v2676
      %3125 = vmatprep.subr.bf16.mxu0 0
      %3126 = vmatpush1.bf16.msra.mxu0 %v2677
      %3127 = vmatprep.subr.bf16.mxu0 0
      %3128 = vmatpush1.bf16.msra.mxu0 %v2678
      %3129 = vmatprep.mubr.bf16.mxu0 %v2095
      %3130 = vmatmul.mubr.bf16.gmra.mrb[0].mxu0 %v1872
      %v3131 = vpop.f32.mrb[0].mxu0
      %v3132 = vadd.f32 %v2971, %v3131
      %v3133 = vpop.f32.mrb[0].mxu0
      %v3134 = vpop.f32.mrb[0].mxu0
      %v3135 = vadd.f32 %v2974, %v3134
      %v3136 = vpop.f32.mrb[0].mxu0
      %3137 = vmatprep.mubr.bf16.mxu0 %v2098
      %3138 = vmatmul.mubr.bf16.gmra.mrb[0].mxu0 %v1884
      %v3139 = vpop.f32.mrb[0].mxu0
      %v3140 = vadd.f32 %v2979, %v3139
      %v3141 = vpop.f32.mrb[0].mxu0
      %v3142 = vpop.f32.mrb[0].mxu0
      %v3143 = vadd.f32 %v2982, %v3142
      %v3144 = vpop.f32.mrb[0].mxu0
      %3145 = vmatprep.mubr.bf16.mxu0 %v2101
      %3146 = vmatmul.mubr.bf16.gmra.mrb[0].mxu0 %v1896
      %v3147 = vpop.f32.mrb[0].mxu0
      %v3148 = vadd.f32 %v2987, %v3147
      %v3149 = vpop.f32.mrb[0].mxu0
      %v3150 = vpop.f32.mrb[0].mxu0
      %v3151 = vadd.f32 %v2990, %v3150
      %v3152 = vpop.f32.mrb[0].mxu0
      %3153 = vmatprep.mubr.bf16.mxu0 %v2104
      %3154 = vmatmul.mubr.bf16.gmra.mrb[0].mxu0 %v1908
      %v3155 = vpop.f32.mrb[0].mxu0
      %v3156 = vadd.f32 %v2995, %v3155
      %v3157 = vpop.f32.mrb[0].mxu0
      %v3158 = vpop.f32.mrb[0].mxu0
      %v3159 = vadd.f32 %v2998, %v3158
      %v3160 = vpop.f32.mrb[0].mxu0
      %3161 = vmatprep.mubr.bf16.mxu0 %v2107
      %3162 = vmatmul.mubr.bf16.gmra.mrb[0].mxu0 %v1920
      %v3163 = vpop.f32.mrb[0].mxu0
      %v3164 = vadd.f32 %v3003, %v3163
      %v3165 = vpop.f32.mrb[0].mxu0
      %v3166 = vpop.f32.mrb[0].mxu0
      %v3167 = vadd.f32 %v3006, %v3166
      %v3168 = vpop.f32.mrb[0].mxu0
      %3169 = vmatprep.mubr.bf16.mxu0 %v2110
      %3170 = vmatmul.mubr.bf16.gmra.mrb[0].mxu0 %v1932
      %v3171 = vpop.f32.mrb[0].mxu0
      %v3172 = vadd.f32 %v3011, %v3171
      %v3173 = vpop.f32.mrb[0].mxu0
      %v3174 = vpop.f32.mrb[0].mxu0
      %v3175 = vadd.f32 %v3014, %v3174
      %v3176 = vpop.f32.mrb[0].mxu0
      %3177 = vmatprep.mubr.bf16.mxu0 %v2113
      %3178 = vmatmul.mubr.bf16.gmra.mrb[0].mxu0 %v1944
      %v3179 = vpop.f32.mrb[0].mxu0
      %v3180 = vadd.f32 %v3019, %v3179
      %v3181 = vpop.f32.mrb[0].mxu0
      %v3182 = vpop.f32.mrb[0].mxu0
      %v3183 = vadd.f32 %v3022, %v3182
      %v3184 = vpop.f32.mrb[0].mxu0
      %3185 = vmatprep.mubr.bf16.mxu0 %v2116
      %3186 = vmatmul.mubr.bf16.gmra.mrb[0].mxu0 %v1956
      %v3187 = vpop.f32.mrb[0].mxu0
      %v3188 = vadd.f32 %v3027, %v3187
      %v3189 = vpop.f32.mrb[0].mxu0
      %v3190 = vpop.f32.mrb[0].mxu0
      %v3191 = vadd.f32 %v3030, %v3190
      %v3192 = vpop.f32.mrb[0].mxu0
      %3193 = vmatprep.mubr.bf16.mxu0 %v2119
      %3194 = vmatmul.mubr.bf16.gmra.mrb[0].mxu0 %v1968
      %v3195 = vpop.f32.mrb[0].mxu0
      %v3196 = vadd.f32 %v3035, %v3195
      %v3197 = vpop.f32.mrb[0].mxu0
      %v3198 = vpop.f32.mrb[0].mxu0
      %v3199 = vadd.f32 %v3038, %v3198
      %v3200 = vpop.f32.mrb[0].mxu0
      %3201 = vmatprep.mubr.bf16.mxu0 %v2122
      %3202 = vmatmul.mubr.bf16.gmra.mrb[0].mxu0 %v1980
      %v3203 = vpop.f32.mrb[0].mxu0
      %v3204 = vadd.f32 %v3043, %v3203
      %v3205 = vpop.f32.mrb[0].mxu0
      %v3206 = vpop.f32.mrb[0].mxu0
      %v3207 = vadd.f32 %v3046, %v3206
      %v3208 = vpop.f32.mrb[0].mxu0
      %3209 = vmatprep.mubr.bf16.mxu0 %v2125
      %3210 = vmatmul.mubr.bf16.gmra.mrb[0].mxu0 %v1992
      %v3211 = vpop.f32.mrb[0].mxu0
      %v3212 = vadd.f32 %v3051, %v3211
      %v3213 = vpop.f32.mrb[0].mxu0
      %v3214 = vpop.f32.mrb[0].mxu0
      %v3215 = vadd.f32 %v3054, %v3214
      %v3216 = vpop.f32.mrb[0].mxu0
      %3217 = vmatprep.mubr.bf16.mxu0 %v2128
      %3218 = vmatmul.mubr.bf16.gmra.mrb[0].mxu0 %v2004
      %v3219 = vpop.f32.mrb[0].mxu0
      %v3220 = vadd.f32 %v3059, %v3219
      %v3221 = vpop.f32.mrb[0].mxu0
      %v3222 = vpop.f32.mrb[0].mxu0
      %v3223 = vadd.f32 %v3062, %v3222
      %v3224 = vpop.f32.mrb[0].mxu0
      %3225 = vmatprep.mubr.bf16.mxu0 %v2131
      %3226 = vmatmul.mubr.bf16.gmra.mrb[0].mxu0 %v2016
      %v3227 = vpop.f32.mrb[0].mxu0
      %v3228 = vadd.f32 %v3067, %v3227
      %v3229 = vpop.f32.mrb[0].mxu0
      %v3230 = vpop.f32.mrb[0].mxu0
      %v3231 = vadd.f32 %v3070, %v3230
      %v3232 = vpop.f32.mrb[0].mxu0
      %3233 = vmatprep.mubr.bf16.mxu0 %v2134
      %3234 = vmatmul.mubr.bf16.gmra.mrb[0].mxu0 %v2028
      %v3235 = vpop.f32.mrb[0].mxu0
      %v3236 = vadd.f32 %v3075, %v3235
      %v3237 = vpop.f32.mrb[0].mxu0
      %v3238 = vpop.f32.mrb[0].mxu0
      %v3239 = vadd.f32 %v3078, %v3238
      %v3240 = vpop.f32.mrb[0].mxu0
      %3241 = vmatprep.mubr.bf16.mxu0 %v2137
      %3242 = vmatmul.mubr.bf16.gmra.mrb[0].mxu0 %v2040
      %v3243 = vpop.f32.mrb[0].mxu0
      %v3244 = vadd.f32 %v3083, %v3243
      %v3245 = vpop.f32.mrb[0].mxu0
      %v3246 = vpop.f32.mrb[0].mxu0
      %v3247 = vadd.f32 %v3086, %v3246
      %v3248 = vpop.f32.mrb[0].mxu0
      %3249 = vmatprep.mubr.bf16.mxu0 %v2171
      %3250 = vmatmul.mubr.bf16.gmra.mrb[0].mxu0 %v2165
      %v3251 = vpop.f32.mrb[0].mxu0
      %v3252 = vadd.f32 %v3091, %v3251
      %v3253 = vpop.f32.mrb[0].mxu0
      %v3254 = vpop.f32.mrb[0].mxu0
      %v3255 = vadd.f32 %v3094, %v3254
      %v3256 = vpop.f32.mrb[0].mxu0
      %3257 = vdwg.mxu0
      %3258 = vmatprep.subr.bf16.mxu0 0
      %3259 = vmatpush1.bf16.msra.mxu0 %v2679
      %3260 = vmatprep.subr.bf16.mxu0 0
      %3261 = vmatpush1.bf16.msra.mxu0 %v2680
      %3262 = vmatprep.subr.bf16.mxu0 0
      %3263 = vmatpush1.bf16.msra.mxu0 %v2681
      %3264 = vmatprep.subr.bf16.mxu0 0
      %3265 = vmatpush1.bf16.msra.mxu0 %v2682
      %3266 = vmatprep.subr.bf16.mxu0 0
      %3267 = vmatpush1.bf16.msra.mxu0 %v2683
      %3268 = vmatprep.subr.bf16.mxu0 0
      %3269 = vmatpush1.bf16.msra.mxu0 %v2684
      %3270 = vmatprep.subr.bf16.mxu0 0
      %3271 = vmatpush1.bf16.msra.mxu0 %v2685
      %3272 = vmatprep.subr.bf16.mxu0 0
      %3273 = vmatpush1.bf16.msra.mxu0 %v2686
      %3274 = vmatprep.subr.bf16.mxu0 0
      %3275 = vmatpush1.bf16.msra.mxu0 %v2687
      %3276 = vmatprep.subr.bf16.mxu0 0
      %3277 = vmatpush1.bf16.msra.mxu0 %v2688
      %3278 = vmatprep.subr.bf16.mxu0 0
      %3279 = vmatpush1.bf16.msra.mxu0 %v2689
      %3280 = vmatprep.subr.bf16.mxu0 0
      %3281 = vmatpush1.bf16.msra.mxu0 %v2690
      %3282 = vmatprep.subr.bf16.mxu0 0
      %3283 = vmatpush1.bf16.msra.mxu0 %v2691
      %3284 = vmatprep.subr.bf16.mxu0 0
      %3285 = vmatpush1.bf16.msra.mxu0 %v2692
      %3286 = vmatprep.subr.bf16.mxu0 0
      %3287 = vmatpush1.bf16.msra.mxu0 %v2693
      %3288 = vmatprep.subr.bf16.mxu0 0
      %3289 = vmatpush1.bf16.msra.mxu0 %v2694
      %3290 = vmatprep.mubr.bf16.mxu0 %v1884
      %3291 = vmatmul.mubr.bf16.gmra.mrb[0].mxu0 %v1814
      %v3292 = vpop.f32.mrb[0].mxu0
      %v3293 = vadd.f32 %v3132, %v3292
      %v3294 = vpop.f32.mrb[0].mxu0
      %v3295 = vpop.f32.mrb[0].mxu0
      %v3296 = vadd.f32 %v3135, %v3295
      %v3297 = vpop.f32.mrb[0].mxu0
      %3298 = vmatprep.mubr.bf16.mxu0 %v1896
      %3299 = vmatmul.mubr.bf16.gmra.mrb[0].mxu0 %v1815
      %v3300 = vpop.f32.mrb[0].mxu0
      %v3301 = vadd.f32 %v3140, %v3300
      %v3302 = vpop.f32.mrb[0].mxu0
      %v3303 = vpop.f32.mrb[0].mxu0
      %v3304 = vadd.f32 %v3143, %v3303
      %v3305 = vpop.f32.mrb[0].mxu0
      %3306 = vmatprep.mubr.bf16.mxu0 %v1908
      %3307 = vmatmul.mubr.bf16.gmra.mrb[0].mxu0 %v1816
      %v3308 = vpop.f32.mrb[0].mxu0
      %v3309 = vadd.f32 %v3148, %v3308
      %v3310 = vpop.f32.mrb[0].mxu0
      %v3311 = vpop.f32.mrb[0].mxu0
      %v3312 = vadd.f32 %v3151, %v3311
      %v3313 = vpop.f32.mrb[0].mxu0
      %3314 = vmatprep.mubr.bf16.mxu0 %v1920
      %3315 = vmatmul.mubr.bf16.gmra.mrb[0].mxu0 %v1817
      %v3316 = vpop.f32.mrb[0].mxu0
      %v3317 = vadd.f32 %v3156, %v3316
      %v3318 = vpop.f32.mrb[0].mxu0
      %v3319 = vpop.f32.mrb[0].mxu0
      %v3320 = vadd.f32 %v3159, %v3319
      %v3321 = vpop.f32.mrb[0].mxu0
      %3322 = vmatprep.mubr.bf16.mxu0 %v1932
      %3323 = vmatmul.mubr.bf16.gmra.mrb[0].mxu0 %v1818
      %v3324 = vpop.f32.mrb[0].mxu0
      %v3325 = vadd.f32 %v3164, %v3324
      %v3326 = vpop.f32.mrb[0].mxu0
      %v3327 = vpop.f32.mrb[0].mxu0
      %v3328 = vadd.f32 %v3167, %v3327
      %v3329 = vpop.f32.mrb[0].mxu0
      %3330 = vmatprep.mubr.bf16.mxu0 %v1944
      %3331 = vmatmul.mubr.bf16.gmra.mrb[0].mxu0 %v1819
      %v3332 = vpop.f32.mrb[0].mxu0
      %v3333 = vadd.f32 %v3172, %v3332
      %v3334 = vpop.f32.mrb[0].mxu0
      %v3335 = vpop.f32.mrb[0].mxu0
      %v3336 = vadd.f32 %v3175, %v3335
      %v3337 = vpop.f32.mrb[0].mxu0
      %3338 = vmatprep.mubr.bf16.mxu0 %v1956
      %3339 = vmatmul.mubr.bf16.gmra.mrb[0].mxu0 %v1820
      %v3340 = vpop.f32.mrb[0].mxu0
      %v3341 = vadd.f32 %v3180, %v3340
      %v3342 = vpop.f32.mrb[0].mxu0
      %v3343 = vpop.f32.mrb[0].mxu0
      %v3344 = vadd.f32 %v3183, %v3343
      %v3345 = vpop.f32.mrb[0].mxu0
      %3346 = vmatprep.mubr.bf16.mxu0 %v1968
      %3347 = vmatmul.mubr.bf16.gmra.mrb[0].mxu0 %v1821
      %v3348 = vpop.f32.mrb[0].mxu0
      %v3349 = vadd.f32 %v3188, %v3348
      %v3350 = vpop.f32.mrb[0].mxu0
      %v3351 = vpop.f32.mrb[0].mxu0
      %v3352 = vadd.f32 %v3191, %v3351
      %v3353 = vpop.f32.mrb[0].mxu0
      %3354 = vmatprep.mubr.bf16.mxu0 %v1980
      %3355 = vmatmul.mubr.bf16.gmra.mrb[0].mxu0 %v1822
      %v3356 = vpop.f32.mrb[0].mxu0
      %v3357 = vadd.f32 %v3196, %v3356
      %v3358 = vpop.f32.mrb[0].mxu0
      %v3359 = vpop.f32.mrb[0].mxu0
      %v3360 = vadd.f32 %v3199, %v3359
      %v3361 = vpop.f32.mrb[0].mxu0
      %3362 = vmatprep.mubr.bf16.mxu0 %v1992
      %3363 = vmatmul.mubr.bf16.gmra.mrb[0].mxu0 %v1823
      %v3364 = vpop.f32.mrb[0].mxu0
      %v3365 = vadd.f32 %v3204, %v3364
      %v3366 = vpop.f32.mrb[0].mxu0
      %v3367 = vpop.f32.mrb[0].mxu0
      %v3368 = vadd.f32 %v3207, %v3367
      %v3369 = vpop.f32.mrb[0].mxu0
      %3370 = vmatprep.mubr.bf16.mxu0 %v2004
      %3371 = vmatmul.mubr.bf16.gmra.mrb[0].mxu0 %v1824
      %v3372 = vpop.f32.mrb[0].mxu0
      %v3373 = vadd.f32 %v3212, %v3372
      %v3374 = vpop.f32.mrb[0].mxu0
      %v3375 = vpop.f32.mrb[0].mxu0
      %v3376 = vadd.f32 %v3215, %v3375
      %v3377 = vpop.f32.mrb[0].mxu0
      %3378 = vmatprep.mubr.bf16.mxu0 %v2016
      %3379 = vmatmul.mubr.bf16.gmra.mrb[0].mxu0 %v1825
      %v3380 = vpop.f32.mrb[0].mxu0
      %v3381 = vadd.f32 %v3220, %v3380
      %v3382 = vpop.f32.mrb[0].mxu0
      %v3383 = vpop.f32.mrb[0].mxu0
      %v3384 = vadd.f32 %v3223, %v3383
      %v3385 = vpop.f32.mrb[0].mxu0
      %3386 = vmatprep.mubr.bf16.mxu0 %v2028
      %3387 = vmatmul.mubr.bf16.gmra.mrb[0].mxu0 %v1826
      %v3388 = vpop.f32.mrb[0].mxu0
      %v3389 = vadd.f32 %v3228, %v3388
      %v3390 = vpop.f32.mrb[0].mxu0
      %v3391 = vpop.f32.mrb[0].mxu0
      %v3392 = vadd.f32 %v3231, %v3391
      %v3393 = vpop.f32.mrb[0].mxu0
      %3394 = vmatprep.mubr.bf16.mxu0 %v2040
      %3395 = vmatmul.mubr.bf16.gmra.mrb[0].mxu0 %v1827
      %v3396 = vpop.f32.mrb[0].mxu0
      %v3397 = vadd.f32 %v3236, %v3396
      %v3398 = vpop.f32.mrb[0].mxu0
      %v3399 = vpop.f32.mrb[0].mxu0
      %v3400 = vadd.f32 %v3239, %v3399
      %v3401 = vpop.f32.mrb[0].mxu0
      %3402 = vmatprep.mubr.bf16.mxu0 %v2165
      %3403 = vmatmul.mubr.bf16.gmra.mrb[0].mxu0 %v1828
      %v3404 = vpop.f32.mrb[0].mxu0
      %v3405 = vadd.f32 %v3244, %v3404
      %v3406 = vpop.f32.mrb[0].mxu0
      %v3407 = vpop.f32.mrb[0].mxu0
      %v3408 = vadd.f32 %v3247, %v3407
      %v3409 = vpop.f32.mrb[0].mxu0
      %3410 = vmatprep.mubr.bf16.mxu0 %v2184
      %3411 = vmatmul.mubr.bf16.gmra.mrb[0].mxu0 %v1829
      %v3412 = vpop.f32.mrb[0].mxu0
      %v3413 = vadd.f32 %v3252, %v3412
      %v3414 = vpop.f32.mrb[0].mxu0
      %v3415 = vpop.f32.mrb[0].mxu0
      %v3416 = vadd.f32 %v3255, %v3415
      %v3417 = vpop.f32.mrb[0].mxu0
      %3418 = vdwg.mxu0
      %3419 = vmatprep.subr.bf16.mxu0 0
      %3420 = vmatpush1.bf16.msra.mxu0 %v2695
      %3421 = vmatprep.subr.bf16.mxu0 0
      %3422 = vmatpush1.bf16.msra.mxu0 %v2696
      %3423 = vmatprep.subr.bf16.mxu0 0
      %3424 = vmatpush1.bf16.msra.mxu0 %v2697
      %3425 = vmatprep.subr.bf16.mxu0 0
      %3426 = vmatpush1.bf16.msra.mxu0 %v2698
      %3427 = vmatprep.subr.bf16.mxu0 0
      %3428 = vmatpush1.bf16.msra.mxu0 %v2699
      %3429 = vmatprep.subr.bf16.mxu0 0
      %3430 = vmatpush1.bf16.msra.mxu0 %v2700
      %3431 = vmatprep.subr.bf16.mxu0 0
      %3432 = vmatpush1.bf16.msra.mxu0 %v2701
      %3433 = vmatprep.subr.bf16.mxu0 0
      %3434 = vmatpush1.bf16.msra.mxu0 %v2702
      %3435 = vmatprep.subr.bf16.mxu0 0
      %3436 = vmatpush1.bf16.msra.mxu0 0
      %3437 = vmatprep.subr.bf16.mxu0 0
      %3438 = vmatpush1.bf16.msra.mxu0 0
      %3439 = vmatprep.subr.bf16.mxu0 0
      %3440 = vmatpush1.bf16.msra.mxu0 0
      %3441 = vmatprep.subr.bf16.mxu0 0
      %3442 = vmatpush1.bf16.msra.mxu0 0
      %3443 = vmatprep.subr.bf16.mxu0 0
      %3444 = vmatpush1.bf16.msra.mxu0 0
      %3445 = vmatprep.subr.bf16.mxu0 0
      %3446 = vmatpush1.bf16.msra.mxu0 0
      %3447 = vmatprep.subr.bf16.mxu0 0
      %3448 = vmatpush1.bf16.msra.mxu0 0
      %3449 = vmatprep.subr.bf16.mxu0 0
      %3450 = vmatpush1.bf16.msra.mxu0 0
      %3451 = vmatprep.mubr.bf16.mxu0 0
      %3452 = vmatmul.mubr.bf16.gmra.mrb[0].mxu0 %v2098
      %v3453 = vpop.f32.mrb[0].mxu0
      %v3454 = vadd.f32 %v3293, %v3453
      %v3455 = vpop.f32.mrb[0].mxu0
      %v3456 = vpop.f32.mrb[0].mxu0
      %v3457 = vadd.f32 %v3296, %v3456
      %v3458 = vpop.f32.mrb[0].mxu0
      %3459 = vmatprep.mubr.bf16.mxu0 0
      %3460 = vmatmul.mubr.bf16.gmra.mrb[0].mxu0 %v2101
      %v3461 = vpop.f32.mrb[0].mxu0
      %v3462 = vadd.f32 %v3301, %v3461
      %v3463 = vpop.f32.mrb[0].mxu0
      %v3464 = vpop.f32.mrb[0].mxu0
      %v3465 = vadd.f32 %v3304, %v3464
      %v3466 = vpop.f32.mrb[0].mxu0
      %3467 = vmatprep.mubr.bf16.mxu0 0
      %3468 = vmatmul.mubr.bf16.gmra.mrb[0].mxu0 %v2104
      %v3469 = vpop.f32.mrb[0].mxu0
      %v3470 = vadd.f32 %v3309, %v3469
      %v3471 = vpop.f32.mrb[0].mxu0
      %v3472 = vpop.f32.mrb[0].mxu0
      %v3473 = vadd.f32 %v3312, %v3472
      %v3474 = vpop.f32.mrb[0].mxu0
      %3475 = vmatprep.mubr.bf16.mxu0 0
      %3476 = vmatmul.mubr.bf16.gmra.mrb[0].mxu0 %v2107
      %v3477 = vpop.f32.mrb[0].mxu0
      %v3478 = vadd.f32 %v3317, %v3477
      %v3479 = vpop.f32.mrb[0].mxu0
      %v3480 = vpop.f32.mrb[0].mxu0
      %v3481 = vadd.f32 %v3320, %v3480
      %v3482 = vpop.f32.mrb[0].mxu0
      %3483 = vmatprep.mubr.bf16.mxu0 0
      %3484 = vmatmul.mubr.bf16.gmra.mrb[0].mxu0 %v2110
      %v3485 = vpop.f32.mrb[0].mxu0
      %v3486 = vadd.f32 %v3325, %v3485
      %v3487 = vpop.f32.mrb[0].mxu0
      %v3488 = vpop.f32.mrb[0].mxu0
      %v3489 = vadd.f32 %v3328, %v3488
      %v3490 = vpop.f32.mrb[0].mxu0
      %3491 = vmatprep.mubr.bf16.mxu0 0
      %3492 = vmatmul.mubr.bf16.gmra.mrb[0].mxu0 %v2113
      %v3493 = vpop.f32.mrb[0].mxu0
      %v3494 = vadd.f32 %v3333, %v3493
      %v3495 = vpop.f32.mrb[0].mxu0
      %v3496 = vpop.f32.mrb[0].mxu0
      %v3497 = vadd.f32 %v3336, %v3496
      %v3498 = vpop.f32.mrb[0].mxu0
      %3499 = vmatprep.mubr.bf16.mxu0 0
      %3500 = vmatmul.mubr.bf16.gmra.mrb[0].mxu0 %v2116
      %v3501 = vpop.f32.mrb[0].mxu0
      %v3502 = vadd.f32 %v3341, %v3501
      %v3503 = vpop.f32.mrb[0].mxu0
      %v3504 = vpop.f32.mrb[0].mxu0
      %v3505 = vadd.f32 %v3344, %v3504
      %v3506 = vpop.f32.mrb[0].mxu0
      %3507 = vmatprep.mubr.bf16.mxu0 0
      %3508 = vmatmul.mubr.bf16.gmra.mrb[0].mxu0 %v2119
      %v3509 = vpop.f32.mrb[0].mxu0
      %v3510 = vadd.f32 %v3349, %v3509
      %v3511 = vpop.f32.mrb[0].mxu0
      %v3512 = vpop.f32.mrb[0].mxu0
      %v3513 = vadd.f32 %v3352, %v3512
      %v3514 = vpop.f32.mrb[0].mxu0
      %3515 = vmatprep.mubr.bf16.mxu0 0
      %3516 = vmatmul.mubr.bf16.gmra.mrb[0].mxu0 %v2122
      %v3517 = vpop.f32.mrb[0].mxu0
      %v3518 = vadd.f32 %v3357, %v3517
      %v3519 = vpop.f32.mrb[0].mxu0
      %v3520 = vpop.f32.mrb[0].mxu0
      %v3521 = vadd.f32 %v3360, %v3520
      %v3522 = vpop.f32.mrb[0].mxu0
      %3523 = vmatprep.mubr.bf16.mxu0 0
      %3524 = vmatmul.mubr.bf16.gmra.mrb[0].mxu0 %v2125
      %v3525 = vpop.f32.mrb[0].mxu0
      %v3526 = vadd.f32 %v3365, %v3525
      %v3527 = vpop.f32.mrb[0].mxu0
      %v3528 = vpop.f32.mrb[0].mxu0
      %v3529 = vadd.f32 %v3368, %v3528
      %v3530 = vpop.f32.mrb[0].mxu0
      %3531 = vmatprep.mubr.bf16.mxu0 0
      %3532 = vmatmul.mubr.bf16.gmra.mrb[0].mxu0 %v2128
      %v3533 = vpop.f32.mrb[0].mxu0
      %v3534 = vadd.f32 %v3373, %v3533
      %v3535 = vpop.f32.mrb[0].mxu0
      %v3536 = vpop.f32.mrb[0].mxu0
      %v3537 = vadd.f32 %v3376, %v3536
      %v3538 = vpop.f32.mrb[0].mxu0
      %3539 = vmatprep.mubr.bf16.mxu0 0
      %3540 = vmatmul.mubr.bf16.gmra.mrb[0].mxu0 %v2131
      %v3541 = vpop.f32.mrb[0].mxu0
      %v3542 = vadd.f32 %v3381, %v3541
      %v3543 = vpop.f32.mrb[0].mxu0
      %v3544 = vpop.f32.mrb[0].mxu0
      %v3545 = vadd.f32 %v3384, %v3544
      %v3546 = vpop.f32.mrb[0].mxu0
      %3547 = vmatprep.mubr.bf16.mxu0 0
      %3548 = vmatmul.mubr.bf16.gmra.mrb[0].mxu0 %v2134
      %v3549 = vpop.f32.mrb[0].mxu0
      %v3550 = vadd.f32 %v3389, %v3549
      %v3551 = vpop.f32.mrb[0].mxu0
      %v3552 = vpop.f32.mrb[0].mxu0
      %v3553 = vadd.f32 %v3392, %v3552
      %v3554 = vpop.f32.mrb[0].mxu0
      %3555 = vmatprep.mubr.bf16.mxu0 0
      %3556 = vmatmul.mubr.bf16.gmra.mrb[0].mxu0 %v2137
      %v3557 = vpop.f32.mrb[0].mxu0
      %v3558 = vadd.f32 %v3397, %v3557
      %v3559 = vpop.f32.mrb[0].mxu0
      %v3560 = vpop.f32.mrb[0].mxu0
      %v3561 = vadd.f32 %v3400, %v3560
      %v3562 = vpop.f32.mrb[0].mxu0
      %3563 = vmatprep.mubr.bf16.mxu0 0
      %3564 = vmatmul.mubr.bf16.gmra.mrb[0].mxu0 %v2171
      %v3565 = vpop.f32.mrb[0].mxu0
      %v3566 = vadd.f32 %v3405, %v3565
      %v3567 = vpop.f32.mrb[0].mxu0
      %v3568 = vpop.f32.mrb[0].mxu0
      %v3569 = vadd.f32 %v3408, %v3568
      %v3570 = vpop.f32.mrb[0].mxu0
      %3571 = vmatprep.mubr.bf16.mxu0 0
      %3572 = vmatmul.mubr.bf16.gmra.mrb[0].mxu0 %v2190
      %v3573 = vpop.f32.mrb[0].mxu0
      %v3574 = vadd.f32 %v3413, %v3573
      %v3575 = vpop.f32.mrb[0].mxu0
      %v3576 = vpop.f32.mrb[0].mxu0
      %v3577 = vadd.f32 %v3416, %v3576
      %v3578 = vpop.f32.mrb[0].mxu0
      %3579 = vdwg.mxu0
      %v3580 = vpack.c.bf16 %v3457, %v3454
      %v3581 = vpack.c.bf16 %v3465, %v3462
      %v3582 = vpack.c.bf16 %v3473, %v3470
      %v3583 = vpack.c.bf16 %v3481, %v3478
      %v3584 = vpack.c.bf16 %v3489, %v3486
      %v3585 = vpack.c.bf16 %v3497, %v3494
      %v3586 = vpack.c.bf16 %v3505, %v3502
      %v3587 = vpack.c.bf16 %v3513, %v3510
      %v3588 = vpack.c.bf16 %v3521, %v3518
      %v3589 = vpack.c.bf16 %v3529, %v3526
      %v3590 = vpack.c.bf16 %v3537, %v3534
      %v3591 = vpack.c.bf16 %v3545, %v3542
      %v3592 = vpack.c.bf16 %v3553, %v3550
      %v3593 = vpack.c.bf16 %v3561, %v3558
      %v3594 = vpack.c.bf16 %v3569, %v3566
      %v3595 = vpack.c.bf16 %v3577, %v3574
      %v3612 = vunpack.c.l.b16 %v3580
      %v3613 = vunpack.c.h.b16 %v3580
      %v3614 = vunpack.c.l.b16 %v3581
      %v3615 = vunpack.c.h.b16 %v3581
      %v3616 = vunpack.c.l.b16 %v3582
      %v3617 = vunpack.c.h.b16 %v3582
      %v3618 = vunpack.c.l.b16 %v3583
      %v3619 = vunpack.c.h.b16 %v3583
      %v3620 = vunpack.c.l.b16 %v3584
      %v3621 = vunpack.c.h.b16 %v3584
      %v3622 = vunpack.c.l.b16 %v3585
      %v3623 = vunpack.c.h.b16 %v3585
      %v3624 = vunpack.c.l.b16 %v3586
      %v3625 = vunpack.c.h.b16 %v3586
      %v3626 = vunpack.c.l.b16 %v3587
      %v3627 = vunpack.c.h.b16 %v3587
      %v3628 = vunpack.c.l.b16 %v3588
      %v3629 = vunpack.c.h.b16 %v3588
      %v3630 = vunpack.c.l.b16 %v3589
      %v3631 = vunpack.c.h.b16 %v3589
      %v3632 = vunpack.c.l.b16 %v3590
      %v3633 = vunpack.c.h.b16 %v3590
      %v3634 = vunpack.c.l.b16 %v3591
      %v3635 = vunpack.c.h.b16 %v3591
      %v3636 = vunpack.c.l.b16 %v3592
      %v3637 = vunpack.c.h.b16 %v3592
      %v3638 = vunpack.c.l.b16 %v3593
      %v3639 = vunpack.c.h.b16 %v3593
      %v3640 = vunpack.c.l.b16 %v3594
      %v3641 = vunpack.c.h.b16 %v3594
      %v3642 = vunpack.c.l.b16 %v3595
      %v3643 = vunpack.c.h.b16 %v3595
      %v3644 = vpack.c.b16 %v3612, %v3612
      %v3645 = vpack.c.b16 %v3613, %v3613
      %v3646 = vpack.c.b16 %v3614, %v3614
      %v3647 = vpack.c.b16 %v3615, %v3615
      %v3648 = vpack.c.b16 %v3616, %v3616
      %v3649 = vpack.c.b16 %v3617, %v3617
      %v3650 = vpack.c.b16 %v3618, %v3618
      %v3651 = vpack.c.b16 %v3619, %v3619
      %v3652 = vpack.c.b16 %v3620, %v3620
      %v3653 = vpack.c.b16 %v3621, %v3621
      %v3654 = vpack.c.b16 %v3622, %v3622
      %v3655 = vpack.c.b16 %v3623, %v3623
      %v3656 = vpack.c.b16 %v3624, %v3624
      %v3657 = vpack.c.b16 %v3625, %v3625
      %v3658 = vpack.c.b16 %v3626, %v3626
      %v3659 = vpack.c.b16 %v3627, %v3627
      %v3660 = vpack.c.b16 %v3628, %v3628
      %v3661 = vpack.c.b16 %v3629, %v3629
      %v3662 = vpack.c.b16 %v3630, %v3630
      %v3663 = vpack.c.b16 %v3631, %v3631
      %v3664 = vpack.c.b16 %v3632, %v3632
      %v3665 = vpack.c.b16 %v3633, %v3633
      %v3666 = vpack.c.b16 %v3634, %v3634
      %v3667 = vpack.c.b16 %v3635, %v3635
      %v3668 = vpack.c.b16 %v3636, %v3636
      %v3669 = vpack.c.b16 %v3637, %v3637
      %v3670 = vpack.c.b16 %v3638, %v3638
      %v3671 = vpack.c.b16 %v3639, %v3639
      %v3672 = vpack.c.b16 %v3640, %v3640
      %v3673 = vpack.c.b16 %v3641, %v3641
      %v3674 = vpack.c.b16 %v3642, %v3642
      %v3675 = vpack.c.b16 %v3643, %v3643
      %3708 = vst [vmem:[%s479] sm:$0xf] %v3644
      %3709 = vst [vmem:[%s479 + $0x4] sm:$0xf] %v3645
      %3710 = vst [vmem:[%s479 + $0x8] sm:$0xf] %v3646
      %3711 = vst [vmem:[%s479 + $0xc] sm:$0xf] %v3647
      %3712 = vst [vmem:[%s479 + $0x10] sm:$0xf] %v3648
      %3713 = vst [vmem:[%s479 + $0x14] sm:$0xf] %v3649
      %3714 = vst [vmem:[%s479 + $0x18] sm:$0xf] %v3650
      %3715 = vst [vmem:[%s479 + $0x1c] sm:$0xf] %v3651
      %3716 = vst [vmem:[%s479 + $0x20] sm:$0xf] %v3652
      %3717 = vst [vmem:[%s479 + $0x24] sm:$0xf] %v3653
      %3718 = vst [vmem:[%s479 + $0x28] sm:$0xf] %v3654
      %3719 = vst [vmem:[%s479 + $0x2c] sm:$0xf] %v3655
      %3720 = vst [vmem:[%s479 + $0x30] sm:$0xf] %v3656
      %3721 = vst [vmem:[%s479 + $0x34] sm:$0xf] %v3657
      %3722 = vst [vmem:[%s479 + $0x38] sm:$0xf] %v3658
      %3723 = vst [vmem:[%s479 + $0x3c] sm:$0xf] %v3659
      %3724 = vst [vmem:[%s479 + $0x40] sm:$0xf] %v3660
      %3725 = vst [vmem:[%s479 + $0x44] sm:$0xf] %v3661
      %3726 = vst [vmem:[%s479 + $0x48] sm:$0xf] %v3662
      %3727 = vst [vmem:[%s479 + $0x4c] sm:$0xf] %v3663
      %3728 = vst [vmem:[%s479 + $0x50] sm:$0xf] %v3664
      %3729 = vst [vmem:[%s479 + $0x54] sm:$0xf] %v3665
      %3730 = vst [vmem:[%s479 + $0x58] sm:$0xf] %v3666
      %3731 = vst [vmem:[%s479 + $0x5c] sm:$0xf] %v3667
      %3732 = vst [vmem:[%s479 + $0x60] sm:$0xf] %v3668
      %3733 = vst [vmem:[%s479 + $0x64] sm:$0xf] %v3669
      %3734 = vst [vmem:[%s479 + $0x68] sm:$0xf] %v3670
      %3735 = vst [vmem:[%s479 + $0x6c] sm:$0xf] %v3671
      %3736 = vst [vmem:[%s479 + $0x70] sm:$0xf] %v3672
      %3737 = vst [vmem:[%s479 + $0x74] sm:$0xf] %v3673
      %3738 = vst [vmem:[%s479 + $0x78] sm:$0xf] %v3674
      %3739 = vst [vmem:[%s479 + $0x7c] sm:$0xf] %v3675
      %v3740 = vunpack.c.l.bf16 %v3580
      %v3741 = vunpack.c.h.bf16 %v3580
      %v3742 = vunpack.c.l.bf16 %v3581
      %v3743 = vunpack.c.h.bf16 %v3581
      %v3744 = vunpack.c.l.bf16 %v3582
      %v3745 = vunpack.c.h.bf16 %v3582
      %v3746 = vunpack.c.l.bf16 %v3583
      %v3747 = vunpack.c.h.bf16 %v3583
      %v3748 = vunpack.c.l.bf16 %v3584
      %v3749 = vunpack.c.h.bf16 %v3584
      %v3750 = vunpack.c.l.bf16 %v3585
      %v3751 = vunpack.c.h.bf16 %v3585
      %v3752 = vunpack.c.l.bf16 %v3586
      %v3753 = vunpack.c.h.bf16 %v3586
      %v3754 = vunpack.c.l.bf16 %v3587
      %v3755 = vunpack.c.h.bf16 %v3587
      %v3756 = vunpack.c.l.bf16 %v3588
      %v3757 = vunpack.c.h.bf16 %v3588
      %v3758 = vunpack.c.l.bf16 %v3589
      %v3759 = vunpack.c.h.bf16 %v3589
      %v3760 = vunpack.c.l.bf16 %v3590
      %v3761 = vunpack.c.h.bf16 %v3590
      %v3762 = vunpack.c.l.bf16 %v3591
      %v3763 = vunpack.c.h.bf16 %v3591
      %v3764 = vunpack.c.l.bf16 %v3592
      %v3765 = vunpack.c.h.bf16 %v3592
      %v3766 = vunpack.c.l.bf16 %v3593
      %v3767 = vunpack.c.h.bf16 %v3593
      %v3768 = vunpack.c.l.bf16 %v3594
      %v3769 = vunpack.c.h.bf16 %v3594
      %v3770 = vunpack.c.l.bf16 %v3595
      %v3771 = vunpack.c.h.bf16 %v3595
      %v3772 = vadd.f32 %v3740, %v3741
      %v3773 = vadd.f32 %v3772, %v3742
      %v3774 = vadd.f32 %v3773, %v3743
      %v3775 = vadd.f32 %v3774, %v3744
      %v3776 = vadd.f32 %v3775, %v3745
      %v3777 = vadd.f32 %v3776, %v3746
      %v3778 = vadd.f32 %v3777, %v3747
      %v3779 = vadd.f32 %v3778, %v3748
      %v3780 = vadd.f32 %v3779, %v3749
      %v3781 = vadd.f32 %v3780, %v3750
      %v3782 = vadd.f32 %v3781, %v3751
      %v3783 = vadd.f32 %v3782, %v3752
      %v3784 = vadd.f32 %v3783, %v3753
      %v3785 = vadd.f32 %v3784, %v3754
      %v3786 = vadd.f32 %v3785, %v3755
      %v3787 = vadd.f32 %v3786, %v3756
      %v3788 = vadd.f32 %v3787, %v3757
      %v3789 = vadd.f32 %v3788, %v3758
      %v3790 = vadd.f32 %v3789, %v3759
      %v3791 = vadd.f32 %v3790, %v3760
      %v3792 = vadd.f32 %v3791, %v3761
      %v3793 = vadd.f32 %v3792, %v3762
      %v3794 = vadd.f32 %v3793, %v3763
      %v3795 = vadd.f32 %v3794, %v3764
      %v3796 = vadd.f32 %v3795, %v3765
      %v3797 = vadd.f32 %v3796, %v3766
      %v3798 = vadd.f32 %v3797, %v3767
      %v3799 = vadd.f32 %v3798, %v3768
      %v3800 = vadd.f32 %v3799, %v3769
      %v3801 = vadd.f32 %v3800, %v3770
      %v3802 = vadd.f32 %v3801, %v3771
      %v3803 = vrot.slane %v3802, 4
      %v3804 = vadd.f32 %v3802, %v3803
      %v3805 = vrot.slane %v3804, 2
      %v3806 = vadd.f32 %v3804, %v3805
      %v3807 = vrot.slane %v3806, 1
      %v3808 = vadd.f32 %v3806, %v3807
      %v3809 = vmul.f32 %v3740, %v3740
      %v3810 = vmul.f32 %v3741, %v3741
      %v3811 = vmul.f32 %v3742, %v3742
      %v3812 = vmul.f32 %v3743, %v3743
      %v3813 = vmul.f32 %v3744, %v3744
      %v3814 = vmul.f32 %v3745, %v3745
      %v3815 = vmul.f32 %v3746, %v3746
      %v3816 = vmul.f32 %v3747, %v3747
      %v3817 = vmul.f32 %v3748, %v3748
      %v3818 = vmul.f32 %v3749, %v3749
      %v3819 = vmul.f32 %v3750, %v3750
      %v3820 = vmul.f32 %v3751, %v3751
      %v3821 = vmul.f32 %v3752, %v3752
      %v3822 = vmul.f32 %v3753, %v3753
      %v3823 = vmul.f32 %v3754, %v3754
      %v3824 = vmul.f32 %v3755, %v3755
      %v3825 = vmul.f32 %v3756, %v3756
      %v3826 = vmul.f32 %v3757, %v3757
      %v3827 = vmul.f32 %v3758, %v3758
      %v3828 = vmul.f32 %v3759, %v3759
      %v3829 = vmul.f32 %v3760, %v3760
      %v3830 = vmul.f32 %v3761, %v3761
      %v3831 = vmul.f32 %v3762, %v3762
      %v3832 = vmul.f32 %v3763, %v3763
      %v3833 = vmul.f32 %v3764, %v3764
      %v3834 = vmul.f32 %v3765, %v3765
      %v3835 = vmul.f32 %v3766, %v3766
      %v3836 = vmul.f32 %v3767, %v3767
      %v3837 = vmul.f32 %v3768, %v3768
      %v3838 = vmul.f32 %v3769, %v3769
      %v3839 = vmul.f32 %v3770, %v3770
      %v3840 = vmul.f32 %v3771, %v3771
      %v3841 = vadd.f32 %v3809, %v3810
      %v3842 = vadd.f32 %v3841, %v3811
      %v3843 = vadd.f32 %v3842, %v3812
      %v3844 = vadd.f32 %v3843, %v3813
      %v3845 = vadd.f32 %v3844, %v3814
      %v3846 = vadd.f32 %v3845, %v3815
      %v3847 = vadd.f32 %v3846, %v3816
      %v3848 = vadd.f32 %v3847, %v3817
      %v3849 = vadd.f32 %v3848, %v3818
      %v3850 = vadd.f32 %v3849, %v3819
      %v3851 = vadd.f32 %v3850, %v3820
      %v3852 = vadd.f32 %v3851, %v3821
      %v3853 = vadd.f32 %v3852, %v3822
      %v3854 = vadd.f32 %v3853, %v3823
      %v3855 = vadd.f32 %v3854, %v3824
      %v3856 = vadd.f32 %v3855, %v3825
      %v3857 = vadd.f32 %v3856, %v3826
      %v3858 = vadd.f32 %v3857, %v3827
      %v3859 = vadd.f32 %v3858, %v3828
      %v3860 = vadd.f32 %v3859, %v3829
      %v3861 = vadd.f32 %v3860, %v3830
      %v3862 = vadd.f32 %v3861, %v3831
      %v3863 = vadd.f32 %v3862, %v3832
      %v3864 = vadd.f32 %v3863, %v3833
      %v3865 = vadd.f32 %v3864, %v3834
      %v3866 = vadd.f32 %v3865, %v3835
      %v3867 = vadd.f32 %v3866, %v3836
      %v3868 = vadd.f32 %v3867, %v3837
      %v3869 = vadd.f32 %v3868, %v3838
      %v3870 = vadd.f32 %v3869, %v3839
      %v3871 = vadd.f32 %v3870, %v3840
      %v3872 = vrot.slane %v3871, 4
      %v3873 = vadd.f32 %v3871, %v3872
      %v3874 = vrot.slane %v3873, 2
      %v3875 = vadd.f32 %v3873, %v3874
      %v3876 = vrot.slane %v3875, 1
      %v3877 = vadd.f32 %v3875, %v3876
      %vm3878 = vcmask 1040384
      %v3879 = vsel %vm3878, %v3808, %v3877
      %p3880 = scmp.eq.s32.totalorder %s25, 0
      // Predicated region
      $region49: #{unet_down.4} parent=47 // pred_check
        %p3881 = pneg %p3880
      $region50: #{unet_down.4} parent=47 // pred_check_branch
        %3883 = sbr.rel (%p3881) target = $region52
      $region51: #{unet_down.4} parent=47 // pred_region
        %3884 = vst [vmem:[%s484] sm:$0x3] 0.0
      $region52: #{unet_down.4} parent=47 // pred_fallthru
        _
      %v3885 = vld [vmem:[%s484] sm:$0x3]
      %v3886 = vadd.f32 %v3885, %v3879
      %3887 = vst [vmem:[%s484] sm:$0x3] %v3886
      %s3888 = smul.u32 16, %s25
      %p3889 = scmp.lt.s32.totalorder %s24, 1
      %s3890 = scalar_select %p3889, %s24, 1
      %p3891 = scmp.lt.s32.totalorder %s3888, 15
      %s3892 = scalar_select %p3891, %s3888, 15
      %s3893 = smul.addr %s3892, 2
      %s3894 = smul.addr %s3890, 32
      %s3895 = sadd.s32 %s3893, %s3894
      %s3896 = smul.addr %s3895, 4
      %s3897 = scalar_lea.vmem %s7, %s3896
      %p3898 = scmp.lt.s32.totalorder %s24, 1
      %s3899 = scalar_select %p3898, %s24, 1
      %s3900 = smul.addr %s3899, 2
      %s3901 = scalar_lea.vmem %s8, %s3900
      // Predicated region
      $region53: #{unet_down.4} parent=47 // pred_check
        %p3902 = pneg %p236
      $region54: #{unet_down.4} parent=47 // pred_check_branch
        %3904 = sbr.rel (%p3902) target = $region56
      $region55: #{unet_down.4} parent=47 // pred_region
        %s3905 = smul.u32 16, %s25
      $region56: #{unet_down.4} parent=47 // pred_fallthru
        _
      // Predicated region
      $region57: #{unet_down.4} parent=47 // pred_check
        %p3906 = pneg %p262
      $region58: #{unet_down.4} parent=47 // pred_check_branch
        %3908 = sbr.rel (%p3906) target = $region60
      $region59: #{unet_down.4} parent=47 // pred_region
        _
      $region60: #{unet_down.4} parent=47 // pred_fallthru
        _
    $region48: #{unet_down.4} parent=5 // pred_fallthru
      _
    %p3909 = scmp.le.s32.totalorder 2, %s15
    // Predicated region
    $region61: #{unet_down.4} parent=5 // pred_check
      %p3910 = pneg %p3909
    $region62: #{unet_down.4} parent=5 // pred_check_branch
      %3912 = sbr.rel (%p3910) target = $region64
    $region63: #{unet_down.4} parent=5 // pred_region
      %s3913 = ssub.s32 %s15, 2
      // Predicated region
      $region65: #{unet_down.4} parent=63 // pred_check
        %p3914 = pneg %p242
      $region66: #{unet_down.4} parent=63 // pred_check_branch
        %3916 = sbr.rel (%p3914) target = $region68
      $region67: #{unet_down.4} parent=63 // pred_region
        %s3917 = smul.u32 16, %s27
        %p3918 = scmp.lt.s32.totalorder %s26, 1
        %s3919 = scalar_select %p3918, %s26, 1
        %p3920 = scmp.lt.s32.totalorder %s3917, 15
        %s3921 = scalar_select %p3920, %s3917, 15
        %s3922 = smul.addr %s3921, 2
        %s3923 = smul.addr %s3919, 32
        %s3924 = sadd.s32 %s3922, %s3923
        %s3925 = smul.addr %s3924, 4
        %s3926 = scalar_lea.vmem %s7, %s3925
      $region68: #{unet_down.4} parent=63 // pred_fallthru
        _
      // Predicated region
      $region69: #{unet_down.4} parent=63 // pred_check
        %p3927 = pneg %p268
      $region70: #{unet_down.4} parent=63 // pred_check_branch
        %3929 = sbr.rel (%p3927) target = $region72
      $region71: #{unet_down.4} parent=63 // pred_region
        %p3930 = scmp.lt.s32.totalorder %s26, 1
        %s3931 = scalar_select %p3930, %s26, 1
        %s3932 = smul.addr %s3931, 2
        %s3933 = scalar_lea.vmem %s8, %s3932
      $region72: #{unet_down.4} parent=63 // pred_fallthru
        _
    $region64: #{unet_down.4} parent=5 // pred_fallthru
      _
  $region6: #{unet_down.4} parent=0 // loop_footer
    %s19 = sadd.s32 1, %s15
  $region7: #{unet_down.4} parent=0 // loop_footer_branch
    %14 = sbr.rel target = $region3
  $region8: #{unet_down.4} parent=0 // loop_exit
    _

</llo_original>
